<compile_context>
chip_gen: v5e
topology: v5e:2x2
jax: 0.10.0
libtpu: 0.0.40
codegen_flags: <defaults>
</compile_context>

<pallas_src>
import math

import jax
import jax.numpy as jnp
from jax.experimental import pallas as pl
from jax.experimental.pallas import tpu as pltpu


def ffn_kernel(x_ref, w1_ref, b1_ref, w2_ref, b2_ref, out_ref):
    """One (sequence-tile, d_ff-tile) step of Linear2(ReLU(Linear1(X)))."""
    j = pl.program_id(1)  # d_ff tile index (reduction axis, last in grid)

    # Initialize the resident output block with the Linear2 bias on the first
    # d_ff tile; subsequent tiles accumulate their partial products into it.
    @pl.when(j == 0)
    def _():
        out_ref[...] = jnp.broadcast_to(b2_ref[...], out_ref.shape).astype(out_ref.dtype)

    # Linear1 + ReLU for this d_ff tile. Weights are pre-transposed in the
    # wrapper ([d_model, d_ff] layout), so no '.T' inside the kernel.
    h = jnp.dot(x_ref[...], w1_ref[...], preferred_element_type=jnp.float32) + b1_ref[...]
    h = jnp.maximum(h, 0.0)

    # Linear2 partial product for this d_ff tile, accumulated into the resident
    # output block (lane-dense [block_s, d_model] store).
    out_ref[...] += jnp.dot(h, w2_ref[...], preferred_element_type=jnp.float32).astype(out_ref.dtype)


def feed_forward_network(x, w1, b1, w2, b2, *, block_s=None, block_ff=None):
    """FeedForwardNetwork forward.

    Args:
      x : [S, d_model]
      w1: [d_ff, d_model], b1: [d_ff]       (linear1, nn.Linear layout [out, in])
      w2: [d_model, d_ff], b2: [d_model]    (linear2, nn.Linear layout [out, in])
    Returns:
      [S, d_model] float32
    """
    S, d_model = x.shape
    d_ff = w1.shape[0]

    # Layout plumbing at trace time (outside the kernel): pre-transpose to
    # [in, out] so the kernel feeds the MXU directly from the loaded layout.
    w1t = w1.T                    # [d_model, d_ff]
    w2t = w2.T                    # [d_ff, d_model]
    b1r = b1.reshape(1, d_ff)
    b2r = b2.reshape(1, d_model)

    if block_s is None:
        block_s = min(S, 256)
    if block_ff is None:
        block_ff = min(d_ff, 2048)
    assert S % block_s == 0 and d_ff % block_ff == 0, "tile sizes must divide shapes"

    # At the module's shapes (S=32, d_model=512, d_ff=2048) this is (1, 1):
    # a single fused invocation, per the performance review.
    grid = (pl.cdiv(S, block_s), pl.cdiv(d_ff, block_ff))

    return pl.pallas_call(
        ffn_kernel,
        out_shape=jax.ShapeDtypeStruct((S, d_model), jnp.float32),
        grid=grid,
        in_specs=[
            pl.BlockSpec((block_s, d_model), lambda i, j: (i, 0)),    # X  tile
            pl.BlockSpec((d_model, block_ff), lambda i, j: (0, j)),   # W1^T tile
            pl.BlockSpec((1, block_ff), lambda i, j: (0, j)),         # b1  tile
            pl.BlockSpec((block_ff, d_model), lambda i, j: (j, 0)),   # W2^T tile
            pl.BlockSpec((1, d_model), lambda i, j: (0, 0)),          # b2
        ],
        out_specs=pl.BlockSpec((block_s, d_model), lambda i, j: (i, 0)),  # resident acc
        compiler_params=pltpu.CompilerParams(
            # Sequence tiles are independent (disjoint output blocks) -> parallel
            # (uses both TCs on v7x for long sequences). d_ff is a reduction that
            # accumulates into the resident output block -> must stay arbitrary.
            dimension_semantics=("parallel", "arbitrary"),
            vmem_limit_bytes=48 * 1024 * 1024,
        ),
    )(x, w1t, b1r, w2t, b2r)


def reference_ffn(x, w1, b1, w2, b2):
    """Pure-JAX reference mirroring the PyTorch FeedForwardNetwork module."""
    h = jnp.maximum(x @ w1.T + b1, 0.0)
    return h @ w2.T + b2


if __name__ == "__main__":
    # Shapes implied by the module: seq_length=32, d_model=512, d_ff=2048.
    S, D_MODEL, D_FF = 32, 512, 2048

    key = jax.random.PRNGKey(0)
    kx, k1, k2 = jax.random.split(key, 3)

    x = jax.random.normal(kx, (S, D_MODEL), dtype=jnp.float32)

    def linear_init(k, out_dim, in_dim):
        # nn.Linear-style uniform init (deterministic given the key).
        bound = 1.0 / math.sqrt(in_dim)
        kw, kb = jax.random.split(k)
        w = jax.random.uniform(kw, (out_dim, in_dim), minval=-bound, maxval=bound,
                               dtype=jnp.float32)
        b = jax.random.uniform(kb, (out_dim,), minval=-bound, maxval=bound,
                               dtype=jnp.float32)
        return w, b

    w1, b1 = linear_init(k1, D_FF, D_MODEL)     # linear1: d_model -> d_ff
    w2, b2 = linear_init(k2, D_MODEL, D_FF)     # linear2: d_ff -> d_model

    out = feed_forward_network(x, w1, b1, w2, b2)
    out = jax.block_until_ready(out)

    ref = reference_ffn(x, w1, b1, w2, b2)
    assert out.shape == (S, D_MODEL)
    assert jnp.allclose(out, ref, rtol=1e-3, atol=1e-3), "mismatch vs reference"

    print("KERNEL_OK")
</pallas_src>

<mosaic_0001>
module attributes {stable_mosaic.version = 11 : i64} {
  func.func @ffn_kernel(%arg0: i32, %arg1: i32, %arg2: memref<32x512xf32, #tpu.memory_space<vmem>>, %arg3: memref<512x2048xf32, #tpu.memory_space<vmem>>, %arg4: memref<1x2048xf32, #tpu.memory_space<vmem>>, %arg5: memref<2048x512xf32, #tpu.memory_space<vmem>>, %arg6: memref<1x512xf32, #tpu.memory_space<vmem>>, %arg7: memref<32x512xf32, #tpu.memory_space<vmem>>) attributes {dimension_semantics = [#tpu.dimension_semantics<parallel>, #tpu.dimension_semantics<arbitrary>], iteration_bounds = array<i64: 1, 1>, scalar_prefetch = 0 : i64, scratch_operands = 0 : i64, tpu.core_type = #tpu.core_type<tc>, window_params = [{transform_indices = @transform_0, window_bounds = array<i64: 32, 512>}, {transform_indices = @transform_1, window_bounds = array<i64: 512, 2048>}, {transform_indices = @transform_2, window_bounds = array<i64: 1, 2048>}, {transform_indices = @transform_3, window_bounds = array<i64: 2048, 512>}, {pipeline_mode = #tpu.pipeline_mode<synchronous>, transform_indices = @transform_4, window_bounds = array<i64: 1, 512>}, {transform_indices = @transform_5, window_bounds = array<i64: 32, 512>}]} {
    %c0_i32 = arith.constant 0 : i32
    %0 = arith.cmpi eq, %arg1, %c0_i32 : i32
    %1 = arith.extui %0 : i1 to i32
    %c0_i32_0 = arith.constant 0 : i32
    %2 = arith.cmpi ne, %1, %c0_i32_0 : i32
    scf.if %2 {
      %c0_14 = arith.constant 0 : index
      %c0_15 = arith.constant 0 : index
      %16 = vector.load %arg6[%c0_14, %c0_15] : memref<1x512xf32, #tpu.memory_space<vmem>>, vector<1x512xf32>
      %17 = vector.shape_cast %16 : vector<1x512xf32> to vector<1x512xf32>
      %18 = vector.broadcast %17 : vector<1x512xf32> to vector<32x512xf32>
      %c0_16 = arith.constant 0 : index
      %c0_17 = arith.constant 0 : index
      %19 = vector.load %arg7[%c0_16, %c0_17] : memref<32x512xf32, #tpu.memory_space<vmem>>, vector<32x512xf32>
      tpu.vector_store %arg7[%c0_16, %c0_17], %18 {strides = array<i32>} : memref<32x512xf32, #tpu.memory_space<vmem>>, vector<32x512xf32>,
    } else {
    }
    %c0 = arith.constant 0 : index
    %c0_1 = arith.constant 0 : index
    %3 = vector.load %arg2[%c0, %c0_1] : memref<32x512xf32, #tpu.memory_space<vmem>>, vector<32x512xf32>
    %c0_2 = arith.constant 0 : index
    %c0_3 = arith.constant 0 : index
    %4 = vector.load %arg3[%c0_2, %c0_3] : memref<512x2048xf32, #tpu.memory_space<vmem>>, vector<512x2048xf32>
    %cst = arith.constant dense<0.000000e+00> : vector<32x2048xf32>
    %5 = tpu.matmul %3, %4, %cst {dimension_numbers = #tpu.dot_dimension_numbers<[1], [0], [0], [1], [0, 0, 1, 1], [], []>} : vector<32x512xf32>, vector<512x2048xf32>, vector<32x2048xf32> -> vector<32x2048xf32>
    %c0_4 = arith.constant 0 : index
    %c0_5 = arith.constant 0 : index
    %6 = vector.load %arg4[%c0_4, %c0_5] : memref<1x2048xf32, #tpu.memory_space<vmem>>, vector<1x2048xf32>
    %7 = vector.broadcast %6 : vector<1x2048xf32> to vector<32x2048xf32>
    %8 = arith.addf %5, %7 : vector<32x2048xf32>
    %cst_6 = arith.constant 0.000000e+00 : f32
    %9 = vector.broadcast %cst_6 : f32 to vector<32x2048xf32>
    %10 = arith.maximumf %8, %9 : vector<32x2048xf32>
    %c0_7 = arith.constant 0 : index
    %c0_8 = arith.constant 0 : index
    %11 = vector.load %arg7[%c0_7, %c0_8] : memref<32x512xf32, #tpu.memory_space<vmem>>, vector<32x512xf32>
    %c0_9 = arith.constant 0 : index
    %c0_10 = arith.constant 0 : index
    %12 = vector.load %arg5[%c0_9, %c0_10] : memref<2048x512xf32, #tpu.memory_space<vmem>>, vector<2048x512xf32>
    %cst_11 = arith.constant dense<0.000000e+00> : vector<32x512xf32>
    %13 = tpu.matmul %10, %12, %cst_11 {dimension_numbers = #tpu.dot_dimension_numbers<[1], [0], [0], [1], [0, 0, 1, 1], [], []>} : vector<32x2048xf32>, vector<2048x512xf32>, vector<32x512xf32> -> vector<32x512xf32>
    %14 = arith.addf %11, %13 : vector<32x512xf32>
    %c0_12 = arith.constant 0 : index
    %c0_13 = arith.constant 0 : index
    %15 = vector.load %arg7[%c0_12, %c0_13] : memref<32x512xf32, #tpu.memory_space<vmem>>, vector<32x512xf32>
    tpu.vector_store %arg7[%c0_12, %c0_13], %14 {strides = array<i32>} : memref<32x512xf32, #tpu.memory_space<vmem>>, vector<32x512xf32>,
    return
  }
  func.func @transform_0(%arg0: i32, %arg1: i32) -> (i32, i32) {
    %c0_i32 = arith.constant 0 : i32
    %c0_i32_0 = arith.constant 0 : i32
    return %arg0, %c0_i32 : i32, i32
  }
  func.func @transform_1(%arg0: i32, %arg1: i32) -> (i32, i32) {
    %c0_i32 = arith.constant 0 : i32
    %c0_i32_0 = arith.constant 0 : i32
    return %c0_i32, %arg1 : i32, i32
  }
  func.func @transform_2(%arg0: i32, %arg1: i32) -> (i32, i32) {
    %c0_i32 = arith.constant 0 : i32
    %c0_i32_0 = arith.constant 0 : i32
    return %c0_i32, %arg1 : i32, i32
  }
  func.func @transform_3(%arg0: i32, %arg1: i32) -> (i32, i32) {
    %c0_i32 = arith.constant 0 : i32
    %c0_i32_0 = arith.constant 0 : i32
    return %arg1, %c0_i32 : i32, i32
  }
  func.func @transform_4(%arg0: i32, %arg1: i32) -> (i32, i32) {
    %c0_i32 = arith.constant 0 : i32
    %c0_i32_0 = arith.constant 0 : i32
    %c0_i32_1 = arith.constant 0 : i32
    return %c0_i32, %c0_i32_0 : i32, i32
  }
  func.func @transform_5(%arg0: i32, %arg1: i32) -> (i32, i32) {
    %c0_i32 = arith.constant 0 : i32
    %c0_i32_0 = arith.constant 0 : i32
    return %arg0, %c0_i32 : i32, i32
  }
}

</mosaic_0001>

<llo_original>
// kernel: tpu_custom_call.1
$region0: #{tpu_custom_call.1}
  #allocation0 [shape = 'u32[]', space=smem, size = 0x4, offset = 0x4, fixed_abs, tag = 'smem constant byte address 0x4 - core index']
  #allocation1 [shape = 'u32[72,128]{1,0:T(1,128)}', space=vmem, size = 0x9000, scoped, tag = 'internal scratch']
  %s0 = inlined_call_operand.hbm [shape: f32[32,512], index: 0, kind: input, shape index: {}]
  %s1 = inlined_call_operand.hbm [shape: f32[512,2048], index: 1, kind: input, shape index: {}]
  %s2 = inlined_call_operand.hbm [shape: f32[1,2048], index: 2, kind: input, shape index: {}]
  %s3 = inlined_call_operand.hbm [shape: f32[2048,512], index: 3, kind: input, shape index: {}]
  %s4 = inlined_call_operand.hbm [shape: f32[1,512], index: 4, kind: input, shape index: {}]
  %s5 = inlined_call_operand.hbm [shape: f32[32,512], index: 5, kind: output, shape index: {}]
  %s6 = sld [smem:[#allocation0]]
  $region54: #{tpu_custom_call.1} parent=0
    _
  %s8 = ssub.s32 1, %s6
  %s9 = scalar_select 0, %s8, %s6
  $region1: #{tpu_custom_call.1} parent=0
    #allocation2 [shape = 'u8[65536]{0}', space=vmem, size = 0x10000, scoped, tag = 'input window, operand 0, single buffered']
    #allocation3 [shape = 's32[1]{0}', space=sflag, size = 0x4, scoped, tag = 'scoped memory for tpu_custom_call.1']
    #allocation4 [shape = 's32[1]{0}', space=sflag, size = 0x4, scoped, tag = 'scoped memory for tpu_custom_call.1']
    #allocation5 [shape = 'u8[4194304]{0}', space=vmem, size = 0x400000, scoped, tag = 'input window, operand 1, single buffered']
    #allocation6 [shape = 's32[1]{0}', space=sflag, size = 0x4, scoped, tag = 'scoped memory for tpu_custom_call.1']
    #allocation7 [shape = 'u8[8192]{0}', space=vmem, size = 0x2000, scoped, tag = 'input window, operand 2, single buffered']
    #allocation8 [shape = 'u8[4194304]{0}', space=vmem, size = 0x400000, scoped, tag = 'input window, operand 3, single buffered']
    #allocation9 [shape = 's32[1]{0}', space=sflag, size = 0x4, scoped, tag = 'scoped memory for tpu_custom_call.1']
    #allocation10 [shape = 'u8[2048]{0}', space=vmem, size = 0x800, scoped, tag = 'input window, operand 4, single buffered']
    #allocation11 [shape = 'u8[65536]{0}', space=vmem, size = 0x10000, scoped, tag = 'output window, operand 0, single buffered']
    %10 = vsyncpa [#allocation3], 0
    %11 = vsyncpa [#allocation6], 0
    %12 = vsyncpa [#allocation9], 0
    %13 = vsyncpa [#allocation4], 0
    // Predicated region
    $region2: #{tpu_custom_call.1} parent=1 // pred_check
      _
    $region3: #{tpu_custom_call.1} parent=1 // pred_check_branch
      %15 = sbr.rel (0) target = $region5
    $region4: #{tpu_custom_call.1} parent=1 // pred_region
      %17 = vsyncadd [#allocation3], 0
      %s18 = sshll.u32 %s0, 4
      %s19 = int_to_ptr.hbm [resolvable:$true] %s18
      %s20 = sshll.u32 [#allocation2], 4
      %s21 = int_to_ptr.vmem [resolvable:$true] %s20
      %26 = dma.hbm_to_vmem [thread:$0]  %s19, 2048, %s21, [#allocation3], 512, 512, 32
    $region5: #{tpu_custom_call.1} parent=1 // pred_fallthru
      _
    // Predicated region
    $region6: #{tpu_custom_call.1} parent=1 // pred_check
      _
    $region7: #{tpu_custom_call.1} parent=1 // pred_check_branch
      %28 = sbr.rel (0) target = $region9
    $region8: #{tpu_custom_call.1} parent=1 // pred_region
      %30 = vsyncadd [#allocation6], 0
      %s31 = sshll.u32 %s1, 4
      %s32 = int_to_ptr.hbm [resolvable:$true] %s31
      %s33 = sshll.u32 [#allocation5], 4
      %s34 = int_to_ptr.vmem [resolvable:$true] %s33
      %39 = dma.hbm_to_vmem [thread:$0]  %s32, 131072, %s34, [#allocation6], 2048, 2048, 128
    $region9: #{tpu_custom_call.1} parent=1 // pred_fallthru
      _
    // Predicated region
    $region10: #{tpu_custom_call.1} parent=1 // pred_check
      _
    $region11: #{tpu_custom_call.1} parent=1 // pred_check_branch
      %41 = sbr.rel (0) target = $region13
    $region12: #{tpu_custom_call.1} parent=1 // pred_region
      %43 = vsyncadd [#allocation6], 0
      %s45 = sshll.u32 %s2, 4
      %s46 = int_to_ptr.hbm [resolvable:$true] %s45
      %s47 = sshll.u32 [#allocation7], 4
      %s48 = int_to_ptr.vmem [resolvable:$true] %s47
      %50 = dma.hbm_to_vmem [thread:$0]  %s46, 256, %s48, [#allocation6]
    $region13: #{tpu_custom_call.1} parent=1 // pred_fallthru
      _
    // Predicated region
    $region14: #{tpu_custom_call.1} parent=1 // pred_check
      _
    $region15: #{tpu_custom_call.1} parent=1 // pred_check_branch
      %52 = sbr.rel (0) target = $region17
    $region16: #{tpu_custom_call.1} parent=1 // pred_region
      %54 = vsyncadd [#allocation9], 0
      %s55 = sshll.u32 %s3, 4
      %s56 = int_to_ptr.hbm [resolvable:$true] %s55
      %s57 = sshll.u32 [#allocation8], 4
      %s58 = int_to_ptr.vmem [resolvable:$true] %s57
      %63 = dma.hbm_to_vmem [thread:$0]  %s56, 131072, %s58, [#allocation9], 512, 512, 32
    $region17: #{tpu_custom_call.1} parent=1 // pred_fallthru
      _
    // Predicated region
    $region18: #{tpu_custom_call.1} parent=1 // pred_check
      _
    $region19: #{tpu_custom_call.1} parent=1 // pred_check_branch
      %65 = sbr.rel (0) target = $region21
    $region20: #{tpu_custom_call.1} parent=1 // pred_region
      %67 = vsyncadd [#allocation9], 0
      %s69 = sshll.u32 %s4, 4
      %s70 = int_to_ptr.hbm [resolvable:$true] %s69
      %s71 = sshll.u32 [#allocation10], 4
      %s72 = int_to_ptr.vmem [resolvable:$true] %s71
      %74 = dma.hbm_to_vmem [thread:$0]  %s70, 64, %s72, [#allocation9]
    $region21: #{tpu_custom_call.1} parent=1 // pred_fallthru
      _
    // Predicated region
    $region22: #{tpu_custom_call.1} parent=1 // pred_check
      _
    $region23: #{tpu_custom_call.1} parent=1 // pred_check_branch
      %76 = sbr.rel (0) target = $region25
    $region24: #{tpu_custom_call.1} parent=1 // pred_region
      %78 = dma.done [#allocation3], 2048
    $region25: #{tpu_custom_call.1} parent=1 // pred_fallthru
      _
    // Predicated region
    $region26: #{tpu_custom_call.1} parent=1 // pred_check
      _
    $region27: #{tpu_custom_call.1} parent=1 // pred_check_branch
      %80 = sbr.rel (0) target = $region29
    $region28: #{tpu_custom_call.1} parent=1 // pred_region
      %82 = dma.done [#allocation6], 131072
    $region29: #{tpu_custom_call.1} parent=1 // pred_fallthru
      _
    // Predicated region
    $region30: #{tpu_custom_call.1} parent=1 // pred_check
      _
    $region31: #{tpu_custom_call.1} parent=1 // pred_check_branch
      %84 = sbr.rel (0) target = $region33
    $region32: #{tpu_custom_call.1} parent=1 // pred_region
      %86 = dma.done [#allocation6], 256
    $region33: #{tpu_custom_call.1} parent=1 // pred_fallthru
      _
    // Predicated region
    $region34: #{tpu_custom_call.1} parent=1 // pred_check
      _
    $region35: #{tpu_custom_call.1} parent=1 // pred_check_branch
      %88 = sbr.rel (0) target = $region37
    $region36: #{tpu_custom_call.1} parent=1 // pred_region
      %90 = dma.done [#allocation9], 131072
    $region37: #{tpu_custom_call.1} parent=1 // pred_fallthru
      _
    // Predicated region
    $region38: #{tpu_custom_call.1} parent=1 // pred_check
      _
    $region39: #{tpu_custom_call.1} parent=1 // pred_check_branch
      %92 = sbr.rel (0) target = $region41
    $region40: #{tpu_custom_call.1} parent=1 // pred_region
      %94 = dma.done [#allocation9], 64
    $region41: #{tpu_custom_call.1} parent=1 // pred_fallthru
      _
    %p95 = scmp.eq.s32.totalorder 0, 0
    // Predicated region
    $region42: #{tpu_custom_call.1} parent=1 // pred_check
      %p96 = pneg %p95
    $region43: #{tpu_custom_call.1} parent=1 // pred_check_branch
      %98 = sbr.rel (%p96) target = $region45
    $region44: #{tpu_custom_call.1} parent=1 // pred_region
      %v99 = vld [vmem:[#allocation10] sm:$0xf]
      %v101 = vperm.slane %v99, 0
      %v102 = vperm.slane %v99, 1
      %v103 = vperm.slane %v99, 2
      %v104 = vperm.slane %v99, 3
      %109 = vst [vmem:[#allocation11] sm:$0xff] %v101
      %110 = vst [vmem:[#allocation11 + $0x8] sm:$0xff] %v102
      %111 = vst [vmem:[#allocation11 + $0x10] sm:$0xff] %v103
      %112 = vst [vmem:[#allocation11 + $0x18] sm:$0xff] %v104
      %113 = vst [vmem:[#allocation11 + $0x20] sm:$0xff] %v101
      %114 = vst [vmem:[#allocation11 + $0x28] sm:$0xff] %v102
      %115 = vst [vmem:[#allocation11 + $0x30] sm:$0xff] %v103
      %116 = vst [vmem:[#allocation11 + $0x38] sm:$0xff] %v104
      %117 = vst [vmem:[#allocation11 + $0x40] sm:$0xff] %v101
      %118 = vst [vmem:[#allocation11 + $0x48] sm:$0xff] %v102
      %119 = vst [vmem:[#allocation11 + $0x50] sm:$0xff] %v103
      %120 = vst [vmem:[#allocation11 + $0x58] sm:$0xff] %v104
      %121 = vst [vmem:[#allocation11 + $0x60] sm:$0xff] %v101
      %122 = vst [vmem:[#allocation11 + $0x68] sm:$0xff] %v102
      %123 = vst [vmem:[#allocation11 + $0x70] sm:$0xff] %v103
      %124 = vst [vmem:[#allocation11 + $0x78] sm:$0xff] %v104
    $region45: #{tpu_custom_call.1} parent=1 // pred_fallthru
      _
    %v125 = vld [vmem:[#allocation2] sm:$0xff]
    %v126 = vld [vmem:[#allocation2 + $0x8] sm:$0xff]
    %v127 = vld [vmem:[#allocation2 + $0x10] sm:$0xff]
    %v128 = vld [vmem:[#allocation2 + $0x18] sm:$0xff]
    %v129 = vld [vmem:[#allocation2 + $0x20] sm:$0xff]
    %v130 = vld [vmem:[#allocation2 + $0x28] sm:$0xff]
    %v131 = vld [vmem:[#allocation2 + $0x30] sm:$0xff]
    %v132 = vld [vmem:[#allocation2 + $0x38] sm:$0xff]
    %v133 = vld [vmem:[#allocation2 + $0x40] sm:$0xff]
    %v134 = vld [vmem:[#allocation2 + $0x48] sm:$0xff]
    %v135 = vld [vmem:[#allocation2 + $0x50] sm:$0xff]
    %v136 = vld [vmem:[#allocation2 + $0x58] sm:$0xff]
    %v137 = vld [vmem:[#allocation2 + $0x60] sm:$0xff]
    %v138 = vld [vmem:[#allocation2 + $0x68] sm:$0xff]
    %v139 = vld [vmem:[#allocation2 + $0x70] sm:$0xff]
    %v140 = vld [vmem:[#allocation2 + $0x78] sm:$0xff]
    %v141 = vld [vmem:[#allocation5] sm:$0xff]
    %v142 = vld [vmem:[#allocation5 + $0x8] sm:$0xff]
    %v143 = vld [vmem:[#allocation5 + $0x10] sm:$0xff]
    %v144 = vld [vmem:[#allocation5 + $0x18] sm:$0xff]
    %v145 = vld [vmem:[#allocation5 + $0x20] sm:$0xff]
    %v146 = vld [vmem:[#allocation5 + $0x28] sm:$0xff]
    %v147 = vld [vmem:[#allocation5 + $0x30] sm:$0xff]
    %v148 = vld [vmem:[#allocation5 + $0x38] sm:$0xff]
    %v149 = vld [vmem:[#allocation5 + $0x40] sm:$0xff]
    %v150 = vld [vmem:[#allocation5 + $0x48] sm:$0xff]
    %v151 = vld [vmem:[#allocation5 + $0x50] sm:$0xff]
    %v152 = vld [vmem:[#allocation5 + $0x58] sm:$0xff]
    %v153 = vld [vmem:[#allocation5 + $0x60] sm:$0xff]
    %v154 = vld [vmem:[#allocation5 + $0x68] sm:$0xff]
    %v155 = vld [vmem:[#allocation5 + $0x70] sm:$0xff]
    %v156 = vld [vmem:[#allocation5 + $0x78] sm:$0xff]
    %v157 = vld [vmem:[#allocation5 + $0x80] sm:$0xff]
    %v158 = vld [vmem:[#allocation5 + $0x88] sm:$0xff]
    %v159 = vld [vmem:[#allocation5 + $0x90] sm:$0xff]
    %v160 = vld [vmem:[#allocation5 + $0x98] sm:$0xff]
    %v161 = vld [vmem:[#allocation5 + $0xa0] sm:$0xff]
    %v162 = vld [vmem:[#allocation5 + $0xa8] sm:$0xff]
    %v163 = vld [vmem:[#allocation5 + $0xb0] sm:$0xff]
    %v164 = vld [vmem:[#allocation5 + $0xb8] sm:$0xff]
    %v165 = vld [vmem:[#allocation5 + $0xc0] sm:$0xff]
    %v166 = vld [vmem:[#allocation5 + $0xc8] sm:$0xff]
    %v167 = vld [vmem:[#allocation5 + $0xd0] sm:$0xff]
    %v168 = vld [vmem:[#allocation5 + $0xd8] sm:$0xff]
    %v169 = vld [vmem:[#allocation5 + $0xe0] sm:$0xff]
    %v170 = vld [vmem:[#allocation5 + $0xe8] sm:$0xff]
    %v171 = vld [vmem:[#allocation5 + $0xf0] sm:$0xff]
    %v172 = vld [vmem:[#allocation5 + $0xf8] sm:$0xff]
    %v173 = vld [vmem:[#allocation5 + $0x100] sm:$0xff]
    %v174 = vld [vmem:[#allocation5 + $0x108] sm:$0xff]
    %v175 = vld [vmem:[#allocation5 + $0x110] sm:$0xff]
    %v176 = vld [vmem:[#allocation5 + $0x118] sm:$0xff]
    %v177 = vld [vmem:[#allocation5 + $0x120] sm:$0xff]
    %v178 = vld [vmem:[#allocation5 + $0x128] sm:$0xff]
    %v179 = vld [vmem:[#allocation5 + $0x130] sm:$0xff]
    %v180 = vld [vmem:[#allocation5 + $0x138] sm:$0xff]
    %v181 = vld [vmem:[#allocation5 + $0x140] sm:$0xff]
    %v182 = vld [vmem:[#allocation5 + $0x148] sm:$0xff]
    %v183 = vld [vmem:[#allocation5 + $0x150] sm:$0xff]
    %v184 = vld [vmem:[#allocation5 + $0x158] sm:$0xff]
    %v185 = vld [vmem:[#allocation5 + $0x160] sm:$0xff]
    %v186 = vld [vmem:[#allocation5 + $0x168] sm:$0xff]
    %v187 = vld [vmem:[#allocation5 + $0x170] sm:$0xff]
    %v188 = vld [vmem:[#allocation5 + $0x178] sm:$0xff]
    %v189 = vld [vmem:[#allocation5 + $0x180] sm:$0xff]
    %v190 = vld [vmem:[#allocation5 + $0x188] sm:$0xff]
    %v191 = vld [vmem:[#allocation5 + $0x190] sm:$0xff]
    %v192 = vld [vmem:[#allocation5 + $0x198] sm:$0xff]
    %v193 = vld [vmem:[#allocation5 + $0x1a0] sm:$0xff]
    %v194 = vld [vmem:[#allocation5 + $0x1a8] sm:$0xff]
    %v195 = vld [vmem:[#allocation5 + $0x1b0] sm:$0xff]
    %v196 = vld [vmem:[#allocation5 + $0x1b8] sm:$0xff]
    %v197 = vld [vmem:[#allocation5 + $0x1c0] sm:$0xff]
    %v198 = vld [vmem:[#allocation5 + $0x1c8] sm:$0xff]
    %v199 = vld [vmem:[#allocation5 + $0x1d0] sm:$0xff]
    %v200 = vld [vmem:[#allocation5 + $0x1d8] sm:$0xff]
    %v201 = vld [vmem:[#allocation5 + $0x1e0] sm:$0xff]
    %v202 = vld [vmem:[#allocation5 + $0x1e8] sm:$0xff]
    %v203 = vld [vmem:[#allocation5 + $0x1f0] sm:$0xff]
    %v204 = vld [vmem:[#allocation5 + $0x1f8] sm:$0xff]
    %v205 = vld [vmem:[#allocation5 + $0x200] sm:$0xff]
    %v206 = vld [vmem:[#allocation5 + $0x208] sm:$0xff]
    %v207 = vld [vmem:[#allocation5 + $0x210] sm:$0xff]
    %v208 = vld [vmem:[#allocation5 + $0x218] sm:$0xff]
    %v209 = vld [vmem:[#allocation5 + $0x220] sm:$0xff]
    %v210 = vld [vmem:[#allocation5 + $0x228] sm:$0xff]
    %v211 = vld [vmem:[#allocation5 + $0x230] sm:$0xff]
    %v212 = vld [vmem:[#allocation5 + $0x238] sm:$0xff]
    %v213 = vld [vmem:[#allocation5 + $0x240] sm:$0xff]
    %v214 = vld [vmem:[#allocation5 + $0x248] sm:$0xff]
    %v215 = vld [vmem:[#allocation5 + $0x250] sm:$0xff]
    %v216 = vld [vmem:[#allocation5 + $0x258] sm:$0xff]
    %v217 = vld [vmem:[#allocation5 + $0x260] sm:$0xff]
    %v218 = vld [vmem:[#allocation5 + $0x268] sm:$0xff]
    %v219 = vld [vmem:[#allocation5 + $0x270] sm:$0xff]
    %v220 = vld [vmem:[#allocation5 + $0x278] sm:$0xff]
    %v221 = vld [vmem:[#allocation5 + $0x280] sm:$0xff]
    %v222 = vld [vmem:[#allocation5 + $0x288] sm:$0xff]
    %v223 = vld [vmem:[#allocation5 + $0x290] sm:$0xff]
    %v224 = vld [vmem:[#allocation5 + $0x298] sm:$0xff]
    %v225 = vld [vmem:[#allocation5 + $0x2a0] sm:$0xff]
    %v226 = vld [vmem:[#allocation5 + $0x2a8] sm:$0xff]
    %v227 = vld [vmem:[#allocation5 + $0x2b0] sm:$0xff]
    %v228 = vld [vmem:[#allocation5 + $0x2b8] sm:$0xff]
    %v229 = vld [vmem:[#allocation5 + $0x2c0] sm:$0xff]
    %v230 = vld [vmem:[#allocation5 + $0x2c8] sm:$0xff]
    %v231 = vld [vmem:[#allocation5 + $0x2d0] sm:$0xff]
    %v232 = vld [vmem:[#allocation5 + $0x2d8] sm:$0xff]
    %v233 = vld [vmem:[#allocation5 + $0x2e0] sm:$0xff]
    %v234 = vld [vmem:[#allocation5 + $0x2e8] sm:$0xff]
    %v235 = vld [vmem:[#allocation5 + $0x2f0] sm:$0xff]
    %v236 = vld [vmem:[#allocation5 + $0x2f8] sm:$0xff]
    %v237 = vld [vmem:[#allocation5 + $0x300] sm:$0xff]
    %v238 = vld [vmem:[#allocation5 + $0x308] sm:$0xff]
    %v239 = vld [vmem:[#allocation5 + $0x310] sm:$0xff]
    %v240 = vld [vmem:[#allocation5 + $0x318] sm:$0xff]
    %v241 = vld [vmem:[#allocation5 + $0x320] sm:$0xff]
    %v242 = vld [vmem:[#allocation5 + $0x328] sm:$0xff]
    %v243 = vld [vmem:[#allocation5 + $0x330] sm:$0xff]
    %v244 = vld [vmem:[#allocation5 + $0x338] sm:$0xff]
    %v245 = vld [vmem:[#allocation5 + $0x340] sm:$0xff]
    %v246 = vld [vmem:[#allocation5 + $0x348] sm:$0xff]
    %v247 = vld [vmem:[#allocation5 + $0x350] sm:$0xff]
    %v248 = vld [vmem:[#allocation5 + $0x358] sm:$0xff]
    %v249 = vld [vmem:[#allocation5 + $0x360] sm:$0xff]
    %v250 = vld [vmem:[#allocation5 + $0x368] sm:$0xff]
    %v251 = vld [vmem:[#allocation5 + $0x370] sm:$0xff]
    %v252 = vld [vmem:[#allocation5 + $0x378] sm:$0xff]
    %v253 = vld [vmem:[#allocation5 + $0x380] sm:$0xff]
    %v254 = vld [vmem:[#allocation5 + $0x388] sm:$0xff]
    %v255 = vld [vmem:[#allocation5 + $0x390] sm:$0xff]
    %v256 = vld [vmem:[#allocation5 + $0x398] sm:$0xff]
    %v257 = vld [vmem:[#allocation5 + $0x3a0] sm:$0xff]
    %v258 = vld [vmem:[#allocation5 + $0x3a8] sm:$0xff]
    %v259 = vld [vmem:[#allocation5 + $0x3b0] sm:$0xff]
    %v260 = vld [vmem:[#allocation5 + $0x3b8] sm:$0xff]
    %v261 = vld [vmem:[#allocation5 + $0x3c0] sm:$0xff]
    %v262 = vld [vmem:[#allocation5 + $0x3c8] sm:$0xff]
    %v263 = vld [vmem:[#allocation5 + $0x3d0] sm:$0xff]
    %v264 = vld [vmem:[#allocation5 + $0x3d8] sm:$0xff]
    %v265 = vld [vmem:[#allocation5 + $0x3e0] sm:$0xff]
    %v266 = vld [vmem:[#allocation5 + $0x3e8] sm:$0xff]
    %v267 = vld [vmem:[#allocation5 + $0x3f0] sm:$0xff]
    %v268 = vld [vmem:[#allocation5 + $0x3f8] sm:$0xff]
    %v269 = vld [vmem:[#allocation5 + $0x400] sm:$0xff]
    %v270 = vld [vmem:[#allocation5 + $0x408] sm:$0xff]
    %v271 = vld [vmem:[#allocation5 + $0x410] sm:$0xff]
    %v272 = vld [vmem:[#allocation5 + $0x418] sm:$0xff]
    %v273 = vld [vmem:[#allocation5 + $0x420] sm:$0xff]
    %v274 = vld [vmem:[#allocation5 + $0x428] sm:$0xff]
    %v275 = vld [vmem:[#allocation5 + $0x430] sm:$0xff]
    %v276 = vld [vmem:[#allocation5 + $0x438] sm:$0xff]
    %v277 = vld [vmem:[#allocation5 + $0x440] sm:$0xff]
    %v278 = vld [vmem:[#allocation5 + $0x448] sm:$0xff]
    %v279 = vld [vmem:[#allocation5 + $0x450] sm:$0xff]
    %v280 = vld [vmem:[#allocation5 + $0x458] sm:$0xff]
    %v281 = vld [vmem:[#allocation5 + $0x460] sm:$0xff]
    %v282 = vld [vmem:[#allocation5 + $0x468] sm:$0xff]
    %v283 = vld [vmem:[#allocation5 + $0x470] sm:$0xff]
    %v284 = vld [vmem:[#allocation5 + $0x478] sm:$0xff]
    %v285 = vld [vmem:[#allocation5 + $0x480] sm:$0xff]
    %v286 = vld [vmem:[#allocation5 + $0x488] sm:$0xff]
    %v287 = vld [vmem:[#allocation5 + $0x490] sm:$0xff]
    %v288 = vld [vmem:[#allocation5 + $0x498] sm:$0xff]
    %v289 = vld [vmem:[#allocation5 + $0x4a0] sm:$0xff]
    %v290 = vld [vmem:[#allocation5 + $0x4a8] sm:$0xff]
    %v291 = vld [vmem:[#allocation5 + $0x4b0] sm:$0xff]
    %v292 = vld [vmem:[#allocation5 + $0x4b8] sm:$0xff]
    %v293 = vld [vmem:[#allocation5 + $0x4c0] sm:$0xff]
    %v294 = vld [vmem:[#allocation5 + $0x4c8] sm:$0xff]
    %v295 = vld [vmem:[#allocation5 + $0x4d0] sm:$0xff]
    %v296 = vld [vmem:[#allocation5 + $0x4d8] sm:$0xff]
    %v297 = vld [vmem:[#allocation5 + $0x4e0] sm:$0xff]
    %v298 = vld [vmem:[#allocation5 + $0x4e8] sm:$0xff]
    %v299 = vld [vmem:[#allocation5 + $0x4f0] sm:$0xff]
    %v300 = vld [vmem:[#allocation5 + $0x4f8] sm:$0xff]
    %v301 = vld [vmem:[#allocation5 + $0x500] sm:$0xff]
    %v302 = vld [vmem:[#allocation5 + $0x508] sm:$0xff]
    %v303 = vld [vmem:[#allocation5 + $0x510] sm:$0xff]
    %v304 = vld [vmem:[#allocation5 + $0x518] sm:$0xff]
    %v305 = vld [vmem:[#allocation5 + $0x520] sm:$0xff]
    %v306 = vld [vmem:[#allocation5 + $0x528] sm:$0xff]
    %v307 = vld [vmem:[#allocation5 + $0x530] sm:$0xff]
    %v308 = vld [vmem:[#allocation5 + $0x538] sm:$0xff]
    %v309 = vld [vmem:[#allocation5 + $0x540] sm:$0xff]
    %v310 = vld [vmem:[#allocation5 + $0x548] sm:$0xff]
    %v311 = vld [vmem:[#allocation5 + $0x550] sm:$0xff]
    %v312 = vld [vmem:[#allocation5 + $0x558] sm:$0xff]
    %v313 = vld [vmem:[#allocation5 + $0x560] sm:$0xff]
    %v314 = vld [vmem:[#allocation5 + $0x568] sm:$0xff]
    %v315 = vld [vmem:[#allocation5 + $0x570] sm:$0xff]
    %v316 = vld [vmem:[#allocation5 + $0x578] sm:$0xff]
    %v317 = vld [vmem:[#allocation5 + $0x580] sm:$0xff]
    %v318 = vld [vmem:[#allocation5 + $0x588] sm:$0xff]
    %v319 = vld [vmem:[#allocation5 + $0x590] sm:$0xff]
    %v320 = vld [vmem:[#allocation5 + $0x598] sm:$0xff]
    %v321 = vld [vmem:[#allocation5 + $0x5a0] sm:$0xff]
    %v322 = vld [vmem:[#allocation5 + $0x5a8] sm:$0xff]
    %v323 = vld [vmem:[#allocation5 + $0x5b0] sm:$0xff]
    %v324 = vld [vmem:[#allocation5 + $0x5b8] sm:$0xff]
    %v325 = vld [vmem:[#allocation5 + $0x5c0] sm:$0xff]
    %v326 = vld [vmem:[#allocation5 + $0x5c8] sm:$0xff]
    %v327 = vld [vmem:[#allocation5 + $0x5d0] sm:$0xff]
    %v328 = vld [vmem:[#allocation5 + $0x5d8] sm:$0xff]
    %v329 = vld [vmem:[#allocation5 + $0x5e0] sm:$0xff]
    %v330 = vld [vmem:[#allocation5 + $0x5e8] sm:$0xff]
    %v331 = vld [vmem:[#allocation5 + $0x5f0] sm:$0xff]
    %v332 = vld [vmem:[#allocation5 + $0x5f8] sm:$0xff]
    %v333 = vld [vmem:[#allocation5 + $0x600] sm:$0xff]
    %v334 = vld [vmem:[#allocation5 + $0x608] sm:$0xff]
    %v335 = vld [vmem:[#allocation5 + $0x610] sm:$0xff]
    %v336 = vld [vmem:[#allocation5 + $0x618] sm:$0xff]
    %v337 = vld [vmem:[#allocation5 + $0x620] sm:$0xff]
    %v338 = vld [vmem:[#allocation5 + $0x628] sm:$0xff]
    %v339 = vld [vmem:[#allocation5 + $0x630] sm:$0xff]
    %v340 = vld [vmem:[#allocation5 + $0x638] sm:$0xff]
    %v341 = vld [vmem:[#allocation5 + $0x640] sm:$0xff]
    %v342 = vld [vmem:[#allocation5 + $0x648] sm:$0xff]
    %v343 = vld [vmem:[#allocation5 + $0x650] sm:$0xff]
    %v344 = vld [vmem:[#allocation5 + $0x658] sm:$0xff]
    %v345 = vld [vmem:[#allocation5 + $0x660] sm:$0xff]
    %v346 = vld [vmem:[#allocation5 + $0x668] sm:$0xff]
    %v347 = vld [vmem:[#allocation5 + $0x670] sm:$0xff]
    %v348 = vld [vmem:[#allocation5 + $0x678] sm:$0xff]
    %v349 = vld [vmem:[#allocation5 + $0x680] sm:$0xff]
    %v350 = vld [vmem:[#allocation5 + $0x688] sm:$0xff]
    %v351 = vld [vmem:[#allocation5 + $0x690] sm:$0xff]
    %v352 = vld [vmem:[#allocation5 + $0x698] sm:$0xff]
    %v353 = vld [vmem:[#allocation5 + $0x6a0] sm:$0xff]
    %v354 = vld [vmem:[#allocation5 + $0x6a8] sm:$0xff]
    %v355 = vld [vmem:[#allocation5 + $0x6b0] sm:$0xff]
    %v356 = vld [vmem:[#allocation5 + $0x6b8] sm:$0xff]
    %v357 = vld [vmem:[#allocation5 + $0x6c0] sm:$0xff]
    %v358 = vld [vmem:[#allocation5 + $0x6c8] sm:$0xff]
    %v359 = vld [vmem:[#allocation5 + $0x6d0] sm:$0xff]
    %v360 = vld [vmem:[#allocation5 + $0x6d8] sm:$0xff]
    %v361 = vld [vmem:[#allocation5 + $0x6e0] sm:$0xff]
    %v362 = vld [vmem:[#allocation5 + $0x6e8] sm:$0xff]
    %v363 = vld [vmem:[#allocation5 + $0x6f0] sm:$0xff]
    %v364 = vld [vmem:[#allocation5 + $0x6f8] sm:$0xff]
    %v365 = vld [vmem:[#allocation5 + $0x700] sm:$0xff]
    %v366 = vld [vmem:[#allocation5 + $0x708] sm:$0xff]
    %v367 = vld [vmem:[#allocation5 + $0x710] sm:$0xff]
    %v368 = vld [vmem:[#allocation5 + $0x718] sm:$0xff]
    %v369 = vld [vmem:[#allocation5 + $0x720] sm:$0xff]
    %v370 = vld [vmem:[#allocation5 + $0x728] sm:$0xff]
    %v371 = vld [vmem:[#allocation5 + $0x730] sm:$0xff]
    %v372 = vld [vmem:[#allocation5 + $0x738] sm:$0xff]
    %v373 = vld [vmem:[#allocation5 + $0x740] sm:$0xff]
    %v374 = vld [vmem:[#allocation5 + $0x748] sm:$0xff]
    %v375 = vld [vmem:[#allocation5 + $0x750] sm:$0xff]
    %v376 = vld [vmem:[#allocation5 + $0x758] sm:$0xff]
    %v377 = vld [vmem:[#allocation5 + $0x760] sm:$0xff]
    %v378 = vld [vmem:[#allocation5 + $0x768] sm:$0xff]
    %v379 = vld [vmem:[#allocation5 + $0x770] sm:$0xff]
    %v380 = vld [vmem:[#allocation5 + $0x778] sm:$0xff]
    %v381 = vld [vmem:[#allocation5 + $0x780] sm:$0xff]
    %v382 = vld [vmem:[#allocation5 + $0x788] sm:$0xff]
    %v383 = vld [vmem:[#allocation5 + $0x790] sm:$0xff]
    %v384 = vld [vmem:[#allocation5 + $0x798] sm:$0xff]
    %v385 = vld [vmem:[#allocation5 + $0x7a0] sm:$0xff]
    %v386 = vld [vmem:[#allocation5 + $0x7a8] sm:$0xff]
    %v387 = vld [vmem:[#allocation5 + $0x7b0] sm:$0xff]
    %v388 = vld [vmem:[#allocation5 + $0x7b8] sm:$0xff]
    %v389 = vld [vmem:[#allocation5 + $0x7c0] sm:$0xff]
    %v390 = vld [vmem:[#allocation5 + $0x7c8] sm:$0xff]
    %v391 = vld [vmem:[#allocation5 + $0x7d0] sm:$0xff]
    %v392 = vld [vmem:[#allocation5 + $0x7d8] sm:$0xff]
    %v393 = vld [vmem:[#allocation5 + $0x7e0] sm:$0xff]
    %v394 = vld [vmem:[#allocation5 + $0x7e8] sm:$0xff]
    %v395 = vld [vmem:[#allocation5 + $0x7f0] sm:$0xff]
    %v396 = vld [vmem:[#allocation5 + $0x7f8] sm:$0xff]
    %v397 = vld [vmem:[#allocation5 + $0x800] sm:$0xff]
    %v398 = vld [vmem:[#allocation5 + $0x808] sm:$0xff]
    %v399 = vld [vmem:[#allocation5 + $0x810] sm:$0xff]
    %v400 = vld [vmem:[#allocation5 + $0x818] sm:$0xff]
    %v401 = vld [vmem:[#allocation5 + $0x820] sm:$0xff]
    %v402 = vld [vmem:[#allocation5 + $0x828] sm:$0xff]
    %v403 = vld [vmem:[#allocation5 + $0x830] sm:$0xff]
    %v404 = vld [vmem:[#allocation5 + $0x838] sm:$0xff]
    %v405 = vld [vmem:[#allocation5 + $0x840] sm:$0xff]
    %v406 = vld [vmem:[#allocation5 + $0x848] sm:$0xff]
    %v407 = vld [vmem:[#allocation5 + $0x850] sm:$0xff]
    %v408 = vld [vmem:[#allocation5 + $0x858] sm:$0xff]
    %v409 = vld [vmem:[#allocation5 + $0x860] sm:$0xff]
    %v410 = vld [vmem:[#allocation5 + $0x868] sm:$0xff]
    %v411 = vld [vmem:[#allocation5 + $0x870] sm:$0xff]
    %v412 = vld [vmem:[#allocation5 + $0x878] sm:$0xff]
    %v413 = vld [vmem:[#allocation5 + $0x880] sm:$0xff]
    %v414 = vld [vmem:[#allocation5 + $0x888] sm:$0xff]
    %v415 = vld [vmem:[#allocation5 + $0x890] sm:$0xff]
    %v416 = vld [vmem:[#allocation5 + $0x898] sm:$0xff]
    %v417 = vld [vmem:[#allocation5 + $0x8a0] sm:$0xff]
    %v418 = vld [vmem:[#allocation5 + $0x8a8] sm:$0xff]
    %v419 = vld [vmem:[#allocation5 + $0x8b0] sm:$0xff]
    %v420 = vld [vmem:[#allocation5 + $0x8b8] sm:$0xff]
    %v421 = vld [vmem:[#allocation5 + $0x8c0] sm:$0xff]
    %v422 = vld [vmem:[#allocation5 + $0x8c8] sm:$0xff]
    %v423 = vld [vmem:[#allocation5 + $0x8d0] sm:$0xff]
    %v424 = vld [vmem:[#allocation5 + $0x8d8] sm:$0xff]
    %v425 = vld [vmem:[#allocation5 + $0x8e0] sm:$0xff]
    %v426 = vld [vmem:[#allocation5 + $0x8e8] sm:$0xff]
    %v427 = vld [vmem:[#allocation5 + $0x8f0] sm:$0xff]
    %v428 = vld [vmem:[#allocation5 + $0x8f8] sm:$0xff]
    %v429 = vld [vmem:[#allocation5 + $0x900] sm:$0xff]
    %v430 = vld [vmem:[#allocation5 + $0x908] sm:$0xff]
    %v431 = vld [vmem:[#allocation5 + $0x910] sm:$0xff]
    %v432 = vld [vmem:[#allocation5 + $0x918] sm:$0xff]
    %v433 = vld [vmem:[#allocation5 + $0x920] sm:$0xff]
    %v434 = vld [vmem:[#allocation5 + $0x928] sm:$0xff]
    %v435 = vld [vmem:[#allocation5 + $0x930] sm:$0xff]
    %v436 = vld [vmem:[#allocation5 + $0x938] sm:$0xff]
    %v437 = vld [vmem:[#allocation5 + $0x940] sm:$0xff]
    %v438 = vld [vmem:[#allocation5 + $0x948] sm:$0xff]
    %v439 = vld [vmem:[#allocation5 + $0x950] sm:$0xff]
    %v440 = vld [vmem:[#allocation5 + $0x958] sm:$0xff]
    %v441 = vld [vmem:[#allocation5 + $0x960] sm:$0xff]
    %v442 = vld [vmem:[#allocation5 + $0x968] sm:$0xff]
    %v443 = vld [vmem:[#allocation5 + $0x970] sm:$0xff]
    %v444 = vld [vmem:[#allocation5 + $0x978] sm:$0xff]
    %v445 = vld [vmem:[#allocation5 + $0x980] sm:$0xff]
    %v446 = vld [vmem:[#allocation5 + $0x988] sm:$0xff]
    %v447 = vld [vmem:[#allocation5 + $0x990] sm:$0xff]
    %v448 = vld [vmem:[#allocation5 + $0x998] sm:$0xff]
    %v449 = vld [vmem:[#allocation5 + $0x9a0] sm:$0xff]
    %v450 = vld [vmem:[#allocation5 + $0x9a8] sm:$0xff]
    %v451 = vld [vmem:[#allocation5 + $0x9b0] sm:$0xff]
    %v452 = vld [vmem:[#allocation5 + $0x9b8] sm:$0xff]
    %v453 = vld [vmem:[#allocation5 + $0x9c0] sm:$0xff]
    %v454 = vld [vmem:[#allocation5 + $0x9c8] sm:$0xff]
    %v455 = vld [vmem:[#allocation5 + $0x9d0] sm:$0xff]
    %v456 = vld [vmem:[#allocation5 + $0x9d8] sm:$0xff]
    %v457 = vld [vmem:[#allocation5 + $0x9e0] sm:$0xff]
    %v458 = vld [vmem:[#allocation5 + $0x9e8] sm:$0xff]
    %v459 = vld [vmem:[#allocation5 + $0x9f0] sm:$0xff]
    %v460 = vld [vmem:[#allocation5 + $0x9f8] sm:$0xff]
    %v461 = vld [vmem:[#allocation5 + $0xa00] sm:$0xff]
    %v462 = vld [vmem:[#allocation5 + $0xa08] sm:$0xff]
    %v463 = vld [vmem:[#allocation5 + $0xa10] sm:$0xff]
    %v464 = vld [vmem:[#allocation5 + $0xa18] sm:$0xff]
    %v465 = vld [vmem:[#allocation5 + $0xa20] sm:$0xff]
    %v466 = vld [vmem:[#allocation5 + $0xa28] sm:$0xff]
    %v467 = vld [vmem:[#allocation5 + $0xa30] sm:$0xff]
    %v468 = vld [vmem:[#allocation5 + $0xa38] sm:$0xff]
    %v469 = vld [vmem:[#allocation5 + $0xa40] sm:$0xff]
    %v470 = vld [vmem:[#allocation5 + $0xa48] sm:$0xff]
    %v471 = vld [vmem:[#allocation5 + $0xa50] sm:$0xff]
    %v472 = vld [vmem:[#allocation5 + $0xa58] sm:$0xff]
    %v473 = vld [vmem:[#allocation5 + $0xa60] sm:$0xff]
    %v474 = vld [vmem:[#allocation5 + $0xa68] sm:$0xff]
    %v475 = vld [vmem:[#allocation5 + $0xa70] sm:$0xff]
    %v476 = vld [vmem:[#allocation5 + $0xa78] sm:$0xff]
    %v477 = vld [vmem:[#allocation5 + $0xa80] sm:$0xff]
    %v478 = vld [vmem:[#allocation5 + $0xa88] sm:$0xff]
    %v479 = vld [vmem:[#allocation5 + $0xa90] sm:$0xff]
    %v480 = vld [vmem:[#allocation5 + $0xa98] sm:$0xff]
    %v481 = vld [vmem:[#allocation5 + $0xaa0] sm:$0xff]
    %v482 = vld [vmem:[#allocation5 + $0xaa8] sm:$0xff]
    %v483 = vld [vmem:[#allocation5 + $0xab0] sm:$0xff]
    %v484 = vld [vmem:[#allocation5 + $0xab8] sm:$0xff]
    %v485 = vld [vmem:[#allocation5 + $0xac0] sm:$0xff]
    %v486 = vld [vmem:[#allocation5 + $0xac8] sm:$0xff]
    %v487 = vld [vmem:[#allocation5 + $0xad0] sm:$0xff]
    %v488 = vld [vmem:[#allocation5 + $0xad8] sm:$0xff]
    %v489 = vld [vmem:[#allocation5 + $0xae0] sm:$0xff]
    %v490 = vld [vmem:[#allocation5 + $0xae8] sm:$0xff]
    %v491 = vld [vmem:[#allocation5 + $0xaf0] sm:$0xff]
    %v492 = vld [vmem:[#allocation5 + $0xaf8] sm:$0xff]
    %v493 = vld [vmem:[#allocation5 + $0xb00] sm:$0xff]
    %v494 = vld [vmem:[#allocation5 + $0xb08] sm:$0xff]
    %v495 = vld [vmem:[#allocation5 + $0xb10] sm:$0xff]
    %v496 = vld [vmem:[#allocation5 + $0xb18] sm:$0xff]
    %v497 = vld [vmem:[#allocation5 + $0xb20] sm:$0xff]
    %v498 = vld [vmem:[#allocation5 + $0xb28] sm:$0xff]
    %v499 = vld [vmem:[#allocation5 + $0xb30] sm:$0xff]
    %v500 = vld [vmem:[#allocation5 + $0xb38] sm:$0xff]
    %v501 = vld [vmem:[#allocation5 + $0xb40] sm:$0xff]
    %v502 = vld [vmem:[#allocation5 + $0xb48] sm:$0xff]
    %v503 = vld [vmem:[#allocation5 + $0xb50] sm:$0xff]
    %v504 = vld [vmem:[#allocation5 + $0xb58] sm:$0xff]
    %v505 = vld [vmem:[#allocation5 + $0xb60] sm:$0xff]
    %v506 = vld [vmem:[#allocation5 + $0xb68] sm:$0xff]
    %v507 = vld [vmem:[#allocation5 + $0xb70] sm:$0xff]
    %v508 = vld [vmem:[#allocation5 + $0xb78] sm:$0xff]
    %v509 = vld [vmem:[#allocation5 + $0xb80] sm:$0xff]
    %v510 = vld [vmem:[#allocation5 + $0xb88] sm:$0xff]
    %v511 = vld [vmem:[#allocation5 + $0xb90] sm:$0xff]
    %v512 = vld [vmem:[#allocation5 + $0xb98] sm:$0xff]
    %v513 = vld [vmem:[#allocation5 + $0xba0] sm:$0xff]
    %v514 = vld [vmem:[#allocation5 + $0xba8] sm:$0xff]
    %v515 = vld [vmem:[#allocation5 + $0xbb0] sm:$0xff]
    %v516 = vld [vmem:[#allocation5 + $0xbb8] sm:$0xff]
    %v517 = vld [vmem:[#allocation5 + $0xbc0] sm:$0xff]
    %v518 = vld [vmem:[#allocation5 + $0xbc8] sm:$0xff]
    %v519 = vld [vmem:[#allocation5 + $0xbd0] sm:$0xff]
    %v520 = vld [vmem:[#allocation5 + $0xbd8] sm:$0xff]
    %v521 = vld [vmem:[#allocation5 + $0xbe0] sm:$0xff]
    %v522 = vld [vmem:[#allocation5 + $0xbe8] sm:$0xff]
    %v523 = vld [vmem:[#allocation5 + $0xbf0] sm:$0xff]
    %v524 = vld [vmem:[#allocation5 + $0xbf8] sm:$0xff]
    %v525 = vld [vmem:[#allocation5 + $0xc00] sm:$0xff]
    %v526 = vld [vmem:[#allocation5 + $0xc08] sm:$0xff]
    %v527 = vld [vmem:[#allocation5 + $0xc10] sm:$0xff]
    %v528 = vld [vmem:[#allocation5 + $0xc18] sm:$0xff]
    %v529 = vld [vmem:[#allocation5 + $0xc20] sm:$0xff]
    %v530 = vld [vmem:[#allocation5 + $0xc28] sm:$0xff]
    %v531 = vld [vmem:[#allocation5 + $0xc30] sm:$0xff]
    %v532 = vld [vmem:[#allocation5 + $0xc38] sm:$0xff]
    %v533 = vld [vmem:[#allocation5 + $0xc40] sm:$0xff]
    %v534 = vld [vmem:[#allocation5 + $0xc48] sm:$0xff]
    %v535 = vld [vmem:[#allocation5 + $0xc50] sm:$0xff]
    %v536 = vld [vmem:[#allocation5 + $0xc58] sm:$0xff]
    %v537 = vld [vmem:[#allocation5 + $0xc60] sm:$0xff]
    %v538 = vld [vmem:[#allocation5 + $0xc68] sm:$0xff]
    %v539 = vld [vmem:[#allocation5 + $0xc70] sm:$0xff]
    %v540 = vld [vmem:[#allocation5 + $0xc78] sm:$0xff]
    %v541 = vld [vmem:[#allocation5 + $0xc80] sm:$0xff]
    %v542 = vld [vmem:[#allocation5 + $0xc88] sm:$0xff]
    %v543 = vld [vmem:[#allocation5 + $0xc90] sm:$0xff]
    %v544 = vld [vmem:[#allocation5 + $0xc98] sm:$0xff]
    %v545 = vld [vmem:[#allocation5 + $0xca0] sm:$0xff]
    %v546 = vld [vmem:[#allocation5 + $0xca8] sm:$0xff]
    %v547 = vld [vmem:[#allocation5 + $0xcb0] sm:$0xff]
    %v548 = vld [vmem:[#allocation5 + $0xcb8] sm:$0xff]
    %v549 = vld [vmem:[#allocation5 + $0xcc0] sm:$0xff]
    %v550 = vld [vmem:[#allocation5 + $0xcc8] sm:$0xff]
    %v551 = vld [vmem:[#allocation5 + $0xcd0] sm:$0xff]
    %v552 = vld [vmem:[#allocation5 + $0xcd8] sm:$0xff]
    %v553 = vld [vmem:[#allocation5 + $0xce0] sm:$0xff]
    %v554 = vld [vmem:[#allocation5 + $0xce8] sm:$0xff]
    %v555 = vld [vmem:[#allocation5 + $0xcf0] sm:$0xff]
    %v556 = vld [vmem:[#allocation5 + $0xcf8] sm:$0xff]
    %v557 = vld [vmem:[#allocation5 + $0xd00] sm:$0xff]
    %v558 = vld [vmem:[#allocation5 + $0xd08] sm:$0xff]
    %v559 = vld [vmem:[#allocation5 + $0xd10] sm:$0xff]
    %v560 = vld [vmem:[#allocation5 + $0xd18] sm:$0xff]
    %v561 = vld [vmem:[#allocation5 + $0xd20] sm:$0xff]
    %v562 = vld [vmem:[#allocation5 + $0xd28] sm:$0xff]
    %v563 = vld [vmem:[#allocation5 + $0xd30] sm:$0xff]
    %v564 = vld [vmem:[#allocation5 + $0xd38] sm:$0xff]
    %v565 = vld [vmem:[#allocation5 + $0xd40] sm:$0xff]
    %v566 = vld [vmem:[#allocation5 + $0xd48] sm:$0xff]
    %v567 = vld [vmem:[#allocation5 + $0xd50] sm:$0xff]
    %v568 = vld [vmem:[#allocation5 + $0xd58] sm:$0xff]
    %v569 = vld [vmem:[#allocation5 + $0xd60] sm:$0xff]
    %v570 = vld [vmem:[#allocation5 + $0xd68] sm:$0xff]
    %v571 = vld [vmem:[#allocation5 + $0xd70] sm:$0xff]
    %v572 = vld [vmem:[#allocation5 + $0xd78] sm:$0xff]
    %v573 = vld [vmem:[#allocation5 + $0xd80] sm:$0xff]
    %v574 = vld [vmem:[#allocation5 + $0xd88] sm:$0xff]
    %v575 = vld [vmem:[#allocation5 + $0xd90] sm:$0xff]
    %v576 = vld [vmem:[#allocation5 + $0xd98] sm:$0xff]
    %v577 = vld [vmem:[#allocation5 + $0xda0] sm:$0xff]
    %v578 = vld [vmem:[#allocation5 + $0xda8] sm:$0xff]
    %v579 = vld [vmem:[#allocation5 + $0xdb0] sm:$0xff]
    %v580 = vld [vmem:[#allocation5 + $0xdb8] sm:$0xff]
    %v581 = vld [vmem:[#allocation5 + $0xdc0] sm:$0xff]
    %v582 = vld [vmem:[#allocation5 + $0xdc8] sm:$0xff]
    %v583 = vld [vmem:[#allocation5 + $0xdd0] sm:$0xff]
    %v584 = vld [vmem:[#allocation5 + $0xdd8] sm:$0xff]
    %v585 = vld [vmem:[#allocation5 + $0xde0] sm:$0xff]
    %v586 = vld [vmem:[#allocation5 + $0xde8] sm:$0xff]
    %v587 = vld [vmem:[#allocation5 + $0xdf0] sm:$0xff]
    %v588 = vld [vmem:[#allocation5 + $0xdf8] sm:$0xff]
    %v589 = vld [vmem:[#allocation5 + $0xe00] sm:$0xff]
    %v590 = vld [vmem:[#allocation5 + $0xe08] sm:$0xff]
    %v591 = vld [vmem:[#allocation5 + $0xe10] sm:$0xff]
    %v592 = vld [vmem:[#allocation5 + $0xe18] sm:$0xff]
    %v593 = vld [vmem:[#allocation5 + $0xe20] sm:$0xff]
    %v594 = vld [vmem:[#allocation5 + $0xe28] sm:$0xff]
    %v595 = vld [vmem:[#allocation5 + $0xe30] sm:$0xff]
    %v596 = vld [vmem:[#allocation5 + $0xe38] sm:$0xff]
    %v597 = vld [vmem:[#allocation5 + $0xe40] sm:$0xff]
    %v598 = vld [vmem:[#allocation5 + $0xe48] sm:$0xff]
    %v599 = vld [vmem:[#allocation5 + $0xe50] sm:$0xff]
    %v600 = vld [vmem:[#allocation5 + $0xe58] sm:$0xff]
    %v601 = vld [vmem:[#allocation5 + $0xe60] sm:$0xff]
    %v602 = vld [vmem:[#allocation5 + $0xe68] sm:$0xff]
    %v603 = vld [vmem:[#allocation5 + $0xe70] sm:$0xff]
    %v604 = vld [vmem:[#allocation5 + $0xe78] sm:$0xff]
    %v605 = vld [vmem:[#allocation5 + $0xe80] sm:$0xff]
    %v606 = vld [vmem:[#allocation5 + $0xe88] sm:$0xff]
    %v607 = vld [vmem:[#allocation5 + $0xe90] sm:$0xff]
    %v608 = vld [vmem:[#allocation5 + $0xe98] sm:$0xff]
    %v609 = vld [vmem:[#allocation5 + $0xea0] sm:$0xff]
    %v610 = vld [vmem:[#allocation5 + $0xea8] sm:$0xff]
    %v611 = vld [vmem:[#allocation5 + $0xeb0] sm:$0xff]
    %v612 = vld [vmem:[#allocation5 + $0xeb8] sm:$0xff]
    %v613 = vld [vmem:[#allocation5 + $0xec0] sm:$0xff]
    %v614 = vld [vmem:[#allocation5 + $0xec8] sm:$0xff]
    %v615 = vld [vmem:[#allocation5 + $0xed0] sm:$0xff]
    %v616 = vld [vmem:[#allocation5 + $0xed8] sm:$0xff]
    %v617 = vld [vmem:[#allocation5 + $0xee0] sm:$0xff]
    %v618 = vld [vmem:[#allocation5 + $0xee8] sm:$0xff]
    %v619 = vld [vmem:[#allocation5 + $0xef0] sm:$0xff]
    %v620 = vld [vmem:[#allocation5 + $0xef8] sm:$0xff]
    %v621 = vld [vmem:[#allocation5 + $0xf00] sm:$0xff]
    %v622 = vld [vmem:[#allocation5 + $0xf08] sm:$0xff]
    %v623 = vld [vmem:[#allocation5 + $0xf10] sm:$0xff]
    %v624 = vld [vmem:[#allocation5 + $0xf18] sm:$0xff]
    %v625 = vld [vmem:[#allocation5 + $0xf20] sm:$0xff]
    %v626 = vld [vmem:[#allocation5 + $0xf28] sm:$0xff]
    %v627 = vld [vmem:[#allocation5 + $0xf30] sm:$0xff]
    %v628 = vld [vmem:[#allocation5 + $0xf38] sm:$0xff]
    %v629 = vld [vmem:[#allocation5 + $0xf40] sm:$0xff]
    %v630 = vld [vmem:[#allocation5 + $0xf48] sm:$0xff]
    %v631 = vld [vmem:[#allocation5 + $0xf50] sm:$0xff]
    %v632 = vld [vmem:[#allocation5 + $0xf58] sm:$0xff]
    %v633 = vld [vmem:[#allocation5 + $0xf60] sm:$0xff]
    %v634 = vld [vmem:[#allocation5 + $0xf68] sm:$0xff]
    %v635 = vld [vmem:[#allocation5 + $0xf70] sm:$0xff]
    %v636 = vld [vmem:[#allocation5 + $0xf78] sm:$0xff]
    %v637 = vld [vmem:[#allocation5 + $0xf80] sm:$0xff]
    %v638 = vld [vmem:[#allocation5 + $0xf88] sm:$0xff]
    %v639 = vld [vmem:[#allocation5 + $0xf90] sm:$0xff]
    %v640 = vld [vmem:[#allocation5 + $0xf98] sm:$0xff]
    %v641 = vld [vmem:[#allocation5 + $0xfa0] sm:$0xff]
    %v642 = vld [vmem:[#allocation5 + $0xfa8] sm:$0xff]
    %v643 = vld [vmem:[#allocation5 + $0xfb0] sm:$0xff]
    %v644 = vld [vmem:[#allocation5 + $0xfb8] sm:$0xff]
    %v645 = vld [vmem:[#allocation5 + $0xfc0] sm:$0xff]
    %v646 = vld [vmem:[#allocation5 + $0xfc8] sm:$0xff]
    %v647 = vld [vmem:[#allocation5 + $0xfd0] sm:$0xff]
    %v648 = vld [vmem:[#allocation5 + $0xfd8] sm:$0xff]
    %v649 = vld [vmem:[#allocation5 + $0xfe0] sm:$0xff]
    %v650 = vld [vmem:[#allocation5 + $0xfe8] sm:$0xff]
    %v651 = vld [vmem:[#allocation5 + $0xff0] sm:$0xff]
    %v652 = vld [vmem:[#allocation5 + $0xff8] sm:$0xff]
    %v653 = vld [vmem:[#allocation5 + $0x1000] sm:$0xff]
    %v654 = vld [vmem:[#allocation5 + $0x1008] sm:$0xff]
    %v655 = vld [vmem:[#allocation5 + $0x1010] sm:$0xff]
    %v656 = vld [vmem:[#allocation5 + $0x1018] sm:$0xff]
    %v657 = vld [vmem:[#allocation5 + $0x1020] sm:$0xff]
    %v658 = vld [vmem:[#allocation5 + $0x1028] sm:$0xff]
    %v659 = vld [vmem:[#allocation5 + $0x1030] sm:$0xff]
    %v660 = vld [vmem:[#allocation5 + $0x1038] sm:$0xff]
    %v661 = vld [vmem:[#allocation5 + $0x1040] sm:$0xff]
    %v662 = vld [vmem:[#allocation5 + $0x1048] sm:$0xff]
    %v663 = vld [vmem:[#allocation5 + $0x1050] sm:$0xff]
    %v664 = vld [vmem:[#allocation5 + $0x1058] sm:$0xff]
    %v665 = vld [vmem:[#allocation5 + $0x1060] sm:$0xff]
    %v666 = vld [vmem:[#allocation5 + $0x1068] sm:$0xff]
    %v667 = vld [vmem:[#allocation5 + $0x1070] sm:$0xff]
    %v668 = vld [vmem:[#allocation5 + $0x1078] sm:$0xff]
    %v669 = vld [vmem:[#allocation5 + $0x1080] sm:$0xff]
    %v670 = vld [vmem:[#allocation5 + $0x1088] sm:$0xff]
    %v671 = vld [vmem:[#allocation5 + $0x1090] sm:$0xff]
    %v672 = vld [vmem:[#allocation5 + $0x1098] sm:$0xff]
    %v673 = vld [vmem:[#allocation5 + $0x10a0] sm:$0xff]
    %v674 = vld [vmem:[#allocation5 + $0x10a8] sm:$0xff]
    %v675 = vld [vmem:[#allocation5 + $0x10b0] sm:$0xff]
    %v676 = vld [vmem:[#allocation5 + $0x10b8] sm:$0xff]
    %v677 = vld [vmem:[#allocation5 + $0x10c0] sm:$0xff]
    %v678 = vld [vmem:[#allocation5 + $0x10c8] sm:$0xff]
    %v679 = vld [vmem:[#allocation5 + $0x10d0] sm:$0xff]
    %v680 = vld [vmem:[#allocation5 + $0x10d8] sm:$0xff]
    %v681 = vld [vmem:[#allocation5 + $0x10e0] sm:$0xff]
    %v682 = vld [vmem:[#allocation5 + $0x10e8] sm:$0xff]
    %v683 = vld [vmem:[#allocation5 + $0x10f0] sm:$0xff]
    %v684 = vld [vmem:[#allocation5 + $0x10f8] sm:$0xff]
    %v685 = vld [vmem:[#allocation5 + $0x1100] sm:$0xff]
    %v686 = vld [vmem:[#allocation5 + $0x1108] sm:$0xff]
    %v687 = vld [vmem:[#allocation5 + $0x1110] sm:$0xff]
    %v688 = vld [vmem:[#allocation5 + $0x1118] sm:$0xff]
    %v689 = vld [vmem:[#allocation5 + $0x1120] sm:$0xff]
    %v690 = vld [vmem:[#allocation5 + $0x1128] sm:$0xff]
    %v691 = vld [vmem:[#allocation5 + $0x1130] sm:$0xff]
    %v692 = vld [vmem:[#allocation5 + $0x1138] sm:$0xff]
    %v693 = vld [vmem:[#allocation5 + $0x1140] sm:$0xff]
    %v694 = vld [vmem:[#allocation5 + $0x1148] sm:$0xff]
    %v695 = vld [vmem:[#allocation5 + $0x1150] sm:$0xff]
    %v696 = vld [vmem:[#allocation5 + $0x1158] sm:$0xff]
    %v697 = vld [vmem:[#allocation5 + $0x1160] sm:$0xff]
    %v698 = vld [vmem:[#allocation5 + $0x1168] sm:$0xff]
    %v699 = vld [vmem:[#allocation5 + $0x1170] sm:$0xff]
    %v700 = vld [vmem:[#allocation5 + $0x1178] sm:$0xff]
    %v701 = vld [vmem:[#allocation5 + $0x1180] sm:$0xff]
    %v702 = vld [vmem:[#allocation5 + $0x1188] sm:$0xff]
    %v703 = vld [vmem:[#allocation5 + $0x1190] sm:$0xff]
    %v704 = vld [vmem:[#allocation5 + $0x1198] sm:$0xff]
    %v705 = vld [vmem:[#allocation5 + $0x11a0] sm:$0xff]
    %v706 = vld [vmem:[#allocation5 + $0x11a8] sm:$0xff]
    %v707 = vld [vmem:[#allocation5 + $0x11b0] sm:$0xff]
    %v708 = vld [vmem:[#allocation5 + $0x11b8] sm:$0xff]
    %v709 = vld [vmem:[#allocation5 + $0x11c0] sm:$0xff]
    %v710 = vld [vmem:[#allocation5 + $0x11c8] sm:$0xff]
    %v711 = vld [vmem:[#allocation5 + $0x11d0] sm:$0xff]
    %v712 = vld [vmem:[#allocation5 + $0x11d8] sm:$0xff]
    %v713 = vld [vmem:[#allocation5 + $0x11e0] sm:$0xff]
    %v714 = vld [vmem:[#allocation5 + $0x11e8] sm:$0xff]
    %v715 = vld [vmem:[#allocation5 + $0x11f0] sm:$0xff]
    %v716 = vld [vmem:[#allocation5 + $0x11f8] sm:$0xff]
    %v717 = vld [vmem:[#allocation5 + $0x1200] sm:$0xff]
    %v718 = vld [vmem:[#allocation5 + $0x1208] sm:$0xff]
    %v719 = vld [vmem:[#allocation5 + $0x1210] sm:$0xff]
    %v720 = vld [vmem:[#allocation5 + $0x1218] sm:$0xff]
    %v721 = vld [vmem:[#allocation5 + $0x1220] sm:$0xff]
    %v722 = vld [vmem:[#allocation5 + $0x1228] sm:$0xff]
    %v723 = vld [vmem:[#allocation5 + $0x1230] sm:$0xff]
    %v724 = vld [vmem:[#allocation5 + $0x1238] sm:$0xff]
    %v725 = vld [vmem:[#allocation5 + $0x1240] sm:$0xff]
    %v726 = vld [vmem:[#allocation5 + $0x1248] sm:$0xff]
    %v727 = vld [vmem:[#allocation5 + $0x1250] sm:$0xff]
    %v728 = vld [vmem:[#allocation5 + $0x1258] sm:$0xff]
    %v729 = vld [vmem:[#allocation5 + $0x1260] sm:$0xff]
    %v730 = vld [vmem:[#allocation5 + $0x1268] sm:$0xff]
    %v731 = vld [vmem:[#allocation5 + $0x1270] sm:$0xff]
    %v732 = vld [vmem:[#allocation5 + $0x1278] sm:$0xff]
    %v733 = vld [vmem:[#allocation5 + $0x1280] sm:$0xff]
    %v734 = vld [vmem:[#allocation5 + $0x1288] sm:$0xff]
    %v735 = vld [vmem:[#allocation5 + $0x1290] sm:$0xff]
    %v736 = vld [vmem:[#allocation5 + $0x1298] sm:$0xff]
    %v737 = vld [vmem:[#allocation5 + $0x12a0] sm:$0xff]
    %v738 = vld [vmem:[#allocation5 + $0x12a8] sm:$0xff]
    %v739 = vld [vmem:[#allocation5 + $0x12b0] sm:$0xff]
    %v740 = vld [vmem:[#allocation5 + $0x12b8] sm:$0xff]
    %v741 = vld [vmem:[#allocation5 + $0x12c0] sm:$0xff]
    %v742 = vld [vmem:[#allocation5 + $0x12c8] sm:$0xff]
    %v743 = vld [vmem:[#allocation5 + $0x12d0] sm:$0xff]
    %v744 = vld [vmem:[#allocation5 + $0x12d8] sm:$0xff]
    %v745 = vld [vmem:[#allocation5 + $0x12e0] sm:$0xff]
    %v746 = vld [vmem:[#allocation5 + $0x12e8] sm:$0xff]
    %v747 = vld [vmem:[#allocation5 + $0x12f0] sm:$0xff]
    %v748 = vld [vmem:[#allocation5 + $0x12f8] sm:$0xff]
    %v749 = vld [vmem:[#allocation5 + $0x1300] sm:$0xff]
    %v750 = vld [vmem:[#allocation5 + $0x1308] sm:$0xff]
    %v751 = vld [vmem:[#allocation5 + $0x1310] sm:$0xff]
    %v752 = vld [vmem:[#allocation5 + $0x1318] sm:$0xff]
    %v753 = vld [vmem:[#allocation5 + $0x1320] sm:$0xff]
    %v754 = vld [vmem:[#allocation5 + $0x1328] sm:$0xff]
    %v755 = vld [vmem:[#allocation5 + $0x1330] sm:$0xff]
    %v756 = vld [vmem:[#allocation5 + $0x1338] sm:$0xff]
    %v757 = vld [vmem:[#allocation5 + $0x1340] sm:$0xff]
    %v758 = vld [vmem:[#allocation5 + $0x1348] sm:$0xff]
    %v759 = vld [vmem:[#allocation5 + $0x1350] sm:$0xff]
    %v760 = vld [vmem:[#allocation5 + $0x1358] sm:$0xff]
    %v761 = vld [vmem:[#allocation5 + $0x1360] sm:$0xff]
    %v762 = vld [vmem:[#allocation5 + $0x1368] sm:$0xff]
    %v763 = vld [vmem:[#allocation5 + $0x1370] sm:$0xff]
    %v764 = vld [vmem:[#allocation5 + $0x1378] sm:$0xff]
    %v765 = vld [vmem:[#allocation5 + $0x1380] sm:$0xff]
    %v766 = vld [vmem:[#allocation5 + $0x1388] sm:$0xff]
    %v767 = vld [vmem:[#allocation5 + $0x1390] sm:$0xff]
    %v768 = vld [vmem:[#allocation5 + $0x1398] sm:$0xff]
    %v769 = vld [vmem:[#allocation5 + $0x13a0] sm:$0xff]
    %v770 = vld [vmem:[#allocation5 + $0x13a8] sm:$0xff]
    %v771 = vld [vmem:[#allocation5 + $0x13b0] sm:$0xff]
    %v772 = vld [vmem:[#allocation5 + $0x13b8] sm:$0xff]
    %v773 = vld [vmem:[#allocation5 + $0x13c0] sm:$0xff]
    %v774 = vld [vmem:[#allocation5 + $0x13c8] sm:$0xff]
    %v775 = vld [vmem:[#allocation5 + $0x13d0] sm:$0xff]
    %v776 = vld [vmem:[#allocation5 + $0x13d8] sm:$0xff]
    %v777 = vld [vmem:[#allocation5 + $0x13e0] sm:$0xff]
    %v778 = vld [vmem:[#allocation5 + $0x13e8] sm:$0xff]
    %v779 = vld [vmem:[#allocation5 + $0x13f0] sm:$0xff]
    %v780 = vld [vmem:[#allocation5 + $0x13f8] sm:$0xff]
    %v781 = vld [vmem:[#allocation5 + $0x1400] sm:$0xff]
    %v782 = vld [vmem:[#allocation5 + $0x1408] sm:$0xff]
    %v783 = vld [vmem:[#allocation5 + $0x1410] sm:$0xff]
    %v784 = vld [vmem:[#allocation5 + $0x1418] sm:$0xff]
    %v785 = vld [vmem:[#allocation5 + $0x1420] sm:$0xff]
    %v786 = vld [vmem:[#allocation5 + $0x1428] sm:$0xff]
    %v787 = vld [vmem:[#allocation5 + $0x1430] sm:$0xff]
    %v788 = vld [vmem:[#allocation5 + $0x1438] sm:$0xff]
    %v789 = vld [vmem:[#allocation5 + $0x1440] sm:$0xff]
    %v790 = vld [vmem:[#allocation5 + $0x1448] sm:$0xff]
    %v791 = vld [vmem:[#allocation5 + $0x1450] sm:$0xff]
    %v792 = vld [vmem:[#allocation5 + $0x1458] sm:$0xff]
    %v793 = vld [vmem:[#allocation5 + $0x1460] sm:$0xff]
    %v794 = vld [vmem:[#allocation5 + $0x1468] sm:$0xff]
    %v795 = vld [vmem:[#allocation5 + $0x1470] sm:$0xff]
    %v796 = vld [vmem:[#allocation5 + $0x1478] sm:$0xff]
    %v797 = vld [vmem:[#allocation5 + $0x1480] sm:$0xff]
    %v798 = vld [vmem:[#allocation5 + $0x1488] sm:$0xff]
    %v799 = vld [vmem:[#allocation5 + $0x1490] sm:$0xff]
    %v800 = vld [vmem:[#allocation5 + $0x1498] sm:$0xff]
    %v801 = vld [vmem:[#allocation5 + $0x14a0] sm:$0xff]
    %v802 = vld [vmem:[#allocation5 + $0x14a8] sm:$0xff]
    %v803 = vld [vmem:[#allocation5 + $0x14b0] sm:$0xff]
    %v804 = vld [vmem:[#allocation5 + $0x14b8] sm:$0xff]
    %v805 = vld [vmem:[#allocation5 + $0x14c0] sm:$0xff]
    %v806 = vld [vmem:[#allocation5 + $0x14c8] sm:$0xff]
    %v807 = vld [vmem:[#allocation5 + $0x14d0] sm:$0xff]
    %v808 = vld [vmem:[#allocation5 + $0x14d8] sm:$0xff]
    %v809 = vld [vmem:[#allocation5 + $0x14e0] sm:$0xff]
    %v810 = vld [vmem:[#allocation5 + $0x14e8] sm:$0xff]
    %v811 = vld [vmem:[#allocation5 + $0x14f0] sm:$0xff]
    %v812 = vld [vmem:[#allocation5 + $0x14f8] sm:$0xff]
    %v813 = vld [vmem:[#allocation5 + $0x1500] sm:$0xff]
    %v814 = vld [vmem:[#allocation5 + $0x1508] sm:$0xff]
    %v815 = vld [vmem:[#allocation5 + $0x1510] sm:$0xff]
    %v816 = vld [vmem:[#allocation5 + $0x1518] sm:$0xff]
    %v817 = vld [vmem:[#allocation5 + $0x1520] sm:$0xff]
    %v818 = vld [vmem:[#allocation5 + $0x1528] sm:$0xff]
    %v819 = vld [vmem:[#allocation5 + $0x1530] sm:$0xff]
    %v820 = vld [vmem:[#allocation5 + $0x1538] sm:$0xff]
    %v821 = vld [vmem:[#allocation5 + $0x1540] sm:$0xff]
    %v822 = vld [vmem:[#allocation5 + $0x1548] sm:$0xff]
    %v823 = vld [vmem:[#allocation5 + $0x1550] sm:$0xff]
    %v824 = vld [vmem:[#allocation5 + $0x1558] sm:$0xff]
    %v825 = vld [vmem:[#allocation5 + $0x1560] sm:$0xff]
    %v826 = vld [vmem:[#allocation5 + $0x1568] sm:$0xff]
    %v827 = vld [vmem:[#allocation5 + $0x1570] sm:$0xff]
    %v828 = vld [vmem:[#allocation5 + $0x1578] sm:$0xff]
    %v829 = vld [vmem:[#allocation5 + $0x1580] sm:$0xff]
    %v830 = vld [vmem:[#allocation5 + $0x1588] sm:$0xff]
    %v831 = vld [vmem:[#allocation5 + $0x1590] sm:$0xff]
    %v832 = vld [vmem:[#allocation5 + $0x1598] sm:$0xff]
    %v833 = vld [vmem:[#allocation5 + $0x15a0] sm:$0xff]
    %v834 = vld [vmem:[#allocation5 + $0x15a8] sm:$0xff]
    %v835 = vld [vmem:[#allocation5 + $0x15b0] sm:$0xff]
    %v836 = vld [vmem:[#allocation5 + $0x15b8] sm:$0xff]
    %v837 = vld [vmem:[#allocation5 + $0x15c0] sm:$0xff]
    %v838 = vld [vmem:[#allocation5 + $0x15c8] sm:$0xff]
    %v839 = vld [vmem:[#allocation5 + $0x15d0] sm:$0xff]
    %v840 = vld [vmem:[#allocation5 + $0x15d8] sm:$0xff]
    %v841 = vld [vmem:[#allocation5 + $0x15e0] sm:$0xff]
    %v842 = vld [vmem:[#allocation5 + $0x15e8] sm:$0xff]
    %v843 = vld [vmem:[#allocation5 + $0x15f0] sm:$0xff]
    %v844 = vld [vmem:[#allocation5 + $0x15f8] sm:$0xff]
    %v845 = vld [vmem:[#allocation5 + $0x1600] sm:$0xff]
    %v846 = vld [vmem:[#allocation5 + $0x1608] sm:$0xff]
    %v847 = vld [vmem:[#allocation5 + $0x1610] sm:$0xff]
    %v848 = vld [vmem:[#allocation5 + $0x1618] sm:$0xff]
    %v849 = vld [vmem:[#allocation5 + $0x1620] sm:$0xff]
    %v850 = vld [vmem:[#allocation5 + $0x1628] sm:$0xff]
    %v851 = vld [vmem:[#allocation5 + $0x1630] sm:$0xff]
    %v852 = vld [vmem:[#allocation5 + $0x1638] sm:$0xff]
    %v853 = vld [vmem:[#allocation5 + $0x1640] sm:$0xff]
    %v854 = vld [vmem:[#allocation5 + $0x1648] sm:$0xff]
    %v855 = vld [vmem:[#allocation5 + $0x1650] sm:$0xff]
    %v856 = vld [vmem:[#allocation5 + $0x1658] sm:$0xff]
    %v857 = vld [vmem:[#allocation5 + $0x1660] sm:$0xff]
    %v858 = vld [vmem:[#allocation5 + $0x1668] sm:$0xff]
    %v859 = vld [vmem:[#allocation5 + $0x1670] sm:$0xff]
    %v860 = vld [vmem:[#allocation5 + $0x1678] sm:$0xff]
    %v861 = vld [vmem:[#allocation5 + $0x1680] sm:$0xff]
    %v862 = vld [vmem:[#allocation5 + $0x1688] sm:$0xff]
    %v863 = vld [vmem:[#allocation5 + $0x1690] sm:$0xff]
    %v864 = vld [vmem:[#allocation5 + $0x1698] sm:$0xff]
    %v865 = vld [vmem:[#allocation5 + $0x16a0] sm:$0xff]
    %v866 = vld [vmem:[#allocation5 + $0x16a8] sm:$0xff]
    %v867 = vld [vmem:[#allocation5 + $0x16b0] sm:$0xff]
    %v868 = vld [vmem:[#allocation5 + $0x16b8] sm:$0xff]
    %v869 = vld [vmem:[#allocation5 + $0x16c0] sm:$0xff]
    %v870 = vld [vmem:[#allocation5 + $0x16c8] sm:$0xff]
    %v871 = vld [vmem:[#allocation5 + $0x16d0] sm:$0xff]
    %v872 = vld [vmem:[#allocation5 + $0x16d8] sm:$0xff]
    %v873 = vld [vmem:[#allocation5 + $0x16e0] sm:$0xff]
    %v874 = vld [vmem:[#allocation5 + $0x16e8] sm:$0xff]
    %v875 = vld [vmem:[#allocation5 + $0x16f0] sm:$0xff]
    %v876 = vld [vmem:[#allocation5 + $0x16f8] sm:$0xff]
    %v877 = vld [vmem:[#allocation5 + $0x1700] sm:$0xff]
    %v878 = vld [vmem:[#allocation5 + $0x1708] sm:$0xff]
    %v879 = vld [vmem:[#allocation5 + $0x1710] sm:$0xff]
    %v880 = vld [vmem:[#allocation5 + $0x1718] sm:$0xff]
    %v881 = vld [vmem:[#allocation5 + $0x1720] sm:$0xff]
    %v882 = vld [vmem:[#allocation5 + $0x1728] sm:$0xff]
    %v883 = vld [vmem:[#allocation5 + $0x1730] sm:$0xff]
    %v884 = vld [vmem:[#allocation5 + $0x1738] sm:$0xff]
    %v885 = vld [vmem:[#allocation5 + $0x1740] sm:$0xff]
    %v886 = vld [vmem:[#allocation5 + $0x1748] sm:$0xff]
    %v887 = vld [vmem:[#allocation5 + $0x1750] sm:$0xff]
    %v888 = vld [vmem:[#allocation5 + $0x1758] sm:$0xff]
    %v889 = vld [vmem:[#allocation5 + $0x1760] sm:$0xff]
    %v890 = vld [vmem:[#allocation5 + $0x1768] sm:$0xff]
    %v891 = vld [vmem:[#allocation5 + $0x1770] sm:$0xff]
    %v892 = vld [vmem:[#allocation5 + $0x1778] sm:$0xff]
    %v893 = vld [vmem:[#allocation5 + $0x1780] sm:$0xff]
    %v894 = vld [vmem:[#allocation5 + $0x1788] sm:$0xff]
    %v895 = vld [vmem:[#allocation5 + $0x1790] sm:$0xff]
    %v896 = vld [vmem:[#allocation5 + $0x1798] sm:$0xff]
    %v897 = vld [vmem:[#allocation5 + $0x17a0] sm:$0xff]
    %v898 = vld [vmem:[#allocation5 + $0x17a8] sm:$0xff]
    %v899 = vld [vmem:[#allocation5 + $0x17b0] sm:$0xff]
    %v900 = vld [vmem:[#allocation5 + $0x17b8] sm:$0xff]
    %v901 = vld [vmem:[#allocation5 + $0x17c0] sm:$0xff]
    %v902 = vld [vmem:[#allocation5 + $0x17c8] sm:$0xff]
    %v903 = vld [vmem:[#allocation5 + $0x17d0] sm:$0xff]
    %v904 = vld [vmem:[#allocation5 + $0x17d8] sm:$0xff]
    %v905 = vld [vmem:[#allocation5 + $0x17e0] sm:$0xff]
    %v906 = vld [vmem:[#allocation5 + $0x17e8] sm:$0xff]
    %v907 = vld [vmem:[#allocation5 + $0x17f0] sm:$0xff]
    %v908 = vld [vmem:[#allocation5 + $0x17f8] sm:$0xff]
    %v909 = vld [vmem:[#allocation5 + $0x1800] sm:$0xff]
    %v910 = vld [vmem:[#allocation5 + $0x1808] sm:$0xff]
    %v911 = vld [vmem:[#allocation5 + $0x1810] sm:$0xff]
    %v912 = vld [vmem:[#allocation5 + $0x1818] sm:$0xff]
    %v913 = vld [vmem:[#allocation5 + $0x1820] sm:$0xff]
    %v914 = vld [vmem:[#allocation5 + $0x1828] sm:$0xff]
    %v915 = vld [vmem:[#allocation5 + $0x1830] sm:$0xff]
    %v916 = vld [vmem:[#allocation5 + $0x1838] sm:$0xff]
    %v917 = vld [vmem:[#allocation5 + $0x1840] sm:$0xff]
    %v918 = vld [vmem:[#allocation5 + $0x1848] sm:$0xff]
    %v919 = vld [vmem:[#allocation5 + $0x1850] sm:$0xff]
    %v920 = vld [vmem:[#allocation5 + $0x1858] sm:$0xff]
    %v921 = vld [vmem:[#allocation5 + $0x1860] sm:$0xff]
    %v922 = vld [vmem:[#allocation5 + $0x1868] sm:$0xff]
    %v923 = vld [vmem:[#allocation5 + $0x1870] sm:$0xff]
    %v924 = vld [vmem:[#allocation5 + $0x1878] sm:$0xff]
    %v925 = vld [vmem:[#allocation5 + $0x1880] sm:$0xff]
    %v926 = vld [vmem:[#allocation5 + $0x1888] sm:$0xff]
    %v927 = vld [vmem:[#allocation5 + $0x1890] sm:$0xff]
    %v928 = vld [vmem:[#allocation5 + $0x1898] sm:$0xff]
    %v929 = vld [vmem:[#allocation5 + $0x18a0] sm:$0xff]
    %v930 = vld [vmem:[#allocation5 + $0x18a8] sm:$0xff]
    %v931 = vld [vmem:[#allocation5 + $0x18b0] sm:$0xff]
    %v932 = vld [vmem:[#allocation5 + $0x18b8] sm:$0xff]
    %v933 = vld [vmem:[#allocation5 + $0x18c0] sm:$0xff]
    %v934 = vld [vmem:[#allocation5 + $0x18c8] sm:$0xff]
    %v935 = vld [vmem:[#allocation5 + $0x18d0] sm:$0xff]
    %v936 = vld [vmem:[#allocation5 + $0x18d8] sm:$0xff]
    %v937 = vld [vmem:[#allocation5 + $0x18e0] sm:$0xff]
    %v938 = vld [vmem:[#allocation5 + $0x18e8] sm:$0xff]
    %v939 = vld [vmem:[#allocation5 + $0x18f0] sm:$0xff]
    %v940 = vld [vmem:[#allocation5 + $0x18f8] sm:$0xff]
    %v941 = vld [vmem:[#allocation5 + $0x1900] sm:$0xff]
    %v942 = vld [vmem:[#allocation5 + $0x1908] sm:$0xff]
    %v943 = vld [vmem:[#allocation5 + $0x1910] sm:$0xff]
    %v944 = vld [vmem:[#allocation5 + $0x1918] sm:$0xff]
    %v945 = vld [vmem:[#allocation5 + $0x1920] sm:$0xff]
    %v946 = vld [vmem:[#allocation5 + $0x1928] sm:$0xff]
    %v947 = vld [vmem:[#allocation5 + $0x1930] sm:$0xff]
    %v948 = vld [vmem:[#allocation5 + $0x1938] sm:$0xff]
    %v949 = vld [vmem:[#allocation5 + $0x1940] sm:$0xff]
    %v950 = vld [vmem:[#allocation5 + $0x1948] sm:$0xff]
    %v951 = vld [vmem:[#allocation5 + $0x1950] sm:$0xff]
    %v952 = vld [vmem:[#allocation5 + $0x1958] sm:$0xff]
    %v953 = vld [vmem:[#allocation5 + $0x1960] sm:$0xff]
    %v954 = vld [vmem:[#allocation5 + $0x1968] sm:$0xff]
    %v955 = vld [vmem:[#allocation5 + $0x1970] sm:$0xff]
    %v956 = vld [vmem:[#allocation5 + $0x1978] sm:$0xff]
    %v957 = vld [vmem:[#allocation5 + $0x1980] sm:$0xff]
    %v958 = vld [vmem:[#allocation5 + $0x1988] sm:$0xff]
    %v959 = vld [vmem:[#allocation5 + $0x1990] sm:$0xff]
    %v960 = vld [vmem:[#allocation5 + $0x1998] sm:$0xff]
    %v961 = vld [vmem:[#allocation5 + $0x19a0] sm:$0xff]
    %v962 = vld [vmem:[#allocation5 + $0x19a8] sm:$0xff]
    %v963 = vld [vmem:[#allocation5 + $0x19b0] sm:$0xff]
    %v964 = vld [vmem:[#allocation5 + $0x19b8] sm:$0xff]
    %v965 = vld [vmem:[#allocation5 + $0x19c0] sm:$0xff]
    %v966 = vld [vmem:[#allocation5 + $0x19c8] sm:$0xff]
    %v967 = vld [vmem:[#allocation5 + $0x19d0] sm:$0xff]
    %v968 = vld [vmem:[#allocation5 + $0x19d8] sm:$0xff]
    %v969 = vld [vmem:[#allocation5 + $0x19e0] sm:$0xff]
    %v970 = vld [vmem:[#allocation5 + $0x19e8] sm:$0xff]
    %v971 = vld [vmem:[#allocation5 + $0x19f0] sm:$0xff]
    %v972 = vld [vmem:[#allocation5 + $0x19f8] sm:$0xff]
    %v973 = vld [vmem:[#allocation5 + $0x1a00] sm:$0xff]
    %v974 = vld [vmem:[#allocation5 + $0x1a08] sm:$0xff]
    %v975 = vld [vmem:[#allocation5 + $0x1a10] sm:$0xff]
    %v976 = vld [vmem:[#allocation5 + $0x1a18] sm:$0xff]
    %v977 = vld [vmem:[#allocation5 + $0x1a20] sm:$0xff]
    %v978 = vld [vmem:[#allocation5 + $0x1a28] sm:$0xff]
    %v979 = vld [vmem:[#allocation5 + $0x1a30] sm:$0xff]
    %v980 = vld [vmem:[#allocation5 + $0x1a38] sm:$0xff]
    %v981 = vld [vmem:[#allocation5 + $0x1a40] sm:$0xff]
    %v982 = vld [vmem:[#allocation5 + $0x1a48] sm:$0xff]
    %v983 = vld [vmem:[#allocation5 + $0x1a50] sm:$0xff]
    %v984 = vld [vmem:[#allocation5 + $0x1a58] sm:$0xff]
    %v985 = vld [vmem:[#allocation5 + $0x1a60] sm:$0xff]
    %v986 = vld [vmem:[#allocation5 + $0x1a68] sm:$0xff]
    %v987 = vld [vmem:[#allocation5 + $0x1a70] sm:$0xff]
    %v988 = vld [vmem:[#allocation5 + $0x1a78] sm:$0xff]
    %v989 = vld [vmem:[#allocation5 + $0x1a80] sm:$0xff]
    %v990 = vld [vmem:[#allocation5 + $0x1a88] sm:$0xff]
    %v991 = vld [vmem:[#allocation5 + $0x1a90] sm:$0xff]
    %v992 = vld [vmem:[#allocation5 + $0x1a98] sm:$0xff]
    %v993 = vld [vmem:[#allocation5 + $0x1aa0] sm:$0xff]
    %v994 = vld [vmem:[#allocation5 + $0x1aa8] sm:$0xff]
    %v995 = vld [vmem:[#allocation5 + $0x1ab0] sm:$0xff]
    %v996 = vld [vmem:[#allocation5 + $0x1ab8] sm:$0xff]
    %v997 = vld [vmem:[#allocation5 + $0x1ac0] sm:$0xff]
    %v998 = vld [vmem:[#allocation5 + $0x1ac8] sm:$0xff]
    %v999 = vld [vmem:[#allocation5 + $0x1ad0] sm:$0xff]
    %v1000 = vld [vmem:[#allocation5 + $0x1ad8] sm:$0xff]
    %v1001 = vld [vmem:[#allocation5 + $0x1ae0] sm:$0xff]
    %v1002 = vld [vmem:[#allocation5 + $0x1ae8] sm:$0xff]
    %v1003 = vld [vmem:[#allocation5 + $0x1af0] sm:$0xff]
    %v1004 = vld [vmem:[#allocation5 + $0x1af8] sm:$0xff]
    %v1005 = vld [vmem:[#allocation5 + $0x1b00] sm:$0xff]
    %v1006 = vld [vmem:[#allocation5 + $0x1b08] sm:$0xff]
    %v1007 = vld [vmem:[#allocation5 + $0x1b10] sm:$0xff]
    %v1008 = vld [vmem:[#allocation5 + $0x1b18] sm:$0xff]
    %v1009 = vld [vmem:[#allocation5 + $0x1b20] sm:$0xff]
    %v1010 = vld [vmem:[#allocation5 + $0x1b28] sm:$0xff]
    %v1011 = vld [vmem:[#allocation5 + $0x1b30] sm:$0xff]
    %v1012 = vld [vmem:[#allocation5 + $0x1b38] sm:$0xff]
    %v1013 = vld [vmem:[#allocation5 + $0x1b40] sm:$0xff]
    %v1014 = vld [vmem:[#allocation5 + $0x1b48] sm:$0xff]
    %v1015 = vld [vmem:[#allocation5 + $0x1b50] sm:$0xff]
    %v1016 = vld [vmem:[#allocation5 + $0x1b58] sm:$0xff]
    %v1017 = vld [vmem:[#allocation5 + $0x1b60] sm:$0xff]
    %v1018 = vld [vmem:[#allocation5 + $0x1b68] sm:$0xff]
    %v1019 = vld [vmem:[#allocation5 + $0x1b70] sm:$0xff]
    %v1020 = vld [vmem:[#allocation5 + $0x1b78] sm:$0xff]
    %v1021 = vld [vmem:[#allocation5 + $0x1b80] sm:$0xff]
    %v1022 = vld [vmem:[#allocation5 + $0x1b88] sm:$0xff]
    %v1023 = vld [vmem:[#allocation5 + $0x1b90] sm:$0xff]
    %v1024 = vld [vmem:[#allocation5 + $0x1b98] sm:$0xff]
    %v1025 = vld [vmem:[#allocation5 + $0x1ba0] sm:$0xff]
    %v1026 = vld [vmem:[#allocation5 + $0x1ba8] sm:$0xff]
    %v1027 = vld [vmem:[#allocation5 + $0x1bb0] sm:$0xff]
    %v1028 = vld [vmem:[#allocation5 + $0x1bb8] sm:$0xff]
    %v1029 = vld [vmem:[#allocation5 + $0x1bc0] sm:$0xff]
    %v1030 = vld [vmem:[#allocation5 + $0x1bc8] sm:$0xff]
    %v1031 = vld [vmem:[#allocation5 + $0x1bd0] sm:$0xff]
    %v1032 = vld [vmem:[#allocation5 + $0x1bd8] sm:$0xff]
    %v1033 = vld [vmem:[#allocation5 + $0x1be0] sm:$0xff]
    %v1034 = vld [vmem:[#allocation5 + $0x1be8] sm:$0xff]
    %v1035 = vld [vmem:[#allocation5 + $0x1bf0] sm:$0xff]
    %v1036 = vld [vmem:[#allocation5 + $0x1bf8] sm:$0xff]
    %v1037 = vld [vmem:[#allocation5 + $0x1c00] sm:$0xff]
    %v1038 = vld [vmem:[#allocation5 + $0x1c08] sm:$0xff]
    %v1039 = vld [vmem:[#allocation5 + $0x1c10] sm:$0xff]
    %v1040 = vld [vmem:[#allocation5 + $0x1c18] sm:$0xff]
    %v1041 = vld [vmem:[#allocation5 + $0x1c20] sm:$0xff]
    %v1042 = vld [vmem:[#allocation5 + $0x1c28] sm:$0xff]
    %v1043 = vld [vmem:[#allocation5 + $0x1c30] sm:$0xff]
    %v1044 = vld [vmem:[#allocation5 + $0x1c38] sm:$0xff]
    %v1045 = vld [vmem:[#allocation5 + $0x1c40] sm:$0xff]
    %v1046 = vld [vmem:[#allocation5 + $0x1c48] sm:$0xff]
    %v1047 = vld [vmem:[#allocation5 + $0x1c50] sm:$0xff]
    %v1048 = vld [vmem:[#allocation5 + $0x1c58] sm:$0xff]
    %v1049 = vld [vmem:[#allocation5 + $0x1c60] sm:$0xff]
    %v1050 = vld [vmem:[#allocation5 + $0x1c68] sm:$0xff]
    %v1051 = vld [vmem:[#allocation5 + $0x1c70] sm:$0xff]
    %v1052 = vld [vmem:[#allocation5 + $0x1c78] sm:$0xff]
    %v1053 = vld [vmem:[#allocation5 + $0x1c80] sm:$0xff]
    %v1054 = vld [vmem:[#allocation5 + $0x1c88] sm:$0xff]
    %v1055 = vld [vmem:[#allocation5 + $0x1c90] sm:$0xff]
    %v1056 = vld [vmem:[#allocation5 + $0x1c98] sm:$0xff]
    %v1057 = vld [vmem:[#allocation5 + $0x1ca0] sm:$0xff]
    %v1058 = vld [vmem:[#allocation5 + $0x1ca8] sm:$0xff]
    %v1059 = vld [vmem:[#allocation5 + $0x1cb0] sm:$0xff]
    %v1060 = vld [vmem:[#allocation5 + $0x1cb8] sm:$0xff]
    %v1061 = vld [vmem:[#allocation5 + $0x1cc0] sm:$0xff]
    %v1062 = vld [vmem:[#allocation5 + $0x1cc8] sm:$0xff]
    %v1063 = vld [vmem:[#allocation5 + $0x1cd0] sm:$0xff]
    %v1064 = vld [vmem:[#allocation5 + $0x1cd8] sm:$0xff]
    %v1065 = vld [vmem:[#allocation5 + $0x1ce0] sm:$0xff]
    %v1066 = vld [vmem:[#allocation5 + $0x1ce8] sm:$0xff]
    %v1067 = vld [vmem:[#allocation5 + $0x1cf0] sm:$0xff]
    %v1068 = vld [vmem:[#allocation5 + $0x1cf8] sm:$0xff]
    %v1069 = vld [vmem:[#allocation5 + $0x1d00] sm:$0xff]
    %v1070 = vld [vmem:[#allocation5 + $0x1d08] sm:$0xff]
    %v1071 = vld [vmem:[#allocation5 + $0x1d10] sm:$0xff]
    %v1072 = vld [vmem:[#allocation5 + $0x1d18] sm:$0xff]
    %v1073 = vld [vmem:[#allocation5 + $0x1d20] sm:$0xff]
    %v1074 = vld [vmem:[#allocation5 + $0x1d28] sm:$0xff]
    %v1075 = vld [vmem:[#allocation5 + $0x1d30] sm:$0xff]
    %v1076 = vld [vmem:[#allocation5 + $0x1d38] sm:$0xff]
    %v1077 = vld [vmem:[#allocation5 + $0x1d40] sm:$0xff]
    %v1078 = vld [vmem:[#allocation5 + $0x1d48] sm:$0xff]
    %v1079 = vld [vmem:[#allocation5 + $0x1d50] sm:$0xff]
    %v1080 = vld [vmem:[#allocation5 + $0x1d58] sm:$0xff]
    %v1081 = vld [vmem:[#allocation5 + $0x1d60] sm:$0xff]
    %v1082 = vld [vmem:[#allocation5 + $0x1d68] sm:$0xff]
    %v1083 = vld [vmem:[#allocation5 + $0x1d70] sm:$0xff]
    %v1084 = vld [vmem:[#allocation5 + $0x1d78] sm:$0xff]
    %v1085 = vld [vmem:[#allocation5 + $0x1d80] sm:$0xff]
    %v1086 = vld [vmem:[#allocation5 + $0x1d88] sm:$0xff]
    %v1087 = vld [vmem:[#allocation5 + $0x1d90] sm:$0xff]
    %v1088 = vld [vmem:[#allocation5 + $0x1d98] sm:$0xff]
    %v1089 = vld [vmem:[#allocation5 + $0x1da0] sm:$0xff]
    %v1090 = vld [vmem:[#allocation5 + $0x1da8] sm:$0xff]
    %v1091 = vld [vmem:[#allocation5 + $0x1db0] sm:$0xff]
    %v1092 = vld [vmem:[#allocation5 + $0x1db8] sm:$0xff]
    %v1093 = vld [vmem:[#allocation5 + $0x1dc0] sm:$0xff]
    %v1094 = vld [vmem:[#allocation5 + $0x1dc8] sm:$0xff]
    %v1095 = vld [vmem:[#allocation5 + $0x1dd0] sm:$0xff]
    %v1096 = vld [vmem:[#allocation5 + $0x1dd8] sm:$0xff]
    %v1097 = vld [vmem:[#allocation5 + $0x1de0] sm:$0xff]
    %v1098 = vld [vmem:[#allocation5 + $0x1de8] sm:$0xff]
    %v1099 = vld [vmem:[#allocation5 + $0x1df0] sm:$0xff]
    %v1100 = vld [vmem:[#allocation5 + $0x1df8] sm:$0xff]
    %v1101 = vld [vmem:[#allocation5 + $0x1e00] sm:$0xff]
    %v1102 = vld [vmem:[#allocation5 + $0x1e08] sm:$0xff]
    %v1103 = vld [vmem:[#allocation5 + $0x1e10] sm:$0xff]
    %v1104 = vld [vmem:[#allocation5 + $0x1e18] sm:$0xff]
    %v1105 = vld [vmem:[#allocation5 + $0x1e20] sm:$0xff]
    %v1106 = vld [vmem:[#allocation5 + $0x1e28] sm:$0xff]
    %v1107 = vld [vmem:[#allocation5 + $0x1e30] sm:$0xff]
    %v1108 = vld [vmem:[#allocation5 + $0x1e38] sm:$0xff]
    %v1109 = vld [vmem:[#allocation5 + $0x1e40] sm:$0xff]
    %v1110 = vld [vmem:[#allocation5 + $0x1e48] sm:$0xff]
    %v1111 = vld [vmem:[#allocation5 + $0x1e50] sm:$0xff]
    %v1112 = vld [vmem:[#allocation5 + $0x1e58] sm:$0xff]
    %v1113 = vld [vmem:[#allocation5 + $0x1e60] sm:$0xff]
    %v1114 = vld [vmem:[#allocation5 + $0x1e68] sm:$0xff]
    %v1115 = vld [vmem:[#allocation5 + $0x1e70] sm:$0xff]
    %v1116 = vld [vmem:[#allocation5 + $0x1e78] sm:$0xff]
    %v1117 = vld [vmem:[#allocation5 + $0x1e80] sm:$0xff]
    %v1118 = vld [vmem:[#allocation5 + $0x1e88] sm:$0xff]
    %v1119 = vld [vmem:[#allocation5 + $0x1e90] sm:$0xff]
    %v1120 = vld [vmem:[#allocation5 + $0x1e98] sm:$0xff]
    %v1121 = vld [vmem:[#allocation5 + $0x1ea0] sm:$0xff]
    %v1122 = vld [vmem:[#allocation5 + $0x1ea8] sm:$0xff]
    %v1123 = vld [vmem:[#allocation5 + $0x1eb0] sm:$0xff]
    %v1124 = vld [vmem:[#allocation5 + $0x1eb8] sm:$0xff]
    %v1125 = vld [vmem:[#allocation5 + $0x1ec0] sm:$0xff]
    %v1126 = vld [vmem:[#allocation5 + $0x1ec8] sm:$0xff]
    %v1127 = vld [vmem:[#allocation5 + $0x1ed0] sm:$0xff]
    %v1128 = vld [vmem:[#allocation5 + $0x1ed8] sm:$0xff]
    %v1129 = vld [vmem:[#allocation5 + $0x1ee0] sm:$0xff]
    %v1130 = vld [vmem:[#allocation5 + $0x1ee8] sm:$0xff]
    %v1131 = vld [vmem:[#allocation5 + $0x1ef0] sm:$0xff]
    %v1132 = vld [vmem:[#allocation5 + $0x1ef8] sm:$0xff]
    %v1133 = vld [vmem:[#allocation5 + $0x1f00] sm:$0xff]
    %v1134 = vld [vmem:[#allocation5 + $0x1f08] sm:$0xff]
    %v1135 = vld [vmem:[#allocation5 + $0x1f10] sm:$0xff]
    %v1136 = vld [vmem:[#allocation5 + $0x1f18] sm:$0xff]
    %v1137 = vld [vmem:[#allocation5 + $0x1f20] sm:$0xff]
    %v1138 = vld [vmem:[#allocation5 + $0x1f28] sm:$0xff]
    %v1139 = vld [vmem:[#allocation5 + $0x1f30] sm:$0xff]
    %v1140 = vld [vmem:[#allocation5 + $0x1f38] sm:$0xff]
    %v1141 = vld [vmem:[#allocation5 + $0x1f40] sm:$0xff]
    %v1142 = vld [vmem:[#allocation5 + $0x1f48] sm:$0xff]
    %v1143 = vld [vmem:[#allocation5 + $0x1f50] sm:$0xff]
    %v1144 = vld [vmem:[#allocation5 + $0x1f58] sm:$0xff]
    %v1145 = vld [vmem:[#allocation5 + $0x1f60] sm:$0xff]
    %v1146 = vld [vmem:[#allocation5 + $0x1f68] sm:$0xff]
    %v1147 = vld [vmem:[#allocation5 + $0x1f70] sm:$0xff]
    %v1148 = vld [vmem:[#allocation5 + $0x1f78] sm:$0xff]
    %v1149 = vld [vmem:[#allocation5 + $0x1f80] sm:$0xff]
    %v1150 = vld [vmem:[#allocation5 + $0x1f88] sm:$0xff]
    %v1151 = vld [vmem:[#allocation5 + $0x1f90] sm:$0xff]
    %v1152 = vld [vmem:[#allocation5 + $0x1f98] sm:$0xff]
    %v1153 = vld [vmem:[#allocation5 + $0x1fa0] sm:$0xff]
    %v1154 = vld [vmem:[#allocation5 + $0x1fa8] sm:$0xff]
    %v1155 = vld [vmem:[#allocation5 + $0x1fb0] sm:$0xff]
    %v1156 = vld [vmem:[#allocation5 + $0x1fb8] sm:$0xff]
    %v1157 = vld [vmem:[#allocation5 + $0x1fc0] sm:$0xff]
    %v1158 = vld [vmem:[#allocation5 + $0x1fc8] sm:$0xff]
    %v1159 = vld [vmem:[#allocation5 + $0x1fd0] sm:$0xff]
    %v1160 = vld [vmem:[#allocation5 + $0x1fd8] sm:$0xff]
    %v1161 = vld [vmem:[#allocation5 + $0x1fe0] sm:$0xff]
    %v1162 = vld [vmem:[#allocation5 + $0x1fe8] sm:$0xff]
    %v1163 = vld [vmem:[#allocation5 + $0x1ff0] sm:$0xff]
    %v1164 = vld [vmem:[#allocation5 + $0x1ff8] sm:$0xff]
    %v1165 = vld [vmem:[#allocation7] sm:$0xff]
    %v1166 = vld [vmem:[#allocation7 + $0x8] sm:$0xff]
    %v1169 = vperm.slane %v1165, 0
    %v1170 = vperm.slane %v1165, 1
    %v1171 = vperm.slane %v1165, 2
    %v1172 = vperm.slane %v1165, 3
    %v1173 = vperm.slane %v1165, 4
    %v1174 = vperm.slane %v1165, 5
    %v1175 = vperm.slane %v1165, 6
    %v1176 = vperm.slane %v1165, 7
    %v1177 = vperm.slane %v1166, 0
    %v1178 = vperm.slane %v1166, 1
    %v1179 = vperm.slane %v1166, 2
    %v1180 = vperm.slane %v1166, 3
    %v1181 = vperm.slane %v1166, 4
    %v1182 = vperm.slane %v1166, 5
    %v1183 = vperm.slane %v1166, 6
    %v1184 = vperm.slane %v1166, 7
    %1201 = vmatpush.msra.mxu0 %v381
    %1202 = vmatpush.msra.mxu0 %v365
    %1203 = vmatpush.msra.mxu0 %v349
    %1204 = vmatpush.msra.mxu0 %v333
    %1205 = vmatpush.msra.mxu0 %v317
    %1206 = vmatpush.msra.mxu0 %v301
    %1207 = vmatpush.msra.mxu0 %v285
    %1208 = vmatpush.msra.mxu0 %v269
    %1209 = vmatpush.msra.mxu0 %v253
    %1210 = vmatpush.msra.mxu0 %v237
    %1211 = vmatpush.msra.mxu0 %v221
    %1212 = vmatpush.msra.mxu0 %v205
    %1213 = vmatpush.msra.mxu0 %v189
    %1214 = vmatpush.msra.mxu0 %v173
    %1215 = vmatpush.msra.mxu0 %v157
    %1216 = vmatpush.msra.mxu0 %v141
    %1217 = vmatmul.f32.gmra.mxu0 %v125
    %v1218 = vpop.f32.mrf.mxu0
    %v1219 = vadd.f32 %v1169, %v1218
    %1220 = vmatmul.f32.gmra.mxu0 %v129
    %v1221 = vpop.f32.mrf.mxu0
    %v1222 = vadd.f32 %v1169, %v1221
    %1223 = vmatmul.f32.gmra.mxu0 %v133
    %v1224 = vpop.f32.mrf.mxu0
    %v1225 = vadd.f32 %v1169, %v1224
    %1226 = vmatmul.f32.gmra.mxu0 %v137
    %v1227 = vpop.f32.mrf.mxu0
    %v1228 = vadd.f32 %v1169, %v1227
    %1229 = vdwg.mxu0
    %1230 = vmatpush.msra.mxu0 %v637
    %1231 = vmatpush.msra.mxu0 %v621
    %1232 = vmatpush.msra.mxu0 %v605
    %1233 = vmatpush.msra.mxu0 %v589
    %1234 = vmatpush.msra.mxu0 %v573
    %1235 = vmatpush.msra.mxu0 %v557
    %1236 = vmatpush.msra.mxu0 %v541
    %1237 = vmatpush.msra.mxu0 %v525
    %1238 = vmatpush.msra.mxu0 %v509
    %1239 = vmatpush.msra.mxu0 %v493
    %1240 = vmatpush.msra.mxu0 %v477
    %1241 = vmatpush.msra.mxu0 %v461
    %1242 = vmatpush.msra.mxu0 %v445
    %1243 = vmatpush.msra.mxu0 %v429
    %1244 = vmatpush.msra.mxu0 %v413
    %1245 = vmatpush.msra.mxu0 %v397
    %1246 = vmatmul.f32.gmra.mxu0 %v126
    %v1247 = vpop.f32.mrf.mxu0
    %v1248 = vadd.f32 %v1219, %v1247
    %1249 = vmatmul.f32.gmra.mxu0 %v130
    %v1250 = vpop.f32.mrf.mxu0
    %v1251 = vadd.f32 %v1222, %v1250
    %1252 = vmatmul.f32.gmra.mxu0 %v134
    %v1253 = vpop.f32.mrf.mxu0
    %v1254 = vadd.f32 %v1225, %v1253
    %1255 = vmatmul.f32.gmra.mxu0 %v138
    %v1256 = vpop.f32.mrf.mxu0
    %v1257 = vadd.f32 %v1228, %v1256
    %1258 = vdwg.mxu0
    %1259 = vmatpush.msra.mxu0 %v893
    %1260 = vmatpush.msra.mxu0 %v877
    %1261 = vmatpush.msra.mxu0 %v861
    %1262 = vmatpush.msra.mxu0 %v845
    %1263 = vmatpush.msra.mxu0 %v829
    %1264 = vmatpush.msra.mxu0 %v813
    %1265 = vmatpush.msra.mxu0 %v797
    %1266 = vmatpush.msra.mxu0 %v781
    %1267 = vmatpush.msra.mxu0 %v765
    %1268 = vmatpush.msra.mxu0 %v749
    %1269 = vmatpush.msra.mxu0 %v733
    %1270 = vmatpush.msra.mxu0 %v717
    %1271 = vmatpush.msra.mxu0 %v701
    %1272 = vmatpush.msra.mxu0 %v685
    %1273 = vmatpush.msra.mxu0 %v669
    %1274 = vmatpush.msra.mxu0 %v653
    %1275 = vmatmul.f32.gmra.mxu0 %v127
    %v1276 = vpop.f32.mrf.mxu0
    %v1277 = vadd.f32 %v1248, %v1276
    %1278 = vmatmul.f32.gmra.mxu0 %v131
    %v1279 = vpop.f32.mrf.mxu0
    %v1280 = vadd.f32 %v1251, %v1279
    %1281 = vmatmul.f32.gmra.mxu0 %v135
    %v1282 = vpop.f32.mrf.mxu0
    %v1283 = vadd.f32 %v1254, %v1282
    %1284 = vmatmul.f32.gmra.mxu0 %v139
    %v1285 = vpop.f32.mrf.mxu0
    %v1286 = vadd.f32 %v1257, %v1285
    %1287 = vdwg.mxu0
    %1288 = vmatpush.msra.mxu0 %v1149
    %1289 = vmatpush.msra.mxu0 %v1133
    %1290 = vmatpush.msra.mxu0 %v1117
    %1291 = vmatpush.msra.mxu0 %v1101
    %1292 = vmatpush.msra.mxu0 %v1085
    %1293 = vmatpush.msra.mxu0 %v1069
    %1294 = vmatpush.msra.mxu0 %v1053
    %1295 = vmatpush.msra.mxu0 %v1037
    %1296 = vmatpush.msra.mxu0 %v1021
    %1297 = vmatpush.msra.mxu0 %v1005
    %1298 = vmatpush.msra.mxu0 %v989
    %1299 = vmatpush.msra.mxu0 %v973
    %1300 = vmatpush.msra.mxu0 %v957
    %1301 = vmatpush.msra.mxu0 %v941
    %1302 = vmatpush.msra.mxu0 %v925
    %1303 = vmatpush.msra.mxu0 %v909
    %1304 = vmatmul.f32.gmra.mxu0 %v128
    %v1305 = vpop.f32.mrf.mxu0
    %v1306 = vadd.f32 %v1277, %v1305
    %1307 = vmatmul.f32.gmra.mxu0 %v132
    %v1308 = vpop.f32.mrf.mxu0
    %v1309 = vadd.f32 %v1280, %v1308
    %1310 = vmatmul.f32.gmra.mxu0 %v136
    %v1311 = vpop.f32.mrf.mxu0
    %v1312 = vadd.f32 %v1283, %v1311
    %1313 = vmatmul.f32.gmra.mxu0 %v140
    %v1314 = vpop.f32.mrf.mxu0
    %v1315 = vadd.f32 %v1286, %v1314
    %1316 = vdwg.mxu0
    %1317 = vmatpush.msra.mxu0 %v382
    %1318 = vmatpush.msra.mxu0 %v366
    %1319 = vmatpush.msra.mxu0 %v350
    %1320 = vmatpush.msra.mxu0 %v334
    %1321 = vmatpush.msra.mxu0 %v318
    %1322 = vmatpush.msra.mxu0 %v302
    %1323 = vmatpush.msra.mxu0 %v286
    %1324 = vmatpush.msra.mxu0 %v270
    %1325 = vmatpush.msra.mxu0 %v254
    %1326 = vmatpush.msra.mxu0 %v238
    %1327 = vmatpush.msra.mxu0 %v222
    %1328 = vmatpush.msra.mxu0 %v206
    %1329 = vmatpush.msra.mxu0 %v190
    %1330 = vmatpush.msra.mxu0 %v174
    %1331 = vmatpush.msra.mxu0 %v158
    %1332 = vmatpush.msra.mxu0 %v142
    %1333 = vmatmul.f32.gmra.mxu0 %v125
    %v1334 = vpop.f32.mrf.mxu0
    %v1335 = vadd.f32 %v1170, %v1334
    %1336 = vmatmul.f32.gmra.mxu0 %v129
    %v1337 = vpop.f32.mrf.mxu0
    %v1338 = vadd.f32 %v1170, %v1337
    %1339 = vmatmul.f32.gmra.mxu0 %v133
    %v1340 = vpop.f32.mrf.mxu0
    %v1341 = vadd.f32 %v1170, %v1340
    %1342 = vmatmul.f32.gmra.mxu0 %v137
    %v1343 = vpop.f32.mrf.mxu0
    %v1344 = vadd.f32 %v1170, %v1343
    %1345 = vdwg.mxu0
    %1346 = vmatpush.msra.mxu0 %v638
    %1347 = vmatpush.msra.mxu0 %v622
    %1348 = vmatpush.msra.mxu0 %v606
    %1349 = vmatpush.msra.mxu0 %v590
    %1350 = vmatpush.msra.mxu0 %v574
    %1351 = vmatpush.msra.mxu0 %v558
    %1352 = vmatpush.msra.mxu0 %v542
    %1353 = vmatpush.msra.mxu0 %v526
    %1354 = vmatpush.msra.mxu0 %v510
    %1355 = vmatpush.msra.mxu0 %v494
    %1356 = vmatpush.msra.mxu0 %v478
    %1357 = vmatpush.msra.mxu0 %v462
    %1358 = vmatpush.msra.mxu0 %v446
    %1359 = vmatpush.msra.mxu0 %v430
    %1360 = vmatpush.msra.mxu0 %v414
    %1361 = vmatpush.msra.mxu0 %v398
    %1362 = vmatmul.f32.gmra.mxu0 %v126
    %v1363 = vpop.f32.mrf.mxu0
    %v1364 = vadd.f32 %v1335, %v1363
    %1365 = vmatmul.f32.gmra.mxu0 %v130
    %v1366 = vpop.f32.mrf.mxu0
    %v1367 = vadd.f32 %v1338, %v1366
    %1368 = vmatmul.f32.gmra.mxu0 %v134
    %v1369 = vpop.f32.mrf.mxu0
    %v1370 = vadd.f32 %v1341, %v1369
    %1371 = vmatmul.f32.gmra.mxu0 %v138
    %v1372 = vpop.f32.mrf.mxu0
    %v1373 = vadd.f32 %v1344, %v1372
    %1374 = vdwg.mxu0
    %1375 = vmatpush.msra.mxu0 %v894
    %1376 = vmatpush.msra.mxu0 %v878
    %1377 = vmatpush.msra.mxu0 %v862
    %1378 = vmatpush.msra.mxu0 %v846
    %1379 = vmatpush.msra.mxu0 %v830
    %1380 = vmatpush.msra.mxu0 %v814
    %1381 = vmatpush.msra.mxu0 %v798
    %1382 = vmatpush.msra.mxu0 %v782
    %1383 = vmatpush.msra.mxu0 %v766
    %1384 = vmatpush.msra.mxu0 %v750
    %1385 = vmatpush.msra.mxu0 %v734
    %1386 = vmatpush.msra.mxu0 %v718
    %1387 = vmatpush.msra.mxu0 %v702
    %1388 = vmatpush.msra.mxu0 %v686
    %1389 = vmatpush.msra.mxu0 %v670
    %1390 = vmatpush.msra.mxu0 %v654
    %1391 = vmatmul.f32.gmra.mxu0 %v127
    %v1392 = vpop.f32.mrf.mxu0
    %v1393 = vadd.f32 %v1364, %v1392
    %1394 = vmatmul.f32.gmra.mxu0 %v131
    %v1395 = vpop.f32.mrf.mxu0
    %v1396 = vadd.f32 %v1367, %v1395
    %1397 = vmatmul.f32.gmra.mxu0 %v135
    %v1398 = vpop.f32.mrf.mxu0
    %v1399 = vadd.f32 %v1370, %v1398
    %1400 = vmatmul.f32.gmra.mxu0 %v139
    %v1401 = vpop.f32.mrf.mxu0
    %v1402 = vadd.f32 %v1373, %v1401
    %1403 = vdwg.mxu0
    %1404 = vmatpush.msra.mxu0 %v1150
    %1405 = vmatpush.msra.mxu0 %v1134
    %1406 = vmatpush.msra.mxu0 %v1118
    %1407 = vmatpush.msra.mxu0 %v1102
    %1408 = vmatpush.msra.mxu0 %v1086
    %1409 = vmatpush.msra.mxu0 %v1070
    %1410 = vmatpush.msra.mxu0 %v1054
    %1411 = vmatpush.msra.mxu0 %v1038
    %1412 = vmatpush.msra.mxu0 %v1022
    %1413 = vmatpush.msra.mxu0 %v1006
    %1414 = vmatpush.msra.mxu0 %v990
    %1415 = vmatpush.msra.mxu0 %v974
    %1416 = vmatpush.msra.mxu0 %v958
    %1417 = vmatpush.msra.mxu0 %v942
    %1418 = vmatpush.msra.mxu0 %v926
    %1419 = vmatpush.msra.mxu0 %v910
    %1420 = vmatmul.f32.gmra.mxu0 %v128
    %v1421 = vpop.f32.mrf.mxu0
    %v1422 = vadd.f32 %v1393, %v1421
    %1423 = vmatmul.f32.gmra.mxu0 %v132
    %v1424 = vpop.f32.mrf.mxu0
    %v1425 = vadd.f32 %v1396, %v1424
    %1426 = vmatmul.f32.gmra.mxu0 %v136
    %v1427 = vpop.f32.mrf.mxu0
    %v1428 = vadd.f32 %v1399, %v1427
    %1429 = vmatmul.f32.gmra.mxu0 %v140
    %v1430 = vpop.f32.mrf.mxu0
    %v1431 = vadd.f32 %v1402, %v1430
    %1432 = vdwg.mxu0
    %1433 = vmatpush.msra.mxu0 %v383
    %1434 = vmatpush.msra.mxu0 %v367
    %1435 = vmatpush.msra.mxu0 %v351
    %1436 = vmatpush.msra.mxu0 %v335
    %1437 = vmatpush.msra.mxu0 %v319
    %1438 = vmatpush.msra.mxu0 %v303
    %1439 = vmatpush.msra.mxu0 %v287
    %1440 = vmatpush.msra.mxu0 %v271
    %1441 = vmatpush.msra.mxu0 %v255
    %1442 = vmatpush.msra.mxu0 %v239
    %1443 = vmatpush.msra.mxu0 %v223
    %1444 = vmatpush.msra.mxu0 %v207
    %1445 = vmatpush.msra.mxu0 %v191
    %1446 = vmatpush.msra.mxu0 %v175
    %1447 = vmatpush.msra.mxu0 %v159
    %1448 = vmatpush.msra.mxu0 %v143
    %1449 = vmatmul.f32.gmra.mxu0 %v125
    %v1450 = vpop.f32.mrf.mxu0
    %v1451 = vadd.f32 %v1171, %v1450
    %1452 = vmatmul.f32.gmra.mxu0 %v129
    %v1453 = vpop.f32.mrf.mxu0
    %v1454 = vadd.f32 %v1171, %v1453
    %1455 = vmatmul.f32.gmra.mxu0 %v133
    %v1456 = vpop.f32.mrf.mxu0
    %v1457 = vadd.f32 %v1171, %v1456
    %1458 = vmatmul.f32.gmra.mxu0 %v137
    %v1459 = vpop.f32.mrf.mxu0
    %v1460 = vadd.f32 %v1171, %v1459
    %1461 = vdwg.mxu0
    %1462 = vmatpush.msra.mxu0 %v639
    %1463 = vmatpush.msra.mxu0 %v623
    %1464 = vmatpush.msra.mxu0 %v607
    %1465 = vmatpush.msra.mxu0 %v591
    %1466 = vmatpush.msra.mxu0 %v575
    %1467 = vmatpush.msra.mxu0 %v559
    %1468 = vmatpush.msra.mxu0 %v543
    %1469 = vmatpush.msra.mxu0 %v527
    %1470 = vmatpush.msra.mxu0 %v511
    %1471 = vmatpush.msra.mxu0 %v495
    %1472 = vmatpush.msra.mxu0 %v479
    %1473 = vmatpush.msra.mxu0 %v463
    %1474 = vmatpush.msra.mxu0 %v447
    %1475 = vmatpush.msra.mxu0 %v431
    %1476 = vmatpush.msra.mxu0 %v415
    %1477 = vmatpush.msra.mxu0 %v399
    %1478 = vmatmul.f32.gmra.mxu0 %v126
    %v1479 = vpop.f32.mrf.mxu0
    %v1480 = vadd.f32 %v1451, %v1479
    %1481 = vmatmul.f32.gmra.mxu0 %v130
    %v1482 = vpop.f32.mrf.mxu0
    %v1483 = vadd.f32 %v1454, %v1482
    %1484 = vmatmul.f32.gmra.mxu0 %v134
    %v1485 = vpop.f32.mrf.mxu0
    %v1486 = vadd.f32 %v1457, %v1485
    %1487 = vmatmul.f32.gmra.mxu0 %v138
    %v1488 = vpop.f32.mrf.mxu0
    %v1489 = vadd.f32 %v1460, %v1488
    %1490 = vdwg.mxu0
    %1491 = vmatpush.msra.mxu0 %v895
    %1492 = vmatpush.msra.mxu0 %v879
    %1493 = vmatpush.msra.mxu0 %v863
    %1494 = vmatpush.msra.mxu0 %v847
    %1495 = vmatpush.msra.mxu0 %v831
    %1496 = vmatpush.msra.mxu0 %v815
    %1497 = vmatpush.msra.mxu0 %v799
    %1498 = vmatpush.msra.mxu0 %v783
    %1499 = vmatpush.msra.mxu0 %v767
    %1500 = vmatpush.msra.mxu0 %v751
    %1501 = vmatpush.msra.mxu0 %v735
    %1502 = vmatpush.msra.mxu0 %v719
    %1503 = vmatpush.msra.mxu0 %v703
    %1504 = vmatpush.msra.mxu0 %v687
    %1505 = vmatpush.msra.mxu0 %v671
    %1506 = vmatpush.msra.mxu0 %v655
    %1507 = vmatmul.f32.gmra.mxu0 %v127
    %v1508 = vpop.f32.mrf.mxu0
    %v1509 = vadd.f32 %v1480, %v1508
    %1510 = vmatmul.f32.gmra.mxu0 %v131
    %v1511 = vpop.f32.mrf.mxu0
    %v1512 = vadd.f32 %v1483, %v1511
    %1513 = vmatmul.f32.gmra.mxu0 %v135
    %v1514 = vpop.f32.mrf.mxu0
    %v1515 = vadd.f32 %v1486, %v1514
    %1516 = vmatmul.f32.gmra.mxu0 %v139
    %v1517 = vpop.f32.mrf.mxu0
    %v1518 = vadd.f32 %v1489, %v1517
    %1519 = vdwg.mxu0
    %1520 = vmatpush.msra.mxu0 %v1151
    %1521 = vmatpush.msra.mxu0 %v1135
    %1522 = vmatpush.msra.mxu0 %v1119
    %1523 = vmatpush.msra.mxu0 %v1103
    %1524 = vmatpush.msra.mxu0 %v1087
    %1525 = vmatpush.msra.mxu0 %v1071
    %1526 = vmatpush.msra.mxu0 %v1055
    %1527 = vmatpush.msra.mxu0 %v1039
    %1528 = vmatpush.msra.mxu0 %v1023
    %1529 = vmatpush.msra.mxu0 %v1007
    %1530 = vmatpush.msra.mxu0 %v991
    %1531 = vmatpush.msra.mxu0 %v975
    %1532 = vmatpush.msra.mxu0 %v959
    %1533 = vmatpush.msra.mxu0 %v943
    %1534 = vmatpush.msra.mxu0 %v927
    %1535 = vmatpush.msra.mxu0 %v911
    %1536 = vmatmul.f32.gmra.mxu0 %v128
    %v1537 = vpop.f32.mrf.mxu0
    %v1538 = vadd.f32 %v1509, %v1537
    %1539 = vmatmul.f32.gmra.mxu0 %v132
    %v1540 = vpop.f32.mrf.mxu0
    %v1541 = vadd.f32 %v1512, %v1540
    %1542 = vmatmul.f32.gmra.mxu0 %v136
    %v1543 = vpop.f32.mrf.mxu0
    %v1544 = vadd.f32 %v1515, %v1543
    %1545 = vmatmul.f32.gmra.mxu0 %v140
    %v1546 = vpop.f32.mrf.mxu0
    %v1547 = vadd.f32 %v1518, %v1546
    %1548 = vdwg.mxu0
    %1549 = vmatpush.msra.mxu0 %v384
    %1550 = vmatpush.msra.mxu0 %v368
    %1551 = vmatpush.msra.mxu0 %v352
    %1552 = vmatpush.msra.mxu0 %v336
    %1553 = vmatpush.msra.mxu0 %v320
    %1554 = vmatpush.msra.mxu0 %v304
    %1555 = vmatpush.msra.mxu0 %v288
    %1556 = vmatpush.msra.mxu0 %v272
    %1557 = vmatpush.msra.mxu0 %v256
    %1558 = vmatpush.msra.mxu0 %v240
    %1559 = vmatpush.msra.mxu0 %v224
    %1560 = vmatpush.msra.mxu0 %v208
    %1561 = vmatpush.msra.mxu0 %v192
    %1562 = vmatpush.msra.mxu0 %v176
    %1563 = vmatpush.msra.mxu0 %v160
    %1564 = vmatpush.msra.mxu0 %v144
    %1565 = vmatmul.f32.gmra.mxu0 %v125
    %v1566 = vpop.f32.mrf.mxu0
    %v1567 = vadd.f32 %v1172, %v1566
    %1568 = vmatmul.f32.gmra.mxu0 %v129
    %v1569 = vpop.f32.mrf.mxu0
    %v1570 = vadd.f32 %v1172, %v1569
    %1571 = vmatmul.f32.gmra.mxu0 %v133
    %v1572 = vpop.f32.mrf.mxu0
    %v1573 = vadd.f32 %v1172, %v1572
    %1574 = vmatmul.f32.gmra.mxu0 %v137
    %v1575 = vpop.f32.mrf.mxu0
    %v1576 = vadd.f32 %v1172, %v1575
    %1577 = vdwg.mxu0
    %1578 = vmatpush.msra.mxu0 %v640
    %1579 = vmatpush.msra.mxu0 %v624
    %1580 = vmatpush.msra.mxu0 %v608
    %1581 = vmatpush.msra.mxu0 %v592
    %1582 = vmatpush.msra.mxu0 %v576
    %1583 = vmatpush.msra.mxu0 %v560
    %1584 = vmatpush.msra.mxu0 %v544
    %1585 = vmatpush.msra.mxu0 %v528
    %1586 = vmatpush.msra.mxu0 %v512
    %1587 = vmatpush.msra.mxu0 %v496
    %1588 = vmatpush.msra.mxu0 %v480
    %1589 = vmatpush.msra.mxu0 %v464
    %1590 = vmatpush.msra.mxu0 %v448
    %1591 = vmatpush.msra.mxu0 %v432
    %1592 = vmatpush.msra.mxu0 %v416
    %1593 = vmatpush.msra.mxu0 %v400
    %1594 = vmatmul.f32.gmra.mxu0 %v126
    %v1595 = vpop.f32.mrf.mxu0
    %v1596 = vadd.f32 %v1567, %v1595
    %1597 = vmatmul.f32.gmra.mxu0 %v130
    %v1598 = vpop.f32.mrf.mxu0
    %v1599 = vadd.f32 %v1570, %v1598
    %1600 = vmatmul.f32.gmra.mxu0 %v134
    %v1601 = vpop.f32.mrf.mxu0
    %v1602 = vadd.f32 %v1573, %v1601
    %1603 = vmatmul.f32.gmra.mxu0 %v138
    %v1604 = vpop.f32.mrf.mxu0
    %v1605 = vadd.f32 %v1576, %v1604
    %1606 = vdwg.mxu0
    %1607 = vmatpush.msra.mxu0 %v896
    %1608 = vmatpush.msra.mxu0 %v880
    %1609 = vmatpush.msra.mxu0 %v864
    %1610 = vmatpush.msra.mxu0 %v848
    %1611 = vmatpush.msra.mxu0 %v832
    %1612 = vmatpush.msra.mxu0 %v816
    %1613 = vmatpush.msra.mxu0 %v800
    %1614 = vmatpush.msra.mxu0 %v784
    %1615 = vmatpush.msra.mxu0 %v768
    %1616 = vmatpush.msra.mxu0 %v752
    %1617 = vmatpush.msra.mxu0 %v736
    %1618 = vmatpush.msra.mxu0 %v720
    %1619 = vmatpush.msra.mxu0 %v704
    %1620 = vmatpush.msra.mxu0 %v688
    %1621 = vmatpush.msra.mxu0 %v672
    %1622 = vmatpush.msra.mxu0 %v656
    %1623 = vmatmul.f32.gmra.mxu0 %v127
    %v1624 = vpop.f32.mrf.mxu0
    %v1625 = vadd.f32 %v1596, %v1624
    %1626 = vmatmul.f32.gmra.mxu0 %v131
    %v1627 = vpop.f32.mrf.mxu0
    %v1628 = vadd.f32 %v1599, %v1627
    %1629 = vmatmul.f32.gmra.mxu0 %v135
    %v1630 = vpop.f32.mrf.mxu0
    %v1631 = vadd.f32 %v1602, %v1630
    %1632 = vmatmul.f32.gmra.mxu0 %v139
    %v1633 = vpop.f32.mrf.mxu0
    %v1634 = vadd.f32 %v1605, %v1633
    %1635 = vdwg.mxu0
    %1636 = vmatpush.msra.mxu0 %v1152
    %1637 = vmatpush.msra.mxu0 %v1136
    %1638 = vmatpush.msra.mxu0 %v1120
    %1639 = vmatpush.msra.mxu0 %v1104
    %1640 = vmatpush.msra.mxu0 %v1088
    %1641 = vmatpush.msra.mxu0 %v1072
    %1642 = vmatpush.msra.mxu0 %v1056
    %1643 = vmatpush.msra.mxu0 %v1040
    %1644 = vmatpush.msra.mxu0 %v1024
    %1645 = vmatpush.msra.mxu0 %v1008
    %1646 = vmatpush.msra.mxu0 %v992
    %1647 = vmatpush.msra.mxu0 %v976
    %1648 = vmatpush.msra.mxu0 %v960
    %1649 = vmatpush.msra.mxu0 %v944
    %1650 = vmatpush.msra.mxu0 %v928
    %1651 = vmatpush.msra.mxu0 %v912
    %1652 = vmatmul.f32.gmra.mxu0 %v128
    %v1653 = vpop.f32.mrf.mxu0
    %v1654 = vadd.f32 %v1625, %v1653
    %1655 = vmatmul.f32.gmra.mxu0 %v132
    %v1656 = vpop.f32.mrf.mxu0
    %v1657 = vadd.f32 %v1628, %v1656
    %1658 = vmatmul.f32.gmra.mxu0 %v136
    %v1659 = vpop.f32.mrf.mxu0
    %v1660 = vadd.f32 %v1631, %v1659
    %1661 = vmatmul.f32.gmra.mxu0 %v140
    %v1662 = vpop.f32.mrf.mxu0
    %v1663 = vadd.f32 %v1634, %v1662
    %1664 = vdwg.mxu0
    %1665 = vmatpush.msra.mxu0 %v385
    %1666 = vmatpush.msra.mxu0 %v369
    %1667 = vmatpush.msra.mxu0 %v353
    %1668 = vmatpush.msra.mxu0 %v337
    %1669 = vmatpush.msra.mxu0 %v321
    %1670 = vmatpush.msra.mxu0 %v305
    %1671 = vmatpush.msra.mxu0 %v289
    %1672 = vmatpush.msra.mxu0 %v273
    %1673 = vmatpush.msra.mxu0 %v257
    %1674 = vmatpush.msra.mxu0 %v241
    %1675 = vmatpush.msra.mxu0 %v225
    %1676 = vmatpush.msra.mxu0 %v209
    %1677 = vmatpush.msra.mxu0 %v193
    %1678 = vmatpush.msra.mxu0 %v177
    %1679 = vmatpush.msra.mxu0 %v161
    %1680 = vmatpush.msra.mxu0 %v145
    %1681 = vmatmul.f32.gmra.mxu0 %v125
    %v1682 = vpop.f32.mrf.mxu0
    %v1683 = vadd.f32 %v1173, %v1682
    %1684 = vmatmul.f32.gmra.mxu0 %v129
    %v1685 = vpop.f32.mrf.mxu0
    %v1686 = vadd.f32 %v1173, %v1685
    %1687 = vmatmul.f32.gmra.mxu0 %v133
    %v1688 = vpop.f32.mrf.mxu0
    %v1689 = vadd.f32 %v1173, %v1688
    %1690 = vmatmul.f32.gmra.mxu0 %v137
    %v1691 = vpop.f32.mrf.mxu0
    %v1692 = vadd.f32 %v1173, %v1691
    %1693 = vdwg.mxu0
    %1694 = vmatpush.msra.mxu0 %v641
    %1695 = vmatpush.msra.mxu0 %v625
    %1696 = vmatpush.msra.mxu0 %v609
    %1697 = vmatpush.msra.mxu0 %v593
    %1698 = vmatpush.msra.mxu0 %v577
    %1699 = vmatpush.msra.mxu0 %v561
    %1700 = vmatpush.msra.mxu0 %v545
    %1701 = vmatpush.msra.mxu0 %v529
    %1702 = vmatpush.msra.mxu0 %v513
    %1703 = vmatpush.msra.mxu0 %v497
    %1704 = vmatpush.msra.mxu0 %v481
    %1705 = vmatpush.msra.mxu0 %v465
    %1706 = vmatpush.msra.mxu0 %v449
    %1707 = vmatpush.msra.mxu0 %v433
    %1708 = vmatpush.msra.mxu0 %v417
    %1709 = vmatpush.msra.mxu0 %v401
    %1710 = vmatmul.f32.gmra.mxu0 %v126
    %v1711 = vpop.f32.mrf.mxu0
    %v1712 = vadd.f32 %v1683, %v1711
    %1713 = vmatmul.f32.gmra.mxu0 %v130
    %v1714 = vpop.f32.mrf.mxu0
    %v1715 = vadd.f32 %v1686, %v1714
    %1716 = vmatmul.f32.gmra.mxu0 %v134
    %v1717 = vpop.f32.mrf.mxu0
    %v1718 = vadd.f32 %v1689, %v1717
    %1719 = vmatmul.f32.gmra.mxu0 %v138
    %v1720 = vpop.f32.mrf.mxu0
    %v1721 = vadd.f32 %v1692, %v1720
    %1722 = vdwg.mxu0
    %1723 = vmatpush.msra.mxu0 %v897
    %1724 = vmatpush.msra.mxu0 %v881
    %1725 = vmatpush.msra.mxu0 %v865
    %1726 = vmatpush.msra.mxu0 %v849
    %1727 = vmatpush.msra.mxu0 %v833
    %1728 = vmatpush.msra.mxu0 %v817
    %1729 = vmatpush.msra.mxu0 %v801
    %1730 = vmatpush.msra.mxu0 %v785
    %1731 = vmatpush.msra.mxu0 %v769
    %1732 = vmatpush.msra.mxu0 %v753
    %1733 = vmatpush.msra.mxu0 %v737
    %1734 = vmatpush.msra.mxu0 %v721
    %1735 = vmatpush.msra.mxu0 %v705
    %1736 = vmatpush.msra.mxu0 %v689
    %1737 = vmatpush.msra.mxu0 %v673
    %1738 = vmatpush.msra.mxu0 %v657
    %1739 = vmatmul.f32.gmra.mxu0 %v127
    %v1740 = vpop.f32.mrf.mxu0
    %v1741 = vadd.f32 %v1712, %v1740
    %1742 = vmatmul.f32.gmra.mxu0 %v131
    %v1743 = vpop.f32.mrf.mxu0
    %v1744 = vadd.f32 %v1715, %v1743
    %1745 = vmatmul.f32.gmra.mxu0 %v135
    %v1746 = vpop.f32.mrf.mxu0
    %v1747 = vadd.f32 %v1718, %v1746
    %1748 = vmatmul.f32.gmra.mxu0 %v139
    %v1749 = vpop.f32.mrf.mxu0
    %v1750 = vadd.f32 %v1721, %v1749
    %1751 = vdwg.mxu0
    %1752 = vmatpush.msra.mxu0 %v1153
    %1753 = vmatpush.msra.mxu0 %v1137
    %1754 = vmatpush.msra.mxu0 %v1121
    %1755 = vmatpush.msra.mxu0 %v1105
    %1756 = vmatpush.msra.mxu0 %v1089
    %1757 = vmatpush.msra.mxu0 %v1073
    %1758 = vmatpush.msra.mxu0 %v1057
    %1759 = vmatpush.msra.mxu0 %v1041
    %1760 = vmatpush.msra.mxu0 %v1025
    %1761 = vmatpush.msra.mxu0 %v1009
    %1762 = vmatpush.msra.mxu0 %v993
    %1763 = vmatpush.msra.mxu0 %v977
    %1764 = vmatpush.msra.mxu0 %v961
    %1765 = vmatpush.msra.mxu0 %v945
    %1766 = vmatpush.msra.mxu0 %v929
    %1767 = vmatpush.msra.mxu0 %v913
    %1768 = vmatmul.f32.gmra.mxu0 %v128
    %v1769 = vpop.f32.mrf.mxu0
    %v1770 = vadd.f32 %v1741, %v1769
    %1771 = vmatmul.f32.gmra.mxu0 %v132
    %v1772 = vpop.f32.mrf.mxu0
    %v1773 = vadd.f32 %v1744, %v1772
    %1774 = vmatmul.f32.gmra.mxu0 %v136
    %v1775 = vpop.f32.mrf.mxu0
    %v1776 = vadd.f32 %v1747, %v1775
    %1777 = vmatmul.f32.gmra.mxu0 %v140
    %v1778 = vpop.f32.mrf.mxu0
    %v1779 = vadd.f32 %v1750, %v1778
    %1780 = vdwg.mxu0
    %1781 = vmatpush.msra.mxu0 %v386
    %1782 = vmatpush.msra.mxu0 %v370
    %1783 = vmatpush.msra.mxu0 %v354
    %1784 = vmatpush.msra.mxu0 %v338
    %1785 = vmatpush.msra.mxu0 %v322
    %1786 = vmatpush.msra.mxu0 %v306
    %1787 = vmatpush.msra.mxu0 %v290
    %1788 = vmatpush.msra.mxu0 %v274
    %1789 = vmatpush.msra.mxu0 %v258
    %1790 = vmatpush.msra.mxu0 %v242
    %1791 = vmatpush.msra.mxu0 %v226
    %1792 = vmatpush.msra.mxu0 %v210
    %1793 = vmatpush.msra.mxu0 %v194
    %1794 = vmatpush.msra.mxu0 %v178
    %1795 = vmatpush.msra.mxu0 %v162
    %1796 = vmatpush.msra.mxu0 %v146
    %1797 = vmatmul.f32.gmra.mxu0 %v125
    %v1798 = vpop.f32.mrf.mxu0
    %v1799 = vadd.f32 %v1174, %v1798
    %1800 = vmatmul.f32.gmra.mxu0 %v129
    %v1801 = vpop.f32.mrf.mxu0
    %v1802 = vadd.f32 %v1174, %v1801
    %1803 = vmatmul.f32.gmra.mxu0 %v133
    %v1804 = vpop.f32.mrf.mxu0
    %v1805 = vadd.f32 %v1174, %v1804
    %1806 = vmatmul.f32.gmra.mxu0 %v137
    %v1807 = vpop.f32.mrf.mxu0
    %v1808 = vadd.f32 %v1174, %v1807
    %1809 = vdwg.mxu0
    %1810 = vmatpush.msra.mxu0 %v642
    %1811 = vmatpush.msra.mxu0 %v626
    %1812 = vmatpush.msra.mxu0 %v610
    %1813 = vmatpush.msra.mxu0 %v594
    %1814 = vmatpush.msra.mxu0 %v578
    %1815 = vmatpush.msra.mxu0 %v562
    %1816 = vmatpush.msra.mxu0 %v546
    %1817 = vmatpush.msra.mxu0 %v530
    %1818 = vmatpush.msra.mxu0 %v514
    %1819 = vmatpush.msra.mxu0 %v498
    %1820 = vmatpush.msra.mxu0 %v482
    %1821 = vmatpush.msra.mxu0 %v466
    %1822 = vmatpush.msra.mxu0 %v450
    %1823 = vmatpush.msra.mxu0 %v434
    %1824 = vmatpush.msra.mxu0 %v418
    %1825 = vmatpush.msra.mxu0 %v402
    %1826 = vmatmul.f32.gmra.mxu0 %v126
    %v1827 = vpop.f32.mrf.mxu0
    %v1828 = vadd.f32 %v1799, %v1827
    %1829 = vmatmul.f32.gmra.mxu0 %v130
    %v1830 = vpop.f32.mrf.mxu0
    %v1831 = vadd.f32 %v1802, %v1830
    %1832 = vmatmul.f32.gmra.mxu0 %v134
    %v1833 = vpop.f32.mrf.mxu0
    %v1834 = vadd.f32 %v1805, %v1833
    %1835 = vmatmul.f32.gmra.mxu0 %v138
    %v1836 = vpop.f32.mrf.mxu0
    %v1837 = vadd.f32 %v1808, %v1836
    %1838 = vdwg.mxu0
    %1839 = vmatpush.msra.mxu0 %v898
    %1840 = vmatpush.msra.mxu0 %v882
    %1841 = vmatpush.msra.mxu0 %v866
    %1842 = vmatpush.msra.mxu0 %v850
    %1843 = vmatpush.msra.mxu0 %v834
    %1844 = vmatpush.msra.mxu0 %v818
    %1845 = vmatpush.msra.mxu0 %v802
    %1846 = vmatpush.msra.mxu0 %v786
    %1847 = vmatpush.msra.mxu0 %v770
    %1848 = vmatpush.msra.mxu0 %v754
    %1849 = vmatpush.msra.mxu0 %v738
    %1850 = vmatpush.msra.mxu0 %v722
    %1851 = vmatpush.msra.mxu0 %v706
    %1852 = vmatpush.msra.mxu0 %v690
    %1853 = vmatpush.msra.mxu0 %v674
    %1854 = vmatpush.msra.mxu0 %v658
    %1855 = vmatmul.f32.gmra.mxu0 %v127
    %v1856 = vpop.f32.mrf.mxu0
    %v1857 = vadd.f32 %v1828, %v1856
    %1858 = vmatmul.f32.gmra.mxu0 %v131
    %v1859 = vpop.f32.mrf.mxu0
    %v1860 = vadd.f32 %v1831, %v1859
    %1861 = vmatmul.f32.gmra.mxu0 %v135
    %v1862 = vpop.f32.mrf.mxu0
    %v1863 = vadd.f32 %v1834, %v1862
    %1864 = vmatmul.f32.gmra.mxu0 %v139
    %v1865 = vpop.f32.mrf.mxu0
    %v1866 = vadd.f32 %v1837, %v1865
    %1867 = vdwg.mxu0
    %1868 = vmatpush.msra.mxu0 %v1154
    %1869 = vmatpush.msra.mxu0 %v1138
    %1870 = vmatpush.msra.mxu0 %v1122
    %1871 = vmatpush.msra.mxu0 %v1106
    %1872 = vmatpush.msra.mxu0 %v1090
    %1873 = vmatpush.msra.mxu0 %v1074
    %1874 = vmatpush.msra.mxu0 %v1058
    %1875 = vmatpush.msra.mxu0 %v1042
    %1876 = vmatpush.msra.mxu0 %v1026
    %1877 = vmatpush.msra.mxu0 %v1010
    %1878 = vmatpush.msra.mxu0 %v994
    %1879 = vmatpush.msra.mxu0 %v978
    %1880 = vmatpush.msra.mxu0 %v962
    %1881 = vmatpush.msra.mxu0 %v946
    %1882 = vmatpush.msra.mxu0 %v930
    %1883 = vmatpush.msra.mxu0 %v914
    %1884 = vmatmul.f32.gmra.mxu0 %v128
    %v1885 = vpop.f32.mrf.mxu0
    %v1886 = vadd.f32 %v1857, %v1885
    %1887 = vmatmul.f32.gmra.mxu0 %v132
    %v1888 = vpop.f32.mrf.mxu0
    %v1889 = vadd.f32 %v1860, %v1888
    %1890 = vmatmul.f32.gmra.mxu0 %v136
    %v1891 = vpop.f32.mrf.mxu0
    %v1892 = vadd.f32 %v1863, %v1891
    %1893 = vmatmul.f32.gmra.mxu0 %v140
    %v1894 = vpop.f32.mrf.mxu0
    %v1895 = vadd.f32 %v1866, %v1894
    %1896 = vdwg.mxu0
    %1897 = vmatpush.msra.mxu0 %v387
    %1898 = vmatpush.msra.mxu0 %v371
    %1899 = vmatpush.msra.mxu0 %v355
    %1900 = vmatpush.msra.mxu0 %v339
    %1901 = vmatpush.msra.mxu0 %v323
    %1902 = vmatpush.msra.mxu0 %v307
    %1903 = vmatpush.msra.mxu0 %v291
    %1904 = vmatpush.msra.mxu0 %v275
    %1905 = vmatpush.msra.mxu0 %v259
    %1906 = vmatpush.msra.mxu0 %v243
    %1907 = vmatpush.msra.mxu0 %v227
    %1908 = vmatpush.msra.mxu0 %v211
    %1909 = vmatpush.msra.mxu0 %v195
    %1910 = vmatpush.msra.mxu0 %v179
    %1911 = vmatpush.msra.mxu0 %v163
    %1912 = vmatpush.msra.mxu0 %v147
    %1913 = vmatmul.f32.gmra.mxu0 %v125
    %v1914 = vpop.f32.mrf.mxu0
    %v1915 = vadd.f32 %v1175, %v1914
    %1916 = vmatmul.f32.gmra.mxu0 %v129
    %v1917 = vpop.f32.mrf.mxu0
    %v1918 = vadd.f32 %v1175, %v1917
    %1919 = vmatmul.f32.gmra.mxu0 %v133
    %v1920 = vpop.f32.mrf.mxu0
    %v1921 = vadd.f32 %v1175, %v1920
    %1922 = vmatmul.f32.gmra.mxu0 %v137
    %v1923 = vpop.f32.mrf.mxu0
    %v1924 = vadd.f32 %v1175, %v1923
    %1925 = vdwg.mxu0
    %1926 = vmatpush.msra.mxu0 %v643
    %1927 = vmatpush.msra.mxu0 %v627
    %1928 = vmatpush.msra.mxu0 %v611
    %1929 = vmatpush.msra.mxu0 %v595
    %1930 = vmatpush.msra.mxu0 %v579
    %1931 = vmatpush.msra.mxu0 %v563
    %1932 = vmatpush.msra.mxu0 %v547
    %1933 = vmatpush.msra.mxu0 %v531
    %1934 = vmatpush.msra.mxu0 %v515
    %1935 = vmatpush.msra.mxu0 %v499
    %1936 = vmatpush.msra.mxu0 %v483
    %1937 = vmatpush.msra.mxu0 %v467
    %1938 = vmatpush.msra.mxu0 %v451
    %1939 = vmatpush.msra.mxu0 %v435
    %1940 = vmatpush.msra.mxu0 %v419
    %1941 = vmatpush.msra.mxu0 %v403
    %1942 = vmatmul.f32.gmra.mxu0 %v126
    %v1943 = vpop.f32.mrf.mxu0
    %v1944 = vadd.f32 %v1915, %v1943
    %1945 = vmatmul.f32.gmra.mxu0 %v130
    %v1946 = vpop.f32.mrf.mxu0
    %v1947 = vadd.f32 %v1918, %v1946
    %1948 = vmatmul.f32.gmra.mxu0 %v134
    %v1949 = vpop.f32.mrf.mxu0
    %v1950 = vadd.f32 %v1921, %v1949
    %1951 = vmatmul.f32.gmra.mxu0 %v138
    %v1952 = vpop.f32.mrf.mxu0
    %v1953 = vadd.f32 %v1924, %v1952
    %1954 = vdwg.mxu0
    %1955 = vmatpush.msra.mxu0 %v899
    %1956 = vmatpush.msra.mxu0 %v883
    %1957 = vmatpush.msra.mxu0 %v867
    %1958 = vmatpush.msra.mxu0 %v851
    %1959 = vmatpush.msra.mxu0 %v835
    %1960 = vmatpush.msra.mxu0 %v819
    %1961 = vmatpush.msra.mxu0 %v803
    %1962 = vmatpush.msra.mxu0 %v787
    %1963 = vmatpush.msra.mxu0 %v771
    %1964 = vmatpush.msra.mxu0 %v755
    %1965 = vmatpush.msra.mxu0 %v739
    %1966 = vmatpush.msra.mxu0 %v723
    %1967 = vmatpush.msra.mxu0 %v707
    %1968 = vmatpush.msra.mxu0 %v691
    %1969 = vmatpush.msra.mxu0 %v675
    %1970 = vmatpush.msra.mxu0 %v659
    %1971 = vmatmul.f32.gmra.mxu0 %v127
    %v1972 = vpop.f32.mrf.mxu0
    %v1973 = vadd.f32 %v1944, %v1972
    %1974 = vmatmul.f32.gmra.mxu0 %v131
    %v1975 = vpop.f32.mrf.mxu0
    %v1976 = vadd.f32 %v1947, %v1975
    %1977 = vmatmul.f32.gmra.mxu0 %v135
    %v1978 = vpop.f32.mrf.mxu0
    %v1979 = vadd.f32 %v1950, %v1978
    %1980 = vmatmul.f32.gmra.mxu0 %v139
    %v1981 = vpop.f32.mrf.mxu0
    %v1982 = vadd.f32 %v1953, %v1981
    %1983 = vdwg.mxu0
    %1984 = vmatpush.msra.mxu0 %v1155
    %1985 = vmatpush.msra.mxu0 %v1139
    %1986 = vmatpush.msra.mxu0 %v1123
    %1987 = vmatpush.msra.mxu0 %v1107
    %1988 = vmatpush.msra.mxu0 %v1091
    %1989 = vmatpush.msra.mxu0 %v1075
    %1990 = vmatpush.msra.mxu0 %v1059
    %1991 = vmatpush.msra.mxu0 %v1043
    %1992 = vmatpush.msra.mxu0 %v1027
    %1993 = vmatpush.msra.mxu0 %v1011
    %1994 = vmatpush.msra.mxu0 %v995
    %1995 = vmatpush.msra.mxu0 %v979
    %1996 = vmatpush.msra.mxu0 %v963
    %1997 = vmatpush.msra.mxu0 %v947
    %1998 = vmatpush.msra.mxu0 %v931
    %1999 = vmatpush.msra.mxu0 %v915
    %2000 = vmatmul.f32.gmra.mxu0 %v128
    %v2001 = vpop.f32.mrf.mxu0
    %v2002 = vadd.f32 %v1973, %v2001
    %2003 = vmatmul.f32.gmra.mxu0 %v132
    %v2004 = vpop.f32.mrf.mxu0
    %v2005 = vadd.f32 %v1976, %v2004
    %2006 = vmatmul.f32.gmra.mxu0 %v136
    %v2007 = vpop.f32.mrf.mxu0
    %v2008 = vadd.f32 %v1979, %v2007
    %2009 = vmatmul.f32.gmra.mxu0 %v140
    %v2010 = vpop.f32.mrf.mxu0
    %v2011 = vadd.f32 %v1982, %v2010
    %2012 = vdwg.mxu0
    %2013 = vmatpush.msra.mxu0 %v388
    %2014 = vmatpush.msra.mxu0 %v372
    %2015 = vmatpush.msra.mxu0 %v356
    %2016 = vmatpush.msra.mxu0 %v340
    %2017 = vmatpush.msra.mxu0 %v324
    %2018 = vmatpush.msra.mxu0 %v308
    %2019 = vmatpush.msra.mxu0 %v292
    %2020 = vmatpush.msra.mxu0 %v276
    %2021 = vmatpush.msra.mxu0 %v260
    %2022 = vmatpush.msra.mxu0 %v244
    %2023 = vmatpush.msra.mxu0 %v228
    %2024 = vmatpush.msra.mxu0 %v212
    %2025 = vmatpush.msra.mxu0 %v196
    %2026 = vmatpush.msra.mxu0 %v180
    %2027 = vmatpush.msra.mxu0 %v164
    %2028 = vmatpush.msra.mxu0 %v148
    %2029 = vmatmul.f32.gmra.mxu0 %v125
    %v2030 = vpop.f32.mrf.mxu0
    %v2031 = vadd.f32 %v1176, %v2030
    %2032 = vmatmul.f32.gmra.mxu0 %v129
    %v2033 = vpop.f32.mrf.mxu0
    %v2034 = vadd.f32 %v1176, %v2033
    %2035 = vmatmul.f32.gmra.mxu0 %v133
    %v2036 = vpop.f32.mrf.mxu0
    %v2037 = vadd.f32 %v1176, %v2036
    %2038 = vmatmul.f32.gmra.mxu0 %v137
    %v2039 = vpop.f32.mrf.mxu0
    %v2040 = vadd.f32 %v1176, %v2039
    %2041 = vdwg.mxu0
    %2042 = vmatpush.msra.mxu0 %v644
    %2043 = vmatpush.msra.mxu0 %v628
    %2044 = vmatpush.msra.mxu0 %v612
    %2045 = vmatpush.msra.mxu0 %v596
    %2046 = vmatpush.msra.mxu0 %v580
    %2047 = vmatpush.msra.mxu0 %v564
    %2048 = vmatpush.msra.mxu0 %v548
    %2049 = vmatpush.msra.mxu0 %v532
    %2050 = vmatpush.msra.mxu0 %v516
    %2051 = vmatpush.msra.mxu0 %v500
    %2052 = vmatpush.msra.mxu0 %v484
    %2053 = vmatpush.msra.mxu0 %v468
    %2054 = vmatpush.msra.mxu0 %v452
    %2055 = vmatpush.msra.mxu0 %v436
    %2056 = vmatpush.msra.mxu0 %v420
    %2057 = vmatpush.msra.mxu0 %v404
    %2058 = vmatmul.f32.gmra.mxu0 %v126
    %v2059 = vpop.f32.mrf.mxu0
    %v2060 = vadd.f32 %v2031, %v2059
    %2061 = vmatmul.f32.gmra.mxu0 %v130
    %v2062 = vpop.f32.mrf.mxu0
    %v2063 = vadd.f32 %v2034, %v2062
    %2064 = vmatmul.f32.gmra.mxu0 %v134
    %v2065 = vpop.f32.mrf.mxu0
    %v2066 = vadd.f32 %v2037, %v2065
    %2067 = vmatmul.f32.gmra.mxu0 %v138
    %v2068 = vpop.f32.mrf.mxu0
    %v2069 = vadd.f32 %v2040, %v2068
    %2070 = vdwg.mxu0
    %2071 = vmatpush.msra.mxu0 %v900
    %2072 = vmatpush.msra.mxu0 %v884
    %2073 = vmatpush.msra.mxu0 %v868
    %2074 = vmatpush.msra.mxu0 %v852
    %2075 = vmatpush.msra.mxu0 %v836
    %2076 = vmatpush.msra.mxu0 %v820
    %2077 = vmatpush.msra.mxu0 %v804
    %2078 = vmatpush.msra.mxu0 %v788
    %2079 = vmatpush.msra.mxu0 %v772
    %2080 = vmatpush.msra.mxu0 %v756
    %2081 = vmatpush.msra.mxu0 %v740
    %2082 = vmatpush.msra.mxu0 %v724
    %2083 = vmatpush.msra.mxu0 %v708
    %2084 = vmatpush.msra.mxu0 %v692
    %2085 = vmatpush.msra.mxu0 %v676
    %2086 = vmatpush.msra.mxu0 %v660
    %2087 = vmatmul.f32.gmra.mxu0 %v127
    %v2088 = vpop.f32.mrf.mxu0
    %v2089 = vadd.f32 %v2060, %v2088
    %2090 = vmatmul.f32.gmra.mxu0 %v131
    %v2091 = vpop.f32.mrf.mxu0
    %v2092 = vadd.f32 %v2063, %v2091
    %2093 = vmatmul.f32.gmra.mxu0 %v135
    %v2094 = vpop.f32.mrf.mxu0
    %v2095 = vadd.f32 %v2066, %v2094
    %2096 = vmatmul.f32.gmra.mxu0 %v139
    %v2097 = vpop.f32.mrf.mxu0
    %v2098 = vadd.f32 %v2069, %v2097
    %2099 = vdwg.mxu0
    %2100 = vmatpush.msra.mxu0 %v1156
    %2101 = vmatpush.msra.mxu0 %v1140
    %2102 = vmatpush.msra.mxu0 %v1124
    %2103 = vmatpush.msra.mxu0 %v1108
    %2104 = vmatpush.msra.mxu0 %v1092
    %2105 = vmatpush.msra.mxu0 %v1076
    %2106 = vmatpush.msra.mxu0 %v1060
    %2107 = vmatpush.msra.mxu0 %v1044
    %2108 = vmatpush.msra.mxu0 %v1028
    %2109 = vmatpush.msra.mxu0 %v1012
    %2110 = vmatpush.msra.mxu0 %v996
    %2111 = vmatpush.msra.mxu0 %v980
    %2112 = vmatpush.msra.mxu0 %v964
    %2113 = vmatpush.msra.mxu0 %v948
    %2114 = vmatpush.msra.mxu0 %v932
    %2115 = vmatpush.msra.mxu0 %v916
    %2116 = vmatmul.f32.gmra.mxu0 %v128
    %v2117 = vpop.f32.mrf.mxu0
    %v2118 = vadd.f32 %v2089, %v2117
    %2119 = vmatmul.f32.gmra.mxu0 %v132
    %v2120 = vpop.f32.mrf.mxu0
    %v2121 = vadd.f32 %v2092, %v2120
    %2122 = vmatmul.f32.gmra.mxu0 %v136
    %v2123 = vpop.f32.mrf.mxu0
    %v2124 = vadd.f32 %v2095, %v2123
    %2125 = vmatmul.f32.gmra.mxu0 %v140
    %v2126 = vpop.f32.mrf.mxu0
    %v2127 = vadd.f32 %v2098, %v2126
    %2128 = vdwg.mxu0
    %2129 = vmatpush.msra.mxu0 %v389
    %2130 = vmatpush.msra.mxu0 %v373
    %2131 = vmatpush.msra.mxu0 %v357
    %2132 = vmatpush.msra.mxu0 %v341
    %2133 = vmatpush.msra.mxu0 %v325
    %2134 = vmatpush.msra.mxu0 %v309
    %2135 = vmatpush.msra.mxu0 %v293
    %2136 = vmatpush.msra.mxu0 %v277
    %2137 = vmatpush.msra.mxu0 %v261
    %2138 = vmatpush.msra.mxu0 %v245
    %2139 = vmatpush.msra.mxu0 %v229
    %2140 = vmatpush.msra.mxu0 %v213
    %2141 = vmatpush.msra.mxu0 %v197
    %2142 = vmatpush.msra.mxu0 %v181
    %2143 = vmatpush.msra.mxu0 %v165
    %2144 = vmatpush.msra.mxu0 %v149
    %2145 = vmatmul.f32.gmra.mxu0 %v125
    %v2146 = vpop.f32.mrf.mxu0
    %v2147 = vadd.f32 %v1177, %v2146
    %2148 = vmatmul.f32.gmra.mxu0 %v129
    %v2149 = vpop.f32.mrf.mxu0
    %v2150 = vadd.f32 %v1177, %v2149
    %2151 = vmatmul.f32.gmra.mxu0 %v133
    %v2152 = vpop.f32.mrf.mxu0
    %v2153 = vadd.f32 %v1177, %v2152
    %2154 = vmatmul.f32.gmra.mxu0 %v137
    %v2155 = vpop.f32.mrf.mxu0
    %v2156 = vadd.f32 %v1177, %v2155
    %2157 = vdwg.mxu0
    %2158 = vmatpush.msra.mxu0 %v645
    %2159 = vmatpush.msra.mxu0 %v629
    %2160 = vmatpush.msra.mxu0 %v613
    %2161 = vmatpush.msra.mxu0 %v597
    %2162 = vmatpush.msra.mxu0 %v581
    %2163 = vmatpush.msra.mxu0 %v565
    %2164 = vmatpush.msra.mxu0 %v549
    %2165 = vmatpush.msra.mxu0 %v533
    %2166 = vmatpush.msra.mxu0 %v517
    %2167 = vmatpush.msra.mxu0 %v501
    %2168 = vmatpush.msra.mxu0 %v485
    %2169 = vmatpush.msra.mxu0 %v469
    %2170 = vmatpush.msra.mxu0 %v453
    %2171 = vmatpush.msra.mxu0 %v437
    %2172 = vmatpush.msra.mxu0 %v421
    %2173 = vmatpush.msra.mxu0 %v405
    %2174 = vmatmul.f32.gmra.mxu0 %v126
    %v2175 = vpop.f32.mrf.mxu0
    %v2176 = vadd.f32 %v2147, %v2175
    %2177 = vmatmul.f32.gmra.mxu0 %v130
    %v2178 = vpop.f32.mrf.mxu0
    %v2179 = vadd.f32 %v2150, %v2178
    %2180 = vmatmul.f32.gmra.mxu0 %v134
    %v2181 = vpop.f32.mrf.mxu0
    %v2182 = vadd.f32 %v2153, %v2181
    %2183 = vmatmul.f32.gmra.mxu0 %v138
    %v2184 = vpop.f32.mrf.mxu0
    %v2185 = vadd.f32 %v2156, %v2184
    %2186 = vdwg.mxu0
    %2187 = vmatpush.msra.mxu0 %v901
    %2188 = vmatpush.msra.mxu0 %v885
    %2189 = vmatpush.msra.mxu0 %v869
    %2190 = vmatpush.msra.mxu0 %v853
    %2191 = vmatpush.msra.mxu0 %v837
    %2192 = vmatpush.msra.mxu0 %v821
    %2193 = vmatpush.msra.mxu0 %v805
    %2194 = vmatpush.msra.mxu0 %v789
    %2195 = vmatpush.msra.mxu0 %v773
    %2196 = vmatpush.msra.mxu0 %v757
    %2197 = vmatpush.msra.mxu0 %v741
    %2198 = vmatpush.msra.mxu0 %v725
    %2199 = vmatpush.msra.mxu0 %v709
    %2200 = vmatpush.msra.mxu0 %v693
    %2201 = vmatpush.msra.mxu0 %v677
    %2202 = vmatpush.msra.mxu0 %v661
    %2203 = vmatmul.f32.gmra.mxu0 %v127
    %v2204 = vpop.f32.mrf.mxu0
    %v2205 = vadd.f32 %v2176, %v2204
    %2206 = vmatmul.f32.gmra.mxu0 %v131
    %v2207 = vpop.f32.mrf.mxu0
    %v2208 = vadd.f32 %v2179, %v2207
    %2209 = vmatmul.f32.gmra.mxu0 %v135
    %v2210 = vpop.f32.mrf.mxu0
    %v2211 = vadd.f32 %v2182, %v2210
    %2212 = vmatmul.f32.gmra.mxu0 %v139
    %v2213 = vpop.f32.mrf.mxu0
    %v2214 = vadd.f32 %v2185, %v2213
    %2215 = vdwg.mxu0
    %2216 = vmatpush.msra.mxu0 %v1157
    %2217 = vmatpush.msra.mxu0 %v1141
    %2218 = vmatpush.msra.mxu0 %v1125
    %2219 = vmatpush.msra.mxu0 %v1109
    %2220 = vmatpush.msra.mxu0 %v1093
    %2221 = vmatpush.msra.mxu0 %v1077
    %2222 = vmatpush.msra.mxu0 %v1061
    %2223 = vmatpush.msra.mxu0 %v1045
    %2224 = vmatpush.msra.mxu0 %v1029
    %2225 = vmatpush.msra.mxu0 %v1013
    %2226 = vmatpush.msra.mxu0 %v997
    %2227 = vmatpush.msra.mxu0 %v981
    %2228 = vmatpush.msra.mxu0 %v965
    %2229 = vmatpush.msra.mxu0 %v949
    %2230 = vmatpush.msra.mxu0 %v933
    %2231 = vmatpush.msra.mxu0 %v917
    %2232 = vmatmul.f32.gmra.mxu0 %v128
    %v2233 = vpop.f32.mrf.mxu0
    %v2234 = vadd.f32 %v2205, %v2233
    %2235 = vmatmul.f32.gmra.mxu0 %v132
    %v2236 = vpop.f32.mrf.mxu0
    %v2237 = vadd.f32 %v2208, %v2236
    %2238 = vmatmul.f32.gmra.mxu0 %v136
    %v2239 = vpop.f32.mrf.mxu0
    %v2240 = vadd.f32 %v2211, %v2239
    %2241 = vmatmul.f32.gmra.mxu0 %v140
    %v2242 = vpop.f32.mrf.mxu0
    %v2243 = vadd.f32 %v2214, %v2242
    %2244 = vdwg.mxu0
    %2245 = vmatpush.msra.mxu0 %v390
    %2246 = vmatpush.msra.mxu0 %v374
    %2247 = vmatpush.msra.mxu0 %v358
    %2248 = vmatpush.msra.mxu0 %v342
    %2249 = vmatpush.msra.mxu0 %v326
    %2250 = vmatpush.msra.mxu0 %v310
    %2251 = vmatpush.msra.mxu0 %v294
    %2252 = vmatpush.msra.mxu0 %v278
    %2253 = vmatpush.msra.mxu0 %v262
    %2254 = vmatpush.msra.mxu0 %v246
    %2255 = vmatpush.msra.mxu0 %v230
    %2256 = vmatpush.msra.mxu0 %v214
    %2257 = vmatpush.msra.mxu0 %v198
    %2258 = vmatpush.msra.mxu0 %v182
    %2259 = vmatpush.msra.mxu0 %v166
    %2260 = vmatpush.msra.mxu0 %v150
    %2261 = vmatmul.f32.gmra.mxu0 %v125
    %v2262 = vpop.f32.mrf.mxu0
    %v2263 = vadd.f32 %v1178, %v2262
    %2264 = vmatmul.f32.gmra.mxu0 %v129
    %v2265 = vpop.f32.mrf.mxu0
    %v2266 = vadd.f32 %v1178, %v2265
    %2267 = vmatmul.f32.gmra.mxu0 %v133
    %v2268 = vpop.f32.mrf.mxu0
    %v2269 = vadd.f32 %v1178, %v2268
    %2270 = vmatmul.f32.gmra.mxu0 %v137
    %v2271 = vpop.f32.mrf.mxu0
    %v2272 = vadd.f32 %v1178, %v2271
    %2273 = vdwg.mxu0
    %2274 = vmatpush.msra.mxu0 %v646
    %2275 = vmatpush.msra.mxu0 %v630
    %2276 = vmatpush.msra.mxu0 %v614
    %2277 = vmatpush.msra.mxu0 %v598
    %2278 = vmatpush.msra.mxu0 %v582
    %2279 = vmatpush.msra.mxu0 %v566
    %2280 = vmatpush.msra.mxu0 %v550
    %2281 = vmatpush.msra.mxu0 %v534
    %2282 = vmatpush.msra.mxu0 %v518
    %2283 = vmatpush.msra.mxu0 %v502
    %2284 = vmatpush.msra.mxu0 %v486
    %2285 = vmatpush.msra.mxu0 %v470
    %2286 = vmatpush.msra.mxu0 %v454
    %2287 = vmatpush.msra.mxu0 %v438
    %2288 = vmatpush.msra.mxu0 %v422
    %2289 = vmatpush.msra.mxu0 %v406
    %2290 = vmatmul.f32.gmra.mxu0 %v126
    %v2291 = vpop.f32.mrf.mxu0
    %v2292 = vadd.f32 %v2263, %v2291
    %2293 = vmatmul.f32.gmra.mxu0 %v130
    %v2294 = vpop.f32.mrf.mxu0
    %v2295 = vadd.f32 %v2266, %v2294
    %2296 = vmatmul.f32.gmra.mxu0 %v134
    %v2297 = vpop.f32.mrf.mxu0
    %v2298 = vadd.f32 %v2269, %v2297
    %2299 = vmatmul.f32.gmra.mxu0 %v138
    %v2300 = vpop.f32.mrf.mxu0
    %v2301 = vadd.f32 %v2272, %v2300
    %2302 = vdwg.mxu0
    %2303 = vmatpush.msra.mxu0 %v902
    %2304 = vmatpush.msra.mxu0 %v886
    %2305 = vmatpush.msra.mxu0 %v870
    %2306 = vmatpush.msra.mxu0 %v854
    %2307 = vmatpush.msra.mxu0 %v838
    %2308 = vmatpush.msra.mxu0 %v822
    %2309 = vmatpush.msra.mxu0 %v806
    %2310 = vmatpush.msra.mxu0 %v790
    %2311 = vmatpush.msra.mxu0 %v774
    %2312 = vmatpush.msra.mxu0 %v758
    %2313 = vmatpush.msra.mxu0 %v742
    %2314 = vmatpush.msra.mxu0 %v726
    %2315 = vmatpush.msra.mxu0 %v710
    %2316 = vmatpush.msra.mxu0 %v694
    %2317 = vmatpush.msra.mxu0 %v678
    %2318 = vmatpush.msra.mxu0 %v662
    %2319 = vmatmul.f32.gmra.mxu0 %v127
    %v2320 = vpop.f32.mrf.mxu0
    %v2321 = vadd.f32 %v2292, %v2320
    %2322 = vmatmul.f32.gmra.mxu0 %v131
    %v2323 = vpop.f32.mrf.mxu0
    %v2324 = vadd.f32 %v2295, %v2323
    %2325 = vmatmul.f32.gmra.mxu0 %v135
    %v2326 = vpop.f32.mrf.mxu0
    %v2327 = vadd.f32 %v2298, %v2326
    %2328 = vmatmul.f32.gmra.mxu0 %v139
    %v2329 = vpop.f32.mrf.mxu0
    %v2330 = vadd.f32 %v2301, %v2329
    %2331 = vdwg.mxu0
    %2332 = vmatpush.msra.mxu0 %v1158
    %2333 = vmatpush.msra.mxu0 %v1142
    %2334 = vmatpush.msra.mxu0 %v1126
    %2335 = vmatpush.msra.mxu0 %v1110
    %2336 = vmatpush.msra.mxu0 %v1094
    %2337 = vmatpush.msra.mxu0 %v1078
    %2338 = vmatpush.msra.mxu0 %v1062
    %2339 = vmatpush.msra.mxu0 %v1046
    %2340 = vmatpush.msra.mxu0 %v1030
    %2341 = vmatpush.msra.mxu0 %v1014
    %2342 = vmatpush.msra.mxu0 %v998
    %2343 = vmatpush.msra.mxu0 %v982
    %2344 = vmatpush.msra.mxu0 %v966
    %2345 = vmatpush.msra.mxu0 %v950
    %2346 = vmatpush.msra.mxu0 %v934
    %2347 = vmatpush.msra.mxu0 %v918
    %2348 = vmatmul.f32.gmra.mxu0 %v128
    %v2349 = vpop.f32.mrf.mxu0
    %v2350 = vadd.f32 %v2321, %v2349
    %2351 = vmatmul.f32.gmra.mxu0 %v132
    %v2352 = vpop.f32.mrf.mxu0
    %v2353 = vadd.f32 %v2324, %v2352
    %2354 = vmatmul.f32.gmra.mxu0 %v136
    %v2355 = vpop.f32.mrf.mxu0
    %v2356 = vadd.f32 %v2327, %v2355
    %2357 = vmatmul.f32.gmra.mxu0 %v140
    %v2358 = vpop.f32.mrf.mxu0
    %v2359 = vadd.f32 %v2330, %v2358
    %2360 = vdwg.mxu0
    %2361 = vmatpush.msra.mxu0 %v391
    %2362 = vmatpush.msra.mxu0 %v375
    %2363 = vmatpush.msra.mxu0 %v359
    %2364 = vmatpush.msra.mxu0 %v343
    %2365 = vmatpush.msra.mxu0 %v327
    %2366 = vmatpush.msra.mxu0 %v311
    %2367 = vmatpush.msra.mxu0 %v295
    %2368 = vmatpush.msra.mxu0 %v279
    %2369 = vmatpush.msra.mxu0 %v263
    %2370 = vmatpush.msra.mxu0 %v247
    %2371 = vmatpush.msra.mxu0 %v231
    %2372 = vmatpush.msra.mxu0 %v215
    %2373 = vmatpush.msra.mxu0 %v199
    %2374 = vmatpush.msra.mxu0 %v183
    %2375 = vmatpush.msra.mxu0 %v167
    %2376 = vmatpush.msra.mxu0 %v151
    %2377 = vmatmul.f32.gmra.mxu0 %v125
    %v2378 = vpop.f32.mrf.mxu0
    %v2379 = vadd.f32 %v1179, %v2378
    %2380 = vmatmul.f32.gmra.mxu0 %v129
    %v2381 = vpop.f32.mrf.mxu0
    %v2382 = vadd.f32 %v1179, %v2381
    %2383 = vmatmul.f32.gmra.mxu0 %v133
    %v2384 = vpop.f32.mrf.mxu0
    %v2385 = vadd.f32 %v1179, %v2384
    %2386 = vmatmul.f32.gmra.mxu0 %v137
    %v2387 = vpop.f32.mrf.mxu0
    %v2388 = vadd.f32 %v1179, %v2387
    %2389 = vdwg.mxu0
    %2390 = vmatpush.msra.mxu0 %v647
    %2391 = vmatpush.msra.mxu0 %v631
    %2392 = vmatpush.msra.mxu0 %v615
    %2393 = vmatpush.msra.mxu0 %v599
    %2394 = vmatpush.msra.mxu0 %v583
    %2395 = vmatpush.msra.mxu0 %v567
    %2396 = vmatpush.msra.mxu0 %v551
    %2397 = vmatpush.msra.mxu0 %v535
    %2398 = vmatpush.msra.mxu0 %v519
    %2399 = vmatpush.msra.mxu0 %v503
    %2400 = vmatpush.msra.mxu0 %v487
    %2401 = vmatpush.msra.mxu0 %v471
    %2402 = vmatpush.msra.mxu0 %v455
    %2403 = vmatpush.msra.mxu0 %v439
    %2404 = vmatpush.msra.mxu0 %v423
    %2405 = vmatpush.msra.mxu0 %v407
    %2406 = vmatmul.f32.gmra.mxu0 %v126
    %v2407 = vpop.f32.mrf.mxu0
    %v2408 = vadd.f32 %v2379, %v2407
    %2409 = vmatmul.f32.gmra.mxu0 %v130
    %v2410 = vpop.f32.mrf.mxu0
    %v2411 = vadd.f32 %v2382, %v2410
    %2412 = vmatmul.f32.gmra.mxu0 %v134
    %v2413 = vpop.f32.mrf.mxu0
    %v2414 = vadd.f32 %v2385, %v2413
    %2415 = vmatmul.f32.gmra.mxu0 %v138
    %v2416 = vpop.f32.mrf.mxu0
    %v2417 = vadd.f32 %v2388, %v2416
    %2418 = vdwg.mxu0
    %2419 = vmatpush.msra.mxu0 %v903
    %2420 = vmatpush.msra.mxu0 %v887
    %2421 = vmatpush.msra.mxu0 %v871
    %2422 = vmatpush.msra.mxu0 %v855
    %2423 = vmatpush.msra.mxu0 %v839
    %2424 = vmatpush.msra.mxu0 %v823
    %2425 = vmatpush.msra.mxu0 %v807
    %2426 = vmatpush.msra.mxu0 %v791
    %2427 = vmatpush.msra.mxu0 %v775
    %2428 = vmatpush.msra.mxu0 %v759
    %2429 = vmatpush.msra.mxu0 %v743
    %2430 = vmatpush.msra.mxu0 %v727
    %2431 = vmatpush.msra.mxu0 %v711
    %2432 = vmatpush.msra.mxu0 %v695
    %2433 = vmatpush.msra.mxu0 %v679
    %2434 = vmatpush.msra.mxu0 %v663
    %2435 = vmatmul.f32.gmra.mxu0 %v127
    %v2436 = vpop.f32.mrf.mxu0
    %v2437 = vadd.f32 %v2408, %v2436
    %2438 = vmatmul.f32.gmra.mxu0 %v131
    %v2439 = vpop.f32.mrf.mxu0
    %v2440 = vadd.f32 %v2411, %v2439
    %2441 = vmatmul.f32.gmra.mxu0 %v135
    %v2442 = vpop.f32.mrf.mxu0
    %v2443 = vadd.f32 %v2414, %v2442
    %2444 = vmatmul.f32.gmra.mxu0 %v139
    %v2445 = vpop.f32.mrf.mxu0
    %v2446 = vadd.f32 %v2417, %v2445
    %2447 = vdwg.mxu0
    %2448 = vmatpush.msra.mxu0 %v1159
    %2449 = vmatpush.msra.mxu0 %v1143
    %2450 = vmatpush.msra.mxu0 %v1127
    %2451 = vmatpush.msra.mxu0 %v1111
    %2452 = vmatpush.msra.mxu0 %v1095
    %2453 = vmatpush.msra.mxu0 %v1079
    %2454 = vmatpush.msra.mxu0 %v1063
    %2455 = vmatpush.msra.mxu0 %v1047
    %2456 = vmatpush.msra.mxu0 %v1031
    %2457 = vmatpush.msra.mxu0 %v1015
    %2458 = vmatpush.msra.mxu0 %v999
    %2459 = vmatpush.msra.mxu0 %v983
    %2460 = vmatpush.msra.mxu0 %v967
    %2461 = vmatpush.msra.mxu0 %v951
    %2462 = vmatpush.msra.mxu0 %v935
    %2463 = vmatpush.msra.mxu0 %v919
    %2464 = vmatmul.f32.gmra.mxu0 %v128
    %v2465 = vpop.f32.mrf.mxu0
    %v2466 = vadd.f32 %v2437, %v2465
    %2467 = vmatmul.f32.gmra.mxu0 %v132
    %v2468 = vpop.f32.mrf.mxu0
    %v2469 = vadd.f32 %v2440, %v2468
    %2470 = vmatmul.f32.gmra.mxu0 %v136
    %v2471 = vpop.f32.mrf.mxu0
    %v2472 = vadd.f32 %v2443, %v2471
    %2473 = vmatmul.f32.gmra.mxu0 %v140
    %v2474 = vpop.f32.mrf.mxu0
    %v2475 = vadd.f32 %v2446, %v2474
    %2476 = vdwg.mxu0
    %2477 = vmatpush.msra.mxu0 %v392
    %2478 = vmatpush.msra.mxu0 %v376
    %2479 = vmatpush.msra.mxu0 %v360
    %2480 = vmatpush.msra.mxu0 %v344
    %2481 = vmatpush.msra.mxu0 %v328
    %2482 = vmatpush.msra.mxu0 %v312
    %2483 = vmatpush.msra.mxu0 %v296
    %2484 = vmatpush.msra.mxu0 %v280
    %2485 = vmatpush.msra.mxu0 %v264
    %2486 = vmatpush.msra.mxu0 %v248
    %2487 = vmatpush.msra.mxu0 %v232
    %2488 = vmatpush.msra.mxu0 %v216
    %2489 = vmatpush.msra.mxu0 %v200
    %2490 = vmatpush.msra.mxu0 %v184
    %2491 = vmatpush.msra.mxu0 %v168
    %2492 = vmatpush.msra.mxu0 %v152
    %2493 = vmatmul.f32.gmra.mxu0 %v125
    %v2494 = vpop.f32.mrf.mxu0
    %v2495 = vadd.f32 %v1180, %v2494
    %2496 = vmatmul.f32.gmra.mxu0 %v129
    %v2497 = vpop.f32.mrf.mxu0
    %v2498 = vadd.f32 %v1180, %v2497
    %2499 = vmatmul.f32.gmra.mxu0 %v133
    %v2500 = vpop.f32.mrf.mxu0
    %v2501 = vadd.f32 %v1180, %v2500
    %2502 = vmatmul.f32.gmra.mxu0 %v137
    %v2503 = vpop.f32.mrf.mxu0
    %v2504 = vadd.f32 %v1180, %v2503
    %2505 = vdwg.mxu0
    %2506 = vmatpush.msra.mxu0 %v648
    %2507 = vmatpush.msra.mxu0 %v632
    %2508 = vmatpush.msra.mxu0 %v616
    %2509 = vmatpush.msra.mxu0 %v600
    %2510 = vmatpush.msra.mxu0 %v584
    %2511 = vmatpush.msra.mxu0 %v568
    %2512 = vmatpush.msra.mxu0 %v552
    %2513 = vmatpush.msra.mxu0 %v536
    %2514 = vmatpush.msra.mxu0 %v520
    %2515 = vmatpush.msra.mxu0 %v504
    %2516 = vmatpush.msra.mxu0 %v488
    %2517 = vmatpush.msra.mxu0 %v472
    %2518 = vmatpush.msra.mxu0 %v456
    %2519 = vmatpush.msra.mxu0 %v440
    %2520 = vmatpush.msra.mxu0 %v424
    %2521 = vmatpush.msra.mxu0 %v408
    %2522 = vmatmul.f32.gmra.mxu0 %v126
    %v2523 = vpop.f32.mrf.mxu0
    %v2524 = vadd.f32 %v2495, %v2523
    %2525 = vmatmul.f32.gmra.mxu0 %v130
    %v2526 = vpop.f32.mrf.mxu0
    %v2527 = vadd.f32 %v2498, %v2526
    %2528 = vmatmul.f32.gmra.mxu0 %v134
    %v2529 = vpop.f32.mrf.mxu0
    %v2530 = vadd.f32 %v2501, %v2529
    %2531 = vmatmul.f32.gmra.mxu0 %v138
    %v2532 = vpop.f32.mrf.mxu0
    %v2533 = vadd.f32 %v2504, %v2532
    %2534 = vdwg.mxu0
    %2535 = vmatpush.msra.mxu0 %v904
    %2536 = vmatpush.msra.mxu0 %v888
    %2537 = vmatpush.msra.mxu0 %v872
    %2538 = vmatpush.msra.mxu0 %v856
    %2539 = vmatpush.msra.mxu0 %v840
    %2540 = vmatpush.msra.mxu0 %v824
    %2541 = vmatpush.msra.mxu0 %v808
    %2542 = vmatpush.msra.mxu0 %v792
    %2543 = vmatpush.msra.mxu0 %v776
    %2544 = vmatpush.msra.mxu0 %v760
    %2545 = vmatpush.msra.mxu0 %v744
    %2546 = vmatpush.msra.mxu0 %v728
    %2547 = vmatpush.msra.mxu0 %v712
    %2548 = vmatpush.msra.mxu0 %v696
    %2549 = vmatpush.msra.mxu0 %v680
    %2550 = vmatpush.msra.mxu0 %v664
    %2551 = vmatmul.f32.gmra.mxu0 %v127
    %v2552 = vpop.f32.mrf.mxu0
    %v2553 = vadd.f32 %v2524, %v2552
    %2554 = vmatmul.f32.gmra.mxu0 %v131
    %v2555 = vpop.f32.mrf.mxu0
    %v2556 = vadd.f32 %v2527, %v2555
    %2557 = vmatmul.f32.gmra.mxu0 %v135
    %v2558 = vpop.f32.mrf.mxu0
    %v2559 = vadd.f32 %v2530, %v2558
    %2560 = vmatmul.f32.gmra.mxu0 %v139
    %v2561 = vpop.f32.mrf.mxu0
    %v2562 = vadd.f32 %v2533, %v2561
    %2563 = vdwg.mxu0
    %2564 = vmatpush.msra.mxu0 %v1160
    %2565 = vmatpush.msra.mxu0 %v1144
    %2566 = vmatpush.msra.mxu0 %v1128
    %2567 = vmatpush.msra.mxu0 %v1112
    %2568 = vmatpush.msra.mxu0 %v1096
    %2569 = vmatpush.msra.mxu0 %v1080
    %2570 = vmatpush.msra.mxu0 %v1064
    %2571 = vmatpush.msra.mxu0 %v1048
    %2572 = vmatpush.msra.mxu0 %v1032
    %2573 = vmatpush.msra.mxu0 %v1016
    %2574 = vmatpush.msra.mxu0 %v1000
    %2575 = vmatpush.msra.mxu0 %v984
    %2576 = vmatpush.msra.mxu0 %v968
    %2577 = vmatpush.msra.mxu0 %v952
    %2578 = vmatpush.msra.mxu0 %v936
    %2579 = vmatpush.msra.mxu0 %v920
    %2580 = vmatmul.f32.gmra.mxu0 %v128
    %v2581 = vpop.f32.mrf.mxu0
    %v2582 = vadd.f32 %v2553, %v2581
    %2583 = vmatmul.f32.gmra.mxu0 %v132
    %v2584 = vpop.f32.mrf.mxu0
    %v2585 = vadd.f32 %v2556, %v2584
    %2586 = vmatmul.f32.gmra.mxu0 %v136
    %v2587 = vpop.f32.mrf.mxu0
    %v2588 = vadd.f32 %v2559, %v2587
    %2589 = vmatmul.f32.gmra.mxu0 %v140
    %v2590 = vpop.f32.mrf.mxu0
    %v2591 = vadd.f32 %v2562, %v2590
    %2592 = vdwg.mxu0
    %2593 = vmatpush.msra.mxu0 %v393
    %2594 = vmatpush.msra.mxu0 %v377
    %2595 = vmatpush.msra.mxu0 %v361
    %2596 = vmatpush.msra.mxu0 %v345
    %2597 = vmatpush.msra.mxu0 %v329
    %2598 = vmatpush.msra.mxu0 %v313
    %2599 = vmatpush.msra.mxu0 %v297
    %2600 = vmatpush.msra.mxu0 %v281
    %2601 = vmatpush.msra.mxu0 %v265
    %2602 = vmatpush.msra.mxu0 %v249
    %2603 = vmatpush.msra.mxu0 %v233
    %2604 = vmatpush.msra.mxu0 %v217
    %2605 = vmatpush.msra.mxu0 %v201
    %2606 = vmatpush.msra.mxu0 %v185
    %2607 = vmatpush.msra.mxu0 %v169
    %2608 = vmatpush.msra.mxu0 %v153
    %2609 = vmatmul.f32.gmra.mxu0 %v125
    %v2610 = vpop.f32.mrf.mxu0
    %v2611 = vadd.f32 %v1181, %v2610
    %2612 = vmatmul.f32.gmra.mxu0 %v129
    %v2613 = vpop.f32.mrf.mxu0
    %v2614 = vadd.f32 %v1181, %v2613
    %2615 = vmatmul.f32.gmra.mxu0 %v133
    %v2616 = vpop.f32.mrf.mxu0
    %v2617 = vadd.f32 %v1181, %v2616
    %2618 = vmatmul.f32.gmra.mxu0 %v137
    %v2619 = vpop.f32.mrf.mxu0
    %v2620 = vadd.f32 %v1181, %v2619
    %2621 = vdwg.mxu0
    %2622 = vmatpush.msra.mxu0 %v649
    %2623 = vmatpush.msra.mxu0 %v633
    %2624 = vmatpush.msra.mxu0 %v617
    %2625 = vmatpush.msra.mxu0 %v601
    %2626 = vmatpush.msra.mxu0 %v585
    %2627 = vmatpush.msra.mxu0 %v569
    %2628 = vmatpush.msra.mxu0 %v553
    %2629 = vmatpush.msra.mxu0 %v537
    %2630 = vmatpush.msra.mxu0 %v521
    %2631 = vmatpush.msra.mxu0 %v505
    %2632 = vmatpush.msra.mxu0 %v489
    %2633 = vmatpush.msra.mxu0 %v473
    %2634 = vmatpush.msra.mxu0 %v457
    %2635 = vmatpush.msra.mxu0 %v441
    %2636 = vmatpush.msra.mxu0 %v425
    %2637 = vmatpush.msra.mxu0 %v409
    %2638 = vmatmul.f32.gmra.mxu0 %v126
    %v2639 = vpop.f32.mrf.mxu0
    %v2640 = vadd.f32 %v2611, %v2639
    %2641 = vmatmul.f32.gmra.mxu0 %v130
    %v2642 = vpop.f32.mrf.mxu0
    %v2643 = vadd.f32 %v2614, %v2642
    %2644 = vmatmul.f32.gmra.mxu0 %v134
    %v2645 = vpop.f32.mrf.mxu0
    %v2646 = vadd.f32 %v2617, %v2645
    %2647 = vmatmul.f32.gmra.mxu0 %v138
    %v2648 = vpop.f32.mrf.mxu0
    %v2649 = vadd.f32 %v2620, %v2648
    %2650 = vdwg.mxu0
    %2651 = vmatpush.msra.mxu0 %v905
    %2652 = vmatpush.msra.mxu0 %v889
    %2653 = vmatpush.msra.mxu0 %v873
    %2654 = vmatpush.msra.mxu0 %v857
    %2655 = vmatpush.msra.mxu0 %v841
    %2656 = vmatpush.msra.mxu0 %v825
    %2657 = vmatpush.msra.mxu0 %v809
    %2658 = vmatpush.msra.mxu0 %v793
    %2659 = vmatpush.msra.mxu0 %v777
    %2660 = vmatpush.msra.mxu0 %v761
    %2661 = vmatpush.msra.mxu0 %v745
    %2662 = vmatpush.msra.mxu0 %v729
    %2663 = vmatpush.msra.mxu0 %v713
    %2664 = vmatpush.msra.mxu0 %v697
    %2665 = vmatpush.msra.mxu0 %v681
    %2666 = vmatpush.msra.mxu0 %v665
    %2667 = vmatmul.f32.gmra.mxu0 %v127
    %v2668 = vpop.f32.mrf.mxu0
    %v2669 = vadd.f32 %v2640, %v2668
    %2670 = vmatmul.f32.gmra.mxu0 %v131
    %v2671 = vpop.f32.mrf.mxu0
    %v2672 = vadd.f32 %v2643, %v2671
    %2673 = vmatmul.f32.gmra.mxu0 %v135
    %v2674 = vpop.f32.mrf.mxu0
    %v2675 = vadd.f32 %v2646, %v2674
    %2676 = vmatmul.f32.gmra.mxu0 %v139
    %v2677 = vpop.f32.mrf.mxu0
    %v2678 = vadd.f32 %v2649, %v2677
    %2679 = vdwg.mxu0
    %2680 = vmatpush.msra.mxu0 %v1161
    %2681 = vmatpush.msra.mxu0 %v1145
    %2682 = vmatpush.msra.mxu0 %v1129
    %2683 = vmatpush.msra.mxu0 %v1113
    %2684 = vmatpush.msra.mxu0 %v1097
    %2685 = vmatpush.msra.mxu0 %v1081
    %2686 = vmatpush.msra.mxu0 %v1065
    %2687 = vmatpush.msra.mxu0 %v1049
    %2688 = vmatpush.msra.mxu0 %v1033
    %2689 = vmatpush.msra.mxu0 %v1017
    %2690 = vmatpush.msra.mxu0 %v1001
    %2691 = vmatpush.msra.mxu0 %v985
    %2692 = vmatpush.msra.mxu0 %v969
    %2693 = vmatpush.msra.mxu0 %v953
    %2694 = vmatpush.msra.mxu0 %v937
    %2695 = vmatpush.msra.mxu0 %v921
    %2696 = vmatmul.f32.gmra.mxu0 %v128
    %v2697 = vpop.f32.mrf.mxu0
    %v2698 = vadd.f32 %v2669, %v2697
    %2699 = vmatmul.f32.gmra.mxu0 %v132
    %v2700 = vpop.f32.mrf.mxu0
    %v2701 = vadd.f32 %v2672, %v2700
    %2702 = vmatmul.f32.gmra.mxu0 %v136
    %v2703 = vpop.f32.mrf.mxu0
    %v2704 = vadd.f32 %v2675, %v2703
    %2705 = vmatmul.f32.gmra.mxu0 %v140
    %v2706 = vpop.f32.mrf.mxu0
    %v2707 = vadd.f32 %v2678, %v2706
    %2708 = vdwg.mxu0
    %2709 = vmatpush.msra.mxu0 %v394
    %2710 = vmatpush.msra.mxu0 %v378
    %2711 = vmatpush.msra.mxu0 %v362
    %2712 = vmatpush.msra.mxu0 %v346
    %2713 = vmatpush.msra.mxu0 %v330
    %2714 = vmatpush.msra.mxu0 %v314
    %2715 = vmatpush.msra.mxu0 %v298
    %2716 = vmatpush.msra.mxu0 %v282
    %2717 = vmatpush.msra.mxu0 %v266
    %2718 = vmatpush.msra.mxu0 %v250
    %2719 = vmatpush.msra.mxu0 %v234
    %2720 = vmatpush.msra.mxu0 %v218
    %2721 = vmatpush.msra.mxu0 %v202
    %2722 = vmatpush.msra.mxu0 %v186
    %2723 = vmatpush.msra.mxu0 %v170
    %2724 = vmatpush.msra.mxu0 %v154
    %2725 = vmatmul.f32.gmra.mxu0 %v125
    %v2726 = vpop.f32.mrf.mxu0
    %v2727 = vadd.f32 %v1182, %v2726
    %2728 = vmatmul.f32.gmra.mxu0 %v129
    %v2729 = vpop.f32.mrf.mxu0
    %v2730 = vadd.f32 %v1182, %v2729
    %2731 = vmatmul.f32.gmra.mxu0 %v133
    %v2732 = vpop.f32.mrf.mxu0
    %v2733 = vadd.f32 %v1182, %v2732
    %2734 = vmatmul.f32.gmra.mxu0 %v137
    %v2735 = vpop.f32.mrf.mxu0
    %v2736 = vadd.f32 %v1182, %v2735
    %2737 = vdwg.mxu0
    %2738 = vmatpush.msra.mxu0 %v650
    %2739 = vmatpush.msra.mxu0 %v634
    %2740 = vmatpush.msra.mxu0 %v618
    %2741 = vmatpush.msra.mxu0 %v602
    %2742 = vmatpush.msra.mxu0 %v586
    %2743 = vmatpush.msra.mxu0 %v570
    %2744 = vmatpush.msra.mxu0 %v554
    %2745 = vmatpush.msra.mxu0 %v538
    %2746 = vmatpush.msra.mxu0 %v522
    %2747 = vmatpush.msra.mxu0 %v506
    %2748 = vmatpush.msra.mxu0 %v490
    %2749 = vmatpush.msra.mxu0 %v474
    %2750 = vmatpush.msra.mxu0 %v458
    %2751 = vmatpush.msra.mxu0 %v442
    %2752 = vmatpush.msra.mxu0 %v426
    %2753 = vmatpush.msra.mxu0 %v410
    %2754 = vmatmul.f32.gmra.mxu0 %v126
    %v2755 = vpop.f32.mrf.mxu0
    %v2756 = vadd.f32 %v2727, %v2755
    %2757 = vmatmul.f32.gmra.mxu0 %v130
    %v2758 = vpop.f32.mrf.mxu0
    %v2759 = vadd.f32 %v2730, %v2758
    %2760 = vmatmul.f32.gmra.mxu0 %v134
    %v2761 = vpop.f32.mrf.mxu0
    %v2762 = vadd.f32 %v2733, %v2761
    %2763 = vmatmul.f32.gmra.mxu0 %v138
    %v2764 = vpop.f32.mrf.mxu0
    %v2765 = vadd.f32 %v2736, %v2764
    %2766 = vdwg.mxu0
    %2767 = vmatpush.msra.mxu0 %v906
    %2768 = vmatpush.msra.mxu0 %v890
    %2769 = vmatpush.msra.mxu0 %v874
    %2770 = vmatpush.msra.mxu0 %v858
    %2771 = vmatpush.msra.mxu0 %v842
    %2772 = vmatpush.msra.mxu0 %v826
    %2773 = vmatpush.msra.mxu0 %v810
    %2774 = vmatpush.msra.mxu0 %v794
    %2775 = vmatpush.msra.mxu0 %v778
    %2776 = vmatpush.msra.mxu0 %v762
    %2777 = vmatpush.msra.mxu0 %v746
    %2778 = vmatpush.msra.mxu0 %v730
    %2779 = vmatpush.msra.mxu0 %v714
    %2780 = vmatpush.msra.mxu0 %v698
    %2781 = vmatpush.msra.mxu0 %v682
    %2782 = vmatpush.msra.mxu0 %v666
    %2783 = vmatmul.f32.gmra.mxu0 %v127
    %v2784 = vpop.f32.mrf.mxu0
    %v2785 = vadd.f32 %v2756, %v2784
    %2786 = vmatmul.f32.gmra.mxu0 %v131
    %v2787 = vpop.f32.mrf.mxu0
    %v2788 = vadd.f32 %v2759, %v2787
    %2789 = vmatmul.f32.gmra.mxu0 %v135
    %v2790 = vpop.f32.mrf.mxu0
    %v2791 = vadd.f32 %v2762, %v2790
    %2792 = vmatmul.f32.gmra.mxu0 %v139
    %v2793 = vpop.f32.mrf.mxu0
    %v2794 = vadd.f32 %v2765, %v2793
    %2795 = vdwg.mxu0
    %2796 = vmatpush.msra.mxu0 %v1162
    %2797 = vmatpush.msra.mxu0 %v1146
    %2798 = vmatpush.msra.mxu0 %v1130
    %2799 = vmatpush.msra.mxu0 %v1114
    %2800 = vmatpush.msra.mxu0 %v1098
    %2801 = vmatpush.msra.mxu0 %v1082
    %2802 = vmatpush.msra.mxu0 %v1066
    %2803 = vmatpush.msra.mxu0 %v1050
    %2804 = vmatpush.msra.mxu0 %v1034
    %2805 = vmatpush.msra.mxu0 %v1018
    %2806 = vmatpush.msra.mxu0 %v1002
    %2807 = vmatpush.msra.mxu0 %v986
    %2808 = vmatpush.msra.mxu0 %v970
    %2809 = vmatpush.msra.mxu0 %v954
    %2810 = vmatpush.msra.mxu0 %v938
    %2811 = vmatpush.msra.mxu0 %v922
    %2812 = vmatmul.f32.gmra.mxu0 %v128
    %v2813 = vpop.f32.mrf.mxu0
    %v2814 = vadd.f32 %v2785, %v2813
    %2815 = vmatmul.f32.gmra.mxu0 %v132
    %v2816 = vpop.f32.mrf.mxu0
    %v2817 = vadd.f32 %v2788, %v2816
    %2818 = vmatmul.f32.gmra.mxu0 %v136
    %v2819 = vpop.f32.mrf.mxu0
    %v2820 = vadd.f32 %v2791, %v2819
    %2821 = vmatmul.f32.gmra.mxu0 %v140
    %v2822 = vpop.f32.mrf.mxu0
    %v2823 = vadd.f32 %v2794, %v2822
    %2824 = vdwg.mxu0
    %2825 = vmatpush.msra.mxu0 %v395
    %2826 = vmatpush.msra.mxu0 %v379
    %2827 = vmatpush.msra.mxu0 %v363
    %2828 = vmatpush.msra.mxu0 %v347
    %2829 = vmatpush.msra.mxu0 %v331
    %2830 = vmatpush.msra.mxu0 %v315
    %2831 = vmatpush.msra.mxu0 %v299
    %2832 = vmatpush.msra.mxu0 %v283
    %2833 = vmatpush.msra.mxu0 %v267
    %2834 = vmatpush.msra.mxu0 %v251
    %2835 = vmatpush.msra.mxu0 %v235
    %2836 = vmatpush.msra.mxu0 %v219
    %2837 = vmatpush.msra.mxu0 %v203
    %2838 = vmatpush.msra.mxu0 %v187
    %2839 = vmatpush.msra.mxu0 %v171
    %2840 = vmatpush.msra.mxu0 %v155
    %2841 = vmatmul.f32.gmra.mxu0 %v125
    %v2842 = vpop.f32.mrf.mxu0
    %v2843 = vadd.f32 %v1183, %v2842
    %2844 = vmatmul.f32.gmra.mxu0 %v129
    %v2845 = vpop.f32.mrf.mxu0
    %v2846 = vadd.f32 %v1183, %v2845
    %2847 = vmatmul.f32.gmra.mxu0 %v133
    %v2848 = vpop.f32.mrf.mxu0
    %v2849 = vadd.f32 %v1183, %v2848
    %2850 = vmatmul.f32.gmra.mxu0 %v137
    %v2851 = vpop.f32.mrf.mxu0
    %v2852 = vadd.f32 %v1183, %v2851
    %2853 = vdwg.mxu0
    %2854 = vmatpush.msra.mxu0 %v651
    %2855 = vmatpush.msra.mxu0 %v635
    %2856 = vmatpush.msra.mxu0 %v619
    %2857 = vmatpush.msra.mxu0 %v603
    %2858 = vmatpush.msra.mxu0 %v587
    %2859 = vmatpush.msra.mxu0 %v571
    %2860 = vmatpush.msra.mxu0 %v555
    %2861 = vmatpush.msra.mxu0 %v539
    %2862 = vmatpush.msra.mxu0 %v523
    %2863 = vmatpush.msra.mxu0 %v507
    %2864 = vmatpush.msra.mxu0 %v491
    %2865 = vmatpush.msra.mxu0 %v475
    %2866 = vmatpush.msra.mxu0 %v459
    %2867 = vmatpush.msra.mxu0 %v443
    %2868 = vmatpush.msra.mxu0 %v427
    %2869 = vmatpush.msra.mxu0 %v411
    %2870 = vmatmul.f32.gmra.mxu0 %v126
    %v2871 = vpop.f32.mrf.mxu0
    %v2872 = vadd.f32 %v2843, %v2871
    %2873 = vmatmul.f32.gmra.mxu0 %v130
    %v2874 = vpop.f32.mrf.mxu0
    %v2875 = vadd.f32 %v2846, %v2874
    %2876 = vmatmul.f32.gmra.mxu0 %v134
    %v2877 = vpop.f32.mrf.mxu0
    %v2878 = vadd.f32 %v2849, %v2877
    %2879 = vmatmul.f32.gmra.mxu0 %v138
    %v2880 = vpop.f32.mrf.mxu0
    %v2881 = vadd.f32 %v2852, %v2880
    %2882 = vdwg.mxu0
    %2883 = vmatpush.msra.mxu0 %v907
    %2884 = vmatpush.msra.mxu0 %v891
    %2885 = vmatpush.msra.mxu0 %v875
    %2886 = vmatpush.msra.mxu0 %v859
    %2887 = vmatpush.msra.mxu0 %v843
    %2888 = vmatpush.msra.mxu0 %v827
    %2889 = vmatpush.msra.mxu0 %v811
    %2890 = vmatpush.msra.mxu0 %v795
    %2891 = vmatpush.msra.mxu0 %v779
    %2892 = vmatpush.msra.mxu0 %v763
    %2893 = vmatpush.msra.mxu0 %v747
    %2894 = vmatpush.msra.mxu0 %v731
    %2895 = vmatpush.msra.mxu0 %v715
    %2896 = vmatpush.msra.mxu0 %v699
    %2897 = vmatpush.msra.mxu0 %v683
    %2898 = vmatpush.msra.mxu0 %v667
    %2899 = vmatmul.f32.gmra.mxu0 %v127
    %v2900 = vpop.f32.mrf.mxu0
    %v2901 = vadd.f32 %v2872, %v2900
    %2902 = vmatmul.f32.gmra.mxu0 %v131
    %v2903 = vpop.f32.mrf.mxu0
    %v2904 = vadd.f32 %v2875, %v2903
    %2905 = vmatmul.f32.gmra.mxu0 %v135
    %v2906 = vpop.f32.mrf.mxu0
    %v2907 = vadd.f32 %v2878, %v2906
    %2908 = vmatmul.f32.gmra.mxu0 %v139
    %v2909 = vpop.f32.mrf.mxu0
    %v2910 = vadd.f32 %v2881, %v2909
    %2911 = vdwg.mxu0
    %2912 = vmatpush.msra.mxu0 %v1163
    %2913 = vmatpush.msra.mxu0 %v1147
    %2914 = vmatpush.msra.mxu0 %v1131
    %2915 = vmatpush.msra.mxu0 %v1115
    %2916 = vmatpush.msra.mxu0 %v1099
    %2917 = vmatpush.msra.mxu0 %v1083
    %2918 = vmatpush.msra.mxu0 %v1067
    %2919 = vmatpush.msra.mxu0 %v1051
    %2920 = vmatpush.msra.mxu0 %v1035
    %2921 = vmatpush.msra.mxu0 %v1019
    %2922 = vmatpush.msra.mxu0 %v1003
    %2923 = vmatpush.msra.mxu0 %v987
    %2924 = vmatpush.msra.mxu0 %v971
    %2925 = vmatpush.msra.mxu0 %v955
    %2926 = vmatpush.msra.mxu0 %v939
    %2927 = vmatpush.msra.mxu0 %v923
    %2928 = vmatmul.f32.gmra.mxu0 %v128
    %v2929 = vpop.f32.mrf.mxu0
    %v2930 = vadd.f32 %v2901, %v2929
    %2931 = vmatmul.f32.gmra.mxu0 %v132
    %v2932 = vpop.f32.mrf.mxu0
    %v2933 = vadd.f32 %v2904, %v2932
    %2934 = vmatmul.f32.gmra.mxu0 %v136
    %v2935 = vpop.f32.mrf.mxu0
    %v2936 = vadd.f32 %v2907, %v2935
    %2937 = vmatmul.f32.gmra.mxu0 %v140
    %v2938 = vpop.f32.mrf.mxu0
    %v2939 = vadd.f32 %v2910, %v2938
    %2940 = vdwg.mxu0
    %2941 = vmatpush.msra.mxu0 %v396
    %2942 = vmatpush.msra.mxu0 %v380
    %2943 = vmatpush.msra.mxu0 %v364
    %2944 = vmatpush.msra.mxu0 %v348
    %2945 = vmatpush.msra.mxu0 %v332
    %2946 = vmatpush.msra.mxu0 %v316
    %2947 = vmatpush.msra.mxu0 %v300
    %2948 = vmatpush.msra.mxu0 %v284
    %2949 = vmatpush.msra.mxu0 %v268
    %2950 = vmatpush.msra.mxu0 %v252
    %2951 = vmatpush.msra.mxu0 %v236
    %2952 = vmatpush.msra.mxu0 %v220
    %2953 = vmatpush.msra.mxu0 %v204
    %2954 = vmatpush.msra.mxu0 %v188
    %2955 = vmatpush.msra.mxu0 %v172
    %2956 = vmatpush.msra.mxu0 %v156
    %2957 = vmatmul.f32.gmra.mxu0 %v125
    %v2958 = vpop.f32.mrf.mxu0
    %v2959 = vadd.f32 %v1184, %v2958
    %2960 = vmatmul.f32.gmra.mxu0 %v129
    %v2961 = vpop.f32.mrf.mxu0
    %v2962 = vadd.f32 %v1184, %v2961
    %2963 = vmatmul.f32.gmra.mxu0 %v133
    %v2964 = vpop.f32.mrf.mxu0
    %v2965 = vadd.f32 %v1184, %v2964
    %2966 = vmatmul.f32.gmra.mxu0 %v137
    %v2967 = vpop.f32.mrf.mxu0
    %v2968 = vadd.f32 %v1184, %v2967
    %2969 = vdwg.mxu0
    %2970 = vmatpush.msra.mxu0 %v652
    %2971 = vmatpush.msra.mxu0 %v636
    %2972 = vmatpush.msra.mxu0 %v620
    %2973 = vmatpush.msra.mxu0 %v604
    %2974 = vmatpush.msra.mxu0 %v588
    %2975 = vmatpush.msra.mxu0 %v572
    %2976 = vmatpush.msra.mxu0 %v556
    %2977 = vmatpush.msra.mxu0 %v540
    %2978 = vmatpush.msra.mxu0 %v524
    %2979 = vmatpush.msra.mxu0 %v508
    %2980 = vmatpush.msra.mxu0 %v492
    %2981 = vmatpush.msra.mxu0 %v476
    %2982 = vmatpush.msra.mxu0 %v460
    %2983 = vmatpush.msra.mxu0 %v444
    %2984 = vmatpush.msra.mxu0 %v428
    %2985 = vmatpush.msra.mxu0 %v412
    %2986 = vmatmul.f32.gmra.mxu0 %v126
    %v2987 = vpop.f32.mrf.mxu0
    %v2988 = vadd.f32 %v2959, %v2987
    %2989 = vmatmul.f32.gmra.mxu0 %v130
    %v2990 = vpop.f32.mrf.mxu0
    %v2991 = vadd.f32 %v2962, %v2990
    %2992 = vmatmul.f32.gmra.mxu0 %v134
    %v2993 = vpop.f32.mrf.mxu0
    %v2994 = vadd.f32 %v2965, %v2993
    %2995 = vmatmul.f32.gmra.mxu0 %v138
    %v2996 = vpop.f32.mrf.mxu0
    %v2997 = vadd.f32 %v2968, %v2996
    %2998 = vdwg.mxu0
    %2999 = vmatpush.msra.mxu0 %v908
    %3000 = vmatpush.msra.mxu0 %v892
    %3001 = vmatpush.msra.mxu0 %v876
    %3002 = vmatpush.msra.mxu0 %v860
    %3003 = vmatpush.msra.mxu0 %v844
    %3004 = vmatpush.msra.mxu0 %v828
    %3005 = vmatpush.msra.mxu0 %v812
    %3006 = vmatpush.msra.mxu0 %v796
    %3007 = vmatpush.msra.mxu0 %v780
    %3008 = vmatpush.msra.mxu0 %v764
    %3009 = vmatpush.msra.mxu0 %v748
    %3010 = vmatpush.msra.mxu0 %v732
    %3011 = vmatpush.msra.mxu0 %v716
    %3012 = vmatpush.msra.mxu0 %v700
    %3013 = vmatpush.msra.mxu0 %v684
    %3014 = vmatpush.msra.mxu0 %v668
    %3015 = vmatmul.f32.gmra.mxu0 %v127
    %v3016 = vpop.f32.mrf.mxu0
    %v3017 = vadd.f32 %v2988, %v3016
    %3018 = vmatmul.f32.gmra.mxu0 %v131
    %v3019 = vpop.f32.mrf.mxu0
    %v3020 = vadd.f32 %v2991, %v3019
    %3021 = vmatmul.f32.gmra.mxu0 %v135
    %v3022 = vpop.f32.mrf.mxu0
    %v3023 = vadd.f32 %v2994, %v3022
    %3024 = vmatmul.f32.gmra.mxu0 %v139
    %v3025 = vpop.f32.mrf.mxu0
    %v3026 = vadd.f32 %v2997, %v3025
    %3027 = vdwg.mxu0
    %3028 = vmatpush.msra.mxu0 %v1164
    %3029 = vmatpush.msra.mxu0 %v1148
    %3030 = vmatpush.msra.mxu0 %v1132
    %3031 = vmatpush.msra.mxu0 %v1116
    %3032 = vmatpush.msra.mxu0 %v1100
    %3033 = vmatpush.msra.mxu0 %v1084
    %3034 = vmatpush.msra.mxu0 %v1068
    %3035 = vmatpush.msra.mxu0 %v1052
    %3036 = vmatpush.msra.mxu0 %v1036
    %3037 = vmatpush.msra.mxu0 %v1020
    %3038 = vmatpush.msra.mxu0 %v1004
    %3039 = vmatpush.msra.mxu0 %v988
    %3040 = vmatpush.msra.mxu0 %v972
    %3041 = vmatpush.msra.mxu0 %v956
    %3042 = vmatpush.msra.mxu0 %v940
    %3043 = vmatpush.msra.mxu0 %v924
    %3044 = vmatmul.f32.gmra.mxu0 %v128
    %v3045 = vpop.f32.mrf.mxu0
    %v3046 = vadd.f32 %v3017, %v3045
    %3047 = vmatmul.f32.gmra.mxu0 %v132
    %v3048 = vpop.f32.mrf.mxu0
    %v3049 = vadd.f32 %v3020, %v3048
    %3050 = vmatmul.f32.gmra.mxu0 %v136
    %v3051 = vpop.f32.mrf.mxu0
    %v3052 = vadd.f32 %v3023, %v3051
    %3053 = vmatmul.f32.gmra.mxu0 %v140
    %v3054 = vpop.f32.mrf.mxu0
    %v3055 = vadd.f32 %v3026, %v3054
    %3056 = vdwg.mxu0
    %v3057 = vmax.f32 %v1306, 0.0
    %v3058 = vmax.f32 %v1422, 0.0
    %v3059 = vmax.f32 %v1538, 0.0
    %v3060 = vmax.f32 %v1654, 0.0
    %v3061 = vmax.f32 %v1770, 0.0
    %v3062 = vmax.f32 %v1886, 0.0
    %v3063 = vmax.f32 %v2002, 0.0
    %v3064 = vmax.f32 %v2118, 0.0
    %v3065 = vmax.f32 %v2234, 0.0
    %v3066 = vmax.f32 %v2350, 0.0
    %v3067 = vmax.f32 %v2466, 0.0
    %v3068 = vmax.f32 %v2582, 0.0
    %v3069 = vmax.f32 %v2698, 0.0
    %v3070 = vmax.f32 %v2814, 0.0
    %v3071 = vmax.f32 %v2930, 0.0
    %v3072 = vmax.f32 %v3046, 0.0
    %v3073 = vmax.f32 %v1309, 0.0
    %v3074 = vmax.f32 %v1425, 0.0
    %v3075 = vmax.f32 %v1541, 0.0
    %v3076 = vmax.f32 %v1657, 0.0
    %v3077 = vmax.f32 %v1773, 0.0
    %v3078 = vmax.f32 %v1889, 0.0
    %v3079 = vmax.f32 %v2005, 0.0
    %v3080 = vmax.f32 %v2121, 0.0
    %v3081 = vmax.f32 %v2237, 0.0
    %v3082 = vmax.f32 %v2353, 0.0
    %v3083 = vmax.f32 %v2469, 0.0
    %v3084 = vmax.f32 %v2585, 0.0
    %v3085 = vmax.f32 %v2701, 0.0
    %v3086 = vmax.f32 %v2817, 0.0
    %v3087 = vmax.f32 %v2933, 0.0
    %v3088 = vmax.f32 %v3049, 0.0
    %v3089 = vmax.f32 %v1312, 0.0
    %v3090 = vmax.f32 %v1428, 0.0
    %v3091 = vmax.f32 %v1544, 0.0
    %v3092 = vmax.f32 %v1660, 0.0
    %v3093 = vmax.f32 %v1776, 0.0
    %v3094 = vmax.f32 %v1892, 0.0
    %v3095 = vmax.f32 %v2008, 0.0
    %v3096 = vmax.f32 %v2124, 0.0
    %v3097 = vmax.f32 %v2240, 0.0
    %v3098 = vmax.f32 %v2356, 0.0
    %v3099 = vmax.f32 %v2472, 0.0
    %v3100 = vmax.f32 %v2588, 0.0
    %v3101 = vmax.f32 %v2704, 0.0
    %v3102 = vmax.f32 %v2820, 0.0
    %v3103 = vmax.f32 %v2936, 0.0
    %v3104 = vmax.f32 %v3052, 0.0
    %v3105 = vmax.f32 %v1315, 0.0
    %v3106 = vmax.f32 %v1431, 0.0
    %v3107 = vmax.f32 %v1547, 0.0
    %v3108 = vmax.f32 %v1663, 0.0
    %v3109 = vmax.f32 %v1779, 0.0
    %v3110 = vmax.f32 %v1895, 0.0
    %v3111 = vmax.f32 %v2011, 0.0
    %v3112 = vmax.f32 %v2127, 0.0
    %v3113 = vmax.f32 %v2243, 0.0
    %v3114 = vmax.f32 %v2359, 0.0
    %v3115 = vmax.f32 %v2475, 0.0
    %v3116 = vmax.f32 %v2591, 0.0
    %v3117 = vmax.f32 %v2707, 0.0
    %v3118 = vmax.f32 %v2823, 0.0
    %v3119 = vmax.f32 %v2939, 0.0
    %v3120 = vmax.f32 %v3055, 0.0
    %v3121 = vld [vmem:[#allocation11] sm:$0xff]
    %v3122 = vld [vmem:[#allocation11 + $0x8] sm:$0xff]
    %v3123 = vld [vmem:[#allocation11 + $0x10] sm:$0xff]
    %v3124 = vld [vmem:[#allocation11 + $0x18] sm:$0xff]
    %v3125 = vld [vmem:[#allocation11 + $0x20] sm:$0xff]
    %v3126 = vld [vmem:[#allocation11 + $0x28] sm:$0xff]
    %v3127 = vld [vmem:[#allocation11 + $0x30] sm:$0xff]
    %v3128 = vld [vmem:[#allocation11 + $0x38] sm:$0xff]
    %v3129 = vld [vmem:[#allocation11 + $0x40] sm:$0xff]
    %v3130 = vld [vmem:[#allocation11 + $0x48] sm:$0xff]
    %v3131 = vld [vmem:[#allocation11 + $0x50] sm:$0xff]
    %v3132 = vld [vmem:[#allocation11 + $0x58] sm:$0xff]
    %v3133 = vld [vmem:[#allocation11 + $0x60] sm:$0xff]
    %v3134 = vld [vmem:[#allocation11 + $0x68] sm:$0xff]
    %v3135 = vld [vmem:[#allocation11 + $0x70] sm:$0xff]
    %v3136 = vld [vmem:[#allocation11 + $0x78] sm:$0xff]
    %v3137 = vld [vmem:[#allocation8] sm:$0xff]
    %v3138 = vld [vmem:[#allocation8 + $0x8] sm:$0xff]
    %v3139 = vld [vmem:[#allocation8 + $0x10] sm:$0xff]
    %v3140 = vld [vmem:[#allocation8 + $0x18] sm:$0xff]
    %v3141 = vld [vmem:[#allocation8 + $0x20] sm:$0xff]
    %v3142 = vld [vmem:[#allocation8 + $0x28] sm:$0xff]
    %v3143 = vld [vmem:[#allocation8 + $0x30] sm:$0xff]
    %v3144 = vld [vmem:[#allocation8 + $0x38] sm:$0xff]
    %v3145 = vld [vmem:[#allocation8 + $0x40] sm:$0xff]
    %v3146 = vld [vmem:[#allocation8 + $0x48] sm:$0xff]
    %v3147 = vld [vmem:[#allocation8 + $0x50] sm:$0xff]
    %v3148 = vld [vmem:[#allocation8 + $0x58] sm:$0xff]
    %v3149 = vld [vmem:[#allocation8 + $0x60] sm:$0xff]
    %v3150 = vld [vmem:[#allocation8 + $0x68] sm:$0xff]
    %v3151 = vld [vmem:[#allocation8 + $0x70] sm:$0xff]
    %v3152 = vld [vmem:[#allocation8 + $0x78] sm:$0xff]
    %v3153 = vld [vmem:[#allocation8 + $0x80] sm:$0xff]
    %v3154 = vld [vmem:[#allocation8 + $0x88] sm:$0xff]
    %v3155 = vld [vmem:[#allocation8 + $0x90] sm:$0xff]
    %v3156 = vld [vmem:[#allocation8 + $0x98] sm:$0xff]
    %v3157 = vld [vmem:[#allocation8 + $0xa0] sm:$0xff]
    %v3158 = vld [vmem:[#allocation8 + $0xa8] sm:$0xff]
    %v3159 = vld [vmem:[#allocation8 + $0xb0] sm:$0xff]
    %v3160 = vld [vmem:[#allocation8 + $0xb8] sm:$0xff]
    %v3161 = vld [vmem:[#allocation8 + $0xc0] sm:$0xff]
    %v3162 = vld [vmem:[#allocation8 + $0xc8] sm:$0xff]
    %v3163 = vld [vmem:[#allocation8 + $0xd0] sm:$0xff]
    %v3164 = vld [vmem:[#allocation8 + $0xd8] sm:$0xff]
    %v3165 = vld [vmem:[#allocation8 + $0xe0] sm:$0xff]
    %v3166 = vld [vmem:[#allocation8 + $0xe8] sm:$0xff]
    %v3167 = vld [vmem:[#allocation8 + $0xf0] sm:$0xff]
    %v3168 = vld [vmem:[#allocation8 + $0xf8] sm:$0xff]
    %v3169 = vld [vmem:[#allocation8 + $0x100] sm:$0xff]
    %v3170 = vld [vmem:[#allocation8 + $0x108] sm:$0xff]
    %v3171 = vld [vmem:[#allocation8 + $0x110] sm:$0xff]
    %v3172 = vld [vmem:[#allocation8 + $0x118] sm:$0xff]
    %v3173 = vld [vmem:[#allocation8 + $0x120] sm:$0xff]
    %v3174 = vld [vmem:[#allocation8 + $0x128] sm:$0xff]
    %v3175 = vld [vmem:[#allocation8 + $0x130] sm:$0xff]
    %v3176 = vld [vmem:[#allocation8 + $0x138] sm:$0xff]
    %v3177 = vld [vmem:[#allocation8 + $0x140] sm:$0xff]
    %v3178 = vld [vmem:[#allocation8 + $0x148] sm:$0xff]
    %v3179 = vld [vmem:[#allocation8 + $0x150] sm:$0xff]
    %v3180 = vld [vmem:[#allocation8 + $0x158] sm:$0xff]
    %v3181 = vld [vmem:[#allocation8 + $0x160] sm:$0xff]
    %v3182 = vld [vmem:[#allocation8 + $0x168] sm:$0xff]
    %v3183 = vld [vmem:[#allocation8 + $0x170] sm:$0xff]
    %v3184 = vld [vmem:[#allocation8 + $0x178] sm:$0xff]
    %v3185 = vld [vmem:[#allocation8 + $0x180] sm:$0xff]
    %v3186 = vld [vmem:[#allocation8 + $0x188] sm:$0xff]
    %v3187 = vld [vmem:[#allocation8 + $0x190] sm:$0xff]
    %v3188 = vld [vmem:[#allocation8 + $0x198] sm:$0xff]
    %v3189 = vld [vmem:[#allocation8 + $0x1a0] sm:$0xff]
    %v3190 = vld [vmem:[#allocation8 + $0x1a8] sm:$0xff]
    %v3191 = vld [vmem:[#allocation8 + $0x1b0] sm:$0xff]
    %v3192 = vld [vmem:[#allocation8 + $0x1b8] sm:$0xff]
    %v3193 = vld [vmem:[#allocation8 + $0x1c0] sm:$0xff]
    %v3194 = vld [vmem:[#allocation8 + $0x1c8] sm:$0xff]
    %v3195 = vld [vmem:[#allocation8 + $0x1d0] sm:$0xff]
    %v3196 = vld [vmem:[#allocation8 + $0x1d8] sm:$0xff]
    %v3197 = vld [vmem:[#allocation8 + $0x1e0] sm:$0xff]
    %v3198 = vld [vmem:[#allocation8 + $0x1e8] sm:$0xff]
    %v3199 = vld [vmem:[#allocation8 + $0x1f0] sm:$0xff]
    %v3200 = vld [vmem:[#allocation8 + $0x1f8] sm:$0xff]
    %v3201 = vld [vmem:[#allocation8 + $0x200] sm:$0xff]
    %v3202 = vld [vmem:[#allocation8 + $0x208] sm:$0xff]
    %v3203 = vld [vmem:[#allocation8 + $0x210] sm:$0xff]
    %v3204 = vld [vmem:[#allocation8 + $0x218] sm:$0xff]
    %v3205 = vld [vmem:[#allocation8 + $0x220] sm:$0xff]
    %v3206 = vld [vmem:[#allocation8 + $0x228] sm:$0xff]
    %v3207 = vld [vmem:[#allocation8 + $0x230] sm:$0xff]
    %v3208 = vld [vmem:[#allocation8 + $0x238] sm:$0xff]
    %v3209 = vld [vmem:[#allocation8 + $0x240] sm:$0xff]
    %v3210 = vld [vmem:[#allocation8 + $0x248] sm:$0xff]
    %v3211 = vld [vmem:[#allocation8 + $0x250] sm:$0xff]
    %v3212 = vld [vmem:[#allocation8 + $0x258] sm:$0xff]
    %v3213 = vld [vmem:[#allocation8 + $0x260] sm:$0xff]
    %v3214 = vld [vmem:[#allocation8 + $0x268] sm:$0xff]
    %v3215 = vld [vmem:[#allocation8 + $0x270] sm:$0xff]
    %v3216 = vld [vmem:[#allocation8 + $0x278] sm:$0xff]
    %v3217 = vld [vmem:[#allocation8 + $0x280] sm:$0xff]
    %v3218 = vld [vmem:[#allocation8 + $0x288] sm:$0xff]
    %v3219 = vld [vmem:[#allocation8 + $0x290] sm:$0xff]
    %v3220 = vld [vmem:[#allocation8 + $0x298] sm:$0xff]
    %v3221 = vld [vmem:[#allocation8 + $0x2a0] sm:$0xff]
    %v3222 = vld [vmem:[#allocation8 + $0x2a8] sm:$0xff]
    %v3223 = vld [vmem:[#allocation8 + $0x2b0] sm:$0xff]
    %v3224 = vld [vmem:[#allocation8 + $0x2b8] sm:$0xff]
    %v3225 = vld [vmem:[#allocation8 + $0x2c0] sm:$0xff]
    %v3226 = vld [vmem:[#allocation8 + $0x2c8] sm:$0xff]
    %v3227 = vld [vmem:[#allocation8 + $0x2d0] sm:$0xff]
    %v3228 = vld [vmem:[#allocation8 + $0x2d8] sm:$0xff]
    %v3229 = vld [vmem:[#allocation8 + $0x2e0] sm:$0xff]
    %v3230 = vld [vmem:[#allocation8 + $0x2e8] sm:$0xff]
    %v3231 = vld [vmem:[#allocation8 + $0x2f0] sm:$0xff]
    %v3232 = vld [vmem:[#allocation8 + $0x2f8] sm:$0xff]
    %v3233 = vld [vmem:[#allocation8 + $0x300] sm:$0xff]
    %v3234 = vld [vmem:[#allocation8 + $0x308] sm:$0xff]
    %v3235 = vld [vmem:[#allocation8 + $0x310] sm:$0xff]
    %v3236 = vld [vmem:[#allocation8 + $0x318] sm:$0xff]
    %v3237 = vld [vmem:[#allocation8 + $0x320] sm:$0xff]
    %v3238 = vld [vmem:[#allocation8 + $0x328] sm:$0xff]
    %v3239 = vld [vmem:[#allocation8 + $0x330] sm:$0xff]
    %v3240 = vld [vmem:[#allocation8 + $0x338] sm:$0xff]
    %v3241 = vld [vmem:[#allocation8 + $0x340] sm:$0xff]
    %v3242 = vld [vmem:[#allocation8 + $0x348] sm:$0xff]
    %v3243 = vld [vmem:[#allocation8 + $0x350] sm:$0xff]
    %v3244 = vld [vmem:[#allocation8 + $0x358] sm:$0xff]
    %v3245 = vld [vmem:[#allocation8 + $0x360] sm:$0xff]
    %v3246 = vld [vmem:[#allocation8 + $0x368] sm:$0xff]
    %v3247 = vld [vmem:[#allocation8 + $0x370] sm:$0xff]
    %v3248 = vld [vmem:[#allocation8 + $0x378] sm:$0xff]
    %v3249 = vld [vmem:[#allocation8 + $0x380] sm:$0xff]
    %v3250 = vld [vmem:[#allocation8 + $0x388] sm:$0xff]
    %v3251 = vld [vmem:[#allocation8 + $0x390] sm:$0xff]
    %v3252 = vld [vmem:[#allocation8 + $0x398] sm:$0xff]
    %v3253 = vld [vmem:[#allocation8 + $0x3a0] sm:$0xff]
    %v3254 = vld [vmem:[#allocation8 + $0x3a8] sm:$0xff]
    %v3255 = vld [vmem:[#allocation8 + $0x3b0] sm:$0xff]
    %v3256 = vld [vmem:[#allocation8 + $0x3b8] sm:$0xff]
    %v3257 = vld [vmem:[#allocation8 + $0x3c0] sm:$0xff]
    %v3258 = vld [vmem:[#allocation8 + $0x3c8] sm:$0xff]
    %v3259 = vld [vmem:[#allocation8 + $0x3d0] sm:$0xff]
    %v3260 = vld [vmem:[#allocation8 + $0x3d8] sm:$0xff]
    %v3261 = vld [vmem:[#allocation8 + $0x3e0] sm:$0xff]
    %v3262 = vld [vmem:[#allocation8 + $0x3e8] sm:$0xff]
    %v3263 = vld [vmem:[#allocation8 + $0x3f0] sm:$0xff]
    %v3264 = vld [vmem:[#allocation8 + $0x3f8] sm:$0xff]
    %v3265 = vld [vmem:[#allocation8 + $0x400] sm:$0xff]
    %v3266 = vld [vmem:[#allocation8 + $0x408] sm:$0xff]
    %v3267 = vld [vmem:[#allocation8 + $0x410] sm:$0xff]
    %v3268 = vld [vmem:[#allocation8 + $0x418] sm:$0xff]
    %v3269 = vld [vmem:[#allocation8 + $0x420] sm:$0xff]
    %v3270 = vld [vmem:[#allocation8 + $0x428] sm:$0xff]
    %v3271 = vld [vmem:[#allocation8 + $0x430] sm:$0xff]
    %v3272 = vld [vmem:[#allocation8 + $0x438] sm:$0xff]
    %v3273 = vld [vmem:[#allocation8 + $0x440] sm:$0xff]
    %v3274 = vld [vmem:[#allocation8 + $0x448] sm:$0xff]
    %v3275 = vld [vmem:[#allocation8 + $0x450] sm:$0xff]
    %v3276 = vld [vmem:[#allocation8 + $0x458] sm:$0xff]
    %v3277 = vld [vmem:[#allocation8 + $0x460] sm:$0xff]
    %v3278 = vld [vmem:[#allocation8 + $0x468] sm:$0xff]
    %v3279 = vld [vmem:[#allocation8 + $0x470] sm:$0xff]
    %v3280 = vld [vmem:[#allocation8 + $0x478] sm:$0xff]
    %v3281 = vld [vmem:[#allocation8 + $0x480] sm:$0xff]
    %v3282 = vld [vmem:[#allocation8 + $0x488] sm:$0xff]
    %v3283 = vld [vmem:[#allocation8 + $0x490] sm:$0xff]
    %v3284 = vld [vmem:[#allocation8 + $0x498] sm:$0xff]
    %v3285 = vld [vmem:[#allocation8 + $0x4a0] sm:$0xff]
    %v3286 = vld [vmem:[#allocation8 + $0x4a8] sm:$0xff]
    %v3287 = vld [vmem:[#allocation8 + $0x4b0] sm:$0xff]
    %v3288 = vld [vmem:[#allocation8 + $0x4b8] sm:$0xff]
    %v3289 = vld [vmem:[#allocation8 + $0x4c0] sm:$0xff]
    %v3290 = vld [vmem:[#allocation8 + $0x4c8] sm:$0xff]
    %v3291 = vld [vmem:[#allocation8 + $0x4d0] sm:$0xff]
    %v3292 = vld [vmem:[#allocation8 + $0x4d8] sm:$0xff]
    %v3293 = vld [vmem:[#allocation8 + $0x4e0] sm:$0xff]
    %v3294 = vld [vmem:[#allocation8 + $0x4e8] sm:$0xff]
    %v3295 = vld [vmem:[#allocation8 + $0x4f0] sm:$0xff]
    %v3296 = vld [vmem:[#allocation8 + $0x4f8] sm:$0xff]
    %v3297 = vld [vmem:[#allocation8 + $0x500] sm:$0xff]
    %v3298 = vld [vmem:[#allocation8 + $0x508] sm:$0xff]
    %v3299 = vld [vmem:[#allocation8 + $0x510] sm:$0xff]
    %v3300 = vld [vmem:[#allocation8 + $0x518] sm:$0xff]
    %v3301 = vld [vmem:[#allocation8 + $0x520] sm:$0xff]
    %v3302 = vld [vmem:[#allocation8 + $0x528] sm:$0xff]
    %v3303 = vld [vmem:[#allocation8 + $0x530] sm:$0xff]
    %v3304 = vld [vmem:[#allocation8 + $0x538] sm:$0xff]
    %v3305 = vld [vmem:[#allocation8 + $0x540] sm:$0xff]
    %v3306 = vld [vmem:[#allocation8 + $0x548] sm:$0xff]
    %v3307 = vld [vmem:[#allocation8 + $0x550] sm:$0xff]
    %v3308 = vld [vmem:[#allocation8 + $0x558] sm:$0xff]
    %v3309 = vld [vmem:[#allocation8 + $0x560] sm:$0xff]
    %v3310 = vld [vmem:[#allocation8 + $0x568] sm:$0xff]
    %v3311 = vld [vmem:[#allocation8 + $0x570] sm:$0xff]
    %v3312 = vld [vmem:[#allocation8 + $0x578] sm:$0xff]
    %v3313 = vld [vmem:[#allocation8 + $0x580] sm:$0xff]
    %v3314 = vld [vmem:[#allocation8 + $0x588] sm:$0xff]
    %v3315 = vld [vmem:[#allocation8 + $0x590] sm:$0xff]
    %v3316 = vld [vmem:[#allocation8 + $0x598] sm:$0xff]
    %v3317 = vld [vmem:[#allocation8 + $0x5a0] sm:$0xff]
    %v3318 = vld [vmem:[#allocation8 + $0x5a8] sm:$0xff]
    %v3319 = vld [vmem:[#allocation8 + $0x5b0] sm:$0xff]
    %v3320 = vld [vmem:[#allocation8 + $0x5b8] sm:$0xff]
    %v3321 = vld [vmem:[#allocation8 + $0x5c0] sm:$0xff]
    %v3322 = vld [vmem:[#allocation8 + $0x5c8] sm:$0xff]
    %v3323 = vld [vmem:[#allocation8 + $0x5d0] sm:$0xff]
    %v3324 = vld [vmem:[#allocation8 + $0x5d8] sm:$0xff]
    %v3325 = vld [vmem:[#allocation8 + $0x5e0] sm:$0xff]
    %v3326 = vld [vmem:[#allocation8 + $0x5e8] sm:$0xff]
    %v3327 = vld [vmem:[#allocation8 + $0x5f0] sm:$0xff]
    %v3328 = vld [vmem:[#allocation8 + $0x5f8] sm:$0xff]
    %v3329 = vld [vmem:[#allocation8 + $0x600] sm:$0xff]
    %v3330 = vld [vmem:[#allocation8 + $0x608] sm:$0xff]
    %v3331 = vld [vmem:[#allocation8 + $0x610] sm:$0xff]
    %v3332 = vld [vmem:[#allocation8 + $0x618] sm:$0xff]
    %v3333 = vld [vmem:[#allocation8 + $0x620] sm:$0xff]
    %v3334 = vld [vmem:[#allocation8 + $0x628] sm:$0xff]
    %v3335 = vld [vmem:[#allocation8 + $0x630] sm:$0xff]
    %v3336 = vld [vmem:[#allocation8 + $0x638] sm:$0xff]
    %v3337 = vld [vmem:[#allocation8 + $0x640] sm:$0xff]
    %v3338 = vld [vmem:[#allocation8 + $0x648] sm:$0xff]
    %v3339 = vld [vmem:[#allocation8 + $0x650] sm:$0xff]
    %v3340 = vld [vmem:[#allocation8 + $0x658] sm:$0xff]
    %v3341 = vld [vmem:[#allocation8 + $0x660] sm:$0xff]
    %v3342 = vld [vmem:[#allocation8 + $0x668] sm:$0xff]
    %v3343 = vld [vmem:[#allocation8 + $0x670] sm:$0xff]
    %v3344 = vld [vmem:[#allocation8 + $0x678] sm:$0xff]
    %v3345 = vld [vmem:[#allocation8 + $0x680] sm:$0xff]
    %v3346 = vld [vmem:[#allocation8 + $0x688] sm:$0xff]
    %v3347 = vld [vmem:[#allocation8 + $0x690] sm:$0xff]
    %v3348 = vld [vmem:[#allocation8 + $0x698] sm:$0xff]
    %v3349 = vld [vmem:[#allocation8 + $0x6a0] sm:$0xff]
    %v3350 = vld [vmem:[#allocation8 + $0x6a8] sm:$0xff]
    %v3351 = vld [vmem:[#allocation8 + $0x6b0] sm:$0xff]
    %v3352 = vld [vmem:[#allocation8 + $0x6b8] sm:$0xff]
    %v3353 = vld [vmem:[#allocation8 + $0x6c0] sm:$0xff]
    %v3354 = vld [vmem:[#allocation8 + $0x6c8] sm:$0xff]
    %v3355 = vld [vmem:[#allocation8 + $0x6d0] sm:$0xff]
    %v3356 = vld [vmem:[#allocation8 + $0x6d8] sm:$0xff]
    %v3357 = vld [vmem:[#allocation8 + $0x6e0] sm:$0xff]
    %v3358 = vld [vmem:[#allocation8 + $0x6e8] sm:$0xff]
    %v3359 = vld [vmem:[#allocation8 + $0x6f0] sm:$0xff]
    %v3360 = vld [vmem:[#allocation8 + $0x6f8] sm:$0xff]
    %v3361 = vld [vmem:[#allocation8 + $0x700] sm:$0xff]
    %v3362 = vld [vmem:[#allocation8 + $0x708] sm:$0xff]
    %v3363 = vld [vmem:[#allocation8 + $0x710] sm:$0xff]
    %v3364 = vld [vmem:[#allocation8 + $0x718] sm:$0xff]
    %v3365 = vld [vmem:[#allocation8 + $0x720] sm:$0xff]
    %v3366 = vld [vmem:[#allocation8 + $0x728] sm:$0xff]
    %v3367 = vld [vmem:[#allocation8 + $0x730] sm:$0xff]
    %v3368 = vld [vmem:[#allocation8 + $0x738] sm:$0xff]
    %v3369 = vld [vmem:[#allocation8 + $0x740] sm:$0xff]
    %v3370 = vld [vmem:[#allocation8 + $0x748] sm:$0xff]
    %v3371 = vld [vmem:[#allocation8 + $0x750] sm:$0xff]
    %v3372 = vld [vmem:[#allocation8 + $0x758] sm:$0xff]
    %v3373 = vld [vmem:[#allocation8 + $0x760] sm:$0xff]
    %v3374 = vld [vmem:[#allocation8 + $0x768] sm:$0xff]
    %v3375 = vld [vmem:[#allocation8 + $0x770] sm:$0xff]
    %v3376 = vld [vmem:[#allocation8 + $0x778] sm:$0xff]
    %v3377 = vld [vmem:[#allocation8 + $0x780] sm:$0xff]
    %v3378 = vld [vmem:[#allocation8 + $0x788] sm:$0xff]
    %v3379 = vld [vmem:[#allocation8 + $0x790] sm:$0xff]
    %v3380 = vld [vmem:[#allocation8 + $0x798] sm:$0xff]
    %v3381 = vld [vmem:[#allocation8 + $0x7a0] sm:$0xff]
    %v3382 = vld [vmem:[#allocation8 + $0x7a8] sm:$0xff]
    %v3383 = vld [vmem:[#allocation8 + $0x7b0] sm:$0xff]
    %v3384 = vld [vmem:[#allocation8 + $0x7b8] sm:$0xff]
    %v3385 = vld [vmem:[#allocation8 + $0x7c0] sm:$0xff]
    %v3386 = vld [vmem:[#allocation8 + $0x7c8] sm:$0xff]
    %v3387 = vld [vmem:[#allocation8 + $0x7d0] sm:$0xff]
    %v3388 = vld [vmem:[#allocation8 + $0x7d8] sm:$0xff]
    %v3389 = vld [vmem:[#allocation8 + $0x7e0] sm:$0xff]
    %v3390 = vld [vmem:[#allocation8 + $0x7e8] sm:$0xff]
    %v3391 = vld [vmem:[#allocation8 + $0x7f0] sm:$0xff]
    %v3392 = vld [vmem:[#allocation8 + $0x7f8] sm:$0xff]
    %v3393 = vld [vmem:[#allocation8 + $0x800] sm:$0xff]
    %v3394 = vld [vmem:[#allocation8 + $0x808] sm:$0xff]
    %v3395 = vld [vmem:[#allocation8 + $0x810] sm:$0xff]
    %v3396 = vld [vmem:[#allocation8 + $0x818] sm:$0xff]
    %v3397 = vld [vmem:[#allocation8 + $0x820] sm:$0xff]
    %v3398 = vld [vmem:[#allocation8 + $0x828] sm:$0xff]
    %v3399 = vld [vmem:[#allocation8 + $0x830] sm:$0xff]
    %v3400 = vld [vmem:[#allocation8 + $0x838] sm:$0xff]
    %v3401 = vld [vmem:[#allocation8 + $0x840] sm:$0xff]
    %v3402 = vld [vmem:[#allocation8 + $0x848] sm:$0xff]
    %v3403 = vld [vmem:[#allocation8 + $0x850] sm:$0xff]
    %v3404 = vld [vmem:[#allocation8 + $0x858] sm:$0xff]
    %v3405 = vld [vmem:[#allocation8 + $0x860] sm:$0xff]
    %v3406 = vld [vmem:[#allocation8 + $0x868] sm:$0xff]
    %v3407 = vld [vmem:[#allocation8 + $0x870] sm:$0xff]
    %v3408 = vld [vmem:[#allocation8 + $0x878] sm:$0xff]
    %v3409 = vld [vmem:[#allocation8 + $0x880] sm:$0xff]
    %v3410 = vld [vmem:[#allocation8 + $0x888] sm:$0xff]
    %v3411 = vld [vmem:[#allocation8 + $0x890] sm:$0xff]
    %v3412 = vld [vmem:[#allocation8 + $0x898] sm:$0xff]
    %v3413 = vld [vmem:[#allocation8 + $0x8a0] sm:$0xff]
    %v3414 = vld [vmem:[#allocation8 + $0x8a8] sm:$0xff]
    %v3415 = vld [vmem:[#allocation8 + $0x8b0] sm:$0xff]
    %v3416 = vld [vmem:[#allocation8 + $0x8b8] sm:$0xff]
    %v3417 = vld [vmem:[#allocation8 + $0x8c0] sm:$0xff]
    %v3418 = vld [vmem:[#allocation8 + $0x8c8] sm:$0xff]
    %v3419 = vld [vmem:[#allocation8 + $0x8d0] sm:$0xff]
    %v3420 = vld [vmem:[#allocation8 + $0x8d8] sm:$0xff]
    %v3421 = vld [vmem:[#allocation8 + $0x8e0] sm:$0xff]
    %v3422 = vld [vmem:[#allocation8 + $0x8e8] sm:$0xff]
    %v3423 = vld [vmem:[#allocation8 + $0x8f0] sm:$0xff]
    %v3424 = vld [vmem:[#allocation8 + $0x8f8] sm:$0xff]
    %v3425 = vld [vmem:[#allocation8 + $0x900] sm:$0xff]
    %v3426 = vld [vmem:[#allocation8 + $0x908] sm:$0xff]
    %v3427 = vld [vmem:[#allocation8 + $0x910] sm:$0xff]
    %v3428 = vld [vmem:[#allocation8 + $0x918] sm:$0xff]
    %v3429 = vld [vmem:[#allocation8 + $0x920] sm:$0xff]
    %v3430 = vld [vmem:[#allocation8 + $0x928] sm:$0xff]
    %v3431 = vld [vmem:[#allocation8 + $0x930] sm:$0xff]
    %v3432 = vld [vmem:[#allocation8 + $0x938] sm:$0xff]
    %v3433 = vld [vmem:[#allocation8 + $0x940] sm:$0xff]
    %v3434 = vld [vmem:[#allocation8 + $0x948] sm:$0xff]
    %v3435 = vld [vmem:[#allocation8 + $0x950] sm:$0xff]
    %v3436 = vld [vmem:[#allocation8 + $0x958] sm:$0xff]
    %v3437 = vld [vmem:[#allocation8 + $0x960] sm:$0xff]
    %v3438 = vld [vmem:[#allocation8 + $0x968] sm:$0xff]
    %v3439 = vld [vmem:[#allocation8 + $0x970] sm:$0xff]
    %v3440 = vld [vmem:[#allocation8 + $0x978] sm:$0xff]
    %v3441 = vld [vmem:[#allocation8 + $0x980] sm:$0xff]
    %v3442 = vld [vmem:[#allocation8 + $0x988] sm:$0xff]
    %v3443 = vld [vmem:[#allocation8 + $0x990] sm:$0xff]
    %v3444 = vld [vmem:[#allocation8 + $0x998] sm:$0xff]
    %v3445 = vld [vmem:[#allocation8 + $0x9a0] sm:$0xff]
    %v3446 = vld [vmem:[#allocation8 + $0x9a8] sm:$0xff]
    %v3447 = vld [vmem:[#allocation8 + $0x9b0] sm:$0xff]
    %v3448 = vld [vmem:[#allocation8 + $0x9b8] sm:$0xff]
    %v3449 = vld [vmem:[#allocation8 + $0x9c0] sm:$0xff]
    %v3450 = vld [vmem:[#allocation8 + $0x9c8] sm:$0xff]
    %v3451 = vld [vmem:[#allocation8 + $0x9d0] sm:$0xff]
    %v3452 = vld [vmem:[#allocation8 + $0x9d8] sm:$0xff]
    %v3453 = vld [vmem:[#allocation8 + $0x9e0] sm:$0xff]
    %v3454 = vld [vmem:[#allocation8 + $0x9e8] sm:$0xff]
    %v3455 = vld [vmem:[#allocation8 + $0x9f0] sm:$0xff]
    %v3456 = vld [vmem:[#allocation8 + $0x9f8] sm:$0xff]
    %v3457 = vld [vmem:[#allocation8 + $0xa00] sm:$0xff]
    %v3458 = vld [vmem:[#allocation8 + $0xa08] sm:$0xff]
    %v3459 = vld [vmem:[#allocation8 + $0xa10] sm:$0xff]
    %v3460 = vld [vmem:[#allocation8 + $0xa18] sm:$0xff]
    %v3461 = vld [vmem:[#allocation8 + $0xa20] sm:$0xff]
    %v3462 = vld [vmem:[#allocation8 + $0xa28] sm:$0xff]
    %v3463 = vld [vmem:[#allocation8 + $0xa30] sm:$0xff]
    %v3464 = vld [vmem:[#allocation8 + $0xa38] sm:$0xff]
    %v3465 = vld [vmem:[#allocation8 + $0xa40] sm:$0xff]
    %v3466 = vld [vmem:[#allocation8 + $0xa48] sm:$0xff]
    %v3467 = vld [vmem:[#allocation8 + $0xa50] sm:$0xff]
    %v3468 = vld [vmem:[#allocation8 + $0xa58] sm:$0xff]
    %v3469 = vld [vmem:[#allocation8 + $0xa60] sm:$0xff]
    %v3470 = vld [vmem:[#allocation8 + $0xa68] sm:$0xff]
    %v3471 = vld [vmem:[#allocation8 + $0xa70] sm:$0xff]
    %v3472 = vld [vmem:[#allocation8 + $0xa78] sm:$0xff]
    %v3473 = vld [vmem:[#allocation8 + $0xa80] sm:$0xff]
    %v3474 = vld [vmem:[#allocation8 + $0xa88] sm:$0xff]
    %v3475 = vld [vmem:[#allocation8 + $0xa90] sm:$0xff]
    %v3476 = vld [vmem:[#allocation8 + $0xa98] sm:$0xff]
    %v3477 = vld [vmem:[#allocation8 + $0xaa0] sm:$0xff]
    %v3478 = vld [vmem:[#allocation8 + $0xaa8] sm:$0xff]
    %v3479 = vld [vmem:[#allocation8 + $0xab0] sm:$0xff]
    %v3480 = vld [vmem:[#allocation8 + $0xab8] sm:$0xff]
    %v3481 = vld [vmem:[#allocation8 + $0xac0] sm:$0xff]
    %v3482 = vld [vmem:[#allocation8 + $0xac8] sm:$0xff]
    %v3483 = vld [vmem:[#allocation8 + $0xad0] sm:$0xff]
    %v3484 = vld [vmem:[#allocation8 + $0xad8] sm:$0xff]
    %v3485 = vld [vmem:[#allocation8 + $0xae0] sm:$0xff]
    %v3486 = vld [vmem:[#allocation8 + $0xae8] sm:$0xff]
    %v3487 = vld [vmem:[#allocation8 + $0xaf0] sm:$0xff]
    %v3488 = vld [vmem:[#allocation8 + $0xaf8] sm:$0xff]
    %v3489 = vld [vmem:[#allocation8 + $0xb00] sm:$0xff]
    %v3490 = vld [vmem:[#allocation8 + $0xb08] sm:$0xff]
    %v3491 = vld [vmem:[#allocation8 + $0xb10] sm:$0xff]
    %v3492 = vld [vmem:[#allocation8 + $0xb18] sm:$0xff]
    %v3493 = vld [vmem:[#allocation8 + $0xb20] sm:$0xff]
    %v3494 = vld [vmem:[#allocation8 + $0xb28] sm:$0xff]
    %v3495 = vld [vmem:[#allocation8 + $0xb30] sm:$0xff]
    %v3496 = vld [vmem:[#allocation8 + $0xb38] sm:$0xff]
    %v3497 = vld [vmem:[#allocation8 + $0xb40] sm:$0xff]
    %v3498 = vld [vmem:[#allocation8 + $0xb48] sm:$0xff]
    %v3499 = vld [vmem:[#allocation8 + $0xb50] sm:$0xff]
    %v3500 = vld [vmem:[#allocation8 + $0xb58] sm:$0xff]
    %v3501 = vld [vmem:[#allocation8 + $0xb60] sm:$0xff]
    %v3502 = vld [vmem:[#allocation8 + $0xb68] sm:$0xff]
    %v3503 = vld [vmem:[#allocation8 + $0xb70] sm:$0xff]
    %v3504 = vld [vmem:[#allocation8 + $0xb78] sm:$0xff]
    %v3505 = vld [vmem:[#allocation8 + $0xb80] sm:$0xff]
    %v3506 = vld [vmem:[#allocation8 + $0xb88] sm:$0xff]
    %v3507 = vld [vmem:[#allocation8 + $0xb90] sm:$0xff]
    %v3508 = vld [vmem:[#allocation8 + $0xb98] sm:$0xff]
    %v3509 = vld [vmem:[#allocation8 + $0xba0] sm:$0xff]
    %v3510 = vld [vmem:[#allocation8 + $0xba8] sm:$0xff]
    %v3511 = vld [vmem:[#allocation8 + $0xbb0] sm:$0xff]
    %v3512 = vld [vmem:[#allocation8 + $0xbb8] sm:$0xff]
    %v3513 = vld [vmem:[#allocation8 + $0xbc0] sm:$0xff]
    %v3514 = vld [vmem:[#allocation8 + $0xbc8] sm:$0xff]
    %v3515 = vld [vmem:[#allocation8 + $0xbd0] sm:$0xff]
    %v3516 = vld [vmem:[#allocation8 + $0xbd8] sm:$0xff]
    %v3517 = vld [vmem:[#allocation8 + $0xbe0] sm:$0xff]
    %v3518 = vld [vmem:[#allocation8 + $0xbe8] sm:$0xff]
    %v3519 = vld [vmem:[#allocation8 + $0xbf0] sm:$0xff]
    %v3520 = vld [vmem:[#allocation8 + $0xbf8] sm:$0xff]
    %v3521 = vld [vmem:[#allocation8 + $0xc00] sm:$0xff]
    %v3522 = vld [vmem:[#allocation8 + $0xc08] sm:$0xff]
    %v3523 = vld [vmem:[#allocation8 + $0xc10] sm:$0xff]
    %v3524 = vld [vmem:[#allocation8 + $0xc18] sm:$0xff]
    %v3525 = vld [vmem:[#allocation8 + $0xc20] sm:$0xff]
    %v3526 = vld [vmem:[#allocation8 + $0xc28] sm:$0xff]
    %v3527 = vld [vmem:[#allocation8 + $0xc30] sm:$0xff]
    %v3528 = vld [vmem:[#allocation8 + $0xc38] sm:$0xff]
    %v3529 = vld [vmem:[#allocation8 + $0xc40] sm:$0xff]
    %v3530 = vld [vmem:[#allocation8 + $0xc48] sm:$0xff]
    %v3531 = vld [vmem:[#allocation8 + $0xc50] sm:$0xff]
    %v3532 = vld [vmem:[#allocation8 + $0xc58] sm:$0xff]
    %v3533 = vld [vmem:[#allocation8 + $0xc60] sm:$0xff]
    %v3534 = vld [vmem:[#allocation8 + $0xc68] sm:$0xff]
    %v3535 = vld [vmem:[#allocation8 + $0xc70] sm:$0xff]
    %v3536 = vld [vmem:[#allocation8 + $0xc78] sm:$0xff]
    %v3537 = vld [vmem:[#allocation8 + $0xc80] sm:$0xff]
    %v3538 = vld [vmem:[#allocation8 + $0xc88] sm:$0xff]
    %v3539 = vld [vmem:[#allocation8 + $0xc90] sm:$0xff]
    %v3540 = vld [vmem:[#allocation8 + $0xc98] sm:$0xff]
    %v3541 = vld [vmem:[#allocation8 + $0xca0] sm:$0xff]
    %v3542 = vld [vmem:[#allocation8 + $0xca8] sm:$0xff]
    %v3543 = vld [vmem:[#allocation8 + $0xcb0] sm:$0xff]
    %v3544 = vld [vmem:[#allocation8 + $0xcb8] sm:$0xff]
    %v3545 = vld [vmem:[#allocation8 + $0xcc0] sm:$0xff]
    %v3546 = vld [vmem:[#allocation8 + $0xcc8] sm:$0xff]
    %v3547 = vld [vmem:[#allocation8 + $0xcd0] sm:$0xff]
    %v3548 = vld [vmem:[#allocation8 + $0xcd8] sm:$0xff]
    %v3549 = vld [vmem:[#allocation8 + $0xce0] sm:$0xff]
    %v3550 = vld [vmem:[#allocation8 + $0xce8] sm:$0xff]
    %v3551 = vld [vmem:[#allocation8 + $0xcf0] sm:$0xff]
    %v3552 = vld [vmem:[#allocation8 + $0xcf8] sm:$0xff]
    %v3553 = vld [vmem:[#allocation8 + $0xd00] sm:$0xff]
    %v3554 = vld [vmem:[#allocation8 + $0xd08] sm:$0xff]
    %v3555 = vld [vmem:[#allocation8 + $0xd10] sm:$0xff]
    %v3556 = vld [vmem:[#allocation8 + $0xd18] sm:$0xff]
    %v3557 = vld [vmem:[#allocation8 + $0xd20] sm:$0xff]
    %v3558 = vld [vmem:[#allocation8 + $0xd28] sm:$0xff]
    %v3559 = vld [vmem:[#allocation8 + $0xd30] sm:$0xff]
    %v3560 = vld [vmem:[#allocation8 + $0xd38] sm:$0xff]
    %v3561 = vld [vmem:[#allocation8 + $0xd40] sm:$0xff]
    %v3562 = vld [vmem:[#allocation8 + $0xd48] sm:$0xff]
    %v3563 = vld [vmem:[#allocation8 + $0xd50] sm:$0xff]
    %v3564 = vld [vmem:[#allocation8 + $0xd58] sm:$0xff]
    %v3565 = vld [vmem:[#allocation8 + $0xd60] sm:$0xff]
    %v3566 = vld [vmem:[#allocation8 + $0xd68] sm:$0xff]
    %v3567 = vld [vmem:[#allocation8 + $0xd70] sm:$0xff]
    %v3568 = vld [vmem:[#allocation8 + $0xd78] sm:$0xff]
    %v3569 = vld [vmem:[#allocation8 + $0xd80] sm:$0xff]
    %v3570 = vld [vmem:[#allocation8 + $0xd88] sm:$0xff]
    %v3571 = vld [vmem:[#allocation8 + $0xd90] sm:$0xff]
    %v3572 = vld [vmem:[#allocation8 + $0xd98] sm:$0xff]
    %v3573 = vld [vmem:[#allocation8 + $0xda0] sm:$0xff]
    %v3574 = vld [vmem:[#allocation8 + $0xda8] sm:$0xff]
    %v3575 = vld [vmem:[#allocation8 + $0xdb0] sm:$0xff]
    %v3576 = vld [vmem:[#allocation8 + $0xdb8] sm:$0xff]
    %v3577 = vld [vmem:[#allocation8 + $0xdc0] sm:$0xff]
    %v3578 = vld [vmem:[#allocation8 + $0xdc8] sm:$0xff]
    %v3579 = vld [vmem:[#allocation8 + $0xdd0] sm:$0xff]
    %v3580 = vld [vmem:[#allocation8 + $0xdd8] sm:$0xff]
    %v3581 = vld [vmem:[#allocation8 + $0xde0] sm:$0xff]
    %v3582 = vld [vmem:[#allocation8 + $0xde8] sm:$0xff]
    %v3583 = vld [vmem:[#allocation8 + $0xdf0] sm:$0xff]
    %v3584 = vld [vmem:[#allocation8 + $0xdf8] sm:$0xff]
    %v3585 = vld [vmem:[#allocation8 + $0xe00] sm:$0xff]
    %v3586 = vld [vmem:[#allocation8 + $0xe08] sm:$0xff]
    %v3587 = vld [vmem:[#allocation8 + $0xe10] sm:$0xff]
    %v3588 = vld [vmem:[#allocation8 + $0xe18] sm:$0xff]
    %v3589 = vld [vmem:[#allocation8 + $0xe20] sm:$0xff]
    %v3590 = vld [vmem:[#allocation8 + $0xe28] sm:$0xff]
    %v3591 = vld [vmem:[#allocation8 + $0xe30] sm:$0xff]
    %v3592 = vld [vmem:[#allocation8 + $0xe38] sm:$0xff]
    %v3593 = vld [vmem:[#allocation8 + $0xe40] sm:$0xff]
    %v3594 = vld [vmem:[#allocation8 + $0xe48] sm:$0xff]
    %v3595 = vld [vmem:[#allocation8 + $0xe50] sm:$0xff]
    %v3596 = vld [vmem:[#allocation8 + $0xe58] sm:$0xff]
    %v3597 = vld [vmem:[#allocation8 + $0xe60] sm:$0xff]
    %v3598 = vld [vmem:[#allocation8 + $0xe68] sm:$0xff]
    %v3599 = vld [vmem:[#allocation8 + $0xe70] sm:$0xff]
    %v3600 = vld [vmem:[#allocation8 + $0xe78] sm:$0xff]
    %v3601 = vld [vmem:[#allocation8 + $0xe80] sm:$0xff]
    %v3602 = vld [vmem:[#allocation8 + $0xe88] sm:$0xff]
    %v3603 = vld [vmem:[#allocation8 + $0xe90] sm:$0xff]
    %v3604 = vld [vmem:[#allocation8 + $0xe98] sm:$0xff]
    %v3605 = vld [vmem:[#allocation8 + $0xea0] sm:$0xff]
    %v3606 = vld [vmem:[#allocation8 + $0xea8] sm:$0xff]
    %v3607 = vld [vmem:[#allocation8 + $0xeb0] sm:$0xff]
    %v3608 = vld [vmem:[#allocation8 + $0xeb8] sm:$0xff]
    %v3609 = vld [vmem:[#allocation8 + $0xec0] sm:$0xff]
    %v3610 = vld [vmem:[#allocation8 + $0xec8] sm:$0xff]
    %v3611 = vld [vmem:[#allocation8 + $0xed0] sm:$0xff]
    %v3612 = vld [vmem:[#allocation8 + $0xed8] sm:$0xff]
    %v3613 = vld [vmem:[#allocation8 + $0xee0] sm:$0xff]
    %v3614 = vld [vmem:[#allocation8 + $0xee8] sm:$0xff]
    %v3615 = vld [vmem:[#allocation8 + $0xef0] sm:$0xff]
    %v3616 = vld [vmem:[#allocation8 + $0xef8] sm:$0xff]
    %v3617 = vld [vmem:[#allocation8 + $0xf00] sm:$0xff]
    %v3618 = vld [vmem:[#allocation8 + $0xf08] sm:$0xff]
    %v3619 = vld [vmem:[#allocation8 + $0xf10] sm:$0xff]
    %v3620 = vld [vmem:[#allocation8 + $0xf18] sm:$0xff]
    %v3621 = vld [vmem:[#allocation8 + $0xf20] sm:$0xff]
    %v3622 = vld [vmem:[#allocation8 + $0xf28] sm:$0xff]
    %v3623 = vld [vmem:[#allocation8 + $0xf30] sm:$0xff]
    %v3624 = vld [vmem:[#allocation8 + $0xf38] sm:$0xff]
    %v3625 = vld [vmem:[#allocation8 + $0xf40] sm:$0xff]
    %v3626 = vld [vmem:[#allocation8 + $0xf48] sm:$0xff]
    %v3627 = vld [vmem:[#allocation8 + $0xf50] sm:$0xff]
    %v3628 = vld [vmem:[#allocation8 + $0xf58] sm:$0xff]
    %v3629 = vld [vmem:[#allocation8 + $0xf60] sm:$0xff]
    %v3630 = vld [vmem:[#allocation8 + $0xf68] sm:$0xff]
    %v3631 = vld [vmem:[#allocation8 + $0xf70] sm:$0xff]
    %v3632 = vld [vmem:[#allocation8 + $0xf78] sm:$0xff]
    %v3633 = vld [vmem:[#allocation8 + $0xf80] sm:$0xff]
    %v3634 = vld [vmem:[#allocation8 + $0xf88] sm:$0xff]
    %v3635 = vld [vmem:[#allocation8 + $0xf90] sm:$0xff]
    %v3636 = vld [vmem:[#allocation8 + $0xf98] sm:$0xff]
    %v3637 = vld [vmem:[#allocation8 + $0xfa0] sm:$0xff]
    %v3638 = vld [vmem:[#allocation8 + $0xfa8] sm:$0xff]
    %v3639 = vld [vmem:[#allocation8 + $0xfb0] sm:$0xff]
    %v3640 = vld [vmem:[#allocation8 + $0xfb8] sm:$0xff]
    %v3641 = vld [vmem:[#allocation8 + $0xfc0] sm:$0xff]
    %v3642 = vld [vmem:[#allocation8 + $0xfc8] sm:$0xff]
    %v3643 = vld [vmem:[#allocation8 + $0xfd0] sm:$0xff]
    %v3644 = vld [vmem:[#allocation8 + $0xfd8] sm:$0xff]
    %v3645 = vld [vmem:[#allocation8 + $0xfe0] sm:$0xff]
    %v3646 = vld [vmem:[#allocation8 + $0xfe8] sm:$0xff]
    %v3647 = vld [vmem:[#allocation8 + $0xff0] sm:$0xff]
    %v3648 = vld [vmem:[#allocation8 + $0xff8] sm:$0xff]
    %v3649 = vld [vmem:[#allocation8 + $0x1000] sm:$0xff]
    %v3650 = vld [vmem:[#allocation8 + $0x1008] sm:$0xff]
    %v3651 = vld [vmem:[#allocation8 + $0x1010] sm:$0xff]
    %v3652 = vld [vmem:[#allocation8 + $0x1018] sm:$0xff]
    %v3653 = vld [vmem:[#allocation8 + $0x1020] sm:$0xff]
    %v3654 = vld [vmem:[#allocation8 + $0x1028] sm:$0xff]
    %v3655 = vld [vmem:[#allocation8 + $0x1030] sm:$0xff]
    %v3656 = vld [vmem:[#allocation8 + $0x1038] sm:$0xff]
    %v3657 = vld [vmem:[#allocation8 + $0x1040] sm:$0xff]
    %v3658 = vld [vmem:[#allocation8 + $0x1048] sm:$0xff]
    %v3659 = vld [vmem:[#allocation8 + $0x1050] sm:$0xff]
    %v3660 = vld [vmem:[#allocation8 + $0x1058] sm:$0xff]
    %v3661 = vld [vmem:[#allocation8 + $0x1060] sm:$0xff]
    %v3662 = vld [vmem:[#allocation8 + $0x1068] sm:$0xff]
    %v3663 = vld [vmem:[#allocation8 + $0x1070] sm:$0xff]
    %v3664 = vld [vmem:[#allocation8 + $0x1078] sm:$0xff]
    %v3665 = vld [vmem:[#allocation8 + $0x1080] sm:$0xff]
    %v3666 = vld [vmem:[#allocation8 + $0x1088] sm:$0xff]
    %v3667 = vld [vmem:[#allocation8 + $0x1090] sm:$0xff]
    %v3668 = vld [vmem:[#allocation8 + $0x1098] sm:$0xff]
    %v3669 = vld [vmem:[#allocation8 + $0x10a0] sm:$0xff]
    %v3670 = vld [vmem:[#allocation8 + $0x10a8] sm:$0xff]
    %v3671 = vld [vmem:[#allocation8 + $0x10b0] sm:$0xff]
    %v3672 = vld [vmem:[#allocation8 + $0x10b8] sm:$0xff]
    %v3673 = vld [vmem:[#allocation8 + $0x10c0] sm:$0xff]
    %v3674 = vld [vmem:[#allocation8 + $0x10c8] sm:$0xff]
    %v3675 = vld [vmem:[#allocation8 + $0x10d0] sm:$0xff]
    %v3676 = vld [vmem:[#allocation8 + $0x10d8] sm:$0xff]
    %v3677 = vld [vmem:[#allocation8 + $0x10e0] sm:$0xff]
    %v3678 = vld [vmem:[#allocation8 + $0x10e8] sm:$0xff]
    %v3679 = vld [vmem:[#allocation8 + $0x10f0] sm:$0xff]
    %v3680 = vld [vmem:[#allocation8 + $0x10f8] sm:$0xff]
    %v3681 = vld [vmem:[#allocation8 + $0x1100] sm:$0xff]
    %v3682 = vld [vmem:[#allocation8 + $0x1108] sm:$0xff]
    %v3683 = vld [vmem:[#allocation8 + $0x1110] sm:$0xff]
    %v3684 = vld [vmem:[#allocation8 + $0x1118] sm:$0xff]
    %v3685 = vld [vmem:[#allocation8 + $0x1120] sm:$0xff]
    %v3686 = vld [vmem:[#allocation8 + $0x1128] sm:$0xff]
    %v3687 = vld [vmem:[#allocation8 + $0x1130] sm:$0xff]
    %v3688 = vld [vmem:[#allocation8 + $0x1138] sm:$0xff]
    %v3689 = vld [vmem:[#allocation8 + $0x1140] sm:$0xff]
    %v3690 = vld [vmem:[#allocation8 + $0x1148] sm:$0xff]
    %v3691 = vld [vmem:[#allocation8 + $0x1150] sm:$0xff]
    %v3692 = vld [vmem:[#allocation8 + $0x1158] sm:$0xff]
    %v3693 = vld [vmem:[#allocation8 + $0x1160] sm:$0xff]
    %v3694 = vld [vmem:[#allocation8 + $0x1168] sm:$0xff]
    %v3695 = vld [vmem:[#allocation8 + $0x1170] sm:$0xff]
    %v3696 = vld [vmem:[#allocation8 + $0x1178] sm:$0xff]
    %v3697 = vld [vmem:[#allocation8 + $0x1180] sm:$0xff]
    %v3698 = vld [vmem:[#allocation8 + $0x1188] sm:$0xff]
    %v3699 = vld [vmem:[#allocation8 + $0x1190] sm:$0xff]
    %v3700 = vld [vmem:[#allocation8 + $0x1198] sm:$0xff]
    %v3701 = vld [vmem:[#allocation8 + $0x11a0] sm:$0xff]
    %v3702 = vld [vmem:[#allocation8 + $0x11a8] sm:$0xff]
    %v3703 = vld [vmem:[#allocation8 + $0x11b0] sm:$0xff]
    %v3704 = vld [vmem:[#allocation8 + $0x11b8] sm:$0xff]
    %v3705 = vld [vmem:[#allocation8 + $0x11c0] sm:$0xff]
    %v3706 = vld [vmem:[#allocation8 + $0x11c8] sm:$0xff]
    %v3707 = vld [vmem:[#allocation8 + $0x11d0] sm:$0xff]
    %v3708 = vld [vmem:[#allocation8 + $0x11d8] sm:$0xff]
    %v3709 = vld [vmem:[#allocation8 + $0x11e0] sm:$0xff]
    %v3710 = vld [vmem:[#allocation8 + $0x11e8] sm:$0xff]
    %v3711 = vld [vmem:[#allocation8 + $0x11f0] sm:$0xff]
    %v3712 = vld [vmem:[#allocation8 + $0x11f8] sm:$0xff]
    %v3713 = vld [vmem:[#allocation8 + $0x1200] sm:$0xff]
    %v3714 = vld [vmem:[#allocation8 + $0x1208] sm:$0xff]
    %v3715 = vld [vmem:[#allocation8 + $0x1210] sm:$0xff]
    %v3716 = vld [vmem:[#allocation8 + $0x1218] sm:$0xff]
    %v3717 = vld [vmem:[#allocation8 + $0x1220] sm:$0xff]
    %v3718 = vld [vmem:[#allocation8 + $0x1228] sm:$0xff]
    %v3719 = vld [vmem:[#allocation8 + $0x1230] sm:$0xff]
    %v3720 = vld [vmem:[#allocation8 + $0x1238] sm:$0xff]
    %v3721 = vld [vmem:[#allocation8 + $0x1240] sm:$0xff]
    %v3722 = vld [vmem:[#allocation8 + $0x1248] sm:$0xff]
    %v3723 = vld [vmem:[#allocation8 + $0x1250] sm:$0xff]
    %v3724 = vld [vmem:[#allocation8 + $0x1258] sm:$0xff]
    %v3725 = vld [vmem:[#allocation8 + $0x1260] sm:$0xff]
    %v3726 = vld [vmem:[#allocation8 + $0x1268] sm:$0xff]
    %v3727 = vld [vmem:[#allocation8 + $0x1270] sm:$0xff]
    %v3728 = vld [vmem:[#allocation8 + $0x1278] sm:$0xff]
    %v3729 = vld [vmem:[#allocation8 + $0x1280] sm:$0xff]
    %v3730 = vld [vmem:[#allocation8 + $0x1288] sm:$0xff]
    %v3731 = vld [vmem:[#allocation8 + $0x1290] sm:$0xff]
    %v3732 = vld [vmem:[#allocation8 + $0x1298] sm:$0xff]
    %v3733 = vld [vmem:[#allocation8 + $0x12a0] sm:$0xff]
    %v3734 = vld [vmem:[#allocation8 + $0x12a8] sm:$0xff]
    %v3735 = vld [vmem:[#allocation8 + $0x12b0] sm:$0xff]
    %v3736 = vld [vmem:[#allocation8 + $0x12b8] sm:$0xff]
    %v3737 = vld [vmem:[#allocation8 + $0x12c0] sm:$0xff]
    %v3738 = vld [vmem:[#allocation8 + $0x12c8] sm:$0xff]
    %v3739 = vld [vmem:[#allocation8 + $0x12d0] sm:$0xff]
    %v3740 = vld [vmem:[#allocation8 + $0x12d8] sm:$0xff]
    %v3741 = vld [vmem:[#allocation8 + $0x12e0] sm:$0xff]
    %v3742 = vld [vmem:[#allocation8 + $0x12e8] sm:$0xff]
    %v3743 = vld [vmem:[#allocation8 + $0x12f0] sm:$0xff]
    %v3744 = vld [vmem:[#allocation8 + $0x12f8] sm:$0xff]
    %v3745 = vld [vmem:[#allocation8 + $0x1300] sm:$0xff]
    %v3746 = vld [vmem:[#allocation8 + $0x1308] sm:$0xff]
    %v3747 = vld [vmem:[#allocation8 + $0x1310] sm:$0xff]
    %v3748 = vld [vmem:[#allocation8 + $0x1318] sm:$0xff]
    %v3749 = vld [vmem:[#allocation8 + $0x1320] sm:$0xff]
    %v3750 = vld [vmem:[#allocation8 + $0x1328] sm:$0xff]
    %v3751 = vld [vmem:[#allocation8 + $0x1330] sm:$0xff]
    %v3752 = vld [vmem:[#allocation8 + $0x1338] sm:$0xff]
    %v3753 = vld [vmem:[#allocation8 + $0x1340] sm:$0xff]
    %v3754 = vld [vmem:[#allocation8 + $0x1348] sm:$0xff]
    %v3755 = vld [vmem:[#allocation8 + $0x1350] sm:$0xff]
    %v3756 = vld [vmem:[#allocation8 + $0x1358] sm:$0xff]
    %v3757 = vld [vmem:[#allocation8 + $0x1360] sm:$0xff]
    %v3758 = vld [vmem:[#allocation8 + $0x1368] sm:$0xff]
    %v3759 = vld [vmem:[#allocation8 + $0x1370] sm:$0xff]
    %v3760 = vld [vmem:[#allocation8 + $0x1378] sm:$0xff]
    %v3761 = vld [vmem:[#allocation8 + $0x1380] sm:$0xff]
    %v3762 = vld [vmem:[#allocation8 + $0x1388] sm:$0xff]
    %v3763 = vld [vmem:[#allocation8 + $0x1390] sm:$0xff]
    %v3764 = vld [vmem:[#allocation8 + $0x1398] sm:$0xff]
    %v3765 = vld [vmem:[#allocation8 + $0x13a0] sm:$0xff]
    %v3766 = vld [vmem:[#allocation8 + $0x13a8] sm:$0xff]
    %v3767 = vld [vmem:[#allocation8 + $0x13b0] sm:$0xff]
    %v3768 = vld [vmem:[#allocation8 + $0x13b8] sm:$0xff]
    %v3769 = vld [vmem:[#allocation8 + $0x13c0] sm:$0xff]
    %v3770 = vld [vmem:[#allocation8 + $0x13c8] sm:$0xff]
    %v3771 = vld [vmem:[#allocation8 + $0x13d0] sm:$0xff]
    %v3772 = vld [vmem:[#allocation8 + $0x13d8] sm:$0xff]
    %v3773 = vld [vmem:[#allocation8 + $0x13e0] sm:$0xff]
    %v3774 = vld [vmem:[#allocation8 + $0x13e8] sm:$0xff]
    %v3775 = vld [vmem:[#allocation8 + $0x13f0] sm:$0xff]
    %v3776 = vld [vmem:[#allocation8 + $0x13f8] sm:$0xff]
    %v3777 = vld [vmem:[#allocation8 + $0x1400] sm:$0xff]
    %v3778 = vld [vmem:[#allocation8 + $0x1408] sm:$0xff]
    %v3779 = vld [vmem:[#allocation8 + $0x1410] sm:$0xff]
    %v3780 = vld [vmem:[#allocation8 + $0x1418] sm:$0xff]
    %v3781 = vld [vmem:[#allocation8 + $0x1420] sm:$0xff]
    %v3782 = vld [vmem:[#allocation8 + $0x1428] sm:$0xff]
    %v3783 = vld [vmem:[#allocation8 + $0x1430] sm:$0xff]
    %v3784 = vld [vmem:[#allocation8 + $0x1438] sm:$0xff]
    %v3785 = vld [vmem:[#allocation8 + $0x1440] sm:$0xff]
    %v3786 = vld [vmem:[#allocation8 + $0x1448] sm:$0xff]
    %v3787 = vld [vmem:[#allocation8 + $0x1450] sm:$0xff]
    %v3788 = vld [vmem:[#allocation8 + $0x1458] sm:$0xff]
    %v3789 = vld [vmem:[#allocation8 + $0x1460] sm:$0xff]
    %v3790 = vld [vmem:[#allocation8 + $0x1468] sm:$0xff]
    %v3791 = vld [vmem:[#allocation8 + $0x1470] sm:$0xff]
    %v3792 = vld [vmem:[#allocation8 + $0x1478] sm:$0xff]
    %v3793 = vld [vmem:[#allocation8 + $0x1480] sm:$0xff]
    %v3794 = vld [vmem:[#allocation8 + $0x1488] sm:$0xff]
    %v3795 = vld [vmem:[#allocation8 + $0x1490] sm:$0xff]
    %v3796 = vld [vmem:[#allocation8 + $0x1498] sm:$0xff]
    %v3797 = vld [vmem:[#allocation8 + $0x14a0] sm:$0xff]
    %v3798 = vld [vmem:[#allocation8 + $0x14a8] sm:$0xff]
    %v3799 = vld [vmem:[#allocation8 + $0x14b0] sm:$0xff]
    %v3800 = vld [vmem:[#allocation8 + $0x14b8] sm:$0xff]
    %v3801 = vld [vmem:[#allocation8 + $0x14c0] sm:$0xff]
    %v3802 = vld [vmem:[#allocation8 + $0x14c8] sm:$0xff]
    %v3803 = vld [vmem:[#allocation8 + $0x14d0] sm:$0xff]
    %v3804 = vld [vmem:[#allocation8 + $0x14d8] sm:$0xff]
    %v3805 = vld [vmem:[#allocation8 + $0x14e0] sm:$0xff]
    %v3806 = vld [vmem:[#allocation8 + $0x14e8] sm:$0xff]
    %v3807 = vld [vmem:[#allocation8 + $0x14f0] sm:$0xff]
    %v3808 = vld [vmem:[#allocation8 + $0x14f8] sm:$0xff]
    %v3809 = vld [vmem:[#allocation8 + $0x1500] sm:$0xff]
    %v3810 = vld [vmem:[#allocation8 + $0x1508] sm:$0xff]
    %v3811 = vld [vmem:[#allocation8 + $0x1510] sm:$0xff]
    %v3812 = vld [vmem:[#allocation8 + $0x1518] sm:$0xff]
    %v3813 = vld [vmem:[#allocation8 + $0x1520] sm:$0xff]
    %v3814 = vld [vmem:[#allocation8 + $0x1528] sm:$0xff]
    %v3815 = vld [vmem:[#allocation8 + $0x1530] sm:$0xff]
    %v3816 = vld [vmem:[#allocation8 + $0x1538] sm:$0xff]
    %v3817 = vld [vmem:[#allocation8 + $0x1540] sm:$0xff]
    %v3818 = vld [vmem:[#allocation8 + $0x1548] sm:$0xff]
    %v3819 = vld [vmem:[#allocation8 + $0x1550] sm:$0xff]
    %v3820 = vld [vmem:[#allocation8 + $0x1558] sm:$0xff]
    %v3821 = vld [vmem:[#allocation8 + $0x1560] sm:$0xff]
    %v3822 = vld [vmem:[#allocation8 + $0x1568] sm:$0xff]
    %v3823 = vld [vmem:[#allocation8 + $0x1570] sm:$0xff]
    %v3824 = vld [vmem:[#allocation8 + $0x1578] sm:$0xff]
    %v3825 = vld [vmem:[#allocation8 + $0x1580] sm:$0xff]
    %v3826 = vld [vmem:[#allocation8 + $0x1588] sm:$0xff]
    %v3827 = vld [vmem:[#allocation8 + $0x1590] sm:$0xff]
    %v3828 = vld [vmem:[#allocation8 + $0x1598] sm:$0xff]
    %v3829 = vld [vmem:[#allocation8 + $0x15a0] sm:$0xff]
    %v3830 = vld [vmem:[#allocation8 + $0x15a8] sm:$0xff]
    %v3831 = vld [vmem:[#allocation8 + $0x15b0] sm:$0xff]
    %v3832 = vld [vmem:[#allocation8 + $0x15b8] sm:$0xff]
    %v3833 = vld [vmem:[#allocation8 + $0x15c0] sm:$0xff]
    %v3834 = vld [vmem:[#allocation8 + $0x15c8] sm:$0xff]
    %v3835 = vld [vmem:[#allocation8 + $0x15d0] sm:$0xff]
    %v3836 = vld [vmem:[#allocation8 + $0x15d8] sm:$0xff]
    %v3837 = vld [vmem:[#allocation8 + $0x15e0] sm:$0xff]
    %v3838 = vld [vmem:[#allocation8 + $0x15e8] sm:$0xff]
    %v3839 = vld [vmem:[#allocation8 + $0x15f0] sm:$0xff]
    %v3840 = vld [vmem:[#allocation8 + $0x15f8] sm:$0xff]
    %v3841 = vld [vmem:[#allocation8 + $0x1600] sm:$0xff]
    %v3842 = vld [vmem:[#allocation8 + $0x1608] sm:$0xff]
    %v3843 = vld [vmem:[#allocation8 + $0x1610] sm:$0xff]
    %v3844 = vld [vmem:[#allocation8 + $0x1618] sm:$0xff]
    %v3845 = vld [vmem:[#allocation8 + $0x1620] sm:$0xff]
    %v3846 = vld [vmem:[#allocation8 + $0x1628] sm:$0xff]
    %v3847 = vld [vmem:[#allocation8 + $0x1630] sm:$0xff]
    %v3848 = vld [vmem:[#allocation8 + $0x1638] sm:$0xff]
    %v3849 = vld [vmem:[#allocation8 + $0x1640] sm:$0xff]
    %v3850 = vld [vmem:[#allocation8 + $0x1648] sm:$0xff]
    %v3851 = vld [vmem:[#allocation8 + $0x1650] sm:$0xff]
    %v3852 = vld [vmem:[#allocation8 + $0x1658] sm:$0xff]
    %v3853 = vld [vmem:[#allocation8 + $0x1660] sm:$0xff]
    %v3854 = vld [vmem:[#allocation8 + $0x1668] sm:$0xff]
    %v3855 = vld [vmem:[#allocation8 + $0x1670] sm:$0xff]
    %v3856 = vld [vmem:[#allocation8 + $0x1678] sm:$0xff]
    %v3857 = vld [vmem:[#allocation8 + $0x1680] sm:$0xff]
    %v3858 = vld [vmem:[#allocation8 + $0x1688] sm:$0xff]
    %v3859 = vld [vmem:[#allocation8 + $0x1690] sm:$0xff]
    %v3860 = vld [vmem:[#allocation8 + $0x1698] sm:$0xff]
    %v3861 = vld [vmem:[#allocation8 + $0x16a0] sm:$0xff]
    %v3862 = vld [vmem:[#allocation8 + $0x16a8] sm:$0xff]
    %v3863 = vld [vmem:[#allocation8 + $0x16b0] sm:$0xff]
    %v3864 = vld [vmem:[#allocation8 + $0x16b8] sm:$0xff]
    %v3865 = vld [vmem:[#allocation8 + $0x16c0] sm:$0xff]
    %v3866 = vld [vmem:[#allocation8 + $0x16c8] sm:$0xff]
    %v3867 = vld [vmem:[#allocation8 + $0x16d0] sm:$0xff]
    %v3868 = vld [vmem:[#allocation8 + $0x16d8] sm:$0xff]
    %v3869 = vld [vmem:[#allocation8 + $0x16e0] sm:$0xff]
    %v3870 = vld [vmem:[#allocation8 + $0x16e8] sm:$0xff]
    %v3871 = vld [vmem:[#allocation8 + $0x16f0] sm:$0xff]
    %v3872 = vld [vmem:[#allocation8 + $0x16f8] sm:$0xff]
    %v3873 = vld [vmem:[#allocation8 + $0x1700] sm:$0xff]
    %v3874 = vld [vmem:[#allocation8 + $0x1708] sm:$0xff]
    %v3875 = vld [vmem:[#allocation8 + $0x1710] sm:$0xff]
    %v3876 = vld [vmem:[#allocation8 + $0x1718] sm:$0xff]
    %v3877 = vld [vmem:[#allocation8 + $0x1720] sm:$0xff]
    %v3878 = vld [vmem:[#allocation8 + $0x1728] sm:$0xff]
    %v3879 = vld [vmem:[#allocation8 + $0x1730] sm:$0xff]
    %v3880 = vld [vmem:[#allocation8 + $0x1738] sm:$0xff]
    %v3881 = vld [vmem:[#allocation8 + $0x1740] sm:$0xff]
    %v3882 = vld [vmem:[#allocation8 + $0x1748] sm:$0xff]
    %v3883 = vld [vmem:[#allocation8 + $0x1750] sm:$0xff]
    %v3884 = vld [vmem:[#allocation8 + $0x1758] sm:$0xff]
    %v3885 = vld [vmem:[#allocation8 + $0x1760] sm:$0xff]
    %v3886 = vld [vmem:[#allocation8 + $0x1768] sm:$0xff]
    %v3887 = vld [vmem:[#allocation8 + $0x1770] sm:$0xff]
    %v3888 = vld [vmem:[#allocation8 + $0x1778] sm:$0xff]
    %v3889 = vld [vmem:[#allocation8 + $0x1780] sm:$0xff]
    %v3890 = vld [vmem:[#allocation8 + $0x1788] sm:$0xff]
    %v3891 = vld [vmem:[#allocation8 + $0x1790] sm:$0xff]
    %v3892 = vld [vmem:[#allocation8 + $0x1798] sm:$0xff]
    %v3893 = vld [vmem:[#allocation8 + $0x17a0] sm:$0xff]
    %v3894 = vld [vmem:[#allocation8 + $0x17a8] sm:$0xff]
    %v3895 = vld [vmem:[#allocation8 + $0x17b0] sm:$0xff]
    %v3896 = vld [vmem:[#allocation8 + $0x17b8] sm:$0xff]
    %v3897 = vld [vmem:[#allocation8 + $0x17c0] sm:$0xff]
    %v3898 = vld [vmem:[#allocation8 + $0x17c8] sm:$0xff]
    %v3899 = vld [vmem:[#allocation8 + $0x17d0] sm:$0xff]
    %v3900 = vld [vmem:[#allocation8 + $0x17d8] sm:$0xff]
    %v3901 = vld [vmem:[#allocation8 + $0x17e0] sm:$0xff]
    %v3902 = vld [vmem:[#allocation8 + $0x17e8] sm:$0xff]
    %v3903 = vld [vmem:[#allocation8 + $0x17f0] sm:$0xff]
    %v3904 = vld [vmem:[#allocation8 + $0x17f8] sm:$0xff]
    %v3905 = vld [vmem:[#allocation8 + $0x1800] sm:$0xff]
    %v3906 = vld [vmem:[#allocation8 + $0x1808] sm:$0xff]
    %v3907 = vld [vmem:[#allocation8 + $0x1810] sm:$0xff]
    %v3908 = vld [vmem:[#allocation8 + $0x1818] sm:$0xff]
    %v3909 = vld [vmem:[#allocation8 + $0x1820] sm:$0xff]
    %v3910 = vld [vmem:[#allocation8 + $0x1828] sm:$0xff]
    %v3911 = vld [vmem:[#allocation8 + $0x1830] sm:$0xff]
    %v3912 = vld [vmem:[#allocation8 + $0x1838] sm:$0xff]
    %v3913 = vld [vmem:[#allocation8 + $0x1840] sm:$0xff]
    %v3914 = vld [vmem:[#allocation8 + $0x1848] sm:$0xff]
    %v3915 = vld [vmem:[#allocation8 + $0x1850] sm:$0xff]
    %v3916 = vld [vmem:[#allocation8 + $0x1858] sm:$0xff]
    %v3917 = vld [vmem:[#allocation8 + $0x1860] sm:$0xff]
    %v3918 = vld [vmem:[#allocation8 + $0x1868] sm:$0xff]
    %v3919 = vld [vmem:[#allocation8 + $0x1870] sm:$0xff]
    %v3920 = vld [vmem:[#allocation8 + $0x1878] sm:$0xff]
    %v3921 = vld [vmem:[#allocation8 + $0x1880] sm:$0xff]
    %v3922 = vld [vmem:[#allocation8 + $0x1888] sm:$0xff]
    %v3923 = vld [vmem:[#allocation8 + $0x1890] sm:$0xff]
    %v3924 = vld [vmem:[#allocation8 + $0x1898] sm:$0xff]
    %v3925 = vld [vmem:[#allocation8 + $0x18a0] sm:$0xff]
    %v3926 = vld [vmem:[#allocation8 + $0x18a8] sm:$0xff]
    %v3927 = vld [vmem:[#allocation8 + $0x18b0] sm:$0xff]
    %v3928 = vld [vmem:[#allocation8 + $0x18b8] sm:$0xff]
    %v3929 = vld [vmem:[#allocation8 + $0x18c0] sm:$0xff]
    %v3930 = vld [vmem:[#allocation8 + $0x18c8] sm:$0xff]
    %v3931 = vld [vmem:[#allocation8 + $0x18d0] sm:$0xff]
    %v3932 = vld [vmem:[#allocation8 + $0x18d8] sm:$0xff]
    %v3933 = vld [vmem:[#allocation8 + $0x18e0] sm:$0xff]
    %v3934 = vld [vmem:[#allocation8 + $0x18e8] sm:$0xff]
    %v3935 = vld [vmem:[#allocation8 + $0x18f0] sm:$0xff]
    %v3936 = vld [vmem:[#allocation8 + $0x18f8] sm:$0xff]
    %v3937 = vld [vmem:[#allocation8 + $0x1900] sm:$0xff]
    %v3938 = vld [vmem:[#allocation8 + $0x1908] sm:$0xff]
    %v3939 = vld [vmem:[#allocation8 + $0x1910] sm:$0xff]
    %v3940 = vld [vmem:[#allocation8 + $0x1918] sm:$0xff]
    %v3941 = vld [vmem:[#allocation8 + $0x1920] sm:$0xff]
    %v3942 = vld [vmem:[#allocation8 + $0x1928] sm:$0xff]
    %v3943 = vld [vmem:[#allocation8 + $0x1930] sm:$0xff]
    %v3944 = vld [vmem:[#allocation8 + $0x1938] sm:$0xff]
    %v3945 = vld [vmem:[#allocation8 + $0x1940] sm:$0xff]
    %v3946 = vld [vmem:[#allocation8 + $0x1948] sm:$0xff]
    %v3947 = vld [vmem:[#allocation8 + $0x1950] sm:$0xff]
    %v3948 = vld [vmem:[#allocation8 + $0x1958] sm:$0xff]
    %v3949 = vld [vmem:[#allocation8 + $0x1960] sm:$0xff]
    %v3950 = vld [vmem:[#allocation8 + $0x1968] sm:$0xff]
    %v3951 = vld [vmem:[#allocation8 + $0x1970] sm:$0xff]
    %v3952 = vld [vmem:[#allocation8 + $0x1978] sm:$0xff]
    %v3953 = vld [vmem:[#allocation8 + $0x1980] sm:$0xff]
    %v3954 = vld [vmem:[#allocation8 + $0x1988] sm:$0xff]
    %v3955 = vld [vmem:[#allocation8 + $0x1990] sm:$0xff]
    %v3956 = vld [vmem:[#allocation8 + $0x1998] sm:$0xff]
    %v3957 = vld [vmem:[#allocation8 + $0x19a0] sm:$0xff]
    %v3958 = vld [vmem:[#allocation8 + $0x19a8] sm:$0xff]
    %v3959 = vld [vmem:[#allocation8 + $0x19b0] sm:$0xff]
    %v3960 = vld [vmem:[#allocation8 + $0x19b8] sm:$0xff]
    %v3961 = vld [vmem:[#allocation8 + $0x19c0] sm:$0xff]
    %v3962 = vld [vmem:[#allocation8 + $0x19c8] sm:$0xff]
    %v3963 = vld [vmem:[#allocation8 + $0x19d0] sm:$0xff]
    %v3964 = vld [vmem:[#allocation8 + $0x19d8] sm:$0xff]
    %v3965 = vld [vmem:[#allocation8 + $0x19e0] sm:$0xff]
    %v3966 = vld [vmem:[#allocation8 + $0x19e8] sm:$0xff]
    %v3967 = vld [vmem:[#allocation8 + $0x19f0] sm:$0xff]
    %v3968 = vld [vmem:[#allocation8 + $0x19f8] sm:$0xff]
    %v3969 = vld [vmem:[#allocation8 + $0x1a00] sm:$0xff]
    %v3970 = vld [vmem:[#allocation8 + $0x1a08] sm:$0xff]
    %v3971 = vld [vmem:[#allocation8 + $0x1a10] sm:$0xff]
    %v3972 = vld [vmem:[#allocation8 + $0x1a18] sm:$0xff]
    %v3973 = vld [vmem:[#allocation8 + $0x1a20] sm:$0xff]
    %v3974 = vld [vmem:[#allocation8 + $0x1a28] sm:$0xff]
    %v3975 = vld [vmem:[#allocation8 + $0x1a30] sm:$0xff]
    %v3976 = vld [vmem:[#allocation8 + $0x1a38] sm:$0xff]
    %v3977 = vld [vmem:[#allocation8 + $0x1a40] sm:$0xff]
    %v3978 = vld [vmem:[#allocation8 + $0x1a48] sm:$0xff]
    %v3979 = vld [vmem:[#allocation8 + $0x1a50] sm:$0xff]
    %v3980 = vld [vmem:[#allocation8 + $0x1a58] sm:$0xff]
    %v3981 = vld [vmem:[#allocation8 + $0x1a60] sm:$0xff]
    %v3982 = vld [vmem:[#allocation8 + $0x1a68] sm:$0xff]
    %v3983 = vld [vmem:[#allocation8 + $0x1a70] sm:$0xff]
    %v3984 = vld [vmem:[#allocation8 + $0x1a78] sm:$0xff]
    %v3985 = vld [vmem:[#allocation8 + $0x1a80] sm:$0xff]
    %v3986 = vld [vmem:[#allocation8 + $0x1a88] sm:$0xff]
    %v3987 = vld [vmem:[#allocation8 + $0x1a90] sm:$0xff]
    %v3988 = vld [vmem:[#allocation8 + $0x1a98] sm:$0xff]
    %v3989 = vld [vmem:[#allocation8 + $0x1aa0] sm:$0xff]
    %v3990 = vld [vmem:[#allocation8 + $0x1aa8] sm:$0xff]
    %v3991 = vld [vmem:[#allocation8 + $0x1ab0] sm:$0xff]
    %v3992 = vld [vmem:[#allocation8 + $0x1ab8] sm:$0xff]
    %v3993 = vld [vmem:[#allocation8 + $0x1ac0] sm:$0xff]
    %v3994 = vld [vmem:[#allocation8 + $0x1ac8] sm:$0xff]
    %v3995 = vld [vmem:[#allocation8 + $0x1ad0] sm:$0xff]
    %v3996 = vld [vmem:[#allocation8 + $0x1ad8] sm:$0xff]
    %v3997 = vld [vmem:[#allocation8 + $0x1ae0] sm:$0xff]
    %v3998 = vld [vmem:[#allocation8 + $0x1ae8] sm:$0xff]
    %v3999 = vld [vmem:[#allocation8 + $0x1af0] sm:$0xff]
    %v4000 = vld [vmem:[#allocation8 + $0x1af8] sm:$0xff]
    %v4001 = vld [vmem:[#allocation8 + $0x1b00] sm:$0xff]
    %v4002 = vld [vmem:[#allocation8 + $0x1b08] sm:$0xff]
    %v4003 = vld [vmem:[#allocation8 + $0x1b10] sm:$0xff]
    %v4004 = vld [vmem:[#allocation8 + $0x1b18] sm:$0xff]
    %v4005 = vld [vmem:[#allocation8 + $0x1b20] sm:$0xff]
    %v4006 = vld [vmem:[#allocation8 + $0x1b28] sm:$0xff]
    %v4007 = vld [vmem:[#allocation8 + $0x1b30] sm:$0xff]
    %v4008 = vld [vmem:[#allocation8 + $0x1b38] sm:$0xff]
    %v4009 = vld [vmem:[#allocation8 + $0x1b40] sm:$0xff]
    %v4010 = vld [vmem:[#allocation8 + $0x1b48] sm:$0xff]
    %v4011 = vld [vmem:[#allocation8 + $0x1b50] sm:$0xff]
    %v4012 = vld [vmem:[#allocation8 + $0x1b58] sm:$0xff]
    %v4013 = vld [vmem:[#allocation8 + $0x1b60] sm:$0xff]
    %v4014 = vld [vmem:[#allocation8 + $0x1b68] sm:$0xff]
    %v4015 = vld [vmem:[#allocation8 + $0x1b70] sm:$0xff]
    %v4016 = vld [vmem:[#allocation8 + $0x1b78] sm:$0xff]
    %v4017 = vld [vmem:[#allocation8 + $0x1b80] sm:$0xff]
    %v4018 = vld [vmem:[#allocation8 + $0x1b88] sm:$0xff]
    %v4019 = vld [vmem:[#allocation8 + $0x1b90] sm:$0xff]
    %v4020 = vld [vmem:[#allocation8 + $0x1b98] sm:$0xff]
    %v4021 = vld [vmem:[#allocation8 + $0x1ba0] sm:$0xff]
    %v4022 = vld [vmem:[#allocation8 + $0x1ba8] sm:$0xff]
    %v4023 = vld [vmem:[#allocation8 + $0x1bb0] sm:$0xff]
    %v4024 = vld [vmem:[#allocation8 + $0x1bb8] sm:$0xff]
    %v4025 = vld [vmem:[#allocation8 + $0x1bc0] sm:$0xff]
    %v4026 = vld [vmem:[#allocation8 + $0x1bc8] sm:$0xff]
    %v4027 = vld [vmem:[#allocation8 + $0x1bd0] sm:$0xff]
    %v4028 = vld [vmem:[#allocation8 + $0x1bd8] sm:$0xff]
    %v4029 = vld [vmem:[#allocation8 + $0x1be0] sm:$0xff]
    %v4030 = vld [vmem:[#allocation8 + $0x1be8] sm:$0xff]
    %v4031 = vld [vmem:[#allocation8 + $0x1bf0] sm:$0xff]
    %v4032 = vld [vmem:[#allocation8 + $0x1bf8] sm:$0xff]
    %v4033 = vld [vmem:[#allocation8 + $0x1c00] sm:$0xff]
    %v4034 = vld [vmem:[#allocation8 + $0x1c08] sm:$0xff]
    %v4035 = vld [vmem:[#allocation8 + $0x1c10] sm:$0xff]
    %v4036 = vld [vmem:[#allocation8 + $0x1c18] sm:$0xff]
    %v4037 = vld [vmem:[#allocation8 + $0x1c20] sm:$0xff]
    %v4038 = vld [vmem:[#allocation8 + $0x1c28] sm:$0xff]
    %v4039 = vld [vmem:[#allocation8 + $0x1c30] sm:$0xff]
    %v4040 = vld [vmem:[#allocation8 + $0x1c38] sm:$0xff]
    %v4041 = vld [vmem:[#allocation8 + $0x1c40] sm:$0xff]
    %v4042 = vld [vmem:[#allocation8 + $0x1c48] sm:$0xff]
    %v4043 = vld [vmem:[#allocation8 + $0x1c50] sm:$0xff]
    %v4044 = vld [vmem:[#allocation8 + $0x1c58] sm:$0xff]
    %v4045 = vld [vmem:[#allocation8 + $0x1c60] sm:$0xff]
    %v4046 = vld [vmem:[#allocation8 + $0x1c68] sm:$0xff]
    %v4047 = vld [vmem:[#allocation8 + $0x1c70] sm:$0xff]
    %v4048 = vld [vmem:[#allocation8 + $0x1c78] sm:$0xff]
    %v4049 = vld [vmem:[#allocation8 + $0x1c80] sm:$0xff]
    %v4050 = vld [vmem:[#allocation8 + $0x1c88] sm:$0xff]
    %v4051 = vld [vmem:[#allocation8 + $0x1c90] sm:$0xff]
    %v4052 = vld [vmem:[#allocation8 + $0x1c98] sm:$0xff]
    %v4053 = vld [vmem:[#allocation8 + $0x1ca0] sm:$0xff]
    %v4054 = vld [vmem:[#allocation8 + $0x1ca8] sm:$0xff]
    %v4055 = vld [vmem:[#allocation8 + $0x1cb0] sm:$0xff]
    %v4056 = vld [vmem:[#allocation8 + $0x1cb8] sm:$0xff]
    %v4057 = vld [vmem:[#allocation8 + $0x1cc0] sm:$0xff]
    %v4058 = vld [vmem:[#allocation8 + $0x1cc8] sm:$0xff]
    %v4059 = vld [vmem:[#allocation8 + $0x1cd0] sm:$0xff]
    %v4060 = vld [vmem:[#allocation8 + $0x1cd8] sm:$0xff]
    %v4061 = vld [vmem:[#allocation8 + $0x1ce0] sm:$0xff]
    %v4062 = vld [vmem:[#allocation8 + $0x1ce8] sm:$0xff]
    %v4063 = vld [vmem:[#allocation8 + $0x1cf0] sm:$0xff]
    %v4064 = vld [vmem:[#allocation8 + $0x1cf8] sm:$0xff]
    %v4065 = vld [vmem:[#allocation8 + $0x1d00] sm:$0xff]
    %v4066 = vld [vmem:[#allocation8 + $0x1d08] sm:$0xff]
    %v4067 = vld [vmem:[#allocation8 + $0x1d10] sm:$0xff]
    %v4068 = vld [vmem:[#allocation8 + $0x1d18] sm:$0xff]
    %v4069 = vld [vmem:[#allocation8 + $0x1d20] sm:$0xff]
    %v4070 = vld [vmem:[#allocation8 + $0x1d28] sm:$0xff]
    %v4071 = vld [vmem:[#allocation8 + $0x1d30] sm:$0xff]
    %v4072 = vld [vmem:[#allocation8 + $0x1d38] sm:$0xff]
    %v4073 = vld [vmem:[#allocation8 + $0x1d40] sm:$0xff]
    %v4074 = vld [vmem:[#allocation8 + $0x1d48] sm:$0xff]
    %v4075 = vld [vmem:[#allocation8 + $0x1d50] sm:$0xff]
    %v4076 = vld [vmem:[#allocation8 + $0x1d58] sm:$0xff]
    %v4077 = vld [vmem:[#allocation8 + $0x1d60] sm:$0xff]
    %v4078 = vld [vmem:[#allocation8 + $0x1d68] sm:$0xff]
    %v4079 = vld [vmem:[#allocation8 + $0x1d70] sm:$0xff]
    %v4080 = vld [vmem:[#allocation8 + $0x1d78] sm:$0xff]
    %v4081 = vld [vmem:[#allocation8 + $0x1d80] sm:$0xff]
    %v4082 = vld [vmem:[#allocation8 + $0x1d88] sm:$0xff]
    %v4083 = vld [vmem:[#allocation8 + $0x1d90] sm:$0xff]
    %v4084 = vld [vmem:[#allocation8 + $0x1d98] sm:$0xff]
    %v4085 = vld [vmem:[#allocation8 + $0x1da0] sm:$0xff]
    %v4086 = vld [vmem:[#allocation8 + $0x1da8] sm:$0xff]
    %v4087 = vld [vmem:[#allocation8 + $0x1db0] sm:$0xff]
    %v4088 = vld [vmem:[#allocation8 + $0x1db8] sm:$0xff]
    %v4089 = vld [vmem:[#allocation8 + $0x1dc0] sm:$0xff]
    %v4090 = vld [vmem:[#allocation8 + $0x1dc8] sm:$0xff]
    %v4091 = vld [vmem:[#allocation8 + $0x1dd0] sm:$0xff]
    %v4092 = vld [vmem:[#allocation8 + $0x1dd8] sm:$0xff]
    %v4093 = vld [vmem:[#allocation8 + $0x1de0] sm:$0xff]
    %v4094 = vld [vmem:[#allocation8 + $0x1de8] sm:$0xff]
    %v4095 = vld [vmem:[#allocation8 + $0x1df0] sm:$0xff]
    %v4096 = vld [vmem:[#allocation8 + $0x1df8] sm:$0xff]
    %v4097 = vld [vmem:[#allocation8 + $0x1e00] sm:$0xff]
    %v4098 = vld [vmem:[#allocation8 + $0x1e08] sm:$0xff]
    %v4099 = vld [vmem:[#allocation8 + $0x1e10] sm:$0xff]
    %v4100 = vld [vmem:[#allocation8 + $0x1e18] sm:$0xff]
    %v4101 = vld [vmem:[#allocation8 + $0x1e20] sm:$0xff]
    %v4102 = vld [vmem:[#allocation8 + $0x1e28] sm:$0xff]
    %v4103 = vld [vmem:[#allocation8 + $0x1e30] sm:$0xff]
    %v4104 = vld [vmem:[#allocation8 + $0x1e38] sm:$0xff]
    %v4105 = vld [vmem:[#allocation8 + $0x1e40] sm:$0xff]
    %v4106 = vld [vmem:[#allocation8 + $0x1e48] sm:$0xff]
    %v4107 = vld [vmem:[#allocation8 + $0x1e50] sm:$0xff]
    %v4108 = vld [vmem:[#allocation8 + $0x1e58] sm:$0xff]
    %v4109 = vld [vmem:[#allocation8 + $0x1e60] sm:$0xff]
    %v4110 = vld [vmem:[#allocation8 + $0x1e68] sm:$0xff]
    %v4111 = vld [vmem:[#allocation8 + $0x1e70] sm:$0xff]
    %v4112 = vld [vmem:[#allocation8 + $0x1e78] sm:$0xff]
    %v4113 = vld [vmem:[#allocation8 + $0x1e80] sm:$0xff]
    %v4114 = vld [vmem:[#allocation8 + $0x1e88] sm:$0xff]
    %v4115 = vld [vmem:[#allocation8 + $0x1e90] sm:$0xff]
    %v4116 = vld [vmem:[#allocation8 + $0x1e98] sm:$0xff]
    %v4117 = vld [vmem:[#allocation8 + $0x1ea0] sm:$0xff]
    %v4118 = vld [vmem:[#allocation8 + $0x1ea8] sm:$0xff]
    %v4119 = vld [vmem:[#allocation8 + $0x1eb0] sm:$0xff]
    %v4120 = vld [vmem:[#allocation8 + $0x1eb8] sm:$0xff]
    %v4121 = vld [vmem:[#allocation8 + $0x1ec0] sm:$0xff]
    %v4122 = vld [vmem:[#allocation8 + $0x1ec8] sm:$0xff]
    %v4123 = vld [vmem:[#allocation8 + $0x1ed0] sm:$0xff]
    %v4124 = vld [vmem:[#allocation8 + $0x1ed8] sm:$0xff]
    %v4125 = vld [vmem:[#allocation8 + $0x1ee0] sm:$0xff]
    %v4126 = vld [vmem:[#allocation8 + $0x1ee8] sm:$0xff]
    %v4127 = vld [vmem:[#allocation8 + $0x1ef0] sm:$0xff]
    %v4128 = vld [vmem:[#allocation8 + $0x1ef8] sm:$0xff]
    %v4129 = vld [vmem:[#allocation8 + $0x1f00] sm:$0xff]
    %v4130 = vld [vmem:[#allocation8 + $0x1f08] sm:$0xff]
    %v4131 = vld [vmem:[#allocation8 + $0x1f10] sm:$0xff]
    %v4132 = vld [vmem:[#allocation8 + $0x1f18] sm:$0xff]
    %v4133 = vld [vmem:[#allocation8 + $0x1f20] sm:$0xff]
    %v4134 = vld [vmem:[#allocation8 + $0x1f28] sm:$0xff]
    %v4135 = vld [vmem:[#allocation8 + $0x1f30] sm:$0xff]
    %v4136 = vld [vmem:[#allocation8 + $0x1f38] sm:$0xff]
    %v4137 = vld [vmem:[#allocation8 + $0x1f40] sm:$0xff]
    %v4138 = vld [vmem:[#allocation8 + $0x1f48] sm:$0xff]
    %v4139 = vld [vmem:[#allocation8 + $0x1f50] sm:$0xff]
    %v4140 = vld [vmem:[#allocation8 + $0x1f58] sm:$0xff]
    %v4141 = vld [vmem:[#allocation8 + $0x1f60] sm:$0xff]
    %v4142 = vld [vmem:[#allocation8 + $0x1f68] sm:$0xff]
    %v4143 = vld [vmem:[#allocation8 + $0x1f70] sm:$0xff]
    %v4144 = vld [vmem:[#allocation8 + $0x1f78] sm:$0xff]
    %v4145 = vld [vmem:[#allocation8 + $0x1f80] sm:$0xff]
    %v4146 = vld [vmem:[#allocation8 + $0x1f88] sm:$0xff]
    %v4147 = vld [vmem:[#allocation8 + $0x1f90] sm:$0xff]
    %v4148 = vld [vmem:[#allocation8 + $0x1f98] sm:$0xff]
    %v4149 = vld [vmem:[#allocation8 + $0x1fa0] sm:$0xff]
    %v4150 = vld [vmem:[#allocation8 + $0x1fa8] sm:$0xff]
    %v4151 = vld [vmem:[#allocation8 + $0x1fb0] sm:$0xff]
    %v4152 = vld [vmem:[#allocation8 + $0x1fb8] sm:$0xff]
    %v4153 = vld [vmem:[#allocation8 + $0x1fc0] sm:$0xff]
    %v4154 = vld [vmem:[#allocation8 + $0x1fc8] sm:$0xff]
    %v4155 = vld [vmem:[#allocation8 + $0x1fd0] sm:$0xff]
    %v4156 = vld [vmem:[#allocation8 + $0x1fd8] sm:$0xff]
    %v4157 = vld [vmem:[#allocation8 + $0x1fe0] sm:$0xff]
    %v4158 = vld [vmem:[#allocation8 + $0x1fe8] sm:$0xff]
    %v4159 = vld [vmem:[#allocation8 + $0x1ff0] sm:$0xff]
    %v4160 = vld [vmem:[#allocation8 + $0x1ff8] sm:$0xff]
    %4161 = vmatpush.msra.mxu0 %v3197
    %4162 = vmatpush.msra.mxu0 %v3193
    %4163 = vmatpush.msra.mxu0 %v3189
    %4164 = vmatpush.msra.mxu0 %v3185
    %4165 = vmatpush.msra.mxu0 %v3181
    %4166 = vmatpush.msra.mxu0 %v3177
    %4167 = vmatpush.msra.mxu0 %v3173
    %4168 = vmatpush.msra.mxu0 %v3169
    %4169 = vmatpush.msra.mxu0 %v3165
    %4170 = vmatpush.msra.mxu0 %v3161
    %4171 = vmatpush.msra.mxu0 %v3157
    %4172 = vmatpush.msra.mxu0 %v3153
    %4173 = vmatpush.msra.mxu0 %v3149
    %4174 = vmatpush.msra.mxu0 %v3145
    %4175 = vmatpush.msra.mxu0 %v3141
    %4176 = vmatpush.msra.mxu0 %v3137
    %4177 = vmatmul.f32.gmra.mxu0 %v3057
    %v4178 = vpop.f32.mrf.mxu0
    %v4179 = vadd.f32 0.0, %v4178
    %4180 = vmatmul.f32.gmra.mxu0 %v3073
    %v4181 = vpop.f32.mrf.mxu0
    %v4182 = vadd.f32 0.0, %v4181
    %4183 = vmatmul.f32.gmra.mxu0 %v3089
    %v4184 = vpop.f32.mrf.mxu0
    %v4185 = vadd.f32 0.0, %v4184
    %4186 = vmatmul.f32.gmra.mxu0 %v3105
    %v4187 = vpop.f32.mrf.mxu0
    %v4188 = vadd.f32 0.0, %v4187
    %4189 = vdwg.mxu0
    %4190 = vmatpush.msra.mxu0 %v3261
    %4191 = vmatpush.msra.mxu0 %v3257
    %4192 = vmatpush.msra.mxu0 %v3253
    %4193 = vmatpush.msra.mxu0 %v3249
    %4194 = vmatpush.msra.mxu0 %v3245
    %4195 = vmatpush.msra.mxu0 %v3241
    %4196 = vmatpush.msra.mxu0 %v3237
    %4197 = vmatpush.msra.mxu0 %v3233
    %4198 = vmatpush.msra.mxu0 %v3229
    %4199 = vmatpush.msra.mxu0 %v3225
    %4200 = vmatpush.msra.mxu0 %v3221
    %4201 = vmatpush.msra.mxu0 %v3217
    %4202 = vmatpush.msra.mxu0 %v3213
    %4203 = vmatpush.msra.mxu0 %v3209
    %4204 = vmatpush.msra.mxu0 %v3205
    %4205 = vmatpush.msra.mxu0 %v3201
    %4206 = vmatmul.f32.gmra.mxu0 %v3058
    %v4207 = vpop.f32.mrf.mxu0
    %v4208 = vadd.f32 %v4179, %v4207
    %4209 = vmatmul.f32.gmra.mxu0 %v3074
    %v4210 = vpop.f32.mrf.mxu0
    %v4211 = vadd.f32 %v4182, %v4210
    %4212 = vmatmul.f32.gmra.mxu0 %v3090
    %v4213 = vpop.f32.mrf.mxu0
    %v4214 = vadd.f32 %v4185, %v4213
    %4215 = vmatmul.f32.gmra.mxu0 %v3106
    %v4216 = vpop.f32.mrf.mxu0
    %v4217 = vadd.f32 %v4188, %v4216
    %4218 = vdwg.mxu0
    %4219 = vmatpush.msra.mxu0 %v3325
    %4220 = vmatpush.msra.mxu0 %v3321
    %4221 = vmatpush.msra.mxu0 %v3317
    %4222 = vmatpush.msra.mxu0 %v3313
    %4223 = vmatpush.msra.mxu0 %v3309
    %4224 = vmatpush.msra.mxu0 %v3305
    %4225 = vmatpush.msra.mxu0 %v3301
    %4226 = vmatpush.msra.mxu0 %v3297
    %4227 = vmatpush.msra.mxu0 %v3293
    %4228 = vmatpush.msra.mxu0 %v3289
    %4229 = vmatpush.msra.mxu0 %v3285
    %4230 = vmatpush.msra.mxu0 %v3281
    %4231 = vmatpush.msra.mxu0 %v3277
    %4232 = vmatpush.msra.mxu0 %v3273
    %4233 = vmatpush.msra.mxu0 %v3269
    %4234 = vmatpush.msra.mxu0 %v3265
    %4235 = vmatmul.f32.gmra.mxu0 %v3059
    %v4236 = vpop.f32.mrf.mxu0
    %v4237 = vadd.f32 %v4208, %v4236
    %4238 = vmatmul.f32.gmra.mxu0 %v3075
    %v4239 = vpop.f32.mrf.mxu0
    %v4240 = vadd.f32 %v4211, %v4239
    %4241 = vmatmul.f32.gmra.mxu0 %v3091
    %v4242 = vpop.f32.mrf.mxu0
    %v4243 = vadd.f32 %v4214, %v4242
    %4244 = vmatmul.f32.gmra.mxu0 %v3107
    %v4245 = vpop.f32.mrf.mxu0
    %v4246 = vadd.f32 %v4217, %v4245
    %4247 = vdwg.mxu0
    %4248 = vmatpush.msra.mxu0 %v3389
    %4249 = vmatpush.msra.mxu0 %v3385
    %4250 = vmatpush.msra.mxu0 %v3381
    %4251 = vmatpush.msra.mxu0 %v3377
    %4252 = vmatpush.msra.mxu0 %v3373
    %4253 = vmatpush.msra.mxu0 %v3369
    %4254 = vmatpush.msra.mxu0 %v3365
    %4255 = vmatpush.msra.mxu0 %v3361
    %4256 = vmatpush.msra.mxu0 %v3357
    %4257 = vmatpush.msra.mxu0 %v3353
    %4258 = vmatpush.msra.mxu0 %v3349
    %4259 = vmatpush.msra.mxu0 %v3345
    %4260 = vmatpush.msra.mxu0 %v3341
    %4261 = vmatpush.msra.mxu0 %v3337
    %4262 = vmatpush.msra.mxu0 %v3333
    %4263 = vmatpush.msra.mxu0 %v3329
    %4264 = vmatmul.f32.gmra.mxu0 %v3060
    %v4265 = vpop.f32.mrf.mxu0
    %v4266 = vadd.f32 %v4237, %v4265
    %4267 = vmatmul.f32.gmra.mxu0 %v3076
    %v4268 = vpop.f32.mrf.mxu0
    %v4269 = vadd.f32 %v4240, %v4268
    %4270 = vmatmul.f32.gmra.mxu0 %v3092
    %v4271 = vpop.f32.mrf.mxu0
    %v4272 = vadd.f32 %v4243, %v4271
    %4273 = vmatmul.f32.gmra.mxu0 %v3108
    %v4274 = vpop.f32.mrf.mxu0
    %v4275 = vadd.f32 %v4246, %v4274
    %4276 = vdwg.mxu0
    %4277 = vmatpush.msra.mxu0 %v3453
    %4278 = vmatpush.msra.mxu0 %v3449
    %4279 = vmatpush.msra.mxu0 %v3445
    %4280 = vmatpush.msra.mxu0 %v3441
    %4281 = vmatpush.msra.mxu0 %v3437
    %4282 = vmatpush.msra.mxu0 %v3433
    %4283 = vmatpush.msra.mxu0 %v3429
    %4284 = vmatpush.msra.mxu0 %v3425
    %4285 = vmatpush.msra.mxu0 %v3421
    %4286 = vmatpush.msra.mxu0 %v3417
    %4287 = vmatpush.msra.mxu0 %v3413
    %4288 = vmatpush.msra.mxu0 %v3409
    %4289 = vmatpush.msra.mxu0 %v3405
    %4290 = vmatpush.msra.mxu0 %v3401
    %4291 = vmatpush.msra.mxu0 %v3397
    %4292 = vmatpush.msra.mxu0 %v3393
    %4293 = vmatmul.f32.gmra.mxu0 %v3061
    %v4294 = vpop.f32.mrf.mxu0
    %v4295 = vadd.f32 %v4266, %v4294
    %4296 = vmatmul.f32.gmra.mxu0 %v3077
    %v4297 = vpop.f32.mrf.mxu0
    %v4298 = vadd.f32 %v4269, %v4297
    %4299 = vmatmul.f32.gmra.mxu0 %v3093
    %v4300 = vpop.f32.mrf.mxu0
    %v4301 = vadd.f32 %v4272, %v4300
    %4302 = vmatmul.f32.gmra.mxu0 %v3109
    %v4303 = vpop.f32.mrf.mxu0
    %v4304 = vadd.f32 %v4275, %v4303
    %4305 = vdwg.mxu0
    %4306 = vmatpush.msra.mxu0 %v3517
    %4307 = vmatpush.msra.mxu0 %v3513
    %4308 = vmatpush.msra.mxu0 %v3509
    %4309 = vmatpush.msra.mxu0 %v3505
    %4310 = vmatpush.msra.mxu0 %v3501
    %4311 = vmatpush.msra.mxu0 %v3497
    %4312 = vmatpush.msra.mxu0 %v3493
    %4313 = vmatpush.msra.mxu0 %v3489
    %4314 = vmatpush.msra.mxu0 %v3485
    %4315 = vmatpush.msra.mxu0 %v3481
    %4316 = vmatpush.msra.mxu0 %v3477
    %4317 = vmatpush.msra.mxu0 %v3473
    %4318 = vmatpush.msra.mxu0 %v3469
    %4319 = vmatpush.msra.mxu0 %v3465
    %4320 = vmatpush.msra.mxu0 %v3461
    %4321 = vmatpush.msra.mxu0 %v3457
    %4322 = vmatmul.f32.gmra.mxu0 %v3062
    %v4323 = vpop.f32.mrf.mxu0
    %v4324 = vadd.f32 %v4295, %v4323
    %4325 = vmatmul.f32.gmra.mxu0 %v3078
    %v4326 = vpop.f32.mrf.mxu0
    %v4327 = vadd.f32 %v4298, %v4326
    %4328 = vmatmul.f32.gmra.mxu0 %v3094
    %v4329 = vpop.f32.mrf.mxu0
    %v4330 = vadd.f32 %v4301, %v4329
    %4331 = vmatmul.f32.gmra.mxu0 %v3110
    %v4332 = vpop.f32.mrf.mxu0
    %v4333 = vadd.f32 %v4304, %v4332
    %4334 = vdwg.mxu0
    %4335 = vmatpush.msra.mxu0 %v3581
    %4336 = vmatpush.msra.mxu0 %v3577
    %4337 = vmatpush.msra.mxu0 %v3573
    %4338 = vmatpush.msra.mxu0 %v3569
    %4339 = vmatpush.msra.mxu0 %v3565
    %4340 = vmatpush.msra.mxu0 %v3561
    %4341 = vmatpush.msra.mxu0 %v3557
    %4342 = vmatpush.msra.mxu0 %v3553
    %4343 = vmatpush.msra.mxu0 %v3549
    %4344 = vmatpush.msra.mxu0 %v3545
    %4345 = vmatpush.msra.mxu0 %v3541
    %4346 = vmatpush.msra.mxu0 %v3537
    %4347 = vmatpush.msra.mxu0 %v3533
    %4348 = vmatpush.msra.mxu0 %v3529
    %4349 = vmatpush.msra.mxu0 %v3525
    %4350 = vmatpush.msra.mxu0 %v3521
    %4351 = vmatmul.f32.gmra.mxu0 %v3063
    %v4352 = vpop.f32.mrf.mxu0
    %v4353 = vadd.f32 %v4324, %v4352
    %4354 = vmatmul.f32.gmra.mxu0 %v3079
    %v4355 = vpop.f32.mrf.mxu0
    %v4356 = vadd.f32 %v4327, %v4355
    %4357 = vmatmul.f32.gmra.mxu0 %v3095
    %v4358 = vpop.f32.mrf.mxu0
    %v4359 = vadd.f32 %v4330, %v4358
    %4360 = vmatmul.f32.gmra.mxu0 %v3111
    %v4361 = vpop.f32.mrf.mxu0
    %v4362 = vadd.f32 %v4333, %v4361
    %4363 = vdwg.mxu0
    %4364 = vmatpush.msra.mxu0 %v3645
    %4365 = vmatpush.msra.mxu0 %v3641
    %4366 = vmatpush.msra.mxu0 %v3637
    %4367 = vmatpush.msra.mxu0 %v3633
    %4368 = vmatpush.msra.mxu0 %v3629
    %4369 = vmatpush.msra.mxu0 %v3625
    %4370 = vmatpush.msra.mxu0 %v3621
    %4371 = vmatpush.msra.mxu0 %v3617
    %4372 = vmatpush.msra.mxu0 %v3613
    %4373 = vmatpush.msra.mxu0 %v3609
    %4374 = vmatpush.msra.mxu0 %v3605
    %4375 = vmatpush.msra.mxu0 %v3601
    %4376 = vmatpush.msra.mxu0 %v3597
    %4377 = vmatpush.msra.mxu0 %v3593
    %4378 = vmatpush.msra.mxu0 %v3589
    %4379 = vmatpush.msra.mxu0 %v3585
    %4380 = vmatmul.f32.gmra.mxu0 %v3064
    %v4381 = vpop.f32.mrf.mxu0
    %v4382 = vadd.f32 %v4353, %v4381
    %4383 = vmatmul.f32.gmra.mxu0 %v3080
    %v4384 = vpop.f32.mrf.mxu0
    %v4385 = vadd.f32 %v4356, %v4384
    %4386 = vmatmul.f32.gmra.mxu0 %v3096
    %v4387 = vpop.f32.mrf.mxu0
    %v4388 = vadd.f32 %v4359, %v4387
    %4389 = vmatmul.f32.gmra.mxu0 %v3112
    %v4390 = vpop.f32.mrf.mxu0
    %v4391 = vadd.f32 %v4362, %v4390
    %4392 = vdwg.mxu0
    %4393 = vmatpush.msra.mxu0 %v3709
    %4394 = vmatpush.msra.mxu0 %v3705
    %4395 = vmatpush.msra.mxu0 %v3701
    %4396 = vmatpush.msra.mxu0 %v3697
    %4397 = vmatpush.msra.mxu0 %v3693
    %4398 = vmatpush.msra.mxu0 %v3689
    %4399 = vmatpush.msra.mxu0 %v3685
    %4400 = vmatpush.msra.mxu0 %v3681
    %4401 = vmatpush.msra.mxu0 %v3677
    %4402 = vmatpush.msra.mxu0 %v3673
    %4403 = vmatpush.msra.mxu0 %v3669
    %4404 = vmatpush.msra.mxu0 %v3665
    %4405 = vmatpush.msra.mxu0 %v3661
    %4406 = vmatpush.msra.mxu0 %v3657
    %4407 = vmatpush.msra.mxu0 %v3653
    %4408 = vmatpush.msra.mxu0 %v3649
    %4409 = vmatmul.f32.gmra.mxu0 %v3065
    %v4410 = vpop.f32.mrf.mxu0
    %v4411 = vadd.f32 %v4382, %v4410
    %4412 = vmatmul.f32.gmra.mxu0 %v3081
    %v4413 = vpop.f32.mrf.mxu0
    %v4414 = vadd.f32 %v4385, %v4413
    %4415 = vmatmul.f32.gmra.mxu0 %v3097
    %v4416 = vpop.f32.mrf.mxu0
    %v4417 = vadd.f32 %v4388, %v4416
    %4418 = vmatmul.f32.gmra.mxu0 %v3113
    %v4419 = vpop.f32.mrf.mxu0
    %v4420 = vadd.f32 %v4391, %v4419
    %4421 = vdwg.mxu0
    %4422 = vmatpush.msra.mxu0 %v3773
    %4423 = vmatpush.msra.mxu0 %v3769
    %4424 = vmatpush.msra.mxu0 %v3765
    %4425 = vmatpush.msra.mxu0 %v3761
    %4426 = vmatpush.msra.mxu0 %v3757
    %4427 = vmatpush.msra.mxu0 %v3753
    %4428 = vmatpush.msra.mxu0 %v3749
    %4429 = vmatpush.msra.mxu0 %v3745
    %4430 = vmatpush.msra.mxu0 %v3741
    %4431 = vmatpush.msra.mxu0 %v3737
    %4432 = vmatpush.msra.mxu0 %v3733
    %4433 = vmatpush.msra.mxu0 %v3729
    %4434 = vmatpush.msra.mxu0 %v3725
    %4435 = vmatpush.msra.mxu0 %v3721
    %4436 = vmatpush.msra.mxu0 %v3717
    %4437 = vmatpush.msra.mxu0 %v3713
    %4438 = vmatmul.f32.gmra.mxu0 %v3066
    %v4439 = vpop.f32.mrf.mxu0
    %v4440 = vadd.f32 %v4411, %v4439
    %4441 = vmatmul.f32.gmra.mxu0 %v3082
    %v4442 = vpop.f32.mrf.mxu0
    %v4443 = vadd.f32 %v4414, %v4442
    %4444 = vmatmul.f32.gmra.mxu0 %v3098
    %v4445 = vpop.f32.mrf.mxu0
    %v4446 = vadd.f32 %v4417, %v4445
    %4447 = vmatmul.f32.gmra.mxu0 %v3114
    %v4448 = vpop.f32.mrf.mxu0
    %v4449 = vadd.f32 %v4420, %v4448
    %4450 = vdwg.mxu0
    %4451 = vmatpush.msra.mxu0 %v3837
    %4452 = vmatpush.msra.mxu0 %v3833
    %4453 = vmatpush.msra.mxu0 %v3829
    %4454 = vmatpush.msra.mxu0 %v3825
    %4455 = vmatpush.msra.mxu0 %v3821
    %4456 = vmatpush.msra.mxu0 %v3817
    %4457 = vmatpush.msra.mxu0 %v3813
    %4458 = vmatpush.msra.mxu0 %v3809
    %4459 = vmatpush.msra.mxu0 %v3805
    %4460 = vmatpush.msra.mxu0 %v3801
    %4461 = vmatpush.msra.mxu0 %v3797
    %4462 = vmatpush.msra.mxu0 %v3793
    %4463 = vmatpush.msra.mxu0 %v3789
    %4464 = vmatpush.msra.mxu0 %v3785
    %4465 = vmatpush.msra.mxu0 %v3781
    %4466 = vmatpush.msra.mxu0 %v3777
    %4467 = vmatmul.f32.gmra.mxu0 %v3067
    %v4468 = vpop.f32.mrf.mxu0
    %v4469 = vadd.f32 %v4440, %v4468
    %4470 = vmatmul.f32.gmra.mxu0 %v3083
    %v4471 = vpop.f32.mrf.mxu0
    %v4472 = vadd.f32 %v4443, %v4471
    %4473 = vmatmul.f32.gmra.mxu0 %v3099
    %v4474 = vpop.f32.mrf.mxu0
    %v4475 = vadd.f32 %v4446, %v4474
    %4476 = vmatmul.f32.gmra.mxu0 %v3115
    %v4477 = vpop.f32.mrf.mxu0
    %v4478 = vadd.f32 %v4449, %v4477
    %4479 = vdwg.mxu0
    %4480 = vmatpush.msra.mxu0 %v3901
    %4481 = vmatpush.msra.mxu0 %v3897
    %4482 = vmatpush.msra.mxu0 %v3893
    %4483 = vmatpush.msra.mxu0 %v3889
    %4484 = vmatpush.msra.mxu0 %v3885
    %4485 = vmatpush.msra.mxu0 %v3881
    %4486 = vmatpush.msra.mxu0 %v3877
    %4487 = vmatpush.msra.mxu0 %v3873
    %4488 = vmatpush.msra.mxu0 %v3869
    %4489 = vmatpush.msra.mxu0 %v3865
    %4490 = vmatpush.msra.mxu0 %v3861
    %4491 = vmatpush.msra.mxu0 %v3857
    %4492 = vmatpush.msra.mxu0 %v3853
    %4493 = vmatpush.msra.mxu0 %v3849
    %4494 = vmatpush.msra.mxu0 %v3845
    %4495 = vmatpush.msra.mxu0 %v3841
    %4496 = vmatmul.f32.gmra.mxu0 %v3068
    %v4497 = vpop.f32.mrf.mxu0
    %v4498 = vadd.f32 %v4469, %v4497
    %4499 = vmatmul.f32.gmra.mxu0 %v3084
    %v4500 = vpop.f32.mrf.mxu0
    %v4501 = vadd.f32 %v4472, %v4500
    %4502 = vmatmul.f32.gmra.mxu0 %v3100
    %v4503 = vpop.f32.mrf.mxu0
    %v4504 = vadd.f32 %v4475, %v4503
    %4505 = vmatmul.f32.gmra.mxu0 %v3116
    %v4506 = vpop.f32.mrf.mxu0
    %v4507 = vadd.f32 %v4478, %v4506
    %4508 = vdwg.mxu0
    %4509 = vmatpush.msra.mxu0 %v3965
    %4510 = vmatpush.msra.mxu0 %v3961
    %4511 = vmatpush.msra.mxu0 %v3957
    %4512 = vmatpush.msra.mxu0 %v3953
    %4513 = vmatpush.msra.mxu0 %v3949
    %4514 = vmatpush.msra.mxu0 %v3945
    %4515 = vmatpush.msra.mxu0 %v3941
    %4516 = vmatpush.msra.mxu0 %v3937
    %4517 = vmatpush.msra.mxu0 %v3933
    %4518 = vmatpush.msra.mxu0 %v3929
    %4519 = vmatpush.msra.mxu0 %v3925
    %4520 = vmatpush.msra.mxu0 %v3921
    %4521 = vmatpush.msra.mxu0 %v3917
    %4522 = vmatpush.msra.mxu0 %v3913
    %4523 = vmatpush.msra.mxu0 %v3909
    %4524 = vmatpush.msra.mxu0 %v3905
    %4525 = vmatmul.f32.gmra.mxu0 %v3069
    %v4526 = vpop.f32.mrf.mxu0
    %v4527 = vadd.f32 %v4498, %v4526
    %4528 = vmatmul.f32.gmra.mxu0 %v3085
    %v4529 = vpop.f32.mrf.mxu0
    %v4530 = vadd.f32 %v4501, %v4529
    %4531 = vmatmul.f32.gmra.mxu0 %v3101
    %v4532 = vpop.f32.mrf.mxu0
    %v4533 = vadd.f32 %v4504, %v4532
    %4534 = vmatmul.f32.gmra.mxu0 %v3117
    %v4535 = vpop.f32.mrf.mxu0
    %v4536 = vadd.f32 %v4507, %v4535
    %4537 = vdwg.mxu0
    %4538 = vmatpush.msra.mxu0 %v4029
    %4539 = vmatpush.msra.mxu0 %v4025
    %4540 = vmatpush.msra.mxu0 %v4021
    %4541 = vmatpush.msra.mxu0 %v4017
    %4542 = vmatpush.msra.mxu0 %v4013
    %4543 = vmatpush.msra.mxu0 %v4009
    %4544 = vmatpush.msra.mxu0 %v4005
    %4545 = vmatpush.msra.mxu0 %v4001
    %4546 = vmatpush.msra.mxu0 %v3997
    %4547 = vmatpush.msra.mxu0 %v3993
    %4548 = vmatpush.msra.mxu0 %v3989
    %4549 = vmatpush.msra.mxu0 %v3985
    %4550 = vmatpush.msra.mxu0 %v3981
    %4551 = vmatpush.msra.mxu0 %v3977
    %4552 = vmatpush.msra.mxu0 %v3973
    %4553 = vmatpush.msra.mxu0 %v3969
    %4554 = vmatmul.f32.gmra.mxu0 %v3070
    %v4555 = vpop.f32.mrf.mxu0
    %v4556 = vadd.f32 %v4527, %v4555
    %4557 = vmatmul.f32.gmra.mxu0 %v3086
    %v4558 = vpop.f32.mrf.mxu0
    %v4559 = vadd.f32 %v4530, %v4558
    %4560 = vmatmul.f32.gmra.mxu0 %v3102
    %v4561 = vpop.f32.mrf.mxu0
    %v4562 = vadd.f32 %v4533, %v4561
    %4563 = vmatmul.f32.gmra.mxu0 %v3118
    %v4564 = vpop.f32.mrf.mxu0
    %v4565 = vadd.f32 %v4536, %v4564
    %4566 = vdwg.mxu0
    %4567 = vmatpush.msra.mxu0 %v4093
    %4568 = vmatpush.msra.mxu0 %v4089
    %4569 = vmatpush.msra.mxu0 %v4085
    %4570 = vmatpush.msra.mxu0 %v4081
    %4571 = vmatpush.msra.mxu0 %v4077
    %4572 = vmatpush.msra.mxu0 %v4073
    %4573 = vmatpush.msra.mxu0 %v4069
    %4574 = vmatpush.msra.mxu0 %v4065
    %4575 = vmatpush.msra.mxu0 %v4061
    %4576 = vmatpush.msra.mxu0 %v4057
    %4577 = vmatpush.msra.mxu0 %v4053
    %4578 = vmatpush.msra.mxu0 %v4049
    %4579 = vmatpush.msra.mxu0 %v4045
    %4580 = vmatpush.msra.mxu0 %v4041
    %4581 = vmatpush.msra.mxu0 %v4037
    %4582 = vmatpush.msra.mxu0 %v4033
    %4583 = vmatmul.f32.gmra.mxu0 %v3071
    %v4584 = vpop.f32.mrf.mxu0
    %v4585 = vadd.f32 %v4556, %v4584
    %4586 = vmatmul.f32.gmra.mxu0 %v3087
    %v4587 = vpop.f32.mrf.mxu0
    %v4588 = vadd.f32 %v4559, %v4587
    %4589 = vmatmul.f32.gmra.mxu0 %v3103
    %v4590 = vpop.f32.mrf.mxu0
    %v4591 = vadd.f32 %v4562, %v4590
    %4592 = vmatmul.f32.gmra.mxu0 %v3119
    %v4593 = vpop.f32.mrf.mxu0
    %v4594 = vadd.f32 %v4565, %v4593
    %4595 = vdwg.mxu0
    %4596 = vmatpush.msra.mxu0 %v4157
    %4597 = vmatpush.msra.mxu0 %v4153
    %4598 = vmatpush.msra.mxu0 %v4149
    %4599 = vmatpush.msra.mxu0 %v4145
    %4600 = vmatpush.msra.mxu0 %v4141
    %4601 = vmatpush.msra.mxu0 %v4137
    %4602 = vmatpush.msra.mxu0 %v4133
    %4603 = vmatpush.msra.mxu0 %v4129
    %4604 = vmatpush.msra.mxu0 %v4125
    %4605 = vmatpush.msra.mxu0 %v4121
    %4606 = vmatpush.msra.mxu0 %v4117
    %4607 = vmatpush.msra.mxu0 %v4113
    %4608 = vmatpush.msra.mxu0 %v4109
    %4609 = vmatpush.msra.mxu0 %v4105
    %4610 = vmatpush.msra.mxu0 %v4101
    %4611 = vmatpush.msra.mxu0 %v4097
    %4612 = vmatmul.f32.gmra.mxu0 %v3072
    %v4613 = vpop.f32.mrf.mxu0
    %v4614 = vadd.f32 %v4585, %v4613
    %4615 = vmatmul.f32.gmra.mxu0 %v3088
    %v4616 = vpop.f32.mrf.mxu0
    %v4617 = vadd.f32 %v4588, %v4616
    %4618 = vmatmul.f32.gmra.mxu0 %v3104
    %v4619 = vpop.f32.mrf.mxu0
    %v4620 = vadd.f32 %v4591, %v4619
    %4621 = vmatmul.f32.gmra.mxu0 %v3120
    %v4622 = vpop.f32.mrf.mxu0
    %v4623 = vadd.f32 %v4594, %v4622
    %4624 = vdwg.mxu0
    %4625 = vmatpush.msra.mxu0 %v3198
    %4626 = vmatpush.msra.mxu0 %v3194
    %4627 = vmatpush.msra.mxu0 %v3190
    %4628 = vmatpush.msra.mxu0 %v3186
    %4629 = vmatpush.msra.mxu0 %v3182
    %4630 = vmatpush.msra.mxu0 %v3178
    %4631 = vmatpush.msra.mxu0 %v3174
    %4632 = vmatpush.msra.mxu0 %v3170
    %4633 = vmatpush.msra.mxu0 %v3166
    %4634 = vmatpush.msra.mxu0 %v3162
    %4635 = vmatpush.msra.mxu0 %v3158
    %4636 = vmatpush.msra.mxu0 %v3154
    %4637 = vmatpush.msra.mxu0 %v3150
    %4638 = vmatpush.msra.mxu0 %v3146
    %4639 = vmatpush.msra.mxu0 %v3142
    %4640 = vmatpush.msra.mxu0 %v3138
    %4641 = vmatmul.f32.gmra.mxu0 %v3057
    %v4642 = vpop.f32.mrf.mxu0
    %v4643 = vadd.f32 0.0, %v4642
    %4644 = vmatmul.f32.gmra.mxu0 %v3073
    %v4645 = vpop.f32.mrf.mxu0
    %v4646 = vadd.f32 0.0, %v4645
    %4647 = vmatmul.f32.gmra.mxu0 %v3089
    %v4648 = vpop.f32.mrf.mxu0
    %v4649 = vadd.f32 0.0, %v4648
    %4650 = vmatmul.f32.gmra.mxu0 %v3105
    %v4651 = vpop.f32.mrf.mxu0
    %v4652 = vadd.f32 0.0, %v4651
    %4653 = vdwg.mxu0
    %4654 = vmatpush.msra.mxu0 %v3262
    %4655 = vmatpush.msra.mxu0 %v3258
    %4656 = vmatpush.msra.mxu0 %v3254
    %4657 = vmatpush.msra.mxu0 %v3250
    %4658 = vmatpush.msra.mxu0 %v3246
    %4659 = vmatpush.msra.mxu0 %v3242
    %4660 = vmatpush.msra.mxu0 %v3238
    %4661 = vmatpush.msra.mxu0 %v3234
    %4662 = vmatpush.msra.mxu0 %v3230
    %4663 = vmatpush.msra.mxu0 %v3226
    %4664 = vmatpush.msra.mxu0 %v3222
    %4665 = vmatpush.msra.mxu0 %v3218
    %4666 = vmatpush.msra.mxu0 %v3214
    %4667 = vmatpush.msra.mxu0 %v3210
    %4668 = vmatpush.msra.mxu0 %v3206
    %4669 = vmatpush.msra.mxu0 %v3202
    %4670 = vmatmul.f32.gmra.mxu0 %v3058
    %v4671 = vpop.f32.mrf.mxu0
    %v4672 = vadd.f32 %v4643, %v4671
    %4673 = vmatmul.f32.gmra.mxu0 %v3074
    %v4674 = vpop.f32.mrf.mxu0
    %v4675 = vadd.f32 %v4646, %v4674
    %4676 = vmatmul.f32.gmra.mxu0 %v3090
    %v4677 = vpop.f32.mrf.mxu0
    %v4678 = vadd.f32 %v4649, %v4677
    %4679 = vmatmul.f32.gmra.mxu0 %v3106
    %v4680 = vpop.f32.mrf.mxu0
    %v4681 = vadd.f32 %v4652, %v4680
    %4682 = vdwg.mxu0
    %4683 = vmatpush.msra.mxu0 %v3326
    %4684 = vmatpush.msra.mxu0 %v3322
    %4685 = vmatpush.msra.mxu0 %v3318
    %4686 = vmatpush.msra.mxu0 %v3314
    %4687 = vmatpush.msra.mxu0 %v3310
    %4688 = vmatpush.msra.mxu0 %v3306
    %4689 = vmatpush.msra.mxu0 %v3302
    %4690 = vmatpush.msra.mxu0 %v3298
    %4691 = vmatpush.msra.mxu0 %v3294
    %4692 = vmatpush.msra.mxu0 %v3290
    %4693 = vmatpush.msra.mxu0 %v3286
    %4694 = vmatpush.msra.mxu0 %v3282
    %4695 = vmatpush.msra.mxu0 %v3278
    %4696 = vmatpush.msra.mxu0 %v3274
    %4697 = vmatpush.msra.mxu0 %v3270
    %4698 = vmatpush.msra.mxu0 %v3266
    %4699 = vmatmul.f32.gmra.mxu0 %v3059
    %v4700 = vpop.f32.mrf.mxu0
    %v4701 = vadd.f32 %v4672, %v4700
    %4702 = vmatmul.f32.gmra.mxu0 %v3075
    %v4703 = vpop.f32.mrf.mxu0
    %v4704 = vadd.f32 %v4675, %v4703
    %4705 = vmatmul.f32.gmra.mxu0 %v3091
    %v4706 = vpop.f32.mrf.mxu0
    %v4707 = vadd.f32 %v4678, %v4706
    %4708 = vmatmul.f32.gmra.mxu0 %v3107
    %v4709 = vpop.f32.mrf.mxu0
    %v4710 = vadd.f32 %v4681, %v4709
    %4711 = vdwg.mxu0
    %4712 = vmatpush.msra.mxu0 %v3390
    %4713 = vmatpush.msra.mxu0 %v3386
    %4714 = vmatpush.msra.mxu0 %v3382
    %4715 = vmatpush.msra.mxu0 %v3378
    %4716 = vmatpush.msra.mxu0 %v3374
    %4717 = vmatpush.msra.mxu0 %v3370
    %4718 = vmatpush.msra.mxu0 %v3366
    %4719 = vmatpush.msra.mxu0 %v3362
    %4720 = vmatpush.msra.mxu0 %v3358
    %4721 = vmatpush.msra.mxu0 %v3354
    %4722 = vmatpush.msra.mxu0 %v3350
    %4723 = vmatpush.msra.mxu0 %v3346
    %4724 = vmatpush.msra.mxu0 %v3342
    %4725 = vmatpush.msra.mxu0 %v3338
    %4726 = vmatpush.msra.mxu0 %v3334
    %4727 = vmatpush.msra.mxu0 %v3330
    %4728 = vmatmul.f32.gmra.mxu0 %v3060
    %v4729 = vpop.f32.mrf.mxu0
    %v4730 = vadd.f32 %v4701, %v4729
    %4731 = vmatmul.f32.gmra.mxu0 %v3076
    %v4732 = vpop.f32.mrf.mxu0
    %v4733 = vadd.f32 %v4704, %v4732
    %4734 = vmatmul.f32.gmra.mxu0 %v3092
    %v4735 = vpop.f32.mrf.mxu0
    %v4736 = vadd.f32 %v4707, %v4735
    %4737 = vmatmul.f32.gmra.mxu0 %v3108
    %v4738 = vpop.f32.mrf.mxu0
    %v4739 = vadd.f32 %v4710, %v4738
    %4740 = vdwg.mxu0
    %4741 = vmatpush.msra.mxu0 %v3454
    %4742 = vmatpush.msra.mxu0 %v3450
    %4743 = vmatpush.msra.mxu0 %v3446
    %4744 = vmatpush.msra.mxu0 %v3442
    %4745 = vmatpush.msra.mxu0 %v3438
    %4746 = vmatpush.msra.mxu0 %v3434
    %4747 = vmatpush.msra.mxu0 %v3430
    %4748 = vmatpush.msra.mxu0 %v3426
    %4749 = vmatpush.msra.mxu0 %v3422
    %4750 = vmatpush.msra.mxu0 %v3418
    %4751 = vmatpush.msra.mxu0 %v3414
    %4752 = vmatpush.msra.mxu0 %v3410
    %4753 = vmatpush.msra.mxu0 %v3406
    %4754 = vmatpush.msra.mxu0 %v3402
    %4755 = vmatpush.msra.mxu0 %v3398
    %4756 = vmatpush.msra.mxu0 %v3394
    %4757 = vmatmul.f32.gmra.mxu0 %v3061
    %v4758 = vpop.f32.mrf.mxu0
    %v4759 = vadd.f32 %v4730, %v4758
    %4760 = vmatmul.f32.gmra.mxu0 %v3077
    %v4761 = vpop.f32.mrf.mxu0
    %v4762 = vadd.f32 %v4733, %v4761
    %4763 = vmatmul.f32.gmra.mxu0 %v3093
    %v4764 = vpop.f32.mrf.mxu0
    %v4765 = vadd.f32 %v4736, %v4764
    %4766 = vmatmul.f32.gmra.mxu0 %v3109
    %v4767 = vpop.f32.mrf.mxu0
    %v4768 = vadd.f32 %v4739, %v4767
    %4769 = vdwg.mxu0
    %4770 = vmatpush.msra.mxu0 %v3518
    %4771 = vmatpush.msra.mxu0 %v3514
    %4772 = vmatpush.msra.mxu0 %v3510
    %4773 = vmatpush.msra.mxu0 %v3506
    %4774 = vmatpush.msra.mxu0 %v3502
    %4775 = vmatpush.msra.mxu0 %v3498
    %4776 = vmatpush.msra.mxu0 %v3494
    %4777 = vmatpush.msra.mxu0 %v3490
    %4778 = vmatpush.msra.mxu0 %v3486
    %4779 = vmatpush.msra.mxu0 %v3482
    %4780 = vmatpush.msra.mxu0 %v3478
    %4781 = vmatpush.msra.mxu0 %v3474
    %4782 = vmatpush.msra.mxu0 %v3470
    %4783 = vmatpush.msra.mxu0 %v3466
    %4784 = vmatpush.msra.mxu0 %v3462
    %4785 = vmatpush.msra.mxu0 %v3458
    %4786 = vmatmul.f32.gmra.mxu0 %v3062
    %v4787 = vpop.f32.mrf.mxu0
    %v4788 = vadd.f32 %v4759, %v4787
    %4789 = vmatmul.f32.gmra.mxu0 %v3078
    %v4790 = vpop.f32.mrf.mxu0
    %v4791 = vadd.f32 %v4762, %v4790
    %4792 = vmatmul.f32.gmra.mxu0 %v3094
    %v4793 = vpop.f32.mrf.mxu0
    %v4794 = vadd.f32 %v4765, %v4793
    %4795 = vmatmul.f32.gmra.mxu0 %v3110
    %v4796 = vpop.f32.mrf.mxu0
    %v4797 = vadd.f32 %v4768, %v4796
    %4798 = vdwg.mxu0
    %4799 = vmatpush.msra.mxu0 %v3582
    %4800 = vmatpush.msra.mxu0 %v3578
    %4801 = vmatpush.msra.mxu0 %v3574
    %4802 = vmatpush.msra.mxu0 %v3570
    %4803 = vmatpush.msra.mxu0 %v3566
    %4804 = vmatpush.msra.mxu0 %v3562
    %4805 = vmatpush.msra.mxu0 %v3558
    %4806 = vmatpush.msra.mxu0 %v3554
    %4807 = vmatpush.msra.mxu0 %v3550
    %4808 = vmatpush.msra.mxu0 %v3546
    %4809 = vmatpush.msra.mxu0 %v3542
    %4810 = vmatpush.msra.mxu0 %v3538
    %4811 = vmatpush.msra.mxu0 %v3534
    %4812 = vmatpush.msra.mxu0 %v3530
    %4813 = vmatpush.msra.mxu0 %v3526
    %4814 = vmatpush.msra.mxu0 %v3522
    %4815 = vmatmul.f32.gmra.mxu0 %v3063
    %v4816 = vpop.f32.mrf.mxu0
    %v4817 = vadd.f32 %v4788, %v4816
    %4818 = vmatmul.f32.gmra.mxu0 %v3079
    %v4819 = vpop.f32.mrf.mxu0
    %v4820 = vadd.f32 %v4791, %v4819
    %4821 = vmatmul.f32.gmra.mxu0 %v3095
    %v4822 = vpop.f32.mrf.mxu0
    %v4823 = vadd.f32 %v4794, %v4822
    %4824 = vmatmul.f32.gmra.mxu0 %v3111
    %v4825 = vpop.f32.mrf.mxu0
    %v4826 = vadd.f32 %v4797, %v4825
    %4827 = vdwg.mxu0
    %4828 = vmatpush.msra.mxu0 %v3646
    %4829 = vmatpush.msra.mxu0 %v3642
    %4830 = vmatpush.msra.mxu0 %v3638
    %4831 = vmatpush.msra.mxu0 %v3634
    %4832 = vmatpush.msra.mxu0 %v3630
    %4833 = vmatpush.msra.mxu0 %v3626
    %4834 = vmatpush.msra.mxu0 %v3622
    %4835 = vmatpush.msra.mxu0 %v3618
    %4836 = vmatpush.msra.mxu0 %v3614
    %4837 = vmatpush.msra.mxu0 %v3610
    %4838 = vmatpush.msra.mxu0 %v3606
    %4839 = vmatpush.msra.mxu0 %v3602
    %4840 = vmatpush.msra.mxu0 %v3598
    %4841 = vmatpush.msra.mxu0 %v3594
    %4842 = vmatpush.msra.mxu0 %v3590
    %4843 = vmatpush.msra.mxu0 %v3586
    %4844 = vmatmul.f32.gmra.mxu0 %v3064
    %v4845 = vpop.f32.mrf.mxu0
    %v4846 = vadd.f32 %v4817, %v4845
    %4847 = vmatmul.f32.gmra.mxu0 %v3080
    %v4848 = vpop.f32.mrf.mxu0
    %v4849 = vadd.f32 %v4820, %v4848
    %4850 = vmatmul.f32.gmra.mxu0 %v3096
    %v4851 = vpop.f32.mrf.mxu0
    %v4852 = vadd.f32 %v4823, %v4851
    %4853 = vmatmul.f32.gmra.mxu0 %v3112
    %v4854 = vpop.f32.mrf.mxu0
    %v4855 = vadd.f32 %v4826, %v4854
    %4856 = vdwg.mxu0
    %4857 = vmatpush.msra.mxu0 %v3710
    %4858 = vmatpush.msra.mxu0 %v3706
    %4859 = vmatpush.msra.mxu0 %v3702
    %4860 = vmatpush.msra.mxu0 %v3698
    %4861 = vmatpush.msra.mxu0 %v3694
    %4862 = vmatpush.msra.mxu0 %v3690
    %4863 = vmatpush.msra.mxu0 %v3686
    %4864 = vmatpush.msra.mxu0 %v3682
    %4865 = vmatpush.msra.mxu0 %v3678
    %4866 = vmatpush.msra.mxu0 %v3674
    %4867 = vmatpush.msra.mxu0 %v3670
    %4868 = vmatpush.msra.mxu0 %v3666
    %4869 = vmatpush.msra.mxu0 %v3662
    %4870 = vmatpush.msra.mxu0 %v3658
    %4871 = vmatpush.msra.mxu0 %v3654
    %4872 = vmatpush.msra.mxu0 %v3650
    %4873 = vmatmul.f32.gmra.mxu0 %v3065
    %v4874 = vpop.f32.mrf.mxu0
    %v4875 = vadd.f32 %v4846, %v4874
    %4876 = vmatmul.f32.gmra.mxu0 %v3081
    %v4877 = vpop.f32.mrf.mxu0
    %v4878 = vadd.f32 %v4849, %v4877
    %4879 = vmatmul.f32.gmra.mxu0 %v3097
    %v4880 = vpop.f32.mrf.mxu0
    %v4881 = vadd.f32 %v4852, %v4880
    %4882 = vmatmul.f32.gmra.mxu0 %v3113
    %v4883 = vpop.f32.mrf.mxu0
    %v4884 = vadd.f32 %v4855, %v4883
    %4885 = vdwg.mxu0
    %4886 = vmatpush.msra.mxu0 %v3774
    %4887 = vmatpush.msra.mxu0 %v3770
    %4888 = vmatpush.msra.mxu0 %v3766
    %4889 = vmatpush.msra.mxu0 %v3762
    %4890 = vmatpush.msra.mxu0 %v3758
    %4891 = vmatpush.msra.mxu0 %v3754
    %4892 = vmatpush.msra.mxu0 %v3750
    %4893 = vmatpush.msra.mxu0 %v3746
    %4894 = vmatpush.msra.mxu0 %v3742
    %4895 = vmatpush.msra.mxu0 %v3738
    %4896 = vmatpush.msra.mxu0 %v3734
    %4897 = vmatpush.msra.mxu0 %v3730
    %4898 = vmatpush.msra.mxu0 %v3726
    %4899 = vmatpush.msra.mxu0 %v3722
    %4900 = vmatpush.msra.mxu0 %v3718
    %4901 = vmatpush.msra.mxu0 %v3714
    %4902 = vmatmul.f32.gmra.mxu0 %v3066
    %v4903 = vpop.f32.mrf.mxu0
    %v4904 = vadd.f32 %v4875, %v4903
    %4905 = vmatmul.f32.gmra.mxu0 %v3082
    %v4906 = vpop.f32.mrf.mxu0
    %v4907 = vadd.f32 %v4878, %v4906
    %4908 = vmatmul.f32.gmra.mxu0 %v3098
    %v4909 = vpop.f32.mrf.mxu0
    %v4910 = vadd.f32 %v4881, %v4909
    %4911 = vmatmul.f32.gmra.mxu0 %v3114
    %v4912 = vpop.f32.mrf.mxu0
    %v4913 = vadd.f32 %v4884, %v4912
    %4914 = vdwg.mxu0
    %4915 = vmatpush.msra.mxu0 %v3838
    %4916 = vmatpush.msra.mxu0 %v3834
    %4917 = vmatpush.msra.mxu0 %v3830
    %4918 = vmatpush.msra.mxu0 %v3826
    %4919 = vmatpush.msra.mxu0 %v3822
    %4920 = vmatpush.msra.mxu0 %v3818
    %4921 = vmatpush.msra.mxu0 %v3814
    %4922 = vmatpush.msra.mxu0 %v3810
    %4923 = vmatpush.msra.mxu0 %v3806
    %4924 = vmatpush.msra.mxu0 %v3802
    %4925 = vmatpush.msra.mxu0 %v3798
    %4926 = vmatpush.msra.mxu0 %v3794
    %4927 = vmatpush.msra.mxu0 %v3790
    %4928 = vmatpush.msra.mxu0 %v3786
    %4929 = vmatpush.msra.mxu0 %v3782
    %4930 = vmatpush.msra.mxu0 %v3778
    %4931 = vmatmul.f32.gmra.mxu0 %v3067
    %v4932 = vpop.f32.mrf.mxu0
    %v4933 = vadd.f32 %v4904, %v4932
    %4934 = vmatmul.f32.gmra.mxu0 %v3083
    %v4935 = vpop.f32.mrf.mxu0
    %v4936 = vadd.f32 %v4907, %v4935
    %4937 = vmatmul.f32.gmra.mxu0 %v3099
    %v4938 = vpop.f32.mrf.mxu0
    %v4939 = vadd.f32 %v4910, %v4938
    %4940 = vmatmul.f32.gmra.mxu0 %v3115
    %v4941 = vpop.f32.mrf.mxu0
    %v4942 = vadd.f32 %v4913, %v4941
    %4943 = vdwg.mxu0
    %4944 = vmatpush.msra.mxu0 %v3902
    %4945 = vmatpush.msra.mxu0 %v3898
    %4946 = vmatpush.msra.mxu0 %v3894
    %4947 = vmatpush.msra.mxu0 %v3890
    %4948 = vmatpush.msra.mxu0 %v3886
    %4949 = vmatpush.msra.mxu0 %v3882
    %4950 = vmatpush.msra.mxu0 %v3878
    %4951 = vmatpush.msra.mxu0 %v3874
    %4952 = vmatpush.msra.mxu0 %v3870
    %4953 = vmatpush.msra.mxu0 %v3866
    %4954 = vmatpush.msra.mxu0 %v3862
    %4955 = vmatpush.msra.mxu0 %v3858
    %4956 = vmatpush.msra.mxu0 %v3854
    %4957 = vmatpush.msra.mxu0 %v3850
    %4958 = vmatpush.msra.mxu0 %v3846
    %4959 = vmatpush.msra.mxu0 %v3842
    %4960 = vmatmul.f32.gmra.mxu0 %v3068
    %v4961 = vpop.f32.mrf.mxu0
    %v4962 = vadd.f32 %v4933, %v4961
    %4963 = vmatmul.f32.gmra.mxu0 %v3084
    %v4964 = vpop.f32.mrf.mxu0
    %v4965 = vadd.f32 %v4936, %v4964
    %4966 = vmatmul.f32.gmra.mxu0 %v3100
    %v4967 = vpop.f32.mrf.mxu0
    %v4968 = vadd.f32 %v4939, %v4967
    %4969 = vmatmul.f32.gmra.mxu0 %v3116
    %v4970 = vpop.f32.mrf.mxu0
    %v4971 = vadd.f32 %v4942, %v4970
    %4972 = vdwg.mxu0
    %4973 = vmatpush.msra.mxu0 %v3966
    %4974 = vmatpush.msra.mxu0 %v3962
    %4975 = vmatpush.msra.mxu0 %v3958
    %4976 = vmatpush.msra.mxu0 %v3954
    %4977 = vmatpush.msra.mxu0 %v3950
    %4978 = vmatpush.msra.mxu0 %v3946
    %4979 = vmatpush.msra.mxu0 %v3942
    %4980 = vmatpush.msra.mxu0 %v3938
    %4981 = vmatpush.msra.mxu0 %v3934
    %4982 = vmatpush.msra.mxu0 %v3930
    %4983 = vmatpush.msra.mxu0 %v3926
    %4984 = vmatpush.msra.mxu0 %v3922
    %4985 = vmatpush.msra.mxu0 %v3918
    %4986 = vmatpush.msra.mxu0 %v3914
    %4987 = vmatpush.msra.mxu0 %v3910
    %4988 = vmatpush.msra.mxu0 %v3906
    %4989 = vmatmul.f32.gmra.mxu0 %v3069
    %v4990 = vpop.f32.mrf.mxu0
    %v4991 = vadd.f32 %v4962, %v4990
    %4992 = vmatmul.f32.gmra.mxu0 %v3085
    %v4993 = vpop.f32.mrf.mxu0
    %v4994 = vadd.f32 %v4965, %v4993
    %4995 = vmatmul.f32.gmra.mxu0 %v3101
    %v4996 = vpop.f32.mrf.mxu0
    %v4997 = vadd.f32 %v4968, %v4996
    %4998 = vmatmul.f32.gmra.mxu0 %v3117
    %v4999 = vpop.f32.mrf.mxu0
    %v5000 = vadd.f32 %v4971, %v4999
    %5001 = vdwg.mxu0
    %5002 = vmatpush.msra.mxu0 %v4030
    %5003 = vmatpush.msra.mxu0 %v4026
    %5004 = vmatpush.msra.mxu0 %v4022
    %5005 = vmatpush.msra.mxu0 %v4018
    %5006 = vmatpush.msra.mxu0 %v4014
    %5007 = vmatpush.msra.mxu0 %v4010
    %5008 = vmatpush.msra.mxu0 %v4006
    %5009 = vmatpush.msra.mxu0 %v4002
    %5010 = vmatpush.msra.mxu0 %v3998
    %5011 = vmatpush.msra.mxu0 %v3994
    %5012 = vmatpush.msra.mxu0 %v3990
    %5013 = vmatpush.msra.mxu0 %v3986
    %5014 = vmatpush.msra.mxu0 %v3982
    %5015 = vmatpush.msra.mxu0 %v3978
    %5016 = vmatpush.msra.mxu0 %v3974
    %5017 = vmatpush.msra.mxu0 %v3970
    %5018 = vmatmul.f32.gmra.mxu0 %v3070
    %v5019 = vpop.f32.mrf.mxu0
    %v5020 = vadd.f32 %v4991, %v5019
    %5021 = vmatmul.f32.gmra.mxu0 %v3086
    %v5022 = vpop.f32.mrf.mxu0
    %v5023 = vadd.f32 %v4994, %v5022
    %5024 = vmatmul.f32.gmra.mxu0 %v3102
    %v5025 = vpop.f32.mrf.mxu0
    %v5026 = vadd.f32 %v4997, %v5025
    %5027 = vmatmul.f32.gmra.mxu0 %v3118
    %v5028 = vpop.f32.mrf.mxu0
    %v5029 = vadd.f32 %v5000, %v5028
    %5030 = vdwg.mxu0
    %5031 = vmatpush.msra.mxu0 %v4094
    %5032 = vmatpush.msra.mxu0 %v4090
    %5033 = vmatpush.msra.mxu0 %v4086
    %5034 = vmatpush.msra.mxu0 %v4082
    %5035 = vmatpush.msra.mxu0 %v4078
    %5036 = vmatpush.msra.mxu0 %v4074
    %5037 = vmatpush.msra.mxu0 %v4070
    %5038 = vmatpush.msra.mxu0 %v4066
    %5039 = vmatpush.msra.mxu0 %v4062
    %5040 = vmatpush.msra.mxu0 %v4058
    %5041 = vmatpush.msra.mxu0 %v4054
    %5042 = vmatpush.msra.mxu0 %v4050
    %5043 = vmatpush.msra.mxu0 %v4046
    %5044 = vmatpush.msra.mxu0 %v4042
    %5045 = vmatpush.msra.mxu0 %v4038
    %5046 = vmatpush.msra.mxu0 %v4034
    %5047 = vmatmul.f32.gmra.mxu0 %v3071
    %v5048 = vpop.f32.mrf.mxu0
    %v5049 = vadd.f32 %v5020, %v5048
    %5050 = vmatmul.f32.gmra.mxu0 %v3087
    %v5051 = vpop.f32.mrf.mxu0
    %v5052 = vadd.f32 %v5023, %v5051
    %5053 = vmatmul.f32.gmra.mxu0 %v3103
    %v5054 = vpop.f32.mrf.mxu0
    %v5055 = vadd.f32 %v5026, %v5054
    %5056 = vmatmul.f32.gmra.mxu0 %v3119
    %v5057 = vpop.f32.mrf.mxu0
    %v5058 = vadd.f32 %v5029, %v5057
    %5059 = vdwg.mxu0
    %5060 = vmatpush.msra.mxu0 %v4158
    %5061 = vmatpush.msra.mxu0 %v4154
    %5062 = vmatpush.msra.mxu0 %v4150
    %5063 = vmatpush.msra.mxu0 %v4146
    %5064 = vmatpush.msra.mxu0 %v4142
    %5065 = vmatpush.msra.mxu0 %v4138
    %5066 = vmatpush.msra.mxu0 %v4134
    %5067 = vmatpush.msra.mxu0 %v4130
    %5068 = vmatpush.msra.mxu0 %v4126
    %5069 = vmatpush.msra.mxu0 %v4122
    %5070 = vmatpush.msra.mxu0 %v4118
    %5071 = vmatpush.msra.mxu0 %v4114
    %5072 = vmatpush.msra.mxu0 %v4110
    %5073 = vmatpush.msra.mxu0 %v4106
    %5074 = vmatpush.msra.mxu0 %v4102
    %5075 = vmatpush.msra.mxu0 %v4098
    %5076 = vmatmul.f32.gmra.mxu0 %v3072
    %v5077 = vpop.f32.mrf.mxu0
    %v5078 = vadd.f32 %v5049, %v5077
    %5079 = vmatmul.f32.gmra.mxu0 %v3088
    %v5080 = vpop.f32.mrf.mxu0
    %v5081 = vadd.f32 %v5052, %v5080
    %5082 = vmatmul.f32.gmra.mxu0 %v3104
    %v5083 = vpop.f32.mrf.mxu0
    %v5084 = vadd.f32 %v5055, %v5083
    %5085 = vmatmul.f32.gmra.mxu0 %v3120
    %v5086 = vpop.f32.mrf.mxu0
    %v5087 = vadd.f32 %v5058, %v5086
    %5088 = vdwg.mxu0
    %5089 = vmatpush.msra.mxu0 %v3199
    %5090 = vmatpush.msra.mxu0 %v3195
    %5091 = vmatpush.msra.mxu0 %v3191
    %5092 = vmatpush.msra.mxu0 %v3187
    %5093 = vmatpush.msra.mxu0 %v3183
    %5094 = vmatpush.msra.mxu0 %v3179
    %5095 = vmatpush.msra.mxu0 %v3175
    %5096 = vmatpush.msra.mxu0 %v3171
    %5097 = vmatpush.msra.mxu0 %v3167
    %5098 = vmatpush.msra.mxu0 %v3163
    %5099 = vmatpush.msra.mxu0 %v3159
    %5100 = vmatpush.msra.mxu0 %v3155
    %5101 = vmatpush.msra.mxu0 %v3151
    %5102 = vmatpush.msra.mxu0 %v3147
    %5103 = vmatpush.msra.mxu0 %v3143
    %5104 = vmatpush.msra.mxu0 %v3139
    %5105 = vmatmul.f32.gmra.mxu0 %v3057
    %v5106 = vpop.f32.mrf.mxu0
    %v5107 = vadd.f32 0.0, %v5106
    %5108 = vmatmul.f32.gmra.mxu0 %v3073
    %v5109 = vpop.f32.mrf.mxu0
    %v5110 = vadd.f32 0.0, %v5109
    %5111 = vmatmul.f32.gmra.mxu0 %v3089
    %v5112 = vpop.f32.mrf.mxu0
    %v5113 = vadd.f32 0.0, %v5112
    %5114 = vmatmul.f32.gmra.mxu0 %v3105
    %v5115 = vpop.f32.mrf.mxu0
    %v5116 = vadd.f32 0.0, %v5115
    %5117 = vdwg.mxu0
    %5118 = vmatpush.msra.mxu0 %v3263
    %5119 = vmatpush.msra.mxu0 %v3259
    %5120 = vmatpush.msra.mxu0 %v3255
    %5121 = vmatpush.msra.mxu0 %v3251
    %5122 = vmatpush.msra.mxu0 %v3247
    %5123 = vmatpush.msra.mxu0 %v3243
    %5124 = vmatpush.msra.mxu0 %v3239
    %5125 = vmatpush.msra.mxu0 %v3235
    %5126 = vmatpush.msra.mxu0 %v3231
    %5127 = vmatpush.msra.mxu0 %v3227
    %5128 = vmatpush.msra.mxu0 %v3223
    %5129 = vmatpush.msra.mxu0 %v3219
    %5130 = vmatpush.msra.mxu0 %v3215
    %5131 = vmatpush.msra.mxu0 %v3211
    %5132 = vmatpush.msra.mxu0 %v3207
    %5133 = vmatpush.msra.mxu0 %v3203
    %5134 = vmatmul.f32.gmra.mxu0 %v3058
    %v5135 = vpop.f32.mrf.mxu0
    %v5136 = vadd.f32 %v5107, %v5135
    %5137 = vmatmul.f32.gmra.mxu0 %v3074
    %v5138 = vpop.f32.mrf.mxu0
    %v5139 = vadd.f32 %v5110, %v5138
    %5140 = vmatmul.f32.gmra.mxu0 %v3090
    %v5141 = vpop.f32.mrf.mxu0
    %v5142 = vadd.f32 %v5113, %v5141
    %5143 = vmatmul.f32.gmra.mxu0 %v3106
    %v5144 = vpop.f32.mrf.mxu0
    %v5145 = vadd.f32 %v5116, %v5144
    %5146 = vdwg.mxu0
    %5147 = vmatpush.msra.mxu0 %v3327
    %5148 = vmatpush.msra.mxu0 %v3323
    %5149 = vmatpush.msra.mxu0 %v3319
    %5150 = vmatpush.msra.mxu0 %v3315
    %5151 = vmatpush.msra.mxu0 %v3311
    %5152 = vmatpush.msra.mxu0 %v3307
    %5153 = vmatpush.msra.mxu0 %v3303
    %5154 = vmatpush.msra.mxu0 %v3299
    %5155 = vmatpush.msra.mxu0 %v3295
    %5156 = vmatpush.msra.mxu0 %v3291
    %5157 = vmatpush.msra.mxu0 %v3287
    %5158 = vmatpush.msra.mxu0 %v3283
    %5159 = vmatpush.msra.mxu0 %v3279
    %5160 = vmatpush.msra.mxu0 %v3275
    %5161 = vmatpush.msra.mxu0 %v3271
    %5162 = vmatpush.msra.mxu0 %v3267
    %5163 = vmatmul.f32.gmra.mxu0 %v3059
    %v5164 = vpop.f32.mrf.mxu0
    %v5165 = vadd.f32 %v5136, %v5164
    %5166 = vmatmul.f32.gmra.mxu0 %v3075
    %v5167 = vpop.f32.mrf.mxu0
    %v5168 = vadd.f32 %v5139, %v5167
    %5169 = vmatmul.f32.gmra.mxu0 %v3091
    %v5170 = vpop.f32.mrf.mxu0
    %v5171 = vadd.f32 %v5142, %v5170
    %5172 = vmatmul.f32.gmra.mxu0 %v3107
    %v5173 = vpop.f32.mrf.mxu0
    %v5174 = vadd.f32 %v5145, %v5173
    %5175 = vdwg.mxu0
    %5176 = vmatpush.msra.mxu0 %v3391
    %5177 = vmatpush.msra.mxu0 %v3387
    %5178 = vmatpush.msra.mxu0 %v3383
    %5179 = vmatpush.msra.mxu0 %v3379
    %5180 = vmatpush.msra.mxu0 %v3375
    %5181 = vmatpush.msra.mxu0 %v3371
    %5182 = vmatpush.msra.mxu0 %v3367
    %5183 = vmatpush.msra.mxu0 %v3363
    %5184 = vmatpush.msra.mxu0 %v3359
    %5185 = vmatpush.msra.mxu0 %v3355
    %5186 = vmatpush.msra.mxu0 %v3351
    %5187 = vmatpush.msra.mxu0 %v3347
    %5188 = vmatpush.msra.mxu0 %v3343
    %5189 = vmatpush.msra.mxu0 %v3339
    %5190 = vmatpush.msra.mxu0 %v3335
    %5191 = vmatpush.msra.mxu0 %v3331
    %5192 = vmatmul.f32.gmra.mxu0 %v3060
    %v5193 = vpop.f32.mrf.mxu0
    %v5194 = vadd.f32 %v5165, %v5193
    %5195 = vmatmul.f32.gmra.mxu0 %v3076
    %v5196 = vpop.f32.mrf.mxu0
    %v5197 = vadd.f32 %v5168, %v5196
    %5198 = vmatmul.f32.gmra.mxu0 %v3092
    %v5199 = vpop.f32.mrf.mxu0
    %v5200 = vadd.f32 %v5171, %v5199
    %5201 = vmatmul.f32.gmra.mxu0 %v3108
    %v5202 = vpop.f32.mrf.mxu0
    %v5203 = vadd.f32 %v5174, %v5202
    %5204 = vdwg.mxu0
    %5205 = vmatpush.msra.mxu0 %v3455
    %5206 = vmatpush.msra.mxu0 %v3451
    %5207 = vmatpush.msra.mxu0 %v3447
    %5208 = vmatpush.msra.mxu0 %v3443
    %5209 = vmatpush.msra.mxu0 %v3439
    %5210 = vmatpush.msra.mxu0 %v3435
    %5211 = vmatpush.msra.mxu0 %v3431
    %5212 = vmatpush.msra.mxu0 %v3427
    %5213 = vmatpush.msra.mxu0 %v3423
    %5214 = vmatpush.msra.mxu0 %v3419
    %5215 = vmatpush.msra.mxu0 %v3415
    %5216 = vmatpush.msra.mxu0 %v3411
    %5217 = vmatpush.msra.mxu0 %v3407
    %5218 = vmatpush.msra.mxu0 %v3403
    %5219 = vmatpush.msra.mxu0 %v3399
    %5220 = vmatpush.msra.mxu0 %v3395
    %5221 = vmatmul.f32.gmra.mxu0 %v3061
    %v5222 = vpop.f32.mrf.mxu0
    %v5223 = vadd.f32 %v5194, %v5222
    %5224 = vmatmul.f32.gmra.mxu0 %v3077
    %v5225 = vpop.f32.mrf.mxu0
    %v5226 = vadd.f32 %v5197, %v5225
    %5227 = vmatmul.f32.gmra.mxu0 %v3093
    %v5228 = vpop.f32.mrf.mxu0
    %v5229 = vadd.f32 %v5200, %v5228
    %5230 = vmatmul.f32.gmra.mxu0 %v3109
    %v5231 = vpop.f32.mrf.mxu0
    %v5232 = vadd.f32 %v5203, %v5231
    %5233 = vdwg.mxu0
    %5234 = vmatpush.msra.mxu0 %v3519
    %5235 = vmatpush.msra.mxu0 %v3515
    %5236 = vmatpush.msra.mxu0 %v3511
    %5237 = vmatpush.msra.mxu0 %v3507
    %5238 = vmatpush.msra.mxu0 %v3503
    %5239 = vmatpush.msra.mxu0 %v3499
    %5240 = vmatpush.msra.mxu0 %v3495
    %5241 = vmatpush.msra.mxu0 %v3491
    %5242 = vmatpush.msra.mxu0 %v3487
    %5243 = vmatpush.msra.mxu0 %v3483
    %5244 = vmatpush.msra.mxu0 %v3479
    %5245 = vmatpush.msra.mxu0 %v3475
    %5246 = vmatpush.msra.mxu0 %v3471
    %5247 = vmatpush.msra.mxu0 %v3467
    %5248 = vmatpush.msra.mxu0 %v3463
    %5249 = vmatpush.msra.mxu0 %v3459
    %5250 = vmatmul.f32.gmra.mxu0 %v3062
    %v5251 = vpop.f32.mrf.mxu0
    %v5252 = vadd.f32 %v5223, %v5251
    %5253 = vmatmul.f32.gmra.mxu0 %v3078
    %v5254 = vpop.f32.mrf.mxu0
    %v5255 = vadd.f32 %v5226, %v5254
    %5256 = vmatmul.f32.gmra.mxu0 %v3094
    %v5257 = vpop.f32.mrf.mxu0
    %v5258 = vadd.f32 %v5229, %v5257
    %5259 = vmatmul.f32.gmra.mxu0 %v3110
    %v5260 = vpop.f32.mrf.mxu0
    %v5261 = vadd.f32 %v5232, %v5260
    %5262 = vdwg.mxu0
    %5263 = vmatpush.msra.mxu0 %v3583
    %5264 = vmatpush.msra.mxu0 %v3579
    %5265 = vmatpush.msra.mxu0 %v3575
    %5266 = vmatpush.msra.mxu0 %v3571
    %5267 = vmatpush.msra.mxu0 %v3567
    %5268 = vmatpush.msra.mxu0 %v3563
    %5269 = vmatpush.msra.mxu0 %v3559
    %5270 = vmatpush.msra.mxu0 %v3555
    %5271 = vmatpush.msra.mxu0 %v3551
    %5272 = vmatpush.msra.mxu0 %v3547
    %5273 = vmatpush.msra.mxu0 %v3543
    %5274 = vmatpush.msra.mxu0 %v3539
    %5275 = vmatpush.msra.mxu0 %v3535
    %5276 = vmatpush.msra.mxu0 %v3531
    %5277 = vmatpush.msra.mxu0 %v3527
    %5278 = vmatpush.msra.mxu0 %v3523
    %5279 = vmatmul.f32.gmra.mxu0 %v3063
    %v5280 = vpop.f32.mrf.mxu0
    %v5281 = vadd.f32 %v5252, %v5280
    %5282 = vmatmul.f32.gmra.mxu0 %v3079
    %v5283 = vpop.f32.mrf.mxu0
    %v5284 = vadd.f32 %v5255, %v5283
    %5285 = vmatmul.f32.gmra.mxu0 %v3095
    %v5286 = vpop.f32.mrf.mxu0
    %v5287 = vadd.f32 %v5258, %v5286
    %5288 = vmatmul.f32.gmra.mxu0 %v3111
    %v5289 = vpop.f32.mrf.mxu0
    %v5290 = vadd.f32 %v5261, %v5289
    %5291 = vdwg.mxu0
    %5292 = vmatpush.msra.mxu0 %v3647
    %5293 = vmatpush.msra.mxu0 %v3643
    %5294 = vmatpush.msra.mxu0 %v3639
    %5295 = vmatpush.msra.mxu0 %v3635
    %5296 = vmatpush.msra.mxu0 %v3631
    %5297 = vmatpush.msra.mxu0 %v3627
    %5298 = vmatpush.msra.mxu0 %v3623
    %5299 = vmatpush.msra.mxu0 %v3619
    %5300 = vmatpush.msra.mxu0 %v3615
    %5301 = vmatpush.msra.mxu0 %v3611
    %5302 = vmatpush.msra.mxu0 %v3607
    %5303 = vmatpush.msra.mxu0 %v3603
    %5304 = vmatpush.msra.mxu0 %v3599
    %5305 = vmatpush.msra.mxu0 %v3595
    %5306 = vmatpush.msra.mxu0 %v3591
    %5307 = vmatpush.msra.mxu0 %v3587
    %5308 = vmatmul.f32.gmra.mxu0 %v3064
    %v5309 = vpop.f32.mrf.mxu0
    %v5310 = vadd.f32 %v5281, %v5309
    %5311 = vmatmul.f32.gmra.mxu0 %v3080
    %v5312 = vpop.f32.mrf.mxu0
    %v5313 = vadd.f32 %v5284, %v5312
    %5314 = vmatmul.f32.gmra.mxu0 %v3096
    %v5315 = vpop.f32.mrf.mxu0
    %v5316 = vadd.f32 %v5287, %v5315
    %5317 = vmatmul.f32.gmra.mxu0 %v3112
    %v5318 = vpop.f32.mrf.mxu0
    %v5319 = vadd.f32 %v5290, %v5318
    %5320 = vdwg.mxu0
    %5321 = vmatpush.msra.mxu0 %v3711
    %5322 = vmatpush.msra.mxu0 %v3707
    %5323 = vmatpush.msra.mxu0 %v3703
    %5324 = vmatpush.msra.mxu0 %v3699
    %5325 = vmatpush.msra.mxu0 %v3695
    %5326 = vmatpush.msra.mxu0 %v3691
    %5327 = vmatpush.msra.mxu0 %v3687
    %5328 = vmatpush.msra.mxu0 %v3683
    %5329 = vmatpush.msra.mxu0 %v3679
    %5330 = vmatpush.msra.mxu0 %v3675
    %5331 = vmatpush.msra.mxu0 %v3671
    %5332 = vmatpush.msra.mxu0 %v3667
    %5333 = vmatpush.msra.mxu0 %v3663
    %5334 = vmatpush.msra.mxu0 %v3659
    %5335 = vmatpush.msra.mxu0 %v3655
    %5336 = vmatpush.msra.mxu0 %v3651
    %5337 = vmatmul.f32.gmra.mxu0 %v3065
    %v5338 = vpop.f32.mrf.mxu0
    %v5339 = vadd.f32 %v5310, %v5338
    %5340 = vmatmul.f32.gmra.mxu0 %v3081
    %v5341 = vpop.f32.mrf.mxu0
    %v5342 = vadd.f32 %v5313, %v5341
    %5343 = vmatmul.f32.gmra.mxu0 %v3097
    %v5344 = vpop.f32.mrf.mxu0
    %v5345 = vadd.f32 %v5316, %v5344
    %5346 = vmatmul.f32.gmra.mxu0 %v3113
    %v5347 = vpop.f32.mrf.mxu0
    %v5348 = vadd.f32 %v5319, %v5347
    %5349 = vdwg.mxu0
    %5350 = vmatpush.msra.mxu0 %v3775
    %5351 = vmatpush.msra.mxu0 %v3771
    %5352 = vmatpush.msra.mxu0 %v3767
    %5353 = vmatpush.msra.mxu0 %v3763
    %5354 = vmatpush.msra.mxu0 %v3759
    %5355 = vmatpush.msra.mxu0 %v3755
    %5356 = vmatpush.msra.mxu0 %v3751
    %5357 = vmatpush.msra.mxu0 %v3747
    %5358 = vmatpush.msra.mxu0 %v3743
    %5359 = vmatpush.msra.mxu0 %v3739
    %5360 = vmatpush.msra.mxu0 %v3735
    %5361 = vmatpush.msra.mxu0 %v3731
    %5362 = vmatpush.msra.mxu0 %v3727
    %5363 = vmatpush.msra.mxu0 %v3723
    %5364 = vmatpush.msra.mxu0 %v3719
    %5365 = vmatpush.msra.mxu0 %v3715
    %5366 = vmatmul.f32.gmra.mxu0 %v3066
    %v5367 = vpop.f32.mrf.mxu0
    %v5368 = vadd.f32 %v5339, %v5367
    %5369 = vmatmul.f32.gmra.mxu0 %v3082
    %v5370 = vpop.f32.mrf.mxu0
    %v5371 = vadd.f32 %v5342, %v5370
    %5372 = vmatmul.f32.gmra.mxu0 %v3098
    %v5373 = vpop.f32.mrf.mxu0
    %v5374 = vadd.f32 %v5345, %v5373
    %5375 = vmatmul.f32.gmra.mxu0 %v3114
    %v5376 = vpop.f32.mrf.mxu0
    %v5377 = vadd.f32 %v5348, %v5376
    %5378 = vdwg.mxu0
    %5379 = vmatpush.msra.mxu0 %v3839
    %5380 = vmatpush.msra.mxu0 %v3835
    %5381 = vmatpush.msra.mxu0 %v3831
    %5382 = vmatpush.msra.mxu0 %v3827
    %5383 = vmatpush.msra.mxu0 %v3823
    %5384 = vmatpush.msra.mxu0 %v3819
    %5385 = vmatpush.msra.mxu0 %v3815
    %5386 = vmatpush.msra.mxu0 %v3811
    %5387 = vmatpush.msra.mxu0 %v3807
    %5388 = vmatpush.msra.mxu0 %v3803
    %5389 = vmatpush.msra.mxu0 %v3799
    %5390 = vmatpush.msra.mxu0 %v3795
    %5391 = vmatpush.msra.mxu0 %v3791
    %5392 = vmatpush.msra.mxu0 %v3787
    %5393 = vmatpush.msra.mxu0 %v3783
    %5394 = vmatpush.msra.mxu0 %v3779
    %5395 = vmatmul.f32.gmra.mxu0 %v3067
    %v5396 = vpop.f32.mrf.mxu0
    %v5397 = vadd.f32 %v5368, %v5396
    %5398 = vmatmul.f32.gmra.mxu0 %v3083
    %v5399 = vpop.f32.mrf.mxu0
    %v5400 = vadd.f32 %v5371, %v5399
    %5401 = vmatmul.f32.gmra.mxu0 %v3099
    %v5402 = vpop.f32.mrf.mxu0
    %v5403 = vadd.f32 %v5374, %v5402
    %5404 = vmatmul.f32.gmra.mxu0 %v3115
    %v5405 = vpop.f32.mrf.mxu0
    %v5406 = vadd.f32 %v5377, %v5405
    %5407 = vdwg.mxu0
    %5408 = vmatpush.msra.mxu0 %v3903
    %5409 = vmatpush.msra.mxu0 %v3899
    %5410 = vmatpush.msra.mxu0 %v3895
    %5411 = vmatpush.msra.mxu0 %v3891
    %5412 = vmatpush.msra.mxu0 %v3887
    %5413 = vmatpush.msra.mxu0 %v3883
    %5414 = vmatpush.msra.mxu0 %v3879
    %5415 = vmatpush.msra.mxu0 %v3875
    %5416 = vmatpush.msra.mxu0 %v3871
    %5417 = vmatpush.msra.mxu0 %v3867
    %5418 = vmatpush.msra.mxu0 %v3863
    %5419 = vmatpush.msra.mxu0 %v3859
    %5420 = vmatpush.msra.mxu0 %v3855
    %5421 = vmatpush.msra.mxu0 %v3851
    %5422 = vmatpush.msra.mxu0 %v3847
    %5423 = vmatpush.msra.mxu0 %v3843
    %5424 = vmatmul.f32.gmra.mxu0 %v3068
    %v5425 = vpop.f32.mrf.mxu0
    %v5426 = vadd.f32 %v5397, %v5425
    %5427 = vmatmul.f32.gmra.mxu0 %v3084
    %v5428 = vpop.f32.mrf.mxu0
    %v5429 = vadd.f32 %v5400, %v5428
    %5430 = vmatmul.f32.gmra.mxu0 %v3100
    %v5431 = vpop.f32.mrf.mxu0
    %v5432 = vadd.f32 %v5403, %v5431
    %5433 = vmatmul.f32.gmra.mxu0 %v3116
    %v5434 = vpop.f32.mrf.mxu0
    %v5435 = vadd.f32 %v5406, %v5434
    %5436 = vdwg.mxu0
    %5437 = vmatpush.msra.mxu0 %v3967
    %5438 = vmatpush.msra.mxu0 %v3963
    %5439 = vmatpush.msra.mxu0 %v3959
    %5440 = vmatpush.msra.mxu0 %v3955
    %5441 = vmatpush.msra.mxu0 %v3951
    %5442 = vmatpush.msra.mxu0 %v3947
    %5443 = vmatpush.msra.mxu0 %v3943
    %5444 = vmatpush.msra.mxu0 %v3939
    %5445 = vmatpush.msra.mxu0 %v3935
    %5446 = vmatpush.msra.mxu0 %v3931
    %5447 = vmatpush.msra.mxu0 %v3927
    %5448 = vmatpush.msra.mxu0 %v3923
    %5449 = vmatpush.msra.mxu0 %v3919
    %5450 = vmatpush.msra.mxu0 %v3915
    %5451 = vmatpush.msra.mxu0 %v3911
    %5452 = vmatpush.msra.mxu0 %v3907
    %5453 = vmatmul.f32.gmra.mxu0 %v3069
    %v5454 = vpop.f32.mrf.mxu0
    %v5455 = vadd.f32 %v5426, %v5454
    %5456 = vmatmul.f32.gmra.mxu0 %v3085
    %v5457 = vpop.f32.mrf.mxu0
    %v5458 = vadd.f32 %v5429, %v5457
    %5459 = vmatmul.f32.gmra.mxu0 %v3101
    %v5460 = vpop.f32.mrf.mxu0
    %v5461 = vadd.f32 %v5432, %v5460
    %5462 = vmatmul.f32.gmra.mxu0 %v3117
    %v5463 = vpop.f32.mrf.mxu0
    %v5464 = vadd.f32 %v5435, %v5463
    %5465 = vdwg.mxu0
    %5466 = vmatpush.msra.mxu0 %v4031
    %5467 = vmatpush.msra.mxu0 %v4027
    %5468 = vmatpush.msra.mxu0 %v4023
    %5469 = vmatpush.msra.mxu0 %v4019
    %5470 = vmatpush.msra.mxu0 %v4015
    %5471 = vmatpush.msra.mxu0 %v4011
    %5472 = vmatpush.msra.mxu0 %v4007
    %5473 = vmatpush.msra.mxu0 %v4003
    %5474 = vmatpush.msra.mxu0 %v3999
    %5475 = vmatpush.msra.mxu0 %v3995
    %5476 = vmatpush.msra.mxu0 %v3991
    %5477 = vmatpush.msra.mxu0 %v3987
    %5478 = vmatpush.msra.mxu0 %v3983
    %5479 = vmatpush.msra.mxu0 %v3979
    %5480 = vmatpush.msra.mxu0 %v3975
    %5481 = vmatpush.msra.mxu0 %v3971
    %5482 = vmatmul.f32.gmra.mxu0 %v3070
    %v5483 = vpop.f32.mrf.mxu0
    %v5484 = vadd.f32 %v5455, %v5483
    %5485 = vmatmul.f32.gmra.mxu0 %v3086
    %v5486 = vpop.f32.mrf.mxu0
    %v5487 = vadd.f32 %v5458, %v5486
    %5488 = vmatmul.f32.gmra.mxu0 %v3102
    %v5489 = vpop.f32.mrf.mxu0
    %v5490 = vadd.f32 %v5461, %v5489
    %5491 = vmatmul.f32.gmra.mxu0 %v3118
    %v5492 = vpop.f32.mrf.mxu0
    %v5493 = vadd.f32 %v5464, %v5492
    %5494 = vdwg.mxu0
    %5495 = vmatpush.msra.mxu0 %v4095
    %5496 = vmatpush.msra.mxu0 %v4091
    %5497 = vmatpush.msra.mxu0 %v4087
    %5498 = vmatpush.msra.mxu0 %v4083
    %5499 = vmatpush.msra.mxu0 %v4079
    %5500 = vmatpush.msra.mxu0 %v4075
    %5501 = vmatpush.msra.mxu0 %v4071
    %5502 = vmatpush.msra.mxu0 %v4067
    %5503 = vmatpush.msra.mxu0 %v4063
    %5504 = vmatpush.msra.mxu0 %v4059
    %5505 = vmatpush.msra.mxu0 %v4055
    %5506 = vmatpush.msra.mxu0 %v4051
    %5507 = vmatpush.msra.mxu0 %v4047
    %5508 = vmatpush.msra.mxu0 %v4043
    %5509 = vmatpush.msra.mxu0 %v4039
    %5510 = vmatpush.msra.mxu0 %v4035
    %5511 = vmatmul.f32.gmra.mxu0 %v3071
    %v5512 = vpop.f32.mrf.mxu0
    %v5513 = vadd.f32 %v5484, %v5512
    %5514 = vmatmul.f32.gmra.mxu0 %v3087
    %v5515 = vpop.f32.mrf.mxu0
    %v5516 = vadd.f32 %v5487, %v5515
    %5517 = vmatmul.f32.gmra.mxu0 %v3103
    %v5518 = vpop.f32.mrf.mxu0
    %v5519 = vadd.f32 %v5490, %v5518
    %5520 = vmatmul.f32.gmra.mxu0 %v3119
    %v5521 = vpop.f32.mrf.mxu0
    %v5522 = vadd.f32 %v5493, %v5521
    %5523 = vdwg.mxu0
    %5524 = vmatpush.msra.mxu0 %v4159
    %5525 = vmatpush.msra.mxu0 %v4155
    %5526 = vmatpush.msra.mxu0 %v4151
    %5527 = vmatpush.msra.mxu0 %v4147
    %5528 = vmatpush.msra.mxu0 %v4143
    %5529 = vmatpush.msra.mxu0 %v4139
    %5530 = vmatpush.msra.mxu0 %v4135
    %5531 = vmatpush.msra.mxu0 %v4131
    %5532 = vmatpush.msra.mxu0 %v4127
    %5533 = vmatpush.msra.mxu0 %v4123
    %5534 = vmatpush.msra.mxu0 %v4119
    %5535 = vmatpush.msra.mxu0 %v4115
    %5536 = vmatpush.msra.mxu0 %v4111
    %5537 = vmatpush.msra.mxu0 %v4107
    %5538 = vmatpush.msra.mxu0 %v4103
    %5539 = vmatpush.msra.mxu0 %v4099
    %5540 = vmatmul.f32.gmra.mxu0 %v3072
    %v5541 = vpop.f32.mrf.mxu0
    %v5542 = vadd.f32 %v5513, %v5541
    %5543 = vmatmul.f32.gmra.mxu0 %v3088
    %v5544 = vpop.f32.mrf.mxu0
    %v5545 = vadd.f32 %v5516, %v5544
    %5546 = vmatmul.f32.gmra.mxu0 %v3104
    %v5547 = vpop.f32.mrf.mxu0
    %v5548 = vadd.f32 %v5519, %v5547
    %5549 = vmatmul.f32.gmra.mxu0 %v3120
    %v5550 = vpop.f32.mrf.mxu0
    %v5551 = vadd.f32 %v5522, %v5550
    %5552 = vdwg.mxu0
    %5553 = vmatpush.msra.mxu0 %v3200
    %5554 = vmatpush.msra.mxu0 %v3196
    %5555 = vmatpush.msra.mxu0 %v3192
    %5556 = vmatpush.msra.mxu0 %v3188
    %5557 = vmatpush.msra.mxu0 %v3184
    %5558 = vmatpush.msra.mxu0 %v3180
    %5559 = vmatpush.msra.mxu0 %v3176
    %5560 = vmatpush.msra.mxu0 %v3172
    %5561 = vmatpush.msra.mxu0 %v3168
    %5562 = vmatpush.msra.mxu0 %v3164
    %5563 = vmatpush.msra.mxu0 %v3160
    %5564 = vmatpush.msra.mxu0 %v3156
    %5565 = vmatpush.msra.mxu0 %v3152
    %5566 = vmatpush.msra.mxu0 %v3148
    %5567 = vmatpush.msra.mxu0 %v3144
    %5568 = vmatpush.msra.mxu0 %v3140
    %5569 = vmatmul.f32.gmra.mxu0 %v3057
    %v5570 = vpop.f32.mrf.mxu0
    %v5571 = vadd.f32 0.0, %v5570
    %5572 = vmatmul.f32.gmra.mxu0 %v3073
    %v5573 = vpop.f32.mrf.mxu0
    %v5574 = vadd.f32 0.0, %v5573
    %5575 = vmatmul.f32.gmra.mxu0 %v3089
    %v5576 = vpop.f32.mrf.mxu0
    %v5577 = vadd.f32 0.0, %v5576
    %5578 = vmatmul.f32.gmra.mxu0 %v3105
    %v5579 = vpop.f32.mrf.mxu0
    %v5580 = vadd.f32 0.0, %v5579
    %5581 = vdwg.mxu0
    %5582 = vmatpush.msra.mxu0 %v3264
    %5583 = vmatpush.msra.mxu0 %v3260
    %5584 = vmatpush.msra.mxu0 %v3256
    %5585 = vmatpush.msra.mxu0 %v3252
    %5586 = vmatpush.msra.mxu0 %v3248
    %5587 = vmatpush.msra.mxu0 %v3244
    %5588 = vmatpush.msra.mxu0 %v3240
    %5589 = vmatpush.msra.mxu0 %v3236
    %5590 = vmatpush.msra.mxu0 %v3232
    %5591 = vmatpush.msra.mxu0 %v3228
    %5592 = vmatpush.msra.mxu0 %v3224
    %5593 = vmatpush.msra.mxu0 %v3220
    %5594 = vmatpush.msra.mxu0 %v3216
    %5595 = vmatpush.msra.mxu0 %v3212
    %5596 = vmatpush.msra.mxu0 %v3208
    %5597 = vmatpush.msra.mxu0 %v3204
    %5598 = vmatmul.f32.gmra.mxu0 %v3058
    %v5599 = vpop.f32.mrf.mxu0
    %v5600 = vadd.f32 %v5571, %v5599
    %5601 = vmatmul.f32.gmra.mxu0 %v3074
    %v5602 = vpop.f32.mrf.mxu0
    %v5603 = vadd.f32 %v5574, %v5602
    %5604 = vmatmul.f32.gmra.mxu0 %v3090
    %v5605 = vpop.f32.mrf.mxu0
    %v5606 = vadd.f32 %v5577, %v5605
    %5607 = vmatmul.f32.gmra.mxu0 %v3106
    %v5608 = vpop.f32.mrf.mxu0
    %v5609 = vadd.f32 %v5580, %v5608
    %5610 = vdwg.mxu0
    %5611 = vmatpush.msra.mxu0 %v3328
    %5612 = vmatpush.msra.mxu0 %v3324
    %5613 = vmatpush.msra.mxu0 %v3320
    %5614 = vmatpush.msra.mxu0 %v3316
    %5615 = vmatpush.msra.mxu0 %v3312
    %5616 = vmatpush.msra.mxu0 %v3308
    %5617 = vmatpush.msra.mxu0 %v3304
    %5618 = vmatpush.msra.mxu0 %v3300
    %5619 = vmatpush.msra.mxu0 %v3296
    %5620 = vmatpush.msra.mxu0 %v3292
    %5621 = vmatpush.msra.mxu0 %v3288
    %5622 = vmatpush.msra.mxu0 %v3284
    %5623 = vmatpush.msra.mxu0 %v3280
    %5624 = vmatpush.msra.mxu0 %v3276
    %5625 = vmatpush.msra.mxu0 %v3272
    %5626 = vmatpush.msra.mxu0 %v3268
    %5627 = vmatmul.f32.gmra.mxu0 %v3059
    %v5628 = vpop.f32.mrf.mxu0
    %v5629 = vadd.f32 %v5600, %v5628
    %5630 = vmatmul.f32.gmra.mxu0 %v3075
    %v5631 = vpop.f32.mrf.mxu0
    %v5632 = vadd.f32 %v5603, %v5631
    %5633 = vmatmul.f32.gmra.mxu0 %v3091
    %v5634 = vpop.f32.mrf.mxu0
    %v5635 = vadd.f32 %v5606, %v5634
    %5636 = vmatmul.f32.gmra.mxu0 %v3107
    %v5637 = vpop.f32.mrf.mxu0
    %v5638 = vadd.f32 %v5609, %v5637
    %5639 = vdwg.mxu0
    %5640 = vmatpush.msra.mxu0 %v3392
    %5641 = vmatpush.msra.mxu0 %v3388
    %5642 = vmatpush.msra.mxu0 %v3384
    %5643 = vmatpush.msra.mxu0 %v3380
    %5644 = vmatpush.msra.mxu0 %v3376
    %5645 = vmatpush.msra.mxu0 %v3372
    %5646 = vmatpush.msra.mxu0 %v3368
    %5647 = vmatpush.msra.mxu0 %v3364
    %5648 = vmatpush.msra.mxu0 %v3360
    %5649 = vmatpush.msra.mxu0 %v3356
    %5650 = vmatpush.msra.mxu0 %v3352
    %5651 = vmatpush.msra.mxu0 %v3348
    %5652 = vmatpush.msra.mxu0 %v3344
    %5653 = vmatpush.msra.mxu0 %v3340
    %5654 = vmatpush.msra.mxu0 %v3336
    %5655 = vmatpush.msra.mxu0 %v3332
    %5656 = vmatmul.f32.gmra.mxu0 %v3060
    %v5657 = vpop.f32.mrf.mxu0
    %v5658 = vadd.f32 %v5629, %v5657
    %5659 = vmatmul.f32.gmra.mxu0 %v3076
    %v5660 = vpop.f32.mrf.mxu0
    %v5661 = vadd.f32 %v5632, %v5660
    %5662 = vmatmul.f32.gmra.mxu0 %v3092
    %v5663 = vpop.f32.mrf.mxu0
    %v5664 = vadd.f32 %v5635, %v5663
    %5665 = vmatmul.f32.gmra.mxu0 %v3108
    %v5666 = vpop.f32.mrf.mxu0
    %v5667 = vadd.f32 %v5638, %v5666
    %5668 = vdwg.mxu0
    %5669 = vmatpush.msra.mxu0 %v3456
    %5670 = vmatpush.msra.mxu0 %v3452
    %5671 = vmatpush.msra.mxu0 %v3448
    %5672 = vmatpush.msra.mxu0 %v3444
    %5673 = vmatpush.msra.mxu0 %v3440
    %5674 = vmatpush.msra.mxu0 %v3436
    %5675 = vmatpush.msra.mxu0 %v3432
    %5676 = vmatpush.msra.mxu0 %v3428
    %5677 = vmatpush.msra.mxu0 %v3424
    %5678 = vmatpush.msra.mxu0 %v3420
    %5679 = vmatpush.msra.mxu0 %v3416
    %5680 = vmatpush.msra.mxu0 %v3412
    %5681 = vmatpush.msra.mxu0 %v3408
    %5682 = vmatpush.msra.mxu0 %v3404
    %5683 = vmatpush.msra.mxu0 %v3400
    %5684 = vmatpush.msra.mxu0 %v3396
    %5685 = vmatmul.f32.gmra.mxu0 %v3061
    %v5686 = vpop.f32.mrf.mxu0
    %v5687 = vadd.f32 %v5658, %v5686
    %5688 = vmatmul.f32.gmra.mxu0 %v3077
    %v5689 = vpop.f32.mrf.mxu0
    %v5690 = vadd.f32 %v5661, %v5689
    %5691 = vmatmul.f32.gmra.mxu0 %v3093
    %v5692 = vpop.f32.mrf.mxu0
    %v5693 = vadd.f32 %v5664, %v5692
    %5694 = vmatmul.f32.gmra.mxu0 %v3109
    %v5695 = vpop.f32.mrf.mxu0
    %v5696 = vadd.f32 %v5667, %v5695
    %5697 = vdwg.mxu0
    %5698 = vmatpush.msra.mxu0 %v3520
    %5699 = vmatpush.msra.mxu0 %v3516
    %5700 = vmatpush.msra.mxu0 %v3512
    %5701 = vmatpush.msra.mxu0 %v3508
    %5702 = vmatpush.msra.mxu0 %v3504
    %5703 = vmatpush.msra.mxu0 %v3500
    %5704 = vmatpush.msra.mxu0 %v3496
    %5705 = vmatpush.msra.mxu0 %v3492
    %5706 = vmatpush.msra.mxu0 %v3488
    %5707 = vmatpush.msra.mxu0 %v3484
    %5708 = vmatpush.msra.mxu0 %v3480
    %5709 = vmatpush.msra.mxu0 %v3476
    %5710 = vmatpush.msra.mxu0 %v3472
    %5711 = vmatpush.msra.mxu0 %v3468
    %5712 = vmatpush.msra.mxu0 %v3464
    %5713 = vmatpush.msra.mxu0 %v3460
    %5714 = vmatmul.f32.gmra.mxu0 %v3062
    %v5715 = vpop.f32.mrf.mxu0
    %v5716 = vadd.f32 %v5687, %v5715
    %5717 = vmatmul.f32.gmra.mxu0 %v3078
    %v5718 = vpop.f32.mrf.mxu0
    %v5719 = vadd.f32 %v5690, %v5718
    %5720 = vmatmul.f32.gmra.mxu0 %v3094
    %v5721 = vpop.f32.mrf.mxu0
    %v5722 = vadd.f32 %v5693, %v5721
    %5723 = vmatmul.f32.gmra.mxu0 %v3110
    %v5724 = vpop.f32.mrf.mxu0
    %v5725 = vadd.f32 %v5696, %v5724
    %5726 = vdwg.mxu0
    %5727 = vmatpush.msra.mxu0 %v3584
    %5728 = vmatpush.msra.mxu0 %v3580
    %5729 = vmatpush.msra.mxu0 %v3576
    %5730 = vmatpush.msra.mxu0 %v3572
    %5731 = vmatpush.msra.mxu0 %v3568
    %5732 = vmatpush.msra.mxu0 %v3564
    %5733 = vmatpush.msra.mxu0 %v3560
    %5734 = vmatpush.msra.mxu0 %v3556
    %5735 = vmatpush.msra.mxu0 %v3552
    %5736 = vmatpush.msra.mxu0 %v3548
    %5737 = vmatpush.msra.mxu0 %v3544
    %5738 = vmatpush.msra.mxu0 %v3540
    %5739 = vmatpush.msra.mxu0 %v3536
    %5740 = vmatpush.msra.mxu0 %v3532
    %5741 = vmatpush.msra.mxu0 %v3528
    %5742 = vmatpush.msra.mxu0 %v3524
    %5743 = vmatmul.f32.gmra.mxu0 %v3063
    %v5744 = vpop.f32.mrf.mxu0
    %v5745 = vadd.f32 %v5716, %v5744
    %5746 = vmatmul.f32.gmra.mxu0 %v3079
    %v5747 = vpop.f32.mrf.mxu0
    %v5748 = vadd.f32 %v5719, %v5747
    %5749 = vmatmul.f32.gmra.mxu0 %v3095
    %v5750 = vpop.f32.mrf.mxu0
    %v5751 = vadd.f32 %v5722, %v5750
    %5752 = vmatmul.f32.gmra.mxu0 %v3111
    %v5753 = vpop.f32.mrf.mxu0
    %v5754 = vadd.f32 %v5725, %v5753
    %5755 = vdwg.mxu0
    %5756 = vmatpush.msra.mxu0 %v3648
    %5757 = vmatpush.msra.mxu0 %v3644
    %5758 = vmatpush.msra.mxu0 %v3640
    %5759 = vmatpush.msra.mxu0 %v3636
    %5760 = vmatpush.msra.mxu0 %v3632
    %5761 = vmatpush.msra.mxu0 %v3628
    %5762 = vmatpush.msra.mxu0 %v3624
    %5763 = vmatpush.msra.mxu0 %v3620
    %5764 = vmatpush.msra.mxu0 %v3616
    %5765 = vmatpush.msra.mxu0 %v3612
    %5766 = vmatpush.msra.mxu0 %v3608
    %5767 = vmatpush.msra.mxu0 %v3604
    %5768 = vmatpush.msra.mxu0 %v3600
    %5769 = vmatpush.msra.mxu0 %v3596
    %5770 = vmatpush.msra.mxu0 %v3592
    %5771 = vmatpush.msra.mxu0 %v3588
    %5772 = vmatmul.f32.gmra.mxu0 %v3064
    %v5773 = vpop.f32.mrf.mxu0
    %v5774 = vadd.f32 %v5745, %v5773
    %5775 = vmatmul.f32.gmra.mxu0 %v3080
    %v5776 = vpop.f32.mrf.mxu0
    %v5777 = vadd.f32 %v5748, %v5776
    %5778 = vmatmul.f32.gmra.mxu0 %v3096
    %v5779 = vpop.f32.mrf.mxu0
    %v5780 = vadd.f32 %v5751, %v5779
    %5781 = vmatmul.f32.gmra.mxu0 %v3112
    %v5782 = vpop.f32.mrf.mxu0
    %v5783 = vadd.f32 %v5754, %v5782
    %5784 = vdwg.mxu0
    %5785 = vmatpush.msra.mxu0 %v3712
    %5786 = vmatpush.msra.mxu0 %v3708
    %5787 = vmatpush.msra.mxu0 %v3704
    %5788 = vmatpush.msra.mxu0 %v3700
    %5789 = vmatpush.msra.mxu0 %v3696
    %5790 = vmatpush.msra.mxu0 %v3692
    %5791 = vmatpush.msra.mxu0 %v3688
    %5792 = vmatpush.msra.mxu0 %v3684
    %5793 = vmatpush.msra.mxu0 %v3680
    %5794 = vmatpush.msra.mxu0 %v3676
    %5795 = vmatpush.msra.mxu0 %v3672
    %5796 = vmatpush.msra.mxu0 %v3668
    %5797 = vmatpush.msra.mxu0 %v3664
    %5798 = vmatpush.msra.mxu0 %v3660
    %5799 = vmatpush.msra.mxu0 %v3656
    %5800 = vmatpush.msra.mxu0 %v3652
    %5801 = vmatmul.f32.gmra.mxu0 %v3065
    %v5802 = vpop.f32.mrf.mxu0
    %v5803 = vadd.f32 %v5774, %v5802
    %5804 = vmatmul.f32.gmra.mxu0 %v3081
    %v5805 = vpop.f32.mrf.mxu0
    %v5806 = vadd.f32 %v5777, %v5805
    %5807 = vmatmul.f32.gmra.mxu0 %v3097
    %v5808 = vpop.f32.mrf.mxu0
    %v5809 = vadd.f32 %v5780, %v5808
    %5810 = vmatmul.f32.gmra.mxu0 %v3113
    %v5811 = vpop.f32.mrf.mxu0
    %v5812 = vadd.f32 %v5783, %v5811
    %5813 = vdwg.mxu0
    %5814 = vmatpush.msra.mxu0 %v3776
    %5815 = vmatpush.msra.mxu0 %v3772
    %5816 = vmatpush.msra.mxu0 %v3768
    %5817 = vmatpush.msra.mxu0 %v3764
    %5818 = vmatpush.msra.mxu0 %v3760
    %5819 = vmatpush.msra.mxu0 %v3756
    %5820 = vmatpush.msra.mxu0 %v3752
    %5821 = vmatpush.msra.mxu0 %v3748
    %5822 = vmatpush.msra.mxu0 %v3744
    %5823 = vmatpush.msra.mxu0 %v3740
    %5824 = vmatpush.msra.mxu0 %v3736
    %5825 = vmatpush.msra.mxu0 %v3732
    %5826 = vmatpush.msra.mxu0 %v3728
    %5827 = vmatpush.msra.mxu0 %v3724
    %5828 = vmatpush.msra.mxu0 %v3720
    %5829 = vmatpush.msra.mxu0 %v3716
    %5830 = vmatmul.f32.gmra.mxu0 %v3066
    %v5831 = vpop.f32.mrf.mxu0
    %v5832 = vadd.f32 %v5803, %v5831
    %5833 = vmatmul.f32.gmra.mxu0 %v3082
    %v5834 = vpop.f32.mrf.mxu0
    %v5835 = vadd.f32 %v5806, %v5834
    %5836 = vmatmul.f32.gmra.mxu0 %v3098
    %v5837 = vpop.f32.mrf.mxu0
    %v5838 = vadd.f32 %v5809, %v5837
    %5839 = vmatmul.f32.gmra.mxu0 %v3114
    %v5840 = vpop.f32.mrf.mxu0
    %v5841 = vadd.f32 %v5812, %v5840
    %5842 = vdwg.mxu0
    %5843 = vmatpush.msra.mxu0 %v3840
    %5844 = vmatpush.msra.mxu0 %v3836
    %5845 = vmatpush.msra.mxu0 %v3832
    %5846 = vmatpush.msra.mxu0 %v3828
    %5847 = vmatpush.msra.mxu0 %v3824
    %5848 = vmatpush.msra.mxu0 %v3820
    %5849 = vmatpush.msra.mxu0 %v3816
    %5850 = vmatpush.msra.mxu0 %v3812
    %5851 = vmatpush.msra.mxu0 %v3808
    %5852 = vmatpush.msra.mxu0 %v3804
    %5853 = vmatpush.msra.mxu0 %v3800
    %5854 = vmatpush.msra.mxu0 %v3796
    %5855 = vmatpush.msra.mxu0 %v3792
    %5856 = vmatpush.msra.mxu0 %v3788
    %5857 = vmatpush.msra.mxu0 %v3784
    %5858 = vmatpush.msra.mxu0 %v3780
    %5859 = vmatmul.f32.gmra.mxu0 %v3067
    %v5860 = vpop.f32.mrf.mxu0
    %v5861 = vadd.f32 %v5832, %v5860
    %5862 = vmatmul.f32.gmra.mxu0 %v3083
    %v5863 = vpop.f32.mrf.mxu0
    %v5864 = vadd.f32 %v5835, %v5863
    %5865 = vmatmul.f32.gmra.mxu0 %v3099
    %v5866 = vpop.f32.mrf.mxu0
    %v5867 = vadd.f32 %v5838, %v5866
    %5868 = vmatmul.f32.gmra.mxu0 %v3115
    %v5869 = vpop.f32.mrf.mxu0
    %v5870 = vadd.f32 %v5841, %v5869
    %5871 = vdwg.mxu0
    %5872 = vmatpush.msra.mxu0 %v3904
    %5873 = vmatpush.msra.mxu0 %v3900
    %5874 = vmatpush.msra.mxu0 %v3896
    %5875 = vmatpush.msra.mxu0 %v3892
    %5876 = vmatpush.msra.mxu0 %v3888
    %5877 = vmatpush.msra.mxu0 %v3884
    %5878 = vmatpush.msra.mxu0 %v3880
    %5879 = vmatpush.msra.mxu0 %v3876
    %5880 = vmatpush.msra.mxu0 %v3872
    %5881 = vmatpush.msra.mxu0 %v3868
    %5882 = vmatpush.msra.mxu0 %v3864
    %5883 = vmatpush.msra.mxu0 %v3860
    %5884 = vmatpush.msra.mxu0 %v3856
    %5885 = vmatpush.msra.mxu0 %v3852
    %5886 = vmatpush.msra.mxu0 %v3848
    %5887 = vmatpush.msra.mxu0 %v3844
    %5888 = vmatmul.f32.gmra.mxu0 %v3068
    %v5889 = vpop.f32.mrf.mxu0
    %v5890 = vadd.f32 %v5861, %v5889
    %5891 = vmatmul.f32.gmra.mxu0 %v3084
    %v5892 = vpop.f32.mrf.mxu0
    %v5893 = vadd.f32 %v5864, %v5892
    %5894 = vmatmul.f32.gmra.mxu0 %v3100
    %v5895 = vpop.f32.mrf.mxu0
    %v5896 = vadd.f32 %v5867, %v5895
    %5897 = vmatmul.f32.gmra.mxu0 %v3116
    %v5898 = vpop.f32.mrf.mxu0
    %v5899 = vadd.f32 %v5870, %v5898
    %5900 = vdwg.mxu0
    %5901 = vmatpush.msra.mxu0 %v3968
    %5902 = vmatpush.msra.mxu0 %v3964
    %5903 = vmatpush.msra.mxu0 %v3960
    %5904 = vmatpush.msra.mxu0 %v3956
    %5905 = vmatpush.msra.mxu0 %v3952
    %5906 = vmatpush.msra.mxu0 %v3948
    %5907 = vmatpush.msra.mxu0 %v3944
    %5908 = vmatpush.msra.mxu0 %v3940
    %5909 = vmatpush.msra.mxu0 %v3936
    %5910 = vmatpush.msra.mxu0 %v3932
    %5911 = vmatpush.msra.mxu0 %v3928
    %5912 = vmatpush.msra.mxu0 %v3924
    %5913 = vmatpush.msra.mxu0 %v3920
    %5914 = vmatpush.msra.mxu0 %v3916
    %5915 = vmatpush.msra.mxu0 %v3912
    %5916 = vmatpush.msra.mxu0 %v3908
    %5917 = vmatmul.f32.gmra.mxu0 %v3069
    %v5918 = vpop.f32.mrf.mxu0
    %v5919 = vadd.f32 %v5890, %v5918
    %5920 = vmatmul.f32.gmra.mxu0 %v3085
    %v5921 = vpop.f32.mrf.mxu0
    %v5922 = vadd.f32 %v5893, %v5921
    %5923 = vmatmul.f32.gmra.mxu0 %v3101
    %v5924 = vpop.f32.mrf.mxu0
    %v5925 = vadd.f32 %v5896, %v5924
    %5926 = vmatmul.f32.gmra.mxu0 %v3117
    %v5927 = vpop.f32.mrf.mxu0
    %v5928 = vadd.f32 %v5899, %v5927
    %5929 = vdwg.mxu0
    %5930 = vmatpush.msra.mxu0 %v4032
    %5931 = vmatpush.msra.mxu0 %v4028
    %5932 = vmatpush.msra.mxu0 %v4024
    %5933 = vmatpush.msra.mxu0 %v4020
    %5934 = vmatpush.msra.mxu0 %v4016
    %5935 = vmatpush.msra.mxu0 %v4012
    %5936 = vmatpush.msra.mxu0 %v4008
    %5937 = vmatpush.msra.mxu0 %v4004
    %5938 = vmatpush.msra.mxu0 %v4000
    %5939 = vmatpush.msra.mxu0 %v3996
    %5940 = vmatpush.msra.mxu0 %v3992
    %5941 = vmatpush.msra.mxu0 %v3988
    %5942 = vmatpush.msra.mxu0 %v3984
    %5943 = vmatpush.msra.mxu0 %v3980
    %5944 = vmatpush.msra.mxu0 %v3976
    %5945 = vmatpush.msra.mxu0 %v3972
    %5946 = vmatmul.f32.gmra.mxu0 %v3070
    %v5947 = vpop.f32.mrf.mxu0
    %v5948 = vadd.f32 %v5919, %v5947
    %5949 = vmatmul.f32.gmra.mxu0 %v3086
    %v5950 = vpop.f32.mrf.mxu0
    %v5951 = vadd.f32 %v5922, %v5950
    %5952 = vmatmul.f32.gmra.mxu0 %v3102
    %v5953 = vpop.f32.mrf.mxu0
    %v5954 = vadd.f32 %v5925, %v5953
    %5955 = vmatmul.f32.gmra.mxu0 %v3118
    %v5956 = vpop.f32.mrf.mxu0
    %v5957 = vadd.f32 %v5928, %v5956
    %5958 = vdwg.mxu0
    %5959 = vmatpush.msra.mxu0 %v4096
    %5960 = vmatpush.msra.mxu0 %v4092
    %5961 = vmatpush.msra.mxu0 %v4088
    %5962 = vmatpush.msra.mxu0 %v4084
    %5963 = vmatpush.msra.mxu0 %v4080
    %5964 = vmatpush.msra.mxu0 %v4076
    %5965 = vmatpush.msra.mxu0 %v4072
    %5966 = vmatpush.msra.mxu0 %v4068
    %5967 = vmatpush.msra.mxu0 %v4064
    %5968 = vmatpush.msra.mxu0 %v4060
    %5969 = vmatpush.msra.mxu0 %v4056
    %5970 = vmatpush.msra.mxu0 %v4052
    %5971 = vmatpush.msra.mxu0 %v4048
    %5972 = vmatpush.msra.mxu0 %v4044
    %5973 = vmatpush.msra.mxu0 %v4040
    %5974 = vmatpush.msra.mxu0 %v4036
    %5975 = vmatmul.f32.gmra.mxu0 %v3071
    %v5976 = vpop.f32.mrf.mxu0
    %v5977 = vadd.f32 %v5948, %v5976
    %5978 = vmatmul.f32.gmra.mxu0 %v3087
    %v5979 = vpop.f32.mrf.mxu0
    %v5980 = vadd.f32 %v5951, %v5979
    %5981 = vmatmul.f32.gmra.mxu0 %v3103
    %v5982 = vpop.f32.mrf.mxu0
    %v5983 = vadd.f32 %v5954, %v5982
    %5984 = vmatmul.f32.gmra.mxu0 %v3119
    %v5985 = vpop.f32.mrf.mxu0
    %v5986 = vadd.f32 %v5957, %v5985
    %5987 = vdwg.mxu0
    %5988 = vmatpush.msra.mxu0 %v4160
    %5989 = vmatpush.msra.mxu0 %v4156
    %5990 = vmatpush.msra.mxu0 %v4152
    %5991 = vmatpush.msra.mxu0 %v4148
    %5992 = vmatpush.msra.mxu0 %v4144
    %5993 = vmatpush.msra.mxu0 %v4140
    %5994 = vmatpush.msra.mxu0 %v4136
    %5995 = vmatpush.msra.mxu0 %v4132
    %5996 = vmatpush.msra.mxu0 %v4128
    %5997 = vmatpush.msra.mxu0 %v4124
    %5998 = vmatpush.msra.mxu0 %v4120
    %5999 = vmatpush.msra.mxu0 %v4116
    %6000 = vmatpush.msra.mxu0 %v4112
    %6001 = vmatpush.msra.mxu0 %v4108
    %6002 = vmatpush.msra.mxu0 %v4104
    %6003 = vmatpush.msra.mxu0 %v4100
    %6004 = vmatmul.f32.gmra.mxu0 %v3072
    %v6005 = vpop.f32.mrf.mxu0
    %v6006 = vadd.f32 %v5977, %v6005
    %6007 = vmatmul.f32.gmra.mxu0 %v3088
    %v6008 = vpop.f32.mrf.mxu0
    %v6009 = vadd.f32 %v5980, %v6008
    %6010 = vmatmul.f32.gmra.mxu0 %v3104
    %v6011 = vpop.f32.mrf.mxu0
    %v6012 = vadd.f32 %v5983, %v6011
    %6013 = vmatmul.f32.gmra.mxu0 %v3120
    %v6014 = vpop.f32.mrf.mxu0
    %v6015 = vadd.f32 %v5986, %v6014
    %6016 = vdwg.mxu0
    %v6017 = vadd.f32 %v3121, %v4614
    %v6018 = vadd.f32 %v3122, %v5078
    %v6019 = vadd.f32 %v3123, %v5542
    %v6020 = vadd.f32 %v3124, %v6006
    %v6021 = vadd.f32 %v3125, %v4617
    %v6022 = vadd.f32 %v3126, %v5081
    %v6023 = vadd.f32 %v3127, %v5545
    %v6024 = vadd.f32 %v3128, %v6009
    %v6025 = vadd.f32 %v3129, %v4620
    %v6026 = vadd.f32 %v3130, %v5084
    %v6027 = vadd.f32 %v3131, %v5548
    %v6028 = vadd.f32 %v3132, %v6012
    %v6029 = vadd.f32 %v3133, %v4623
    %v6030 = vadd.f32 %v3134, %v5087
    %v6031 = vadd.f32 %v3135, %v5551
    %v6032 = vadd.f32 %v3136, %v6015
    %6033 = vst [vmem:[#allocation11] sm:$0xff] %v6017
    %6034 = vst [vmem:[#allocation11 + $0x8] sm:$0xff] %v6018
    %6035 = vst [vmem:[#allocation11 + $0x10] sm:$0xff] %v6019
    %6036 = vst [vmem:[#allocation11 + $0x18] sm:$0xff] %v6020
    %6037 = vst [vmem:[#allocation11 + $0x20] sm:$0xff] %v6021
    %6038 = vst [vmem:[#allocation11 + $0x28] sm:$0xff] %v6022
    %6039 = vst [vmem:[#allocation11 + $0x30] sm:$0xff] %v6023
    %6040 = vst [vmem:[#allocation11 + $0x38] sm:$0xff] %v6024
    %6041 = vst [vmem:[#allocation11 + $0x40] sm:$0xff] %v6025
    %6042 = vst [vmem:[#allocation11 + $0x48] sm:$0xff] %v6026
    %6043 = vst [vmem:[#allocation11 + $0x50] sm:$0xff] %v6027
    %6044 = vst [vmem:[#allocation11 + $0x58] sm:$0xff] %v6028
    %6045 = vst [vmem:[#allocation11 + $0x60] sm:$0xff] %v6029
    %6046 = vst [vmem:[#allocation11 + $0x68] sm:$0xff] %v6030
    %6047 = vst [vmem:[#allocation11 + $0x70] sm:$0xff] %v6031
    %6048 = vst [vmem:[#allocation11 + $0x78] sm:$0xff] %v6032
    // Predicated region
    $region46: #{tpu_custom_call.1} parent=1 // pred_check
      _
    $region47: #{tpu_custom_call.1} parent=1 // pred_check_branch
      %6050 = sbr.rel (0) target = $region49
    $region48: #{tpu_custom_call.1} parent=1 // pred_region
      %6052 = vsyncadd [#allocation4], 0
      %s6053 = sshll.u32 [#allocation11], 4
      %s6054 = int_to_ptr.vmem [resolvable:$true] %s6053
      %s6055 = sshll.u32 %s5, 4
      %s6056 = int_to_ptr.hbm [resolvable:$true] %s6055
      %6061 = dma.vmem_to_hbm [thread:$0]  %s6054, 2048, %s6056, [#allocation4], 512, 512, 32
    $region49: #{tpu_custom_call.1} parent=1 // pred_fallthru
      _
    // Predicated region
    $region50: #{tpu_custom_call.1} parent=1 // pred_check
      _
    $region51: #{tpu_custom_call.1} parent=1 // pred_check_branch
      %6063 = sbr.rel (0) target = $region53
    $region52: #{tpu_custom_call.1} parent=1 // pred_region
      %6065 = dma.done [#allocation4], 2048
    $region53: #{tpu_custom_call.1} parent=1 // pred_fallthru
      _
    %6066 = vsyncpa [#allocation3], 1
    %6067 = vsyncpa [#allocation6], 1
    %6068 = vsyncpa [#allocation9], 1
    %6069 = vsyncpa [#allocation4], 1

</llo_original>
